<compile_context>
chip_gen: v7x
topology: tpu7x:2x2x1
jax: 0.10.0
libtpu: 0.0.40
codegen_flags: <defaults>
</compile_context>

<pallas_src>
import jax
import jax.numpy as jnp
from jax.experimental import pallas as pl
from jax.experimental.pallas import tpu as pltpu

B = 32              # hardcoded in the PyTorch forward: ans = torch.zeros((32, 3))
C = 12              # channels (BatchNorm1d(12))
SEQ = 70            # sequence length (attention / TIBlock)
SEQ_PAD = 128       # lane-padded sequence length (post-matmul tensors)
LTOT = 73           # last dim of the raw input (3 "point" cols + 70 seq cols)
NSTREAM = 3
ROWS = NSTREAM * B * C          # 1152
M = NSTREAM * B                 # 96 rows per channel slab (96 % 8 == 0)
FEAT = C * SEQ                  # 840, flattened features of the stand-in heads
EPS_BN = 1e-5
EPS_LN = 1e-5


# --------------------------------------------------------------------------
# One fused kernel: affine (BN*attention) + TIBlock + heads + stream mixing
# --------------------------------------------------------------------------
def _splite_fused_kernel(x_ref, scale_ref, shift_ref, att_ref,
                         w1t_ref, w2t_ref, b12_ref, g_ref, beta_ref,
                         wh_ref, bh_ref, wsm_ref, ans_ref):
    # ---- fused eval-mode BatchNorm1d + attention as one affine ------------
    x = x_ref[...]                                             # (1152, 70) f32
    y = (x * scale_ref[...] + shift_ref[...]) * att_ref[...]   # lane/sublane bcast

    # ---- TIBlock: fc1(relu(y)) + fc2(y) as two accumulated K=70 matmuls ---
    # (dropout == identity in eval mode; biases pre-summed into b12).
    # Weight N dims are zero-padded to 128 lanes -> z is lane-dense with
    # exact zeros in the pad lanes.
    yr = jnp.maximum(y, 0.0).astype(jnp.bfloat16)
    yb = y.astype(jnp.bfloat16)
    z = (jnp.dot(yr, w1t_ref[...], preferred_element_type=jnp.float32)
         + jnp.dot(yb, w2t_ref[...], preferred_element_type=jnp.float32)
         + b12_ref[...])                                       # (1152, 128)

    # LayerNorm over SEQ (biased variance, eps = 1e-5, torch defaults).
    # Single-pass stats: pad lanes of z are exactly zero, so unmasked
    # full-lane sums divided by SEQ give the true mean / mean-of-squares.
    mean = jnp.sum(z, axis=-1, keepdims=True) * (1.0 / SEQ)
    msq = jnp.sum(z * z, axis=-1, keepdims=True) * (1.0 / SEQ)
    var = msq - mean * mean
    # gamma/beta are zero-padded -> ti pad lanes stay exactly zero.
    ti = (z - mean) * jax.lax.rsqrt(var + EPS_LN) * g_ref[...] + beta_ref[...]

    # ---- stand-in heads: one channel-batched contraction + channel reduce -
    # TODO(synk): resnet34 backbone definition not provided; linear stand-in.
    # Reshape splits only the major dim at a 96-row (8/16-aligned) boundary.
    ti3 = ti.reshape(C, M, SEQ_PAD).astype(jnp.bfloat16)       # (12, 96, 128)
    hc = jnp.einsum('cml,clo->cmo', ti3, wh_ref[...],
                    preferred_element_type=jnp.float32)        # (12, 96, 3)
    heads = jnp.sum(hc, axis=0) + bh_ref[...]                  # (96, 3)

    r_a = heads[0 * B:1 * B, :]      # avg  stream: col 0 -> resnet, cols 1:3 -> resnet2
    r_l = heads[1 * B:2 * B, :]      # low  stream
    r_h = heads[2 * B:3 * B, :]      # high stream

    # softmaxed mixing weights live in SMEM (scalar reads)
    res1 = (wsm_ref[0, 0] * r_a[:, 0:1] + wsm_ref[0, 1] * r_l[:, 0:1]
            + wsm_ref[0, 2] * r_h[:, 0:1])                     # (B, 1)
    res2 = (wsm_ref[1, 0] * r_a[:, 1:3] + wsm_ref[1, 1] * r_l[:, 1:3]
            + wsm_ref[1, 2] * r_h[:, 1:3])                     # (B, 2)

    res1 = jax.nn.sigmoid(res1)
    inv = pl.reciprocal(res1, approx=True)   # EUP slot (otherwise idle); ~2^-12 rel err

    col2 = res1                                                # ans[:, 2]
    col1 = jax.nn.sigmoid(res2[:, 1:2] * inv)                  # ans[:, 1]
    col0 = jax.nn.sigmoid(res2[:, 0:1] * inv)                  # ans[:, 0]
    ans_ref[...] = jnp.concatenate([col0, col1, col2], axis=1)


def splite_fused(x_rows, scale_col, shift_col, att, w1t, w2t, b12, ln_g, ln_b,
                 wh, bh, wsm):
    vmem = lambda shape: pl.BlockSpec(shape, lambda: (0,) * len(shape))
    return pl.pallas_call(
        _splite_fused_kernel,
        out_shape=jax.ShapeDtypeStruct((B, 3), jnp.float32),
        in_specs=[vmem((ROWS, SEQ)),            # x rows (channel-major)
                  vmem((ROWS, 1)),              # per-row BN scale
                  vmem((ROWS, 1)),              # per-row BN shift
                  vmem((1, SEQ)),               # attention
                  vmem((SEQ, SEQ_PAD)),         # w1.T, N zero-padded to 128, bf16
                  vmem((SEQ, SEQ_PAD)),         # w2.T, N zero-padded to 128, bf16
                  vmem((1, SEQ_PAD)),           # b1 + b2 (zero-padded)
                  vmem((1, SEQ_PAD)),           # LayerNorm gamma (zero-padded)
                  vmem((1, SEQ_PAD)),           # LayerNorm beta  (zero-padded)
                  vmem((C, SEQ_PAD, 3)),        # head weights per channel, bf16
                  vmem((1, 3)),                 # head bias
                  pl.BlockSpec(memory_space=pltpu.MemorySpace.SMEM)],  # mixing weights
        out_specs=vmem((B, 3)),
    )(x_rows, scale_col, shift_col, att, w1t, w2t, b12, ln_g, ln_b, wh, bh, wsm)


# --------------------------------------------------------------------------
# Parameter construction (deterministic) + forward glue
# --------------------------------------------------------------------------
def make_params(key):
    ks = jax.random.split(key, 8)
    u = lambda k, shape, bound: jax.random.uniform(k, shape, jnp.float32, -bound, bound)

    params = {}
    # Splite parameters
    params["attention"] = jnp.ones((1, SEQ), jnp.float32)            # as in __init__
    params["weight"] = jnp.ones((2, 3), jnp.float32)                 # as in __init__
    # BatchNorm1d(12) x3 — eval mode, default gamma=1, beta=0, mean=0, var=1
    params["bn_gamma"] = jnp.ones((NSTREAM, C), jnp.float32)
    params["bn_beta"] = jnp.zeros((NSTREAM, C), jnp.float32)
    params["bn_mean"] = jnp.zeros((NSTREAM, C), jnp.float32)
    params["bn_var"] = jnp.ones((NSTREAM, C), jnp.float32)
    # TIBlock (shared across streams)
    kb = 1.0 / (SEQ ** 0.5)
    params["ti_w1"] = u(ks[0], (SEQ, SEQ), kb)
    params["ti_b1"] = u(ks[1], (SEQ,), kb)
    params["ti_w2"] = u(ks[2], (SEQ, SEQ), kb)
    params["ti_b2"] = u(ks[3], (SEQ,), kb)
    params["ln_g"] = jnp.ones((SEQ,), jnp.float32)
    params["ln_b"] = jnp.zeros((SEQ,), jnp.float32)
    # TODO(synk): resnet34 stand-in heads (definition not provided in source)
    kh = 1.0 / (FEAT ** 0.5)
    w_r1 = u(ks[4], (FEAT, 1), kh)
    b_r1 = u(ks[5], (1,), kh)
    w_r2 = u(ks[6], (FEAT, 2), kh)
    b_r2 = u(ks[7], (2,), kh)
    params["w_heads"] = jnp.concatenate([w_r1, w_r2], axis=1)         # (FEAT, 3)
    params["b_heads"] = jnp.concatenate([b_r1, b_r2])[None, :]        # (1, 3)
    return params


def splite_forward(params, x):
    # x: (B, C, 3, LTOT).  The x_*_point slices (last-dim [:3]) are dead code
    # in the PyTorch forward, so only the [3:] sequence part is used.
    # slice + transpose fuse into ONE ~320 KB XLA copy under jit; rows ordered
    # (channel, stream, batch) so the head contraction sees contiguous,
    # sublane-aligned (3*B, SEQ) per-channel slabs with a free in-kernel reshape.
    x_seq = x[:, :, :, 3:].astype(jnp.float32)                        # (B, C, 3, SEQ)
    x_rows = jnp.transpose(x_seq, (1, 2, 0, 3)).reshape(ROWS, SEQ)

    # fold eval-mode BatchNorm1d into a per-(stream, channel) affine (tiny);
    # attention stays as a (1, SEQ) lane vector broadcast inside the kernel.
    bn_scale = params["bn_gamma"] / jnp.sqrt(params["bn_var"] + EPS_BN)   # (3, C)
    bn_shift = params["bn_beta"] - params["bn_mean"] * bn_scale            # (3, C)
    scale_col = jnp.broadcast_to(bn_scale.T[:, :, None],
                                 (C, NSTREAM, B)).reshape(ROWS, 1)
    shift_col = jnp.broadcast_to(bn_shift.T[:, :, None],
                                 (C, NSTREAM, B)).reshape(ROWS, 1)

    # TIBlock weights: transposed, output dim zero-padded to 128 lanes, bf16
    # (matmul operands only; BN/LN/sigmoid stay f32 inside the kernel).
    pad_n = lambda w: jnp.pad(w, ((0, 0), (0, SEQ_PAD - SEQ)))
    w1t = pad_n(params["ti_w1"].T).astype(jnp.bfloat16)                # (70, 128)
    w2t = pad_n(params["ti_w2"].T).astype(jnp.bfloat16)                # (70, 128)
    pad_v = lambda v: jnp.pad(v, (0, SEQ_PAD - SEQ))[None, :]          # (1, 128)
    b12 = pad_v(params["ti_b1"] + params["ti_b2"])
    ln_g = pad_v(params["ln_g"])
    ln_b = pad_v(params["ln_b"])

    # stand-in head weights: (C, SEQ, 3), K zero-padded to 128, bf16
    wh = params["w_heads"].reshape(C, SEQ, 3)                          # flatten = c*SEQ + l
    wh = jnp.pad(wh, ((0, 0), (0, SEQ_PAD - SEQ), (0, 0))).astype(jnp.bfloat16)

    wsm = jax.nn.softmax(params["weight"], axis=1)  # (2, 3) mixing weights -> SMEM

    ans = splite_fused(x_rows, scale_col, shift_col, params["attention"],
                       w1t, w2t, b12, ln_g, ln_b,
                       wh, params["b_heads"], wsm)
    return ans                                                        # (32, 3)


if __name__ == "__main__":
    key = jax.random.PRNGKey(0)
    k_par, k_x = jax.random.split(key)
    params = make_params(k_par)
    x = jax.random.normal(k_x, (B, C, NSTREAM, LTOT), dtype=jnp.float32)

    ans = jax.jit(splite_forward)(params, x)
    ans = jax.block_until_ready(ans)
    assert ans.shape == (B, 3) and ans.dtype == jnp.float32
    assert bool(jnp.all(jnp.isfinite(ans)))
    print("KERNEL_OK")
</pallas_src>

<mosaic_0001>
module attributes {stable_mosaic.version = 11 : i64} {
  func.func @_splite_fused_kernel(%arg0: memref<1152x70xf32, #tpu.memory_space<vmem>>, %arg1: memref<1152x1xf32, #tpu.memory_space<vmem>>, %arg2: memref<1152x1xf32, #tpu.memory_space<vmem>>, %arg3: memref<1x70xf32, #tpu.memory_space<vmem>>, %arg4: memref<70x128xbf16, #tpu.memory_space<vmem>>, %arg5: memref<70x128xbf16, #tpu.memory_space<vmem>>, %arg6: memref<1x128xf32, #tpu.memory_space<vmem>>, %arg7: memref<1x128xf32, #tpu.memory_space<vmem>>, %arg8: memref<1x128xf32, #tpu.memory_space<vmem>>, %arg9: memref<12x128x3xbf16, #tpu.memory_space<vmem>>, %arg10: memref<1x3xf32, #tpu.memory_space<vmem>>, %arg11: memref<2x3xf32, #tpu.memory_space<smem>>, %arg12: memref<32x3xf32, #tpu.memory_space<vmem>>) attributes {dimension_semantics = [], scalar_prefetch = 0 : i64, scratch_operands = 0 : i64, tpu.core_type = #tpu.core_type<tc>} {
    %c0 = arith.constant 0 : index
    %c0_0 = arith.constant 0 : index
    %0 = vector.load %arg0[%c0, %c0_0] : memref<1152x70xf32, #tpu.memory_space<vmem>>, vector<1152x70xf32>
    %c0_1 = arith.constant 0 : index
    %c0_2 = arith.constant 0 : index
    %1 = vector.load %arg1[%c0_1, %c0_2] : memref<1152x1xf32, #tpu.memory_space<vmem>>, vector<1152x1xf32>
    %2 = vector.broadcast %1 : vector<1152x1xf32> to vector<1152x70xf32>
    %3 = arith.mulf %0, %2 : vector<1152x70xf32>
    %c0_3 = arith.constant 0 : index
    %c0_4 = arith.constant 0 : index
    %4 = vector.load %arg2[%c0_3, %c0_4] : memref<1152x1xf32, #tpu.memory_space<vmem>>, vector<1152x1xf32>
    %5 = vector.broadcast %4 : vector<1152x1xf32> to vector<1152x70xf32>
    %6 = arith.addf %3, %5 : vector<1152x70xf32>
    %c0_5 = arith.constant 0 : index
    %c0_6 = arith.constant 0 : index
    %7 = vector.load %arg3[%c0_5, %c0_6] : memref<1x70xf32, #tpu.memory_space<vmem>>, vector<1x70xf32>
    %8 = vector.broadcast %7 : vector<1x70xf32> to vector<1152x70xf32>
    %9 = arith.mulf %6, %8 : vector<1152x70xf32>
    %cst = arith.constant 0.000000e+00 : f32
    %10 = vector.broadcast %cst : f32 to vector<1152x70xf32>
    %11 = arith.maximumf %9, %10 : vector<1152x70xf32>
    %12 = arith.truncf %11 : vector<1152x70xf32> to vector<1152x70xbf16>
    %13 = arith.truncf %9 : vector<1152x70xf32> to vector<1152x70xbf16>
    %c0_7 = arith.constant 0 : index
    %c0_8 = arith.constant 0 : index
    %14 = vector.load %arg4[%c0_7, %c0_8] : memref<70x128xbf16, #tpu.memory_space<vmem>>, vector<70x128xbf16>
    %cst_9 = arith.constant dense<0.000000e+00> : vector<1152x128xf32>
    %15 = tpu.matmul %12, %14, %cst_9 {dimension_numbers = #tpu.dot_dimension_numbers<[1], [0], [0], [1], [0, 0, 1, 1], [], []>} : vector<1152x70xbf16>, vector<70x128xbf16>, vector<1152x128xf32> -> vector<1152x128xf32>
    %c0_10 = arith.constant 0 : index
    %c0_11 = arith.constant 0 : index
    %16 = vector.load %arg5[%c0_10, %c0_11] : memref<70x128xbf16, #tpu.memory_space<vmem>>, vector<70x128xbf16>
    %cst_12 = arith.constant dense<0.000000e+00> : vector<1152x128xf32>
    %17 = tpu.matmul %13, %16, %cst_12 {dimension_numbers = #tpu.dot_dimension_numbers<[1], [0], [0], [1], [0, 0, 1, 1], [], []>} : vector<1152x70xbf16>, vector<70x128xbf16>, vector<1152x128xf32> -> vector<1152x128xf32>
    %18 = arith.addf %15, %17 : vector<1152x128xf32>
    %c0_13 = arith.constant 0 : index
    %c0_14 = arith.constant 0 : index
    %19 = vector.load %arg6[%c0_13, %c0_14] : memref<1x128xf32, #tpu.memory_space<vmem>>, vector<1x128xf32>
    %20 = vector.broadcast %19 : vector<1x128xf32> to vector<1152x128xf32>
    %21 = arith.addf %18, %20 : vector<1152x128xf32>
    %cst_15 = arith.constant dense<0.000000e+00> : vector<1152xf32>
    %22 = vector.multi_reduction <add>, %21, %cst_15 [1] : vector<1152x128xf32> to vector<1152xf32>
    %23 = vector.shape_cast %22 : vector<1152xf32> to vector<1152x1xf32>
    %cst_16 = arith.constant 0.0142857144 : f32
    %24 = vector.broadcast %cst_16 : f32 to vector<1152x1xf32>
    %25 = arith.mulf %23, %24 : vector<1152x1xf32>
    %26 = arith.mulf %21, %21 : vector<1152x128xf32>
    %cst_17 = arith.constant dense<0.000000e+00> : vector<1152xf32>
    %27 = vector.multi_reduction <add>, %26, %cst_17 [1] : vector<1152x128xf32> to vector<1152xf32>
    %28 = vector.shape_cast %27 : vector<1152xf32> to vector<1152x1xf32>
    %cst_18 = arith.constant 0.0142857144 : f32
    %29 = vector.broadcast %cst_18 : f32 to vector<1152x1xf32>
    %30 = arith.mulf %28, %29 : vector<1152x1xf32>
    %31 = arith.mulf %25, %25 : vector<1152x1xf32>
    %32 = arith.subf %30, %31 : vector<1152x1xf32>
    %33 = vector.broadcast %25 : vector<1152x1xf32> to vector<1152x128xf32>
    %34 = arith.subf %21, %33 : vector<1152x128xf32>
    %cst_19 = arith.constant 9.99999974E-6 : f32
    %35 = vector.broadcast %cst_19 : f32 to vector<1152x1xf32>
    %36 = arith.addf %32, %35 : vector<1152x1xf32>
    %37 = math.rsqrt %36 : vector<1152x1xf32>
    %38 = vector.broadcast %37 : vector<1152x1xf32> to vector<1152x128xf32>
    %39 = arith.mulf %34, %38 : vector<1152x128xf32>
    %c0_20 = arith.constant 0 : index
    %c0_21 = arith.constant 0 : index
    %40 = vector.load %arg7[%c0_20, %c0_21] : memref<1x128xf32, #tpu.memory_space<vmem>>, vector<1x128xf32>
    %41 = vector.broadcast %40 : vector<1x128xf32> to vector<1152x128xf32>
    %42 = arith.mulf %39, %41 : vector<1152x128xf32>
    %c0_22 = arith.constant 0 : index
    %c0_23 = arith.constant 0 : index
    %43 = vector.load %arg8[%c0_22, %c0_23] : memref<1x128xf32, #tpu.memory_space<vmem>>, vector<1x128xf32>
    %44 = vector.broadcast %43 : vector<1x128xf32> to vector<1152x128xf32>
    %45 = arith.addf %42, %44 : vector<1152x128xf32>
    %46 = vector.shape_cast %45 : vector<1152x128xf32> to vector<12x96x128xf32>
    %47 = arith.truncf %46 : vector<12x96x128xf32> to vector<12x96x128xbf16>
    %c0_24 = arith.constant 0 : index
    %c0_25 = arith.constant 0 : index
    %c0_26 = arith.constant 0 : index
    %48 = vector.load %arg9[%c0_24, %c0_25, %c0_26] : memref<12x128x3xbf16, #tpu.memory_space<vmem>>, vector<12x128x3xbf16>
    "tpu.trace_start"() <{level = 10 : i32, message = "cml,clo->cmo"}> : () -> ()
    %cst_27 = arith.constant dense<0.000000e+00> : vector<12x96x3xf32>
    %49 = tpu.matmul %47, %48, %cst_27 {dimension_numbers = #tpu.dot_dimension_numbers<[2], [1], [1], [2], [0, 0, 0, 1, 1, 2], [0], [0]>} : vector<12x96x128xbf16>, vector<12x128x3xbf16>, vector<12x96x3xf32> -> vector<12x96x3xf32>
    "tpu.trace_stop"() : () -> ()
    %cst_28 = arith.constant dense<0.000000e+00> : vector<96x3xf32>
    %50 = vector.multi_reduction <add>, %49, %cst_28 [0] : vector<12x96x3xf32> to vector<96x3xf32>
    %c0_29 = arith.constant 0 : index
    %c0_30 = arith.constant 0 : index
    %51 = vector.load %arg10[%c0_29, %c0_30] : memref<1x3xf32, #tpu.memory_space<vmem>>, vector<1x3xf32>
    %52 = vector.broadcast %51 : vector<1x3xf32> to vector<96x3xf32>
    %53 = arith.addf %50, %52 : vector<96x3xf32>
    %54 = vector.extract_strided_slice %53 {offsets = [0, 0], sizes = [32, 3], strides = [1, 1]} : vector<96x3xf32> to vector<32x3xf32>
    %55 = vector.extract_strided_slice %53 {offsets = [32, 0], sizes = [32, 3], strides = [1, 1]} : vector<96x3xf32> to vector<32x3xf32>
    %56 = vector.extract_strided_slice %53 {offsets = [64, 0], sizes = [32, 3], strides = [1, 1]} : vector<96x3xf32> to vector<32x3xf32>
    %c0_31 = arith.constant 0 : index
    %c0_32 = arith.constant 0 : index
    %57 = memref.load %arg11[%c0_31, %c0_32] : memref<2x3xf32, #tpu.memory_space<smem>>
    %58 = vector.extract_strided_slice %54 {offsets = [0, 0], sizes = [32, 1], strides = [1, 1]} : vector<32x3xf32> to vector<32x1xf32>
    %59 = vector.broadcast %57 : f32 to vector<32x1xf32>
    %60 = arith.mulf %59, %58 : vector<32x1xf32>
    %c0_33 = arith.constant 0 : index
    %c1 = arith.constant 1 : index
    %61 = memref.load %arg11[%c0_33, %c1] : memref<2x3xf32, #tpu.memory_space<smem>>
    %62 = vector.extract_strided_slice %55 {offsets = [0, 0], sizes = [32, 1], strides = [1, 1]} : vector<32x3xf32> to vector<32x1xf32>
    %63 = vector.broadcast %61 : f32 to vector<32x1xf32>
    %64 = arith.mulf %63, %62 : vector<32x1xf32>
    %65 = arith.addf %60, %64 : vector<32x1xf32>
    %c0_34 = arith.constant 0 : index
    %c2 = arith.constant 2 : index
    %66 = memref.load %arg11[%c0_34, %c2] : memref<2x3xf32, #tpu.memory_space<smem>>
    %67 = vector.extract_strided_slice %56 {offsets = [0, 0], sizes = [32, 1], strides = [1, 1]} : vector<32x3xf32> to vector<32x1xf32>
    %68 = vector.broadcast %66 : f32 to vector<32x1xf32>
    %69 = arith.mulf %68, %67 : vector<32x1xf32>
    %70 = arith.addf %65, %69 : vector<32x1xf32>
    %c1_35 = arith.constant 1 : index
    %c0_36 = arith.constant 0 : index
    %71 = memref.load %arg11[%c1_35, %c0_36] : memref<2x3xf32, #tpu.memory_space<smem>>
    %72 = vector.extract_strided_slice %54 {offsets = [0, 1], sizes = [32, 2], strides = [1, 1]} : vector<32x3xf32> to vector<32x2xf32>
    %73 = vector.broadcast %71 : f32 to vector<32x2xf32>
    %74 = arith.mulf %73, %72 : vector<32x2xf32>
    %c1_37 = arith.constant 1 : index
    %c1_38 = arith.constant 1 : index
    %75 = memref.load %arg11[%c1_37, %c1_38] : memref<2x3xf32, #tpu.memory_space<smem>>
    %76 = vector.extract_strided_slice %55 {offsets = [0, 1], sizes = [32, 2], strides = [1, 1]} : vector<32x3xf32> to vector<32x2xf32>
    %77 = vector.broadcast %75 : f32 to vector<32x2xf32>
    %78 = arith.mulf %77, %76 : vector<32x2xf32>
    %79 = arith.addf %74, %78 : vector<32x2xf32>
    %c1_39 = arith.constant 1 : index
    %c2_40 = arith.constant 2 : index
    %80 = memref.load %arg11[%c1_39, %c2_40] : memref<2x3xf32, #tpu.memory_space<smem>>
    %81 = vector.extract_strided_slice %56 {offsets = [0, 1], sizes = [32, 2], strides = [1, 1]} : vector<32x3xf32> to vector<32x2xf32>
    %82 = vector.broadcast %80 : f32 to vector<32x2xf32>
    %83 = arith.mulf %82, %81 : vector<32x2xf32>
    %84 = arith.addf %79, %83 : vector<32x2xf32>
    %85 = arith.negf %70 : vector<32x1xf32>
    %86 = math.exp %85 : vector<32x1xf32>
    %cst_41 = arith.constant 1.000000e+00 : f32
    %87 = vector.broadcast %cst_41 : f32 to vector<32x1xf32>
    %88 = arith.addf %87, %86 : vector<32x1xf32>
    %89 = arith.divf %87, %88 : vector<32x1xf32>
    %90 = tpu.reciprocal %89 {approx = true} : vector<32x1xf32> -> vector<32x1xf32>
    %91 = vector.extract_strided_slice %84 {offsets = [0, 1], sizes = [32, 1], strides = [1, 1]} : vector<32x2xf32> to vector<32x1xf32>
    %92 = arith.mulf %91, %90 : vector<32x1xf32>
    %93 = arith.negf %92 : vector<32x1xf32>
    %94 = math.exp %93 : vector<32x1xf32>
    %cst_42 = arith.constant 1.000000e+00 : f32
    %95 = vector.broadcast %cst_42 : f32 to vector<32x1xf32>
    %96 = arith.addf %95, %94 : vector<32x1xf32>
    %97 = arith.divf %95, %96 : vector<32x1xf32>
    %98 = vector.extract_strided_slice %84 {offsets = [0, 0], sizes = [32, 1], strides = [1, 1]} : vector<32x2xf32> to vector<32x1xf32>
    %99 = arith.mulf %98, %90 : vector<32x1xf32>
    %100 = arith.negf %99 : vector<32x1xf32>
    %101 = math.exp %100 : vector<32x1xf32>
    %cst_43 = arith.constant 1.000000e+00 : f32
    %102 = vector.broadcast %cst_43 : f32 to vector<32x1xf32>
    %103 = arith.addf %102, %101 : vector<32x1xf32>
    %104 = arith.divf %102, %103 : vector<32x1xf32>
    %105 = tpu.concatenate %104, %97, %89 in 1 : vector<32x1xf32>, vector<32x1xf32>, vector<32x1xf32> -> vector<32x3xf32>
    %c0_44 = arith.constant 0 : index
    %c0_45 = arith.constant 0 : index
    %106 = vector.load %arg12[%c0_44, %c0_45] : memref<32x3xf32, #tpu.memory_space<vmem>>, vector<32x3xf32>
    tpu.vector_store %arg12[%c0_44, %c0_45], %105 {strides = array<i32>} : memref<32x3xf32, #tpu.memory_space<vmem>>, vector<32x3xf32>,
    return
  }
}

</mosaic_0001>

<llo_original>
// kernel: splite_forward.1
$region0: #{splite_forward.1}
  #allocation0 [shape = 'u32[]', space=smem, size = 0x4, offset = 0x4, fixed_abs, tag = 'smem constant byte address 0x4 - core index']
  #allocation1 [shape = 'u32[144,128]{1,0:T(1,128)}', space=vmem, size = 0x12000, scoped, tag = 'internal scratch']
  %s0 = inlined_call_operand.vmem [shape: f32[1152,70], index: 0, kind: input, shape index: {}]
  %s1 = inlined_call_operand.vmem [shape: f32[1152,1], index: 1, kind: input, shape index: {}]
  %s2 = inlined_call_operand.vmem [shape: f32[1152,1], index: 2, kind: input, shape index: {}]
  %s3 = inlined_call_operand.vmem [shape: f32[1,70], index: 3, kind: input, shape index: {}]
  %s4 = inlined_call_operand.vmem [shape: bf16[70,128], index: 4, kind: input, shape index: {}]
  %s5 = inlined_call_operand.vmem [shape: bf16[70,128], index: 5, kind: input, shape index: {}]
  %s6 = inlined_call_operand.vmem [shape: f32[1,128], index: 6, kind: input, shape index: {}]
  %s7 = inlined_call_operand.vmem [shape: f32[1,128], index: 7, kind: input, shape index: {}]
  %s8 = inlined_call_operand.vmem [shape: f32[1,128], index: 8, kind: input, shape index: {}]
  %s9 = inlined_call_operand.vmem [shape: bf16[12,128,3], index: 9, kind: input, shape index: {}]
  %s10 = inlined_call_operand.vmem [shape: f32[1,3], index: 10, kind: input, shape index: {}]
  %s11 = inlined_call_operand.vmem [shape: f32[2,3], index: 11, kind: input, shape index: {}]
  %s12 = inlined_call_operand.vmem [shape: f32[32,3], index: 12, kind: output, shape index: {}]
  %s13 = sld [smem:[#allocation0]]
  $region62: #{splite_forward.1} parent=0
    _
  %s15 = ssub.s32 1, %s13
  %s16 = scalar_select 0, %s15, %s13
  $region1: #{splite_forward.1} parent=0
    #allocation2 [shape = 'u8[1024]{0}', space=smem, size = 0x400, scoped, tag = 'input window, operand 11, single buffered']
    #allocation3 [shape = 's32[1]{0}', space=sflag, size = 0x4, scoped, tag = 'scoped memory for splite_forward.1']
    %17 = vsyncpa [#allocation3], 0
    // Predicated region
    $region2: #{splite_forward.1} parent=1 // pred_check
      _
    $region3: #{splite_forward.1} parent=1 // pred_check_branch
      %19 = sbr.rel (0) target = $region5
    $region4: #{splite_forward.1} parent=1 // pred_region
      _
    $region5: #{splite_forward.1} parent=1 // pred_fallthru
      _
    // Predicated region
    $region6: #{splite_forward.1} parent=1 // pred_check
      _
    $region7: #{splite_forward.1} parent=1 // pred_check_branch
      %21 = sbr.rel (0) target = $region9
    $region8: #{splite_forward.1} parent=1 // pred_region
      _
    $region9: #{splite_forward.1} parent=1 // pred_fallthru
      _
    // Predicated region
    $region10: #{splite_forward.1} parent=1 // pred_check
      _
    $region11: #{splite_forward.1} parent=1 // pred_check_branch
      %23 = sbr.rel (0) target = $region13
    $region12: #{splite_forward.1} parent=1 // pred_region
      _
    $region13: #{splite_forward.1} parent=1 // pred_fallthru
      _
    // Predicated region
    $region14: #{splite_forward.1} parent=1 // pred_check
      _
    $region15: #{splite_forward.1} parent=1 // pred_check_branch
      %25 = sbr.rel (0) target = $region17
    $region16: #{splite_forward.1} parent=1 // pred_region
      _
    $region17: #{splite_forward.1} parent=1 // pred_fallthru
      _
    // Predicated region
    $region18: #{splite_forward.1} parent=1 // pred_check
      _
    $region19: #{splite_forward.1} parent=1 // pred_check_branch
      %27 = sbr.rel (0) target = $region21
    $region20: #{splite_forward.1} parent=1 // pred_region
      _
    $region21: #{splite_forward.1} parent=1 // pred_fallthru
      _
    // Predicated region
    $region22: #{splite_forward.1} parent=1 // pred_check
      _
    $region23: #{splite_forward.1} parent=1 // pred_check_branch
      %29 = sbr.rel (0) target = $region25
    $region24: #{splite_forward.1} parent=1 // pred_region
      _
    $region25: #{splite_forward.1} parent=1 // pred_fallthru
      _
    // Predicated region
    $region26: #{splite_forward.1} parent=1 // pred_check
      _
    $region27: #{splite_forward.1} parent=1 // pred_check_branch
      %31 = sbr.rel (0) target = $region29
    $region28: #{splite_forward.1} parent=1 // pred_region
      _
    $region29: #{splite_forward.1} parent=1 // pred_fallthru
      _
    // Predicated region
    $region30: #{splite_forward.1} parent=1 // pred_check
      _
    $region31: #{splite_forward.1} parent=1 // pred_check_branch
      %33 = sbr.rel (0) target = $region33
    $region32: #{splite_forward.1} parent=1 // pred_region
      _
    $region33: #{splite_forward.1} parent=1 // pred_fallthru
      _
    // Predicated region
    $region34: #{splite_forward.1} parent=1 // pred_check
      _
    $region35: #{splite_forward.1} parent=1 // pred_check_branch
      %35 = sbr.rel (0) target = $region37
    $region36: #{splite_forward.1} parent=1 // pred_region
      _
    $region37: #{splite_forward.1} parent=1 // pred_fallthru
      _
    // Predicated region
    $region38: #{splite_forward.1} parent=1 // pred_check
      _
    $region39: #{splite_forward.1} parent=1 // pred_check_branch
      %37 = sbr.rel (0) target = $region41
    $region40: #{splite_forward.1} parent=1 // pred_region
      _
    $region41: #{splite_forward.1} parent=1 // pred_fallthru
      _
    // Predicated region
    $region42: #{splite_forward.1} parent=1 // pred_check
      _
    $region43: #{splite_forward.1} parent=1 // pred_check_branch
      %39 = sbr.rel (0) target = $region45
    $region44: #{splite_forward.1} parent=1 // pred_region
      _
    $region45: #{splite_forward.1} parent=1 // pred_fallthru
      _
    // Predicated region
    $region46: #{splite_forward.1} parent=1 // pred_check
      _
    $region47: #{splite_forward.1} parent=1 // pred_check_branch
      %41 = sbr.rel (0) target = $region49
    $region48: #{splite_forward.1} parent=1 // pred_region
      %s43 = ssub.s32 32, 32
      %44 = vsyncadd [#allocation3], %s43
      %s46 = sshll.u32 %s11, 4
      %s47 = int_to_ptr.vmem [resolvable:$true] %s46
      %49 = dma.vmem_to_smem %s47, 32, [#allocation2], [#allocation3]
    $region49: #{splite_forward.1} parent=1 // pred_fallthru
      _
    // Predicated region
    $region50: #{splite_forward.1} parent=1 // pred_check
      _
    $region51: #{splite_forward.1} parent=1 // pred_check_branch
      %51 = sbr.rel (0) target = $region53
    $region52: #{splite_forward.1} parent=1 // pred_region
      %52 = dma.done [#allocation3], 32
    $region53: #{splite_forward.1} parent=1 // pred_fallthru
      _
    %53 = sfence
    %v55 = vld [vmem:[%s0] sm:$0xff]
    %v56 = vld [vmem:[%s0 + $0x8] sm:$0xff]
    %v57 = vld [vmem:[%s0 + $0x10] sm:$0xff]
    %v58 = vld [vmem:[%s0 + $0x18] sm:$0xff]
    %v59 = vld [vmem:[%s0 + $0x20] sm:$0xff]
    %v60 = vld [vmem:[%s0 + $0x28] sm:$0xff]
    %v61 = vld [vmem:[%s0 + $0x30] sm:$0xff]
    %v62 = vld [vmem:[%s0 + $0x38] sm:$0xff]
    %v63 = vld [vmem:[%s0 + $0x40] sm:$0xff]
    %v64 = vld [vmem:[%s0 + $0x48] sm:$0xff]
    %v65 = vld [vmem:[%s0 + $0x50] sm:$0xff]
    %v66 = vld [vmem:[%s0 + $0x58] sm:$0xff]
    %v67 = vld [vmem:[%s0 + $0x60] sm:$0xff]
    %v68 = vld [vmem:[%s0 + $0x68] sm:$0xff]
    %v69 = vld [vmem:[%s0 + $0x70] sm:$0xff]
    %v70 = vld [vmem:[%s0 + $0x78] sm:$0xff]
    %v71 = vld [vmem:[%s0 + $0x80] sm:$0xff]
    %v72 = vld [vmem:[%s0 + $0x88] sm:$0xff]
    %v73 = vld [vmem:[%s0 + $0x90] sm:$0xff]
    %v74 = vld [vmem:[%s0 + $0x98] sm:$0xff]
    %v75 = vld [vmem:[%s0 + $0xa0] sm:$0xff]
    %v76 = vld [vmem:[%s0 + $0xa8] sm:$0xff]
    %v77 = vld [vmem:[%s0 + $0xb0] sm:$0xff]
    %v78 = vld [vmem:[%s0 + $0xb8] sm:$0xff]
    %v79 = vld [vmem:[%s0 + $0xc0] sm:$0xff]
    %v80 = vld [vmem:[%s0 + $0xc8] sm:$0xff]
    %v81 = vld [vmem:[%s0 + $0xd0] sm:$0xff]
    %v82 = vld [vmem:[%s0 + $0xd8] sm:$0xff]
    %v83 = vld [vmem:[%s0 + $0xe0] sm:$0xff]
    %v84 = vld [vmem:[%s0 + $0xe8] sm:$0xff]
    %v85 = vld [vmem:[%s0 + $0xf0] sm:$0xff]
    %v86 = vld [vmem:[%s0 + $0xf8] sm:$0xff]
    %v87 = vld [vmem:[%s0 + $0x100] sm:$0xff]
    %v88 = vld [vmem:[%s0 + $0x108] sm:$0xff]
    %v89 = vld [vmem:[%s0 + $0x110] sm:$0xff]
    %v90 = vld [vmem:[%s0 + $0x118] sm:$0xff]
    %v91 = vld [vmem:[%s0 + $0x120] sm:$0xff]
    %v92 = vld [vmem:[%s0 + $0x128] sm:$0xff]
    %v93 = vld [vmem:[%s0 + $0x130] sm:$0xff]
    %v94 = vld [vmem:[%s0 + $0x138] sm:$0xff]
    %v95 = vld [vmem:[%s0 + $0x140] sm:$0xff]
    %v96 = vld [vmem:[%s0 + $0x148] sm:$0xff]
    %v97 = vld [vmem:[%s0 + $0x150] sm:$0xff]
    %v98 = vld [vmem:[%s0 + $0x158] sm:$0xff]
    %v99 = vld [vmem:[%s0 + $0x160] sm:$0xff]
    %v100 = vld [vmem:[%s0 + $0x168] sm:$0xff]
    %v101 = vld [vmem:[%s0 + $0x170] sm:$0xff]
    %v102 = vld [vmem:[%s0 + $0x178] sm:$0xff]
    %v103 = vld [vmem:[%s0 + $0x180] sm:$0xff]
    %v104 = vld [vmem:[%s0 + $0x188] sm:$0xff]
    %v105 = vld [vmem:[%s0 + $0x190] sm:$0xff]
    %v106 = vld [vmem:[%s0 + $0x198] sm:$0xff]
    %v107 = vld [vmem:[%s0 + $0x1a0] sm:$0xff]
    %v108 = vld [vmem:[%s0 + $0x1a8] sm:$0xff]
    %v109 = vld [vmem:[%s0 + $0x1b0] sm:$0xff]
    %v110 = vld [vmem:[%s0 + $0x1b8] sm:$0xff]
    %v111 = vld [vmem:[%s0 + $0x1c0] sm:$0xff]
    %v112 = vld [vmem:[%s0 + $0x1c8] sm:$0xff]
    %v113 = vld [vmem:[%s0 + $0x1d0] sm:$0xff]
    %v114 = vld [vmem:[%s0 + $0x1d8] sm:$0xff]
    %v115 = vld [vmem:[%s0 + $0x1e0] sm:$0xff]
    %v116 = vld [vmem:[%s0 + $0x1e8] sm:$0xff]
    %v117 = vld [vmem:[%s0 + $0x1f0] sm:$0xff]
    %v118 = vld [vmem:[%s0 + $0x1f8] sm:$0xff]
    %v119 = vld [vmem:[%s0 + $0x200] sm:$0xff]
    %v120 = vld [vmem:[%s0 + $0x208] sm:$0xff]
    %v121 = vld [vmem:[%s0 + $0x210] sm:$0xff]
    %v122 = vld [vmem:[%s0 + $0x218] sm:$0xff]
    %v123 = vld [vmem:[%s0 + $0x220] sm:$0xff]
    %v124 = vld [vmem:[%s0 + $0x228] sm:$0xff]
    %v125 = vld [vmem:[%s0 + $0x230] sm:$0xff]
    %v126 = vld [vmem:[%s0 + $0x238] sm:$0xff]
    %v127 = vld [vmem:[%s0 + $0x240] sm:$0xff]
    %v128 = vld [vmem:[%s0 + $0x248] sm:$0xff]
    %v129 = vld [vmem:[%s0 + $0x250] sm:$0xff]
    %v130 = vld [vmem:[%s0 + $0x258] sm:$0xff]
    %v131 = vld [vmem:[%s0 + $0x260] sm:$0xff]
    %v132 = vld [vmem:[%s0 + $0x268] sm:$0xff]
    %v133 = vld [vmem:[%s0 + $0x270] sm:$0xff]
    %v134 = vld [vmem:[%s0 + $0x278] sm:$0xff]
    %v135 = vld [vmem:[%s0 + $0x280] sm:$0xff]
    %v136 = vld [vmem:[%s0 + $0x288] sm:$0xff]
    %v137 = vld [vmem:[%s0 + $0x290] sm:$0xff]
    %v138 = vld [vmem:[%s0 + $0x298] sm:$0xff]
    %v139 = vld [vmem:[%s0 + $0x2a0] sm:$0xff]
    %v140 = vld [vmem:[%s0 + $0x2a8] sm:$0xff]
    %v141 = vld [vmem:[%s0 + $0x2b0] sm:$0xff]
    %v142 = vld [vmem:[%s0 + $0x2b8] sm:$0xff]
    %v143 = vld [vmem:[%s0 + $0x2c0] sm:$0xff]
    %v144 = vld [vmem:[%s0 + $0x2c8] sm:$0xff]
    %v145 = vld [vmem:[%s0 + $0x2d0] sm:$0xff]
    %v146 = vld [vmem:[%s0 + $0x2d8] sm:$0xff]
    %v147 = vld [vmem:[%s0 + $0x2e0] sm:$0xff]
    %v148 = vld [vmem:[%s0 + $0x2e8] sm:$0xff]
    %v149 = vld [vmem:[%s0 + $0x2f0] sm:$0xff]
    %v150 = vld [vmem:[%s0 + $0x2f8] sm:$0xff]
    %v151 = vld [vmem:[%s0 + $0x300] sm:$0xff]
    %v152 = vld [vmem:[%s0 + $0x308] sm:$0xff]
    %v153 = vld [vmem:[%s0 + $0x310] sm:$0xff]
    %v154 = vld [vmem:[%s0 + $0x318] sm:$0xff]
    %v155 = vld [vmem:[%s0 + $0x320] sm:$0xff]
    %v156 = vld [vmem:[%s0 + $0x328] sm:$0xff]
    %v157 = vld [vmem:[%s0 + $0x330] sm:$0xff]
    %v158 = vld [vmem:[%s0 + $0x338] sm:$0xff]
    %v159 = vld [vmem:[%s0 + $0x340] sm:$0xff]
    %v160 = vld [vmem:[%s0 + $0x348] sm:$0xff]
    %v161 = vld [vmem:[%s0 + $0x350] sm:$0xff]
    %v162 = vld [vmem:[%s0 + $0x358] sm:$0xff]
    %v163 = vld [vmem:[%s0 + $0x360] sm:$0xff]
    %v164 = vld [vmem:[%s0 + $0x368] sm:$0xff]
    %v165 = vld [vmem:[%s0 + $0x370] sm:$0xff]
    %v166 = vld [vmem:[%s0 + $0x378] sm:$0xff]
    %v167 = vld [vmem:[%s0 + $0x380] sm:$0xff]
    %v168 = vld [vmem:[%s0 + $0x388] sm:$0xff]
    %v169 = vld [vmem:[%s0 + $0x390] sm:$0xff]
    %v170 = vld [vmem:[%s0 + $0x398] sm:$0xff]
    %v171 = vld [vmem:[%s0 + $0x3a0] sm:$0xff]
    %v172 = vld [vmem:[%s0 + $0x3a8] sm:$0xff]
    %v173 = vld [vmem:[%s0 + $0x3b0] sm:$0xff]
    %v174 = vld [vmem:[%s0 + $0x3b8] sm:$0xff]
    %v175 = vld [vmem:[%s0 + $0x3c0] sm:$0xff]
    %v176 = vld [vmem:[%s0 + $0x3c8] sm:$0xff]
    %v177 = vld [vmem:[%s0 + $0x3d0] sm:$0xff]
    %v178 = vld [vmem:[%s0 + $0x3d8] sm:$0xff]
    %v179 = vld [vmem:[%s0 + $0x3e0] sm:$0xff]
    %v180 = vld [vmem:[%s0 + $0x3e8] sm:$0xff]
    %v181 = vld [vmem:[%s0 + $0x3f0] sm:$0xff]
    %v182 = vld [vmem:[%s0 + $0x3f8] sm:$0xff]
    %v183 = vld [vmem:[%s0 + $0x400] sm:$0xff]
    %v184 = vld [vmem:[%s0 + $0x408] sm:$0xff]
    %v185 = vld [vmem:[%s0 + $0x410] sm:$0xff]
    %v186 = vld [vmem:[%s0 + $0x418] sm:$0xff]
    %v187 = vld [vmem:[%s0 + $0x420] sm:$0xff]
    %v188 = vld [vmem:[%s0 + $0x428] sm:$0xff]
    %v189 = vld [vmem:[%s0 + $0x430] sm:$0xff]
    %v190 = vld [vmem:[%s0 + $0x438] sm:$0xff]
    %v191 = vld [vmem:[%s0 + $0x440] sm:$0xff]
    %v192 = vld [vmem:[%s0 + $0x448] sm:$0xff]
    %v193 = vld [vmem:[%s0 + $0x450] sm:$0xff]
    %v194 = vld [vmem:[%s0 + $0x458] sm:$0xff]
    %v195 = vld [vmem:[%s0 + $0x460] sm:$0xff]
    %v196 = vld [vmem:[%s0 + $0x468] sm:$0xff]
    %v197 = vld [vmem:[%s0 + $0x470] sm:$0xff]
    %v198 = vld [vmem:[%s0 + $0x478] sm:$0xff]
    %v199 = vld [vmem:[%s1] sm:$0xff]
    %v200 = vld [vmem:[%s1 + $0x8] sm:$0xff]
    %v201 = vld [vmem:[%s1 + $0x10] sm:$0xff]
    %v202 = vld [vmem:[%s1 + $0x18] sm:$0xff]
    %v203 = vld [vmem:[%s1 + $0x20] sm:$0xff]
    %v204 = vld [vmem:[%s1 + $0x28] sm:$0xff]
    %v205 = vld [vmem:[%s1 + $0x30] sm:$0xff]
    %v206 = vld [vmem:[%s1 + $0x38] sm:$0xff]
    %v207 = vld [vmem:[%s1 + $0x40] sm:$0xff]
    %v208 = vld [vmem:[%s1 + $0x48] sm:$0xff]
    %v209 = vld [vmem:[%s1 + $0x50] sm:$0xff]
    %v210 = vld [vmem:[%s1 + $0x58] sm:$0xff]
    %v211 = vld [vmem:[%s1 + $0x60] sm:$0xff]
    %v212 = vld [vmem:[%s1 + $0x68] sm:$0xff]
    %v213 = vld [vmem:[%s1 + $0x70] sm:$0xff]
    %v214 = vld [vmem:[%s1 + $0x78] sm:$0xff]
    %v215 = vld [vmem:[%s1 + $0x80] sm:$0xff]
    %v216 = vld [vmem:[%s1 + $0x88] sm:$0xff]
    %v217 = vld [vmem:[%s1 + $0x90] sm:$0xff]
    %v218 = vld [vmem:[%s1 + $0x98] sm:$0xff]
    %v219 = vld [vmem:[%s1 + $0xa0] sm:$0xff]
    %v220 = vld [vmem:[%s1 + $0xa8] sm:$0xff]
    %v221 = vld [vmem:[%s1 + $0xb0] sm:$0xff]
    %v222 = vld [vmem:[%s1 + $0xb8] sm:$0xff]
    %v223 = vld [vmem:[%s1 + $0xc0] sm:$0xff]
    %v224 = vld [vmem:[%s1 + $0xc8] sm:$0xff]
    %v225 = vld [vmem:[%s1 + $0xd0] sm:$0xff]
    %v226 = vld [vmem:[%s1 + $0xd8] sm:$0xff]
    %v227 = vld [vmem:[%s1 + $0xe0] sm:$0xff]
    %v228 = vld [vmem:[%s1 + $0xe8] sm:$0xff]
    %v229 = vld [vmem:[%s1 + $0xf0] sm:$0xff]
    %v230 = vld [vmem:[%s1 + $0xf8] sm:$0xff]
    %v231 = vld [vmem:[%s1 + $0x100] sm:$0xff]
    %v232 = vld [vmem:[%s1 + $0x108] sm:$0xff]
    %v233 = vld [vmem:[%s1 + $0x110] sm:$0xff]
    %v234 = vld [vmem:[%s1 + $0x118] sm:$0xff]
    %v235 = vld [vmem:[%s1 + $0x120] sm:$0xff]
    %v236 = vld [vmem:[%s1 + $0x128] sm:$0xff]
    %v237 = vld [vmem:[%s1 + $0x130] sm:$0xff]
    %v238 = vld [vmem:[%s1 + $0x138] sm:$0xff]
    %v239 = vld [vmem:[%s1 + $0x140] sm:$0xff]
    %v240 = vld [vmem:[%s1 + $0x148] sm:$0xff]
    %v241 = vld [vmem:[%s1 + $0x150] sm:$0xff]
    %v242 = vld [vmem:[%s1 + $0x158] sm:$0xff]
    %v243 = vld [vmem:[%s1 + $0x160] sm:$0xff]
    %v244 = vld [vmem:[%s1 + $0x168] sm:$0xff]
    %v245 = vld [vmem:[%s1 + $0x170] sm:$0xff]
    %v246 = vld [vmem:[%s1 + $0x178] sm:$0xff]
    %v247 = vld [vmem:[%s1 + $0x180] sm:$0xff]
    %v248 = vld [vmem:[%s1 + $0x188] sm:$0xff]
    %v249 = vld [vmem:[%s1 + $0x190] sm:$0xff]
    %v250 = vld [vmem:[%s1 + $0x198] sm:$0xff]
    %v251 = vld [vmem:[%s1 + $0x1a0] sm:$0xff]
    %v252 = vld [vmem:[%s1 + $0x1a8] sm:$0xff]
    %v253 = vld [vmem:[%s1 + $0x1b0] sm:$0xff]
    %v254 = vld [vmem:[%s1 + $0x1b8] sm:$0xff]
    %v255 = vld [vmem:[%s1 + $0x1c0] sm:$0xff]
    %v256 = vld [vmem:[%s1 + $0x1c8] sm:$0xff]
    %v257 = vld [vmem:[%s1 + $0x1d0] sm:$0xff]
    %v258 = vld [vmem:[%s1 + $0x1d8] sm:$0xff]
    %v259 = vld [vmem:[%s1 + $0x1e0] sm:$0xff]
    %v260 = vld [vmem:[%s1 + $0x1e8] sm:$0xff]
    %v261 = vld [vmem:[%s1 + $0x1f0] sm:$0xff]
    %v262 = vld [vmem:[%s1 + $0x1f8] sm:$0xff]
    %v263 = vld [vmem:[%s1 + $0x200] sm:$0xff]
    %v264 = vld [vmem:[%s1 + $0x208] sm:$0xff]
    %v265 = vld [vmem:[%s1 + $0x210] sm:$0xff]
    %v266 = vld [vmem:[%s1 + $0x218] sm:$0xff]
    %v267 = vld [vmem:[%s1 + $0x220] sm:$0xff]
    %v268 = vld [vmem:[%s1 + $0x228] sm:$0xff]
    %v269 = vld [vmem:[%s1 + $0x230] sm:$0xff]
    %v270 = vld [vmem:[%s1 + $0x238] sm:$0xff]
    %v271 = vld [vmem:[%s1 + $0x240] sm:$0xff]
    %v272 = vld [vmem:[%s1 + $0x248] sm:$0xff]
    %v273 = vld [vmem:[%s1 + $0x250] sm:$0xff]
    %v274 = vld [vmem:[%s1 + $0x258] sm:$0xff]
    %v275 = vld [vmem:[%s1 + $0x260] sm:$0xff]
    %v276 = vld [vmem:[%s1 + $0x268] sm:$0xff]
    %v277 = vld [vmem:[%s1 + $0x270] sm:$0xff]
    %v278 = vld [vmem:[%s1 + $0x278] sm:$0xff]
    %v279 = vld [vmem:[%s1 + $0x280] sm:$0xff]
    %v280 = vld [vmem:[%s1 + $0x288] sm:$0xff]
    %v281 = vld [vmem:[%s1 + $0x290] sm:$0xff]
    %v282 = vld [vmem:[%s1 + $0x298] sm:$0xff]
    %v283 = vld [vmem:[%s1 + $0x2a0] sm:$0xff]
    %v284 = vld [vmem:[%s1 + $0x2a8] sm:$0xff]
    %v285 = vld [vmem:[%s1 + $0x2b0] sm:$0xff]
    %v286 = vld [vmem:[%s1 + $0x2b8] sm:$0xff]
    %v287 = vld [vmem:[%s1 + $0x2c0] sm:$0xff]
    %v288 = vld [vmem:[%s1 + $0x2c8] sm:$0xff]
    %v289 = vld [vmem:[%s1 + $0x2d0] sm:$0xff]
    %v290 = vld [vmem:[%s1 + $0x2d8] sm:$0xff]
    %v291 = vld [vmem:[%s1 + $0x2e0] sm:$0xff]
    %v292 = vld [vmem:[%s1 + $0x2e8] sm:$0xff]
    %v293 = vld [vmem:[%s1 + $0x2f0] sm:$0xff]
    %v294 = vld [vmem:[%s1 + $0x2f8] sm:$0xff]
    %v295 = vld [vmem:[%s1 + $0x300] sm:$0xff]
    %v296 = vld [vmem:[%s1 + $0x308] sm:$0xff]
    %v297 = vld [vmem:[%s1 + $0x310] sm:$0xff]
    %v298 = vld [vmem:[%s1 + $0x318] sm:$0xff]
    %v299 = vld [vmem:[%s1 + $0x320] sm:$0xff]
    %v300 = vld [vmem:[%s1 + $0x328] sm:$0xff]
    %v301 = vld [vmem:[%s1 + $0x330] sm:$0xff]
    %v302 = vld [vmem:[%s1 + $0x338] sm:$0xff]
    %v303 = vld [vmem:[%s1 + $0x340] sm:$0xff]
    %v304 = vld [vmem:[%s1 + $0x348] sm:$0xff]
    %v305 = vld [vmem:[%s1 + $0x350] sm:$0xff]
    %v306 = vld [vmem:[%s1 + $0x358] sm:$0xff]
    %v307 = vld [vmem:[%s1 + $0x360] sm:$0xff]
    %v308 = vld [vmem:[%s1 + $0x368] sm:$0xff]
    %v309 = vld [vmem:[%s1 + $0x370] sm:$0xff]
    %v310 = vld [vmem:[%s1 + $0x378] sm:$0xff]
    %v311 = vld [vmem:[%s1 + $0x380] sm:$0xff]
    %v312 = vld [vmem:[%s1 + $0x388] sm:$0xff]
    %v313 = vld [vmem:[%s1 + $0x390] sm:$0xff]
    %v314 = vld [vmem:[%s1 + $0x398] sm:$0xff]
    %v315 = vld [vmem:[%s1 + $0x3a0] sm:$0xff]
    %v316 = vld [vmem:[%s1 + $0x3a8] sm:$0xff]
    %v317 = vld [vmem:[%s1 + $0x3b0] sm:$0xff]
    %v318 = vld [vmem:[%s1 + $0x3b8] sm:$0xff]
    %v319 = vld [vmem:[%s1 + $0x3c0] sm:$0xff]
    %v320 = vld [vmem:[%s1 + $0x3c8] sm:$0xff]
    %v321 = vld [vmem:[%s1 + $0x3d0] sm:$0xff]
    %v322 = vld [vmem:[%s1 + $0x3d8] sm:$0xff]
    %v323 = vld [vmem:[%s1 + $0x3e0] sm:$0xff]
    %v324 = vld [vmem:[%s1 + $0x3e8] sm:$0xff]
    %v325 = vld [vmem:[%s1 + $0x3f0] sm:$0xff]
    %v326 = vld [vmem:[%s1 + $0x3f8] sm:$0xff]
    %v327 = vld [vmem:[%s1 + $0x400] sm:$0xff]
    %v328 = vld [vmem:[%s1 + $0x408] sm:$0xff]
    %v329 = vld [vmem:[%s1 + $0x410] sm:$0xff]
    %v330 = vld [vmem:[%s1 + $0x418] sm:$0xff]
    %v331 = vld [vmem:[%s1 + $0x420] sm:$0xff]
    %v332 = vld [vmem:[%s1 + $0x428] sm:$0xff]
    %v333 = vld [vmem:[%s1 + $0x430] sm:$0xff]
    %v334 = vld [vmem:[%s1 + $0x438] sm:$0xff]
    %v335 = vld [vmem:[%s1 + $0x440] sm:$0xff]
    %v336 = vld [vmem:[%s1 + $0x448] sm:$0xff]
    %v337 = vld [vmem:[%s1 + $0x450] sm:$0xff]
    %v338 = vld [vmem:[%s1 + $0x458] sm:$0xff]
    %v339 = vld [vmem:[%s1 + $0x460] sm:$0xff]
    %v340 = vld [vmem:[%s1 + $0x468] sm:$0xff]
    %v341 = vld [vmem:[%s1 + $0x470] sm:$0xff]
    %v342 = vld [vmem:[%s1 + $0x478] sm:$0xff]
    %344 = vset.pattern.permute.xlu0 0
    %345 = vperm.xlu0 %344, %v199
    %v346 = vpop.permute.xlu0 %345
    %349 = vset.pattern.permute.xlu0 0
    %350 = vperm.xlu0 %349, %v200
    %v351 = vpop.permute.xlu0 %350
    %354 = vset.pattern.permute.xlu0 0
    %355 = vperm.xlu0 %354, %v201
    %v356 = vpop.permute.xlu0 %355
    %359 = vset.pattern.permute.xlu0 0
    %360 = vperm.xlu0 %359, %v202
    %v361 = vpop.permute.xlu0 %360
    %364 = vset.pattern.permute.xlu0 0
    %365 = vperm.xlu0 %364, %v203
    %v366 = vpop.permute.xlu0 %365
    %369 = vset.pattern.permute.xlu0 0
    %370 = vperm.xlu0 %369, %v204
    %v371 = vpop.permute.xlu0 %370
    %374 = vset.pattern.permute.xlu0 0
    %375 = vperm.xlu0 %374, %v205
    %v376 = vpop.permute.xlu0 %375
    %379 = vset.pattern.permute.xlu0 0
    %380 = vperm.xlu0 %379, %v206
    %v381 = vpop.permute.xlu0 %380
    %384 = vset.pattern.permute.xlu0 0
    %385 = vperm.xlu0 %384, %v207
    %v386 = vpop.permute.xlu0 %385
    %389 = vset.pattern.permute.xlu0 0
    %390 = vperm.xlu0 %389, %v208
    %v391 = vpop.permute.xlu0 %390
    %394 = vset.pattern.permute.xlu0 0
    %395 = vperm.xlu0 %394, %v209
    %v396 = vpop.permute.xlu0 %395
    %399 = vset.pattern.permute.xlu0 0
    %400 = vperm.xlu0 %399, %v210
    %v401 = vpop.permute.xlu0 %400
    %404 = vset.pattern.permute.xlu0 0
    %405 = vperm.xlu0 %404, %v211
    %v406 = vpop.permute.xlu0 %405
    %409 = vset.pattern.permute.xlu0 0
    %410 = vperm.xlu0 %409, %v212
    %v411 = vpop.permute.xlu0 %410
    %414 = vset.pattern.permute.xlu0 0
    %415 = vperm.xlu0 %414, %v213
    %v416 = vpop.permute.xlu0 %415
    %419 = vset.pattern.permute.xlu0 0
    %420 = vperm.xlu0 %419, %v214
    %v421 = vpop.permute.xlu0 %420
    %424 = vset.pattern.permute.xlu0 0
    %425 = vperm.xlu0 %424, %v215
    %v426 = vpop.permute.xlu0 %425
    %429 = vset.pattern.permute.xlu0 0
    %430 = vperm.xlu0 %429, %v216
    %v431 = vpop.permute.xlu0 %430
    %434 = vset.pattern.permute.xlu0 0
    %435 = vperm.xlu0 %434, %v217
    %v436 = vpop.permute.xlu0 %435
    %439 = vset.pattern.permute.xlu0 0
    %440 = vperm.xlu0 %439, %v218
    %v441 = vpop.permute.xlu0 %440
    %444 = vset.pattern.permute.xlu0 0
    %445 = vperm.xlu0 %444, %v219
    %v446 = vpop.permute.xlu0 %445
    %449 = vset.pattern.permute.xlu0 0
    %450 = vperm.xlu0 %449, %v220
    %v451 = vpop.permute.xlu0 %450
    %454 = vset.pattern.permute.xlu0 0
    %455 = vperm.xlu0 %454, %v221
    %v456 = vpop.permute.xlu0 %455
    %459 = vset.pattern.permute.xlu0 0
    %460 = vperm.xlu0 %459, %v222
    %v461 = vpop.permute.xlu0 %460
    %464 = vset.pattern.permute.xlu0 0
    %465 = vperm.xlu0 %464, %v223
    %v466 = vpop.permute.xlu0 %465
    %469 = vset.pattern.permute.xlu0 0
    %470 = vperm.xlu0 %469, %v224
    %v471 = vpop.permute.xlu0 %470
    %474 = vset.pattern.permute.xlu0 0
    %475 = vperm.xlu0 %474, %v225
    %v476 = vpop.permute.xlu0 %475
    %479 = vset.pattern.permute.xlu0 0
    %480 = vperm.xlu0 %479, %v226
    %v481 = vpop.permute.xlu0 %480
    %484 = vset.pattern.permute.xlu0 0
    %485 = vperm.xlu0 %484, %v227
    %v486 = vpop.permute.xlu0 %485
    %489 = vset.pattern.permute.xlu0 0
    %490 = vperm.xlu0 %489, %v228
    %v491 = vpop.permute.xlu0 %490
    %494 = vset.pattern.permute.xlu0 0
    %495 = vperm.xlu0 %494, %v229
    %v496 = vpop.permute.xlu0 %495
    %499 = vset.pattern.permute.xlu0 0
    %500 = vperm.xlu0 %499, %v230
    %v501 = vpop.permute.xlu0 %500
    %504 = vset.pattern.permute.xlu0 0
    %505 = vperm.xlu0 %504, %v231
    %v506 = vpop.permute.xlu0 %505
    %509 = vset.pattern.permute.xlu0 0
    %510 = vperm.xlu0 %509, %v232
    %v511 = vpop.permute.xlu0 %510
    %514 = vset.pattern.permute.xlu0 0
    %515 = vperm.xlu0 %514, %v233
    %v516 = vpop.permute.xlu0 %515
    %519 = vset.pattern.permute.xlu0 0
    %520 = vperm.xlu0 %519, %v234
    %v521 = vpop.permute.xlu0 %520
    %524 = vset.pattern.permute.xlu0 0
    %525 = vperm.xlu0 %524, %v235
    %v526 = vpop.permute.xlu0 %525
    %529 = vset.pattern.permute.xlu0 0
    %530 = vperm.xlu0 %529, %v236
    %v531 = vpop.permute.xlu0 %530
    %534 = vset.pattern.permute.xlu0 0
    %535 = vperm.xlu0 %534, %v237
    %v536 = vpop.permute.xlu0 %535
    %539 = vset.pattern.permute.xlu0 0
    %540 = vperm.xlu0 %539, %v238
    %v541 = vpop.permute.xlu0 %540
    %544 = vset.pattern.permute.xlu0 0
    %545 = vperm.xlu0 %544, %v239
    %v546 = vpop.permute.xlu0 %545
    %549 = vset.pattern.permute.xlu0 0
    %550 = vperm.xlu0 %549, %v240
    %v551 = vpop.permute.xlu0 %550
    %554 = vset.pattern.permute.xlu0 0
    %555 = vperm.xlu0 %554, %v241
    %v556 = vpop.permute.xlu0 %555
    %559 = vset.pattern.permute.xlu0 0
    %560 = vperm.xlu0 %559, %v242
    %v561 = vpop.permute.xlu0 %560
    %564 = vset.pattern.permute.xlu0 0
    %565 = vperm.xlu0 %564, %v243
    %v566 = vpop.permute.xlu0 %565
    %569 = vset.pattern.permute.xlu0 0
    %570 = vperm.xlu0 %569, %v244
    %v571 = vpop.permute.xlu0 %570
    %574 = vset.pattern.permute.xlu0 0
    %575 = vperm.xlu0 %574, %v245
    %v576 = vpop.permute.xlu0 %575
    %579 = vset.pattern.permute.xlu0 0
    %580 = vperm.xlu0 %579, %v246
    %v581 = vpop.permute.xlu0 %580
    %584 = vset.pattern.permute.xlu0 0
    %585 = vperm.xlu0 %584, %v247
    %v586 = vpop.permute.xlu0 %585
    %589 = vset.pattern.permute.xlu0 0
    %590 = vperm.xlu0 %589, %v248
    %v591 = vpop.permute.xlu0 %590
    %594 = vset.pattern.permute.xlu0 0
    %595 = vperm.xlu0 %594, %v249
    %v596 = vpop.permute.xlu0 %595
    %599 = vset.pattern.permute.xlu0 0
    %600 = vperm.xlu0 %599, %v250
    %v601 = vpop.permute.xlu0 %600
    %604 = vset.pattern.permute.xlu0 0
    %605 = vperm.xlu0 %604, %v251
    %v606 = vpop.permute.xlu0 %605
    %609 = vset.pattern.permute.xlu0 0
    %610 = vperm.xlu0 %609, %v252
    %v611 = vpop.permute.xlu0 %610
    %614 = vset.pattern.permute.xlu0 0
    %615 = vperm.xlu0 %614, %v253
    %v616 = vpop.permute.xlu0 %615
    %619 = vset.pattern.permute.xlu0 0
    %620 = vperm.xlu0 %619, %v254
    %v621 = vpop.permute.xlu0 %620
    %624 = vset.pattern.permute.xlu0 0
    %625 = vperm.xlu0 %624, %v255
    %v626 = vpop.permute.xlu0 %625
    %629 = vset.pattern.permute.xlu0 0
    %630 = vperm.xlu0 %629, %v256
    %v631 = vpop.permute.xlu0 %630
    %634 = vset.pattern.permute.xlu0 0
    %635 = vperm.xlu0 %634, %v257
    %v636 = vpop.permute.xlu0 %635
    %639 = vset.pattern.permute.xlu0 0
    %640 = vperm.xlu0 %639, %v258
    %v641 = vpop.permute.xlu0 %640
    %644 = vset.pattern.permute.xlu0 0
    %645 = vperm.xlu0 %644, %v259
    %v646 = vpop.permute.xlu0 %645
    %649 = vset.pattern.permute.xlu0 0
    %650 = vperm.xlu0 %649, %v260
    %v651 = vpop.permute.xlu0 %650
    %654 = vset.pattern.permute.xlu0 0
    %655 = vperm.xlu0 %654, %v261
    %v656 = vpop.permute.xlu0 %655
    %659 = vset.pattern.permute.xlu0 0
    %660 = vperm.xlu0 %659, %v262
    %v661 = vpop.permute.xlu0 %660
    %664 = vset.pattern.permute.xlu0 0
    %665 = vperm.xlu0 %664, %v263
    %v666 = vpop.permute.xlu0 %665
    %669 = vset.pattern.permute.xlu0 0
    %670 = vperm.xlu0 %669, %v264
    %v671 = vpop.permute.xlu0 %670
    %674 = vset.pattern.permute.xlu0 0
    %675 = vperm.xlu0 %674, %v265
    %v676 = vpop.permute.xlu0 %675
    %679 = vset.pattern.permute.xlu0 0
    %680 = vperm.xlu0 %679, %v266
    %v681 = vpop.permute.xlu0 %680
    %684 = vset.pattern.permute.xlu0 0
    %685 = vperm.xlu0 %684, %v267
    %v686 = vpop.permute.xlu0 %685
    %689 = vset.pattern.permute.xlu0 0
    %690 = vperm.xlu0 %689, %v268
    %v691 = vpop.permute.xlu0 %690
    %694 = vset.pattern.permute.xlu0 0
    %695 = vperm.xlu0 %694, %v269
    %v696 = vpop.permute.xlu0 %695
    %699 = vset.pattern.permute.xlu0 0
    %700 = vperm.xlu0 %699, %v270
    %v701 = vpop.permute.xlu0 %700
    %704 = vset.pattern.permute.xlu0 0
    %705 = vperm.xlu0 %704, %v271
    %v706 = vpop.permute.xlu0 %705
    %709 = vset.pattern.permute.xlu0 0
    %710 = vperm.xlu0 %709, %v272
    %v711 = vpop.permute.xlu0 %710
    %714 = vset.pattern.permute.xlu0 0
    %715 = vperm.xlu0 %714, %v273
    %v716 = vpop.permute.xlu0 %715
    %719 = vset.pattern.permute.xlu0 0
    %720 = vperm.xlu0 %719, %v274
    %v721 = vpop.permute.xlu0 %720
    %724 = vset.pattern.permute.xlu0 0
    %725 = vperm.xlu0 %724, %v275
    %v726 = vpop.permute.xlu0 %725
    %729 = vset.pattern.permute.xlu0 0
    %730 = vperm.xlu0 %729, %v276
    %v731 = vpop.permute.xlu0 %730
    %734 = vset.pattern.permute.xlu0 0
    %735 = vperm.xlu0 %734, %v277
    %v736 = vpop.permute.xlu0 %735
    %739 = vset.pattern.permute.xlu0 0
    %740 = vperm.xlu0 %739, %v278
    %v741 = vpop.permute.xlu0 %740
    %744 = vset.pattern.permute.xlu0 0
    %745 = vperm.xlu0 %744, %v279
    %v746 = vpop.permute.xlu0 %745
    %749 = vset.pattern.permute.xlu0 0
    %750 = vperm.xlu0 %749, %v280
    %v751 = vpop.permute.xlu0 %750
    %754 = vset.pattern.permute.xlu0 0
    %755 = vperm.xlu0 %754, %v281
    %v756 = vpop.permute.xlu0 %755
    %759 = vset.pattern.permute.xlu0 0
    %760 = vperm.xlu0 %759, %v282
    %v761 = vpop.permute.xlu0 %760
    %764 = vset.pattern.permute.xlu0 0
    %765 = vperm.xlu0 %764, %v283
    %v766 = vpop.permute.xlu0 %765
    %769 = vset.pattern.permute.xlu0 0
    %770 = vperm.xlu0 %769, %v284
    %v771 = vpop.permute.xlu0 %770
    %774 = vset.pattern.permute.xlu0 0
    %775 = vperm.xlu0 %774, %v285
    %v776 = vpop.permute.xlu0 %775
    %779 = vset.pattern.permute.xlu0 0
    %780 = vperm.xlu0 %779, %v286
    %v781 = vpop.permute.xlu0 %780
    %784 = vset.pattern.permute.xlu0 0
    %785 = vperm.xlu0 %784, %v287
    %v786 = vpop.permute.xlu0 %785
    %789 = vset.pattern.permute.xlu0 0
    %790 = vperm.xlu0 %789, %v288
    %v791 = vpop.permute.xlu0 %790
    %794 = vset.pattern.permute.xlu0 0
    %795 = vperm.xlu0 %794, %v289
    %v796 = vpop.permute.xlu0 %795
    %799 = vset.pattern.permute.xlu0 0
    %800 = vperm.xlu0 %799, %v290
    %v801 = vpop.permute.xlu0 %800
    %804 = vset.pattern.permute.xlu0 0
    %805 = vperm.xlu0 %804, %v291
    %v806 = vpop.permute.xlu0 %805
    %809 = vset.pattern.permute.xlu0 0
    %810 = vperm.xlu0 %809, %v292
    %v811 = vpop.permute.xlu0 %810
    %814 = vset.pattern.permute.xlu0 0
    %815 = vperm.xlu0 %814, %v293
    %v816 = vpop.permute.xlu0 %815
    %819 = vset.pattern.permute.xlu0 0
    %820 = vperm.xlu0 %819, %v294
    %v821 = vpop.permute.xlu0 %820
    %824 = vset.pattern.permute.xlu0 0
    %825 = vperm.xlu0 %824, %v295
    %v826 = vpop.permute.xlu0 %825
    %829 = vset.pattern.permute.xlu0 0
    %830 = vperm.xlu0 %829, %v296
    %v831 = vpop.permute.xlu0 %830
    %834 = vset.pattern.permute.xlu0 0
    %835 = vperm.xlu0 %834, %v297
    %v836 = vpop.permute.xlu0 %835
    %839 = vset.pattern.permute.xlu0 0
    %840 = vperm.xlu0 %839, %v298
    %v841 = vpop.permute.xlu0 %840
    %844 = vset.pattern.permute.xlu0 0
    %845 = vperm.xlu0 %844, %v299
    %v846 = vpop.permute.xlu0 %845
    %849 = vset.pattern.permute.xlu0 0
    %850 = vperm.xlu0 %849, %v300
    %v851 = vpop.permute.xlu0 %850
    %854 = vset.pattern.permute.xlu0 0
    %855 = vperm.xlu0 %854, %v301
    %v856 = vpop.permute.xlu0 %855
    %859 = vset.pattern.permute.xlu0 0
    %860 = vperm.xlu0 %859, %v302
    %v861 = vpop.permute.xlu0 %860
    %864 = vset.pattern.permute.xlu0 0
    %865 = vperm.xlu0 %864, %v303
    %v866 = vpop.permute.xlu0 %865
    %869 = vset.pattern.permute.xlu0 0
    %870 = vperm.xlu0 %869, %v304
    %v871 = vpop.permute.xlu0 %870
    %874 = vset.pattern.permute.xlu0 0
    %875 = vperm.xlu0 %874, %v305
    %v876 = vpop.permute.xlu0 %875
    %879 = vset.pattern.permute.xlu0 0
    %880 = vperm.xlu0 %879, %v306
    %v881 = vpop.permute.xlu0 %880
    %884 = vset.pattern.permute.xlu0 0
    %885 = vperm.xlu0 %884, %v307
    %v886 = vpop.permute.xlu0 %885
    %889 = vset.pattern.permute.xlu0 0
    %890 = vperm.xlu0 %889, %v308
    %v891 = vpop.permute.xlu0 %890
    %894 = vset.pattern.permute.xlu0 0
    %895 = vperm.xlu0 %894, %v309
    %v896 = vpop.permute.xlu0 %895
    %899 = vset.pattern.permute.xlu0 0
    %900 = vperm.xlu0 %899, %v310
    %v901 = vpop.permute.xlu0 %900
    %904 = vset.pattern.permute.xlu0 0
    %905 = vperm.xlu0 %904, %v311
    %v906 = vpop.permute.xlu0 %905
    %909 = vset.pattern.permute.xlu0 0
    %910 = vperm.xlu0 %909, %v312
    %v911 = vpop.permute.xlu0 %910
    %914 = vset.pattern.permute.xlu0 0
    %915 = vperm.xlu0 %914, %v313
    %v916 = vpop.permute.xlu0 %915
    %919 = vset.pattern.permute.xlu0 0
    %920 = vperm.xlu0 %919, %v314
    %v921 = vpop.permute.xlu0 %920
    %924 = vset.pattern.permute.xlu0 0
    %925 = vperm.xlu0 %924, %v315
    %v926 = vpop.permute.xlu0 %925
    %929 = vset.pattern.permute.xlu0 0
    %930 = vperm.xlu0 %929, %v316
    %v931 = vpop.permute.xlu0 %930
    %934 = vset.pattern.permute.xlu0 0
    %935 = vperm.xlu0 %934, %v317
    %v936 = vpop.permute.xlu0 %935
    %939 = vset.pattern.permute.xlu0 0
    %940 = vperm.xlu0 %939, %v318
    %v941 = vpop.permute.xlu0 %940
    %944 = vset.pattern.permute.xlu0 0
    %945 = vperm.xlu0 %944, %v319
    %v946 = vpop.permute.xlu0 %945
    %949 = vset.pattern.permute.xlu0 0
    %950 = vperm.xlu0 %949, %v320
    %v951 = vpop.permute.xlu0 %950
    %954 = vset.pattern.permute.xlu0 0
    %955 = vperm.xlu0 %954, %v321
    %v956 = vpop.permute.xlu0 %955
    %959 = vset.pattern.permute.xlu0 0
    %960 = vperm.xlu0 %959, %v322
    %v961 = vpop.permute.xlu0 %960
    %964 = vset.pattern.permute.xlu0 0
    %965 = vperm.xlu0 %964, %v323
    %v966 = vpop.permute.xlu0 %965
    %969 = vset.pattern.permute.xlu0 0
    %970 = vperm.xlu0 %969, %v324
    %v971 = vpop.permute.xlu0 %970
    %974 = vset.pattern.permute.xlu0 0
    %975 = vperm.xlu0 %974, %v325
    %v976 = vpop.permute.xlu0 %975
    %979 = vset.pattern.permute.xlu0 0
    %980 = vperm.xlu0 %979, %v326
    %v981 = vpop.permute.xlu0 %980
    %984 = vset.pattern.permute.xlu0 0
    %985 = vperm.xlu0 %984, %v327
    %v986 = vpop.permute.xlu0 %985
    %989 = vset.pattern.permute.xlu0 0
    %990 = vperm.xlu0 %989, %v328
    %v991 = vpop.permute.xlu0 %990
    %994 = vset.pattern.permute.xlu0 0
    %995 = vperm.xlu0 %994, %v329
    %v996 = vpop.permute.xlu0 %995
    %999 = vset.pattern.permute.xlu0 0
    %1000 = vperm.xlu0 %999, %v330
    %v1001 = vpop.permute.xlu0 %1000
    %1004 = vset.pattern.permute.xlu0 0
    %1005 = vperm.xlu0 %1004, %v331
    %v1006 = vpop.permute.xlu0 %1005
    %1009 = vset.pattern.permute.xlu0 0
    %1010 = vperm.xlu0 %1009, %v332
    %v1011 = vpop.permute.xlu0 %1010
    %1014 = vset.pattern.permute.xlu0 0
    %1015 = vperm.xlu0 %1014, %v333
    %v1016 = vpop.permute.xlu0 %1015
    %1019 = vset.pattern.permute.xlu0 0
    %1020 = vperm.xlu0 %1019, %v334
    %v1021 = vpop.permute.xlu0 %1020
    %1024 = vset.pattern.permute.xlu0 0
    %1025 = vperm.xlu0 %1024, %v335
    %v1026 = vpop.permute.xlu0 %1025
    %1029 = vset.pattern.permute.xlu0 0
    %1030 = vperm.xlu0 %1029, %v336
    %v1031 = vpop.permute.xlu0 %1030
    %1034 = vset.pattern.permute.xlu0 0
    %1035 = vperm.xlu0 %1034, %v337
    %v1036 = vpop.permute.xlu0 %1035
    %1039 = vset.pattern.permute.xlu0 0
    %1040 = vperm.xlu0 %1039, %v338
    %v1041 = vpop.permute.xlu0 %1040
    %1044 = vset.pattern.permute.xlu0 0
    %1045 = vperm.xlu0 %1044, %v339
    %v1046 = vpop.permute.xlu0 %1045
    %1049 = vset.pattern.permute.xlu0 0
    %1050 = vperm.xlu0 %1049, %v340
    %v1051 = vpop.permute.xlu0 %1050
    %1054 = vset.pattern.permute.xlu0 0
    %1055 = vperm.xlu0 %1054, %v341
    %v1056 = vpop.permute.xlu0 %1055
    %1059 = vset.pattern.permute.xlu0 0
    %1060 = vperm.xlu0 %1059, %v342
    %v1061 = vpop.permute.xlu0 %1060
    %v1063 = vmul.f32 %v55, %v346
    %v1064 = vmul.f32 %v56, %v351
    %v1065 = vmul.f32 %v57, %v356
    %v1066 = vmul.f32 %v58, %v361
    %v1067 = vmul.f32 %v59, %v366
    %v1068 = vmul.f32 %v60, %v371
    %v1069 = vmul.f32 %v61, %v376
    %v1070 = vmul.f32 %v62, %v381
    %v1071 = vmul.f32 %v63, %v386
    %v1072 = vmul.f32 %v64, %v391
    %v1073 = vmul.f32 %v65, %v396
    %v1074 = vmul.f32 %v66, %v401
    %v1075 = vmul.f32 %v67, %v406
    %v1076 = vmul.f32 %v68, %v411
    %v1077 = vmul.f32 %v69, %v416
    %v1078 = vmul.f32 %v70, %v421
    %v1079 = vmul.f32 %v71, %v426
    %v1080 = vmul.f32 %v72, %v431
    %v1081 = vmul.f32 %v73, %v436
    %v1082 = vmul.f32 %v74, %v441
    %v1083 = vmul.f32 %v75, %v446
    %v1084 = vmul.f32 %v76, %v451
    %v1085 = vmul.f32 %v77, %v456
    %v1086 = vmul.f32 %v78, %v461
    %v1087 = vmul.f32 %v79, %v466
    %v1088 = vmul.f32 %v80, %v471
    %v1089 = vmul.f32 %v81, %v476
    %v1090 = vmul.f32 %v82, %v481
    %v1091 = vmul.f32 %v83, %v486
    %v1092 = vmul.f32 %v84, %v491
    %v1093 = vmul.f32 %v85, %v496
    %v1094 = vmul.f32 %v86, %v501
    %v1095 = vmul.f32 %v87, %v506
    %v1096 = vmul.f32 %v88, %v511
    %v1097 = vmul.f32 %v89, %v516
    %v1098 = vmul.f32 %v90, %v521
    %v1099 = vmul.f32 %v91, %v526
    %v1100 = vmul.f32 %v92, %v531
    %v1101 = vmul.f32 %v93, %v536
    %v1102 = vmul.f32 %v94, %v541
    %v1103 = vmul.f32 %v95, %v546
    %v1104 = vmul.f32 %v96, %v551
    %v1105 = vmul.f32 %v97, %v556
    %v1106 = vmul.f32 %v98, %v561
    %v1107 = vmul.f32 %v99, %v566
    %v1108 = vmul.f32 %v100, %v571
    %v1109 = vmul.f32 %v101, %v576
    %v1110 = vmul.f32 %v102, %v581
    %v1111 = vmul.f32 %v103, %v586
    %v1112 = vmul.f32 %v104, %v591
    %v1113 = vmul.f32 %v105, %v596
    %v1114 = vmul.f32 %v106, %v601
    %v1115 = vmul.f32 %v107, %v606
    %v1116 = vmul.f32 %v108, %v611
    %v1117 = vmul.f32 %v109, %v616
    %v1118 = vmul.f32 %v110, %v621
    %v1119 = vmul.f32 %v111, %v626
    %v1120 = vmul.f32 %v112, %v631
    %v1121 = vmul.f32 %v113, %v636
    %v1122 = vmul.f32 %v114, %v641
    %v1123 = vmul.f32 %v115, %v646
    %v1124 = vmul.f32 %v116, %v651
    %v1125 = vmul.f32 %v117, %v656
    %v1126 = vmul.f32 %v118, %v661
    %v1127 = vmul.f32 %v119, %v666
    %v1128 = vmul.f32 %v120, %v671
    %v1129 = vmul.f32 %v121, %v676
    %v1130 = vmul.f32 %v122, %v681
    %v1131 = vmul.f32 %v123, %v686
    %v1132 = vmul.f32 %v124, %v691
    %v1133 = vmul.f32 %v125, %v696
    %v1134 = vmul.f32 %v126, %v701
    %v1135 = vmul.f32 %v127, %v706
    %v1136 = vmul.f32 %v128, %v711
    %v1137 = vmul.f32 %v129, %v716
    %v1138 = vmul.f32 %v130, %v721
    %v1139 = vmul.f32 %v131, %v726
    %v1140 = vmul.f32 %v132, %v731
    %v1141 = vmul.f32 %v133, %v736
    %v1142 = vmul.f32 %v134, %v741
    %v1143 = vmul.f32 %v135, %v746
    %v1144 = vmul.f32 %v136, %v751
    %v1145 = vmul.f32 %v137, %v756
    %v1146 = vmul.f32 %v138, %v761
    %v1147 = vmul.f32 %v139, %v766
    %v1148 = vmul.f32 %v140, %v771
    %v1149 = vmul.f32 %v141, %v776
    %v1150 = vmul.f32 %v142, %v781
    %v1151 = vmul.f32 %v143, %v786
    %v1152 = vmul.f32 %v144, %v791
    %v1153 = vmul.f32 %v145, %v796
    %v1154 = vmul.f32 %v146, %v801
    %v1155 = vmul.f32 %v147, %v806
    %v1156 = vmul.f32 %v148, %v811
    %v1157 = vmul.f32 %v149, %v816
    %v1158 = vmul.f32 %v150, %v821
    %v1159 = vmul.f32 %v151, %v826
    %v1160 = vmul.f32 %v152, %v831
    %v1161 = vmul.f32 %v153, %v836
    %v1162 = vmul.f32 %v154, %v841
    %v1163 = vmul.f32 %v155, %v846
    %v1164 = vmul.f32 %v156, %v851
    %v1165 = vmul.f32 %v157, %v856
    %v1166 = vmul.f32 %v158, %v861
    %v1167 = vmul.f32 %v159, %v866
    %v1168 = vmul.f32 %v160, %v871
    %v1169 = vmul.f32 %v161, %v876
    %v1170 = vmul.f32 %v162, %v881
    %v1171 = vmul.f32 %v163, %v886
    %v1172 = vmul.f32 %v164, %v891
    %v1173 = vmul.f32 %v165, %v896
    %v1174 = vmul.f32 %v166, %v901
    %v1175 = vmul.f32 %v167, %v906
    %v1176 = vmul.f32 %v168, %v911
    %v1177 = vmul.f32 %v169, %v916
    %v1178 = vmul.f32 %v170, %v921
    %v1179 = vmul.f32 %v171, %v926
    %v1180 = vmul.f32 %v172, %v931
    %v1181 = vmul.f32 %v173, %v936
    %v1182 = vmul.f32 %v174, %v941
    %v1183 = vmul.f32 %v175, %v946
    %v1184 = vmul.f32 %v176, %v951
    %v1185 = vmul.f32 %v177, %v956
    %v1186 = vmul.f32 %v178, %v961
    %v1187 = vmul.f32 %v179, %v966
    %v1188 = vmul.f32 %v180, %v971
    %v1189 = vmul.f32 %v181, %v976
    %v1190 = vmul.f32 %v182, %v981
    %v1191 = vmul.f32 %v183, %v986
    %v1192 = vmul.f32 %v184, %v991
    %v1193 = vmul.f32 %v185, %v996
    %v1194 = vmul.f32 %v186, %v1001
    %v1195 = vmul.f32 %v187, %v1006
    %v1196 = vmul.f32 %v188, %v1011
    %v1197 = vmul.f32 %v189, %v1016
    %v1198 = vmul.f32 %v190, %v1021
    %v1199 = vmul.f32 %v191, %v1026
    %v1200 = vmul.f32 %v192, %v1031
    %v1201 = vmul.f32 %v193, %v1036
    %v1202 = vmul.f32 %v194, %v1041
    %v1203 = vmul.f32 %v195, %v1046
    %v1204 = vmul.f32 %v196, %v1051
    %v1205 = vmul.f32 %v197, %v1056
    %v1206 = vmul.f32 %v198, %v1061
    %v1207 = vld [vmem:[%s2] sm:$0xff]
    %v1208 = vld [vmem:[%s2 + $0x8] sm:$0xff]
    %v1209 = vld [vmem:[%s2 + $0x10] sm:$0xff]
    %v1210 = vld [vmem:[%s2 + $0x18] sm:$0xff]
    %v1211 = vld [vmem:[%s2 + $0x20] sm:$0xff]
    %v1212 = vld [vmem:[%s2 + $0x28] sm:$0xff]
    %v1213 = vld [vmem:[%s2 + $0x30] sm:$0xff]
    %v1214 = vld [vmem:[%s2 + $0x38] sm:$0xff]
    %v1215 = vld [vmem:[%s2 + $0x40] sm:$0xff]
    %v1216 = vld [vmem:[%s2 + $0x48] sm:$0xff]
    %v1217 = vld [vmem:[%s2 + $0x50] sm:$0xff]
    %v1218 = vld [vmem:[%s2 + $0x58] sm:$0xff]
    %v1219 = vld [vmem:[%s2 + $0x60] sm:$0xff]
    %v1220 = vld [vmem:[%s2 + $0x68] sm:$0xff]
    %v1221 = vld [vmem:[%s2 + $0x70] sm:$0xff]
    %v1222 = vld [vmem:[%s2 + $0x78] sm:$0xff]
    %v1223 = vld [vmem:[%s2 + $0x80] sm:$0xff]
    %v1224 = vld [vmem:[%s2 + $0x88] sm:$0xff]
    %v1225 = vld [vmem:[%s2 + $0x90] sm:$0xff]
    %v1226 = vld [vmem:[%s2 + $0x98] sm:$0xff]
    %v1227 = vld [vmem:[%s2 + $0xa0] sm:$0xff]
    %v1228 = vld [vmem:[%s2 + $0xa8] sm:$0xff]
    %v1229 = vld [vmem:[%s2 + $0xb0] sm:$0xff]
    %v1230 = vld [vmem:[%s2 + $0xb8] sm:$0xff]
    %v1231 = vld [vmem:[%s2 + $0xc0] sm:$0xff]
    %v1232 = vld [vmem:[%s2 + $0xc8] sm:$0xff]
    %v1233 = vld [vmem:[%s2 + $0xd0] sm:$0xff]
    %v1234 = vld [vmem:[%s2 + $0xd8] sm:$0xff]
    %v1235 = vld [vmem:[%s2 + $0xe0] sm:$0xff]
    %v1236 = vld [vmem:[%s2 + $0xe8] sm:$0xff]
    %v1237 = vld [vmem:[%s2 + $0xf0] sm:$0xff]
    %v1238 = vld [vmem:[%s2 + $0xf8] sm:$0xff]
    %v1239 = vld [vmem:[%s2 + $0x100] sm:$0xff]
    %v1240 = vld [vmem:[%s2 + $0x108] sm:$0xff]
    %v1241 = vld [vmem:[%s2 + $0x110] sm:$0xff]
    %v1242 = vld [vmem:[%s2 + $0x118] sm:$0xff]
    %v1243 = vld [vmem:[%s2 + $0x120] sm:$0xff]
    %v1244 = vld [vmem:[%s2 + $0x128] sm:$0xff]
    %v1245 = vld [vmem:[%s2 + $0x130] sm:$0xff]
    %v1246 = vld [vmem:[%s2 + $0x138] sm:$0xff]
    %v1247 = vld [vmem:[%s2 + $0x140] sm:$0xff]
    %v1248 = vld [vmem:[%s2 + $0x148] sm:$0xff]
    %v1249 = vld [vmem:[%s2 + $0x150] sm:$0xff]
    %v1250 = vld [vmem:[%s2 + $0x158] sm:$0xff]
    %v1251 = vld [vmem:[%s2 + $0x160] sm:$0xff]
    %v1252 = vld [vmem:[%s2 + $0x168] sm:$0xff]
    %v1253 = vld [vmem:[%s2 + $0x170] sm:$0xff]
    %v1254 = vld [vmem:[%s2 + $0x178] sm:$0xff]
    %v1255 = vld [vmem:[%s2 + $0x180] sm:$0xff]
    %v1256 = vld [vmem:[%s2 + $0x188] sm:$0xff]
    %v1257 = vld [vmem:[%s2 + $0x190] sm:$0xff]
    %v1258 = vld [vmem:[%s2 + $0x198] sm:$0xff]
    %v1259 = vld [vmem:[%s2 + $0x1a0] sm:$0xff]
    %v1260 = vld [vmem:[%s2 + $0x1a8] sm:$0xff]
    %v1261 = vld [vmem:[%s2 + $0x1b0] sm:$0xff]
    %v1262 = vld [vmem:[%s2 + $0x1b8] sm:$0xff]
    %v1263 = vld [vmem:[%s2 + $0x1c0] sm:$0xff]
    %v1264 = vld [vmem:[%s2 + $0x1c8] sm:$0xff]
    %v1265 = vld [vmem:[%s2 + $0x1d0] sm:$0xff]
    %v1266 = vld [vmem:[%s2 + $0x1d8] sm:$0xff]
    %v1267 = vld [vmem:[%s2 + $0x1e0] sm:$0xff]
    %v1268 = vld [vmem:[%s2 + $0x1e8] sm:$0xff]
    %v1269 = vld [vmem:[%s2 + $0x1f0] sm:$0xff]
    %v1270 = vld [vmem:[%s2 + $0x1f8] sm:$0xff]
    %v1271 = vld [vmem:[%s2 + $0x200] sm:$0xff]
    %v1272 = vld [vmem:[%s2 + $0x208] sm:$0xff]
    %v1273 = vld [vmem:[%s2 + $0x210] sm:$0xff]
    %v1274 = vld [vmem:[%s2 + $0x218] sm:$0xff]
    %v1275 = vld [vmem:[%s2 + $0x220] sm:$0xff]
    %v1276 = vld [vmem:[%s2 + $0x228] sm:$0xff]
    %v1277 = vld [vmem:[%s2 + $0x230] sm:$0xff]
    %v1278 = vld [vmem:[%s2 + $0x238] sm:$0xff]
    %v1279 = vld [vmem:[%s2 + $0x240] sm:$0xff]
    %v1280 = vld [vmem:[%s2 + $0x248] sm:$0xff]
    %v1281 = vld [vmem:[%s2 + $0x250] sm:$0xff]
    %v1282 = vld [vmem:[%s2 + $0x258] sm:$0xff]
    %v1283 = vld [vmem:[%s2 + $0x260] sm:$0xff]
    %v1284 = vld [vmem:[%s2 + $0x268] sm:$0xff]
    %v1285 = vld [vmem:[%s2 + $0x270] sm:$0xff]
    %v1286 = vld [vmem:[%s2 + $0x278] sm:$0xff]
    %v1287 = vld [vmem:[%s2 + $0x280] sm:$0xff]
    %v1288 = vld [vmem:[%s2 + $0x288] sm:$0xff]
    %v1289 = vld [vmem:[%s2 + $0x290] sm:$0xff]
    %v1290 = vld [vmem:[%s2 + $0x298] sm:$0xff]
    %v1291 = vld [vmem:[%s2 + $0x2a0] sm:$0xff]
    %v1292 = vld [vmem:[%s2 + $0x2a8] sm:$0xff]
    %v1293 = vld [vmem:[%s2 + $0x2b0] sm:$0xff]
    %v1294 = vld [vmem:[%s2 + $0x2b8] sm:$0xff]
    %v1295 = vld [vmem:[%s2 + $0x2c0] sm:$0xff]
    %v1296 = vld [vmem:[%s2 + $0x2c8] sm:$0xff]
    %v1297 = vld [vmem:[%s2 + $0x2d0] sm:$0xff]
    %v1298 = vld [vmem:[%s2 + $0x2d8] sm:$0xff]
    %v1299 = vld [vmem:[%s2 + $0x2e0] sm:$0xff]
    %v1300 = vld [vmem:[%s2 + $0x2e8] sm:$0xff]
    %v1301 = vld [vmem:[%s2 + $0x2f0] sm:$0xff]
    %v1302 = vld [vmem:[%s2 + $0x2f8] sm:$0xff]
    %v1303 = vld [vmem:[%s2 + $0x300] sm:$0xff]
    %v1304 = vld [vmem:[%s2 + $0x308] sm:$0xff]
    %v1305 = vld [vmem:[%s2 + $0x310] sm:$0xff]
    %v1306 = vld [vmem:[%s2 + $0x318] sm:$0xff]
    %v1307 = vld [vmem:[%s2 + $0x320] sm:$0xff]
    %v1308 = vld [vmem:[%s2 + $0x328] sm:$0xff]
    %v1309 = vld [vmem:[%s2 + $0x330] sm:$0xff]
    %v1310 = vld [vmem:[%s2 + $0x338] sm:$0xff]
    %v1311 = vld [vmem:[%s2 + $0x340] sm:$0xff]
    %v1312 = vld [vmem:[%s2 + $0x348] sm:$0xff]
    %v1313 = vld [vmem:[%s2 + $0x350] sm:$0xff]
    %v1314 = vld [vmem:[%s2 + $0x358] sm:$0xff]
    %v1315 = vld [vmem:[%s2 + $0x360] sm:$0xff]
    %v1316 = vld [vmem:[%s2 + $0x368] sm:$0xff]
    %v1317 = vld [vmem:[%s2 + $0x370] sm:$0xff]
    %v1318 = vld [vmem:[%s2 + $0x378] sm:$0xff]
    %v1319 = vld [vmem:[%s2 + $0x380] sm:$0xff]
    %v1320 = vld [vmem:[%s2 + $0x388] sm:$0xff]
    %v1321 = vld [vmem:[%s2 + $0x390] sm:$0xff]
    %v1322 = vld [vmem:[%s2 + $0x398] sm:$0xff]
    %v1323 = vld [vmem:[%s2 + $0x3a0] sm:$0xff]
    %v1324 = vld [vmem:[%s2 + $0x3a8] sm:$0xff]
    %v1325 = vld [vmem:[%s2 + $0x3b0] sm:$0xff]
    %v1326 = vld [vmem:[%s2 + $0x3b8] sm:$0xff]
    %v1327 = vld [vmem:[%s2 + $0x3c0] sm:$0xff]
    %v1328 = vld [vmem:[%s2 + $0x3c8] sm:$0xff]
    %v1329 = vld [vmem:[%s2 + $0x3d0] sm:$0xff]
    %v1330 = vld [vmem:[%s2 + $0x3d8] sm:$0xff]
    %v1331 = vld [vmem:[%s2 + $0x3e0] sm:$0xff]
    %v1332 = vld [vmem:[%s2 + $0x3e8] sm:$0xff]
    %v1333 = vld [vmem:[%s2 + $0x3f0] sm:$0xff]
    %v1334 = vld [vmem:[%s2 + $0x3f8] sm:$0xff]
    %v1335 = vld [vmem:[%s2 + $0x400] sm:$0xff]
    %v1336 = vld [vmem:[%s2 + $0x408] sm:$0xff]
    %v1337 = vld [vmem:[%s2 + $0x410] sm:$0xff]
    %v1338 = vld [vmem:[%s2 + $0x418] sm:$0xff]
    %v1339 = vld [vmem:[%s2 + $0x420] sm:$0xff]
    %v1340 = vld [vmem:[%s2 + $0x428] sm:$0xff]
    %v1341 = vld [vmem:[%s2 + $0x430] sm:$0xff]
    %v1342 = vld [vmem:[%s2 + $0x438] sm:$0xff]
    %v1343 = vld [vmem:[%s2 + $0x440] sm:$0xff]
    %v1344 = vld [vmem:[%s2 + $0x448] sm:$0xff]
    %v1345 = vld [vmem:[%s2 + $0x450] sm:$0xff]
    %v1346 = vld [vmem:[%s2 + $0x458] sm:$0xff]
    %v1347 = vld [vmem:[%s2 + $0x460] sm:$0xff]
    %v1348 = vld [vmem:[%s2 + $0x468] sm:$0xff]
    %v1349 = vld [vmem:[%s2 + $0x470] sm:$0xff]
    %v1350 = vld [vmem:[%s2 + $0x478] sm:$0xff]
    %1352 = vset.pattern.permute.xlu0 0
    %1353 = vperm.xlu0 %1352, %v1207
    %v1354 = vpop.permute.xlu0 %1353
    %1357 = vset.pattern.permute.xlu0 0
    %1358 = vperm.xlu0 %1357, %v1208
    %v1359 = vpop.permute.xlu0 %1358
    %1362 = vset.pattern.permute.xlu0 0
    %1363 = vperm.xlu0 %1362, %v1209
    %v1364 = vpop.permute.xlu0 %1363
    %1367 = vset.pattern.permute.xlu0 0
    %1368 = vperm.xlu0 %1367, %v1210
    %v1369 = vpop.permute.xlu0 %1368
    %1372 = vset.pattern.permute.xlu0 0
    %1373 = vperm.xlu0 %1372, %v1211
    %v1374 = vpop.permute.xlu0 %1373
    %1377 = vset.pattern.permute.xlu0 0
    %1378 = vperm.xlu0 %1377, %v1212
    %v1379 = vpop.permute.xlu0 %1378
    %1382 = vset.pattern.permute.xlu0 0
    %1383 = vperm.xlu0 %1382, %v1213
    %v1384 = vpop.permute.xlu0 %1383
    %1387 = vset.pattern.permute.xlu0 0
    %1388 = vperm.xlu0 %1387, %v1214
    %v1389 = vpop.permute.xlu0 %1388
    %1392 = vset.pattern.permute.xlu0 0
    %1393 = vperm.xlu0 %1392, %v1215
    %v1394 = vpop.permute.xlu0 %1393
    %1397 = vset.pattern.permute.xlu0 0
    %1398 = vperm.xlu0 %1397, %v1216
    %v1399 = vpop.permute.xlu0 %1398
    %1402 = vset.pattern.permute.xlu0 0
    %1403 = vperm.xlu0 %1402, %v1217
    %v1404 = vpop.permute.xlu0 %1403
    %1407 = vset.pattern.permute.xlu0 0
    %1408 = vperm.xlu0 %1407, %v1218
    %v1409 = vpop.permute.xlu0 %1408
    %1412 = vset.pattern.permute.xlu0 0
    %1413 = vperm.xlu0 %1412, %v1219
    %v1414 = vpop.permute.xlu0 %1413
    %1417 = vset.pattern.permute.xlu0 0
    %1418 = vperm.xlu0 %1417, %v1220
    %v1419 = vpop.permute.xlu0 %1418
    %1422 = vset.pattern.permute.xlu0 0
    %1423 = vperm.xlu0 %1422, %v1221
    %v1424 = vpop.permute.xlu0 %1423
    %1427 = vset.pattern.permute.xlu0 0
    %1428 = vperm.xlu0 %1427, %v1222
    %v1429 = vpop.permute.xlu0 %1428
    %1432 = vset.pattern.permute.xlu0 0
    %1433 = vperm.xlu0 %1432, %v1223
    %v1434 = vpop.permute.xlu0 %1433
    %1437 = vset.pattern.permute.xlu0 0
    %1438 = vperm.xlu0 %1437, %v1224
    %v1439 = vpop.permute.xlu0 %1438
    %1442 = vset.pattern.permute.xlu0 0
    %1443 = vperm.xlu0 %1442, %v1225
    %v1444 = vpop.permute.xlu0 %1443
    %1447 = vset.pattern.permute.xlu0 0
    %1448 = vperm.xlu0 %1447, %v1226
    %v1449 = vpop.permute.xlu0 %1448
    %1452 = vset.pattern.permute.xlu0 0
    %1453 = vperm.xlu0 %1452, %v1227
    %v1454 = vpop.permute.xlu0 %1453
    %1457 = vset.pattern.permute.xlu0 0
    %1458 = vperm.xlu0 %1457, %v1228
    %v1459 = vpop.permute.xlu0 %1458
    %1462 = vset.pattern.permute.xlu0 0
    %1463 = vperm.xlu0 %1462, %v1229
    %v1464 = vpop.permute.xlu0 %1463
    %1467 = vset.pattern.permute.xlu0 0
    %1468 = vperm.xlu0 %1467, %v1230
    %v1469 = vpop.permute.xlu0 %1468
    %1472 = vset.pattern.permute.xlu0 0
    %1473 = vperm.xlu0 %1472, %v1231
    %v1474 = vpop.permute.xlu0 %1473
    %1477 = vset.pattern.permute.xlu0 0
    %1478 = vperm.xlu0 %1477, %v1232
    %v1479 = vpop.permute.xlu0 %1478
    %1482 = vset.pattern.permute.xlu0 0
    %1483 = vperm.xlu0 %1482, %v1233
    %v1484 = vpop.permute.xlu0 %1483
    %1487 = vset.pattern.permute.xlu0 0
    %1488 = vperm.xlu0 %1487, %v1234
    %v1489 = vpop.permute.xlu0 %1488
    %1492 = vset.pattern.permute.xlu0 0
    %1493 = vperm.xlu0 %1492, %v1235
    %v1494 = vpop.permute.xlu0 %1493
    %1497 = vset.pattern.permute.xlu0 0
    %1498 = vperm.xlu0 %1497, %v1236
    %v1499 = vpop.permute.xlu0 %1498
    %1502 = vset.pattern.permute.xlu0 0
    %1503 = vperm.xlu0 %1502, %v1237
    %v1504 = vpop.permute.xlu0 %1503
    %1507 = vset.pattern.permute.xlu0 0
    %1508 = vperm.xlu0 %1507, %v1238
    %v1509 = vpop.permute.xlu0 %1508
    %1512 = vset.pattern.permute.xlu0 0
    %1513 = vperm.xlu0 %1512, %v1239
    %v1514 = vpop.permute.xlu0 %1513
    %1517 = vset.pattern.permute.xlu0 0
    %1518 = vperm.xlu0 %1517, %v1240
    %v1519 = vpop.permute.xlu0 %1518
    %1522 = vset.pattern.permute.xlu0 0
    %1523 = vperm.xlu0 %1522, %v1241
    %v1524 = vpop.permute.xlu0 %1523
    %1527 = vset.pattern.permute.xlu0 0
    %1528 = vperm.xlu0 %1527, %v1242
    %v1529 = vpop.permute.xlu0 %1528
    %1532 = vset.pattern.permute.xlu0 0
    %1533 = vperm.xlu0 %1532, %v1243
    %v1534 = vpop.permute.xlu0 %1533
    %1537 = vset.pattern.permute.xlu0 0
    %1538 = vperm.xlu0 %1537, %v1244
    %v1539 = vpop.permute.xlu0 %1538
    %1542 = vset.pattern.permute.xlu0 0
    %1543 = vperm.xlu0 %1542, %v1245
    %v1544 = vpop.permute.xlu0 %1543
    %1547 = vset.pattern.permute.xlu0 0
    %1548 = vperm.xlu0 %1547, %v1246
    %v1549 = vpop.permute.xlu0 %1548
    %1552 = vset.pattern.permute.xlu0 0
    %1553 = vperm.xlu0 %1552, %v1247
    %v1554 = vpop.permute.xlu0 %1553
    %1557 = vset.pattern.permute.xlu0 0
    %1558 = vperm.xlu0 %1557, %v1248
    %v1559 = vpop.permute.xlu0 %1558
    %1562 = vset.pattern.permute.xlu0 0
    %1563 = vperm.xlu0 %1562, %v1249
    %v1564 = vpop.permute.xlu0 %1563
    %1567 = vset.pattern.permute.xlu0 0
    %1568 = vperm.xlu0 %1567, %v1250
    %v1569 = vpop.permute.xlu0 %1568
    %1572 = vset.pattern.permute.xlu0 0
    %1573 = vperm.xlu0 %1572, %v1251
    %v1574 = vpop.permute.xlu0 %1573
    %1577 = vset.pattern.permute.xlu0 0
    %1578 = vperm.xlu0 %1577, %v1252
    %v1579 = vpop.permute.xlu0 %1578
    %1582 = vset.pattern.permute.xlu0 0
    %1583 = vperm.xlu0 %1582, %v1253
    %v1584 = vpop.permute.xlu0 %1583
    %1587 = vset.pattern.permute.xlu0 0
    %1588 = vperm.xlu0 %1587, %v1254
    %v1589 = vpop.permute.xlu0 %1588
    %1592 = vset.pattern.permute.xlu0 0
    %1593 = vperm.xlu0 %1592, %v1255
    %v1594 = vpop.permute.xlu0 %1593
    %1597 = vset.pattern.permute.xlu0 0
    %1598 = vperm.xlu0 %1597, %v1256
    %v1599 = vpop.permute.xlu0 %1598
    %1602 = vset.pattern.permute.xlu0 0
    %1603 = vperm.xlu0 %1602, %v1257
    %v1604 = vpop.permute.xlu0 %1603
    %1607 = vset.pattern.permute.xlu0 0
    %1608 = vperm.xlu0 %1607, %v1258
    %v1609 = vpop.permute.xlu0 %1608
    %1612 = vset.pattern.permute.xlu0 0
    %1613 = vperm.xlu0 %1612, %v1259
    %v1614 = vpop.permute.xlu0 %1613
    %1617 = vset.pattern.permute.xlu0 0
    %1618 = vperm.xlu0 %1617, %v1260
    %v1619 = vpop.permute.xlu0 %1618
    %1622 = vset.pattern.permute.xlu0 0
    %1623 = vperm.xlu0 %1622, %v1261
    %v1624 = vpop.permute.xlu0 %1623
    %1627 = vset.pattern.permute.xlu0 0
    %1628 = vperm.xlu0 %1627, %v1262
    %v1629 = vpop.permute.xlu0 %1628
    %1632 = vset.pattern.permute.xlu0 0
    %1633 = vperm.xlu0 %1632, %v1263
    %v1634 = vpop.permute.xlu0 %1633
    %1637 = vset.pattern.permute.xlu0 0
    %1638 = vperm.xlu0 %1637, %v1264
    %v1639 = vpop.permute.xlu0 %1638
    %1642 = vset.pattern.permute.xlu0 0
    %1643 = vperm.xlu0 %1642, %v1265
    %v1644 = vpop.permute.xlu0 %1643
    %1647 = vset.pattern.permute.xlu0 0
    %1648 = vperm.xlu0 %1647, %v1266
    %v1649 = vpop.permute.xlu0 %1648
    %1652 = vset.pattern.permute.xlu0 0
    %1653 = vperm.xlu0 %1652, %v1267
    %v1654 = vpop.permute.xlu0 %1653
    %1657 = vset.pattern.permute.xlu0 0
    %1658 = vperm.xlu0 %1657, %v1268
    %v1659 = vpop.permute.xlu0 %1658
    %1662 = vset.pattern.permute.xlu0 0
    %1663 = vperm.xlu0 %1662, %v1269
    %v1664 = vpop.permute.xlu0 %1663
    %1667 = vset.pattern.permute.xlu0 0
    %1668 = vperm.xlu0 %1667, %v1270
    %v1669 = vpop.permute.xlu0 %1668
    %1672 = vset.pattern.permute.xlu0 0
    %1673 = vperm.xlu0 %1672, %v1271
    %v1674 = vpop.permute.xlu0 %1673
    %1677 = vset.pattern.permute.xlu0 0
    %1678 = vperm.xlu0 %1677, %v1272
    %v1679 = vpop.permute.xlu0 %1678
    %1682 = vset.pattern.permute.xlu0 0
    %1683 = vperm.xlu0 %1682, %v1273
    %v1684 = vpop.permute.xlu0 %1683
    %1687 = vset.pattern.permute.xlu0 0
    %1688 = vperm.xlu0 %1687, %v1274
    %v1689 = vpop.permute.xlu0 %1688
    %1692 = vset.pattern.permute.xlu0 0
    %1693 = vperm.xlu0 %1692, %v1275
    %v1694 = vpop.permute.xlu0 %1693
    %1697 = vset.pattern.permute.xlu0 0
    %1698 = vperm.xlu0 %1697, %v1276
    %v1699 = vpop.permute.xlu0 %1698
    %1702 = vset.pattern.permute.xlu0 0
    %1703 = vperm.xlu0 %1702, %v1277
    %v1704 = vpop.permute.xlu0 %1703
    %1707 = vset.pattern.permute.xlu0 0
    %1708 = vperm.xlu0 %1707, %v1278
    %v1709 = vpop.permute.xlu0 %1708
    %1712 = vset.pattern.permute.xlu0 0
    %1713 = vperm.xlu0 %1712, %v1279
    %v1714 = vpop.permute.xlu0 %1713
    %1717 = vset.pattern.permute.xlu0 0
    %1718 = vperm.xlu0 %1717, %v1280
    %v1719 = vpop.permute.xlu0 %1718
    %1722 = vset.pattern.permute.xlu0 0
    %1723 = vperm.xlu0 %1722, %v1281
    %v1724 = vpop.permute.xlu0 %1723
    %1727 = vset.pattern.permute.xlu0 0
    %1728 = vperm.xlu0 %1727, %v1282
    %v1729 = vpop.permute.xlu0 %1728
    %1732 = vset.pattern.permute.xlu0 0
    %1733 = vperm.xlu0 %1732, %v1283
    %v1734 = vpop.permute.xlu0 %1733
    %1737 = vset.pattern.permute.xlu0 0
    %1738 = vperm.xlu0 %1737, %v1284
    %v1739 = vpop.permute.xlu0 %1738
    %1742 = vset.pattern.permute.xlu0 0
    %1743 = vperm.xlu0 %1742, %v1285
    %v1744 = vpop.permute.xlu0 %1743
    %1747 = vset.pattern.permute.xlu0 0
    %1748 = vperm.xlu0 %1747, %v1286
    %v1749 = vpop.permute.xlu0 %1748
    %1752 = vset.pattern.permute.xlu0 0
    %1753 = vperm.xlu0 %1752, %v1287
    %v1754 = vpop.permute.xlu0 %1753
    %1757 = vset.pattern.permute.xlu0 0
    %1758 = vperm.xlu0 %1757, %v1288
    %v1759 = vpop.permute.xlu0 %1758
    %1762 = vset.pattern.permute.xlu0 0
    %1763 = vperm.xlu0 %1762, %v1289
    %v1764 = vpop.permute.xlu0 %1763
    %1767 = vset.pattern.permute.xlu0 0
    %1768 = vperm.xlu0 %1767, %v1290
    %v1769 = vpop.permute.xlu0 %1768
    %1772 = vset.pattern.permute.xlu0 0
    %1773 = vperm.xlu0 %1772, %v1291
    %v1774 = vpop.permute.xlu0 %1773
    %1777 = vset.pattern.permute.xlu0 0
    %1778 = vperm.xlu0 %1777, %v1292
    %v1779 = vpop.permute.xlu0 %1778
    %1782 = vset.pattern.permute.xlu0 0
    %1783 = vperm.xlu0 %1782, %v1293
    %v1784 = vpop.permute.xlu0 %1783
    %1787 = vset.pattern.permute.xlu0 0
    %1788 = vperm.xlu0 %1787, %v1294
    %v1789 = vpop.permute.xlu0 %1788
    %1792 = vset.pattern.permute.xlu0 0
    %1793 = vperm.xlu0 %1792, %v1295
    %v1794 = vpop.permute.xlu0 %1793
    %1797 = vset.pattern.permute.xlu0 0
    %1798 = vperm.xlu0 %1797, %v1296
    %v1799 = vpop.permute.xlu0 %1798
    %1802 = vset.pattern.permute.xlu0 0
    %1803 = vperm.xlu0 %1802, %v1297
    %v1804 = vpop.permute.xlu0 %1803
    %1807 = vset.pattern.permute.xlu0 0
    %1808 = vperm.xlu0 %1807, %v1298
    %v1809 = vpop.permute.xlu0 %1808
    %1812 = vset.pattern.permute.xlu0 0
    %1813 = vperm.xlu0 %1812, %v1299
    %v1814 = vpop.permute.xlu0 %1813
    %1817 = vset.pattern.permute.xlu0 0
    %1818 = vperm.xlu0 %1817, %v1300
    %v1819 = vpop.permute.xlu0 %1818
    %1822 = vset.pattern.permute.xlu0 0
    %1823 = vperm.xlu0 %1822, %v1301
    %v1824 = vpop.permute.xlu0 %1823
    %1827 = vset.pattern.permute.xlu0 0
    %1828 = vperm.xlu0 %1827, %v1302
    %v1829 = vpop.permute.xlu0 %1828
    %1832 = vset.pattern.permute.xlu0 0
    %1833 = vperm.xlu0 %1832, %v1303
    %v1834 = vpop.permute.xlu0 %1833
    %1837 = vset.pattern.permute.xlu0 0
    %1838 = vperm.xlu0 %1837, %v1304
    %v1839 = vpop.permute.xlu0 %1838
    %1842 = vset.pattern.permute.xlu0 0
    %1843 = vperm.xlu0 %1842, %v1305
    %v1844 = vpop.permute.xlu0 %1843
    %1847 = vset.pattern.permute.xlu0 0
    %1848 = vperm.xlu0 %1847, %v1306
    %v1849 = vpop.permute.xlu0 %1848
    %1852 = vset.pattern.permute.xlu0 0
    %1853 = vperm.xlu0 %1852, %v1307
    %v1854 = vpop.permute.xlu0 %1853
    %1857 = vset.pattern.permute.xlu0 0
    %1858 = vperm.xlu0 %1857, %v1308
    %v1859 = vpop.permute.xlu0 %1858
    %1862 = vset.pattern.permute.xlu0 0
    %1863 = vperm.xlu0 %1862, %v1309
    %v1864 = vpop.permute.xlu0 %1863
    %1867 = vset.pattern.permute.xlu0 0
    %1868 = vperm.xlu0 %1867, %v1310
    %v1869 = vpop.permute.xlu0 %1868
    %1872 = vset.pattern.permute.xlu0 0
    %1873 = vperm.xlu0 %1872, %v1311
    %v1874 = vpop.permute.xlu0 %1873
    %1877 = vset.pattern.permute.xlu0 0
    %1878 = vperm.xlu0 %1877, %v1312
    %v1879 = vpop.permute.xlu0 %1878
    %1882 = vset.pattern.permute.xlu0 0
    %1883 = vperm.xlu0 %1882, %v1313
    %v1884 = vpop.permute.xlu0 %1883
    %1887 = vset.pattern.permute.xlu0 0
    %1888 = vperm.xlu0 %1887, %v1314
    %v1889 = vpop.permute.xlu0 %1888
    %1892 = vset.pattern.permute.xlu0 0
    %1893 = vperm.xlu0 %1892, %v1315
    %v1894 = vpop.permute.xlu0 %1893
    %1897 = vset.pattern.permute.xlu0 0
    %1898 = vperm.xlu0 %1897, %v1316
    %v1899 = vpop.permute.xlu0 %1898
    %1902 = vset.pattern.permute.xlu0 0
    %1903 = vperm.xlu0 %1902, %v1317
    %v1904 = vpop.permute.xlu0 %1903
    %1907 = vset.pattern.permute.xlu0 0
    %1908 = vperm.xlu0 %1907, %v1318
    %v1909 = vpop.permute.xlu0 %1908
    %1912 = vset.pattern.permute.xlu0 0
    %1913 = vperm.xlu0 %1912, %v1319
    %v1914 = vpop.permute.xlu0 %1913
    %1917 = vset.pattern.permute.xlu0 0
    %1918 = vperm.xlu0 %1917, %v1320
    %v1919 = vpop.permute.xlu0 %1918
    %1922 = vset.pattern.permute.xlu0 0
    %1923 = vperm.xlu0 %1922, %v1321
    %v1924 = vpop.permute.xlu0 %1923
    %1927 = vset.pattern.permute.xlu0 0
    %1928 = vperm.xlu0 %1927, %v1322
    %v1929 = vpop.permute.xlu0 %1928
    %1932 = vset.pattern.permute.xlu0 0
    %1933 = vperm.xlu0 %1932, %v1323
    %v1934 = vpop.permute.xlu0 %1933
    %1937 = vset.pattern.permute.xlu0 0
    %1938 = vperm.xlu0 %1937, %v1324
    %v1939 = vpop.permute.xlu0 %1938
    %1942 = vset.pattern.permute.xlu0 0
    %1943 = vperm.xlu0 %1942, %v1325
    %v1944 = vpop.permute.xlu0 %1943
    %1947 = vset.pattern.permute.xlu0 0
    %1948 = vperm.xlu0 %1947, %v1326
    %v1949 = vpop.permute.xlu0 %1948
    %1952 = vset.pattern.permute.xlu0 0
    %1953 = vperm.xlu0 %1952, %v1327
    %v1954 = vpop.permute.xlu0 %1953
    %1957 = vset.pattern.permute.xlu0 0
    %1958 = vperm.xlu0 %1957, %v1328
    %v1959 = vpop.permute.xlu0 %1958
    %1962 = vset.pattern.permute.xlu0 0
    %1963 = vperm.xlu0 %1962, %v1329
    %v1964 = vpop.permute.xlu0 %1963
    %1967 = vset.pattern.permute.xlu0 0
    %1968 = vperm.xlu0 %1967, %v1330
    %v1969 = vpop.permute.xlu0 %1968
    %1972 = vset.pattern.permute.xlu0 0
    %1973 = vperm.xlu0 %1972, %v1331
    %v1974 = vpop.permute.xlu0 %1973
    %1977 = vset.pattern.permute.xlu0 0
    %1978 = vperm.xlu0 %1977, %v1332
    %v1979 = vpop.permute.xlu0 %1978
    %1982 = vset.pattern.permute.xlu0 0
    %1983 = vperm.xlu0 %1982, %v1333
    %v1984 = vpop.permute.xlu0 %1983
    %1987 = vset.pattern.permute.xlu0 0
    %1988 = vperm.xlu0 %1987, %v1334
    %v1989 = vpop.permute.xlu0 %1988
    %1992 = vset.pattern.permute.xlu0 0
    %1993 = vperm.xlu0 %1992, %v1335
    %v1994 = vpop.permute.xlu0 %1993
    %1997 = vset.pattern.permute.xlu0 0
    %1998 = vperm.xlu0 %1997, %v1336
    %v1999 = vpop.permute.xlu0 %1998
    %2002 = vset.pattern.permute.xlu0 0
    %2003 = vperm.xlu0 %2002, %v1337
    %v2004 = vpop.permute.xlu0 %2003
    %2007 = vset.pattern.permute.xlu0 0
    %2008 = vperm.xlu0 %2007, %v1338
    %v2009 = vpop.permute.xlu0 %2008
    %2012 = vset.pattern.permute.xlu0 0
    %2013 = vperm.xlu0 %2012, %v1339
    %v2014 = vpop.permute.xlu0 %2013
    %2017 = vset.pattern.permute.xlu0 0
    %2018 = vperm.xlu0 %2017, %v1340
    %v2019 = vpop.permute.xlu0 %2018
    %2022 = vset.pattern.permute.xlu0 0
    %2023 = vperm.xlu0 %2022, %v1341
    %v2024 = vpop.permute.xlu0 %2023
    %2027 = vset.pattern.permute.xlu0 0
    %2028 = vperm.xlu0 %2027, %v1342
    %v2029 = vpop.permute.xlu0 %2028
    %2032 = vset.pattern.permute.xlu0 0
    %2033 = vperm.xlu0 %2032, %v1343
    %v2034 = vpop.permute.xlu0 %2033
    %2037 = vset.pattern.permute.xlu0 0
    %2038 = vperm.xlu0 %2037, %v1344
    %v2039 = vpop.permute.xlu0 %2038
    %2042 = vset.pattern.permute.xlu0 0
    %2043 = vperm.xlu0 %2042, %v1345
    %v2044 = vpop.permute.xlu0 %2043
    %2047 = vset.pattern.permute.xlu0 0
    %2048 = vperm.xlu0 %2047, %v1346
    %v2049 = vpop.permute.xlu0 %2048
    %2052 = vset.pattern.permute.xlu0 0
    %2053 = vperm.xlu0 %2052, %v1347
    %v2054 = vpop.permute.xlu0 %2053
    %2057 = vset.pattern.permute.xlu0 0
    %2058 = vperm.xlu0 %2057, %v1348
    %v2059 = vpop.permute.xlu0 %2058
    %2062 = vset.pattern.permute.xlu0 0
    %2063 = vperm.xlu0 %2062, %v1349
    %v2064 = vpop.permute.xlu0 %2063
    %2067 = vset.pattern.permute.xlu0 0
    %2068 = vperm.xlu0 %2067, %v1350
    %v2069 = vpop.permute.xlu0 %2068
    %v2071 = vadd.f32 %v1063, %v1354
    %v2072 = vadd.f32 %v1064, %v1359
    %v2073 = vadd.f32 %v1065, %v1364
    %v2074 = vadd.f32 %v1066, %v1369
    %v2075 = vadd.f32 %v1067, %v1374
    %v2076 = vadd.f32 %v1068, %v1379
    %v2077 = vadd.f32 %v1069, %v1384
    %v2078 = vadd.f32 %v1070, %v1389
    %v2079 = vadd.f32 %v1071, %v1394
    %v2080 = vadd.f32 %v1072, %v1399
    %v2081 = vadd.f32 %v1073, %v1404
    %v2082 = vadd.f32 %v1074, %v1409
    %v2083 = vadd.f32 %v1075, %v1414
    %v2084 = vadd.f32 %v1076, %v1419
    %v2085 = vadd.f32 %v1077, %v1424
    %v2086 = vadd.f32 %v1078, %v1429
    %v2087 = vadd.f32 %v1079, %v1434
    %v2088 = vadd.f32 %v1080, %v1439
    %v2089 = vadd.f32 %v1081, %v1444
    %v2090 = vadd.f32 %v1082, %v1449
    %v2091 = vadd.f32 %v1083, %v1454
    %v2092 = vadd.f32 %v1084, %v1459
    %v2093 = vadd.f32 %v1085, %v1464
    %v2094 = vadd.f32 %v1086, %v1469
    %v2095 = vadd.f32 %v1087, %v1474
    %v2096 = vadd.f32 %v1088, %v1479
    %v2097 = vadd.f32 %v1089, %v1484
    %v2098 = vadd.f32 %v1090, %v1489
    %v2099 = vadd.f32 %v1091, %v1494
    %v2100 = vadd.f32 %v1092, %v1499
    %v2101 = vadd.f32 %v1093, %v1504
    %v2102 = vadd.f32 %v1094, %v1509
    %v2103 = vadd.f32 %v1095, %v1514
    %v2104 = vadd.f32 %v1096, %v1519
    %v2105 = vadd.f32 %v1097, %v1524
    %v2106 = vadd.f32 %v1098, %v1529
    %v2107 = vadd.f32 %v1099, %v1534
    %v2108 = vadd.f32 %v1100, %v1539
    %v2109 = vadd.f32 %v1101, %v1544
    %v2110 = vadd.f32 %v1102, %v1549
    %v2111 = vadd.f32 %v1103, %v1554
    %v2112 = vadd.f32 %v1104, %v1559
    %v2113 = vadd.f32 %v1105, %v1564
    %v2114 = vadd.f32 %v1106, %v1569
    %v2115 = vadd.f32 %v1107, %v1574
    %v2116 = vadd.f32 %v1108, %v1579
    %v2117 = vadd.f32 %v1109, %v1584
    %v2118 = vadd.f32 %v1110, %v1589
    %v2119 = vadd.f32 %v1111, %v1594
    %v2120 = vadd.f32 %v1112, %v1599
    %v2121 = vadd.f32 %v1113, %v1604
    %v2122 = vadd.f32 %v1114, %v1609
    %v2123 = vadd.f32 %v1115, %v1614
    %v2124 = vadd.f32 %v1116, %v1619
    %v2125 = vadd.f32 %v1117, %v1624
    %v2126 = vadd.f32 %v1118, %v1629
    %v2127 = vadd.f32 %v1119, %v1634
    %v2128 = vadd.f32 %v1120, %v1639
    %v2129 = vadd.f32 %v1121, %v1644
    %v2130 = vadd.f32 %v1122, %v1649
    %v2131 = vadd.f32 %v1123, %v1654
    %v2132 = vadd.f32 %v1124, %v1659
    %v2133 = vadd.f32 %v1125, %v1664
    %v2134 = vadd.f32 %v1126, %v1669
    %v2135 = vadd.f32 %v1127, %v1674
    %v2136 = vadd.f32 %v1128, %v1679
    %v2137 = vadd.f32 %v1129, %v1684
    %v2138 = vadd.f32 %v1130, %v1689
    %v2139 = vadd.f32 %v1131, %v1694
    %v2140 = vadd.f32 %v1132, %v1699
    %v2141 = vadd.f32 %v1133, %v1704
    %v2142 = vadd.f32 %v1134, %v1709
    %v2143 = vadd.f32 %v1135, %v1714
    %v2144 = vadd.f32 %v1136, %v1719
    %v2145 = vadd.f32 %v1137, %v1724
    %v2146 = vadd.f32 %v1138, %v1729
    %v2147 = vadd.f32 %v1139, %v1734
    %v2148 = vadd.f32 %v1140, %v1739
    %v2149 = vadd.f32 %v1141, %v1744
    %v2150 = vadd.f32 %v1142, %v1749
    %v2151 = vadd.f32 %v1143, %v1754
    %v2152 = vadd.f32 %v1144, %v1759
    %v2153 = vadd.f32 %v1145, %v1764
    %v2154 = vadd.f32 %v1146, %v1769
    %v2155 = vadd.f32 %v1147, %v1774
    %v2156 = vadd.f32 %v1148, %v1779
    %v2157 = vadd.f32 %v1149, %v1784
    %v2158 = vadd.f32 %v1150, %v1789
    %v2159 = vadd.f32 %v1151, %v1794
    %v2160 = vadd.f32 %v1152, %v1799
    %v2161 = vadd.f32 %v1153, %v1804
    %v2162 = vadd.f32 %v1154, %v1809
    %v2163 = vadd.f32 %v1155, %v1814
    %v2164 = vadd.f32 %v1156, %v1819
    %v2165 = vadd.f32 %v1157, %v1824
    %v2166 = vadd.f32 %v1158, %v1829
    %v2167 = vadd.f32 %v1159, %v1834
    %v2168 = vadd.f32 %v1160, %v1839
    %v2169 = vadd.f32 %v1161, %v1844
    %v2170 = vadd.f32 %v1162, %v1849
    %v2171 = vadd.f32 %v1163, %v1854
    %v2172 = vadd.f32 %v1164, %v1859
    %v2173 = vadd.f32 %v1165, %v1864
    %v2174 = vadd.f32 %v1166, %v1869
    %v2175 = vadd.f32 %v1167, %v1874
    %v2176 = vadd.f32 %v1168, %v1879
    %v2177 = vadd.f32 %v1169, %v1884
    %v2178 = vadd.f32 %v1170, %v1889
    %v2179 = vadd.f32 %v1171, %v1894
    %v2180 = vadd.f32 %v1172, %v1899
    %v2181 = vadd.f32 %v1173, %v1904
    %v2182 = vadd.f32 %v1174, %v1909
    %v2183 = vadd.f32 %v1175, %v1914
    %v2184 = vadd.f32 %v1176, %v1919
    %v2185 = vadd.f32 %v1177, %v1924
    %v2186 = vadd.f32 %v1178, %v1929
    %v2187 = vadd.f32 %v1179, %v1934
    %v2188 = vadd.f32 %v1180, %v1939
    %v2189 = vadd.f32 %v1181, %v1944
    %v2190 = vadd.f32 %v1182, %v1949
    %v2191 = vadd.f32 %v1183, %v1954
    %v2192 = vadd.f32 %v1184, %v1959
    %v2193 = vadd.f32 %v1185, %v1964
    %v2194 = vadd.f32 %v1186, %v1969
    %v2195 = vadd.f32 %v1187, %v1974
    %v2196 = vadd.f32 %v1188, %v1979
    %v2197 = vadd.f32 %v1189, %v1984
    %v2198 = vadd.f32 %v1190, %v1989
    %v2199 = vadd.f32 %v1191, %v1994
    %v2200 = vadd.f32 %v1192, %v1999
    %v2201 = vadd.f32 %v1193, %v2004
    %v2202 = vadd.f32 %v1194, %v2009
    %v2203 = vadd.f32 %v1195, %v2014
    %v2204 = vadd.f32 %v1196, %v2019
    %v2205 = vadd.f32 %v1197, %v2024
    %v2206 = vadd.f32 %v1198, %v2029
    %v2207 = vadd.f32 %v1199, %v2034
    %v2208 = vadd.f32 %v1200, %v2039
    %v2209 = vadd.f32 %v1201, %v2044
    %v2210 = vadd.f32 %v1202, %v2049
    %v2211 = vadd.f32 %v1203, %v2054
    %v2212 = vadd.f32 %v1204, %v2059
    %v2213 = vadd.f32 %v1205, %v2064
    %v2214 = vadd.f32 %v1206, %v2069
    %v2215 = vld [vmem:[%s3] sm:$0x1]
    %v2217 = vlaneseq
    %v2218 = vshrl.u32 %v2217, 7
    %v2219 = vsub.s32 0, %v2218
    %v2220 = vrot.slane %v2215, %v2219
    %v2222 = vmul.f32 %v2071, %v2220
    %v2223 = vmul.f32 %v2072, %v2220
    %v2224 = vmul.f32 %v2073, %v2220
    %v2225 = vmul.f32 %v2074, %v2220
    %v2226 = vmul.f32 %v2075, %v2220
    %v2227 = vmul.f32 %v2076, %v2220
    %v2228 = vmul.f32 %v2077, %v2220
    %v2229 = vmul.f32 %v2078, %v2220
    %v2230 = vmul.f32 %v2079, %v2220
    %v2231 = vmul.f32 %v2080, %v2220
    %v2232 = vmul.f32 %v2081, %v2220
    %v2233 = vmul.f32 %v2082, %v2220
    %v2234 = vmul.f32 %v2083, %v2220
    %v2235 = vmul.f32 %v2084, %v2220
    %v2236 = vmul.f32 %v2085, %v2220
    %v2237 = vmul.f32 %v2086, %v2220
    %v2238 = vmul.f32 %v2087, %v2220
    %v2239 = vmul.f32 %v2088, %v2220
    %v2240 = vmul.f32 %v2089, %v2220
    %v2241 = vmul.f32 %v2090, %v2220
    %v2242 = vmul.f32 %v2091, %v2220
    %v2243 = vmul.f32 %v2092, %v2220
    %v2244 = vmul.f32 %v2093, %v2220
    %v2245 = vmul.f32 %v2094, %v2220
    %v2246 = vmul.f32 %v2095, %v2220
    %v2247 = vmul.f32 %v2096, %v2220
    %v2248 = vmul.f32 %v2097, %v2220
    %v2249 = vmul.f32 %v2098, %v2220
    %v2250 = vmul.f32 %v2099, %v2220
    %v2251 = vmul.f32 %v2100, %v2220
    %v2252 = vmul.f32 %v2101, %v2220
    %v2253 = vmul.f32 %v2102, %v2220
    %v2254 = vmul.f32 %v2103, %v2220
    %v2255 = vmul.f32 %v2104, %v2220
    %v2256 = vmul.f32 %v2105, %v2220
    %v2257 = vmul.f32 %v2106, %v2220
    %v2258 = vmul.f32 %v2107, %v2220
    %v2259 = vmul.f32 %v2108, %v2220
    %v2260 = vmul.f32 %v2109, %v2220
    %v2261 = vmul.f32 %v2110, %v2220
    %v2262 = vmul.f32 %v2111, %v2220
    %v2263 = vmul.f32 %v2112, %v2220
    %v2264 = vmul.f32 %v2113, %v2220
    %v2265 = vmul.f32 %v2114, %v2220
    %v2266 = vmul.f32 %v2115, %v2220
    %v2267 = vmul.f32 %v2116, %v2220
    %v2268 = vmul.f32 %v2117, %v2220
    %v2269 = vmul.f32 %v2118, %v2220
    %v2270 = vmul.f32 %v2119, %v2220
    %v2271 = vmul.f32 %v2120, %v2220
    %v2272 = vmul.f32 %v2121, %v2220
    %v2273 = vmul.f32 %v2122, %v2220
    %v2274 = vmul.f32 %v2123, %v2220
    %v2275 = vmul.f32 %v2124, %v2220
    %v2276 = vmul.f32 %v2125, %v2220
    %v2277 = vmul.f32 %v2126, %v2220
    %v2278 = vmul.f32 %v2127, %v2220
    %v2279 = vmul.f32 %v2128, %v2220
    %v2280 = vmul.f32 %v2129, %v2220
    %v2281 = vmul.f32 %v2130, %v2220
    %v2282 = vmul.f32 %v2131, %v2220
    %v2283 = vmul.f32 %v2132, %v2220
    %v2284 = vmul.f32 %v2133, %v2220
    %v2285 = vmul.f32 %v2134, %v2220
    %v2286 = vmul.f32 %v2135, %v2220
    %v2287 = vmul.f32 %v2136, %v2220
    %v2288 = vmul.f32 %v2137, %v2220
    %v2289 = vmul.f32 %v2138, %v2220
    %v2290 = vmul.f32 %v2139, %v2220
    %v2291 = vmul.f32 %v2140, %v2220
    %v2292 = vmul.f32 %v2141, %v2220
    %v2293 = vmul.f32 %v2142, %v2220
    %v2294 = vmul.f32 %v2143, %v2220
    %v2295 = vmul.f32 %v2144, %v2220
    %v2296 = vmul.f32 %v2145, %v2220
    %v2297 = vmul.f32 %v2146, %v2220
    %v2298 = vmul.f32 %v2147, %v2220
    %v2299 = vmul.f32 %v2148, %v2220
    %v2300 = vmul.f32 %v2149, %v2220
    %v2301 = vmul.f32 %v2150, %v2220
    %v2302 = vmul.f32 %v2151, %v2220
    %v2303 = vmul.f32 %v2152, %v2220
    %v2304 = vmul.f32 %v2153, %v2220
    %v2305 = vmul.f32 %v2154, %v2220
    %v2306 = vmul.f32 %v2155, %v2220
    %v2307 = vmul.f32 %v2156, %v2220
    %v2308 = vmul.f32 %v2157, %v2220
    %v2309 = vmul.f32 %v2158, %v2220
    %v2310 = vmul.f32 %v2159, %v2220
    %v2311 = vmul.f32 %v2160, %v2220
    %v2312 = vmul.f32 %v2161, %v2220
    %v2313 = vmul.f32 %v2162, %v2220
    %v2314 = vmul.f32 %v2163, %v2220
    %v2315 = vmul.f32 %v2164, %v2220
    %v2316 = vmul.f32 %v2165, %v2220
    %v2317 = vmul.f32 %v2166, %v2220
    %v2318 = vmul.f32 %v2167, %v2220
    %v2319 = vmul.f32 %v2168, %v2220
    %v2320 = vmul.f32 %v2169, %v2220
    %v2321 = vmul.f32 %v2170, %v2220
    %v2322 = vmul.f32 %v2171, %v2220
    %v2323 = vmul.f32 %v2172, %v2220
    %v2324 = vmul.f32 %v2173, %v2220
    %v2325 = vmul.f32 %v2174, %v2220
    %v2326 = vmul.f32 %v2175, %v2220
    %v2327 = vmul.f32 %v2176, %v2220
    %v2328 = vmul.f32 %v2177, %v2220
    %v2329 = vmul.f32 %v2178, %v2220
    %v2330 = vmul.f32 %v2179, %v2220
    %v2331 = vmul.f32 %v2180, %v2220
    %v2332 = vmul.f32 %v2181, %v2220
    %v2333 = vmul.f32 %v2182, %v2220
    %v2334 = vmul.f32 %v2183, %v2220
    %v2335 = vmul.f32 %v2184, %v2220
    %v2336 = vmul.f32 %v2185, %v2220
    %v2337 = vmul.f32 %v2186, %v2220
    %v2338 = vmul.f32 %v2187, %v2220
    %v2339 = vmul.f32 %v2188, %v2220
    %v2340 = vmul.f32 %v2189, %v2220
    %v2341 = vmul.f32 %v2190, %v2220
    %v2342 = vmul.f32 %v2191, %v2220
    %v2343 = vmul.f32 %v2192, %v2220
    %v2344 = vmul.f32 %v2193, %v2220
    %v2345 = vmul.f32 %v2194, %v2220
    %v2346 = vmul.f32 %v2195, %v2220
    %v2347 = vmul.f32 %v2196, %v2220
    %v2348 = vmul.f32 %v2197, %v2220
    %v2349 = vmul.f32 %v2198, %v2220
    %v2350 = vmul.f32 %v2199, %v2220
    %v2351 = vmul.f32 %v2200, %v2220
    %v2352 = vmul.f32 %v2201, %v2220
    %v2353 = vmul.f32 %v2202, %v2220
    %v2354 = vmul.f32 %v2203, %v2220
    %v2355 = vmul.f32 %v2204, %v2220
    %v2356 = vmul.f32 %v2205, %v2220
    %v2357 = vmul.f32 %v2206, %v2220
    %v2358 = vmul.f32 %v2207, %v2220
    %v2359 = vmul.f32 %v2208, %v2220
    %v2360 = vmul.f32 %v2209, %v2220
    %v2361 = vmul.f32 %v2210, %v2220
    %v2362 = vmul.f32 %v2211, %v2220
    %v2363 = vmul.f32 %v2212, %v2220
    %v2364 = vmul.f32 %v2213, %v2220
    %v2365 = vmul.f32 %v2214, %v2220
    %v2366 = vmax.f32 %v2222, 0.0
    %v2367 = vmax.f32 %v2223, 0.0
    %v2368 = vmax.f32 %v2224, 0.0
    %v2369 = vmax.f32 %v2225, 0.0
    %v2370 = vmax.f32 %v2226, 0.0
    %v2371 = vmax.f32 %v2227, 0.0
    %v2372 = vmax.f32 %v2228, 0.0
    %v2373 = vmax.f32 %v2229, 0.0
    %v2374 = vmax.f32 %v2230, 0.0
    %v2375 = vmax.f32 %v2231, 0.0
    %v2376 = vmax.f32 %v2232, 0.0
    %v2377 = vmax.f32 %v2233, 0.0
    %v2378 = vmax.f32 %v2234, 0.0
    %v2379 = vmax.f32 %v2235, 0.0
    %v2380 = vmax.f32 %v2236, 0.0
    %v2381 = vmax.f32 %v2237, 0.0
    %v2382 = vmax.f32 %v2238, 0.0
    %v2383 = vmax.f32 %v2239, 0.0
    %v2384 = vmax.f32 %v2240, 0.0
    %v2385 = vmax.f32 %v2241, 0.0
    %v2386 = vmax.f32 %v2242, 0.0
    %v2387 = vmax.f32 %v2243, 0.0
    %v2388 = vmax.f32 %v2244, 0.0
    %v2389 = vmax.f32 %v2245, 0.0
    %v2390 = vmax.f32 %v2246, 0.0
    %v2391 = vmax.f32 %v2247, 0.0
    %v2392 = vmax.f32 %v2248, 0.0
    %v2393 = vmax.f32 %v2249, 0.0
    %v2394 = vmax.f32 %v2250, 0.0
    %v2395 = vmax.f32 %v2251, 0.0
    %v2396 = vmax.f32 %v2252, 0.0
    %v2397 = vmax.f32 %v2253, 0.0
    %v2398 = vmax.f32 %v2254, 0.0
    %v2399 = vmax.f32 %v2255, 0.0
    %v2400 = vmax.f32 %v2256, 0.0
    %v2401 = vmax.f32 %v2257, 0.0
    %v2402 = vmax.f32 %v2258, 0.0
    %v2403 = vmax.f32 %v2259, 0.0
    %v2404 = vmax.f32 %v2260, 0.0
    %v2405 = vmax.f32 %v2261, 0.0
    %v2406 = vmax.f32 %v2262, 0.0
    %v2407 = vmax.f32 %v2263, 0.0
    %v2408 = vmax.f32 %v2264, 0.0
    %v2409 = vmax.f32 %v2265, 0.0
    %v2410 = vmax.f32 %v2266, 0.0
    %v2411 = vmax.f32 %v2267, 0.0
    %v2412 = vmax.f32 %v2268, 0.0
    %v2413 = vmax.f32 %v2269, 0.0
    %v2414 = vmax.f32 %v2270, 0.0
    %v2415 = vmax.f32 %v2271, 0.0
    %v2416 = vmax.f32 %v2272, 0.0
    %v2417 = vmax.f32 %v2273, 0.0
    %v2418 = vmax.f32 %v2274, 0.0
    %v2419 = vmax.f32 %v2275, 0.0
    %v2420 = vmax.f32 %v2276, 0.0
    %v2421 = vmax.f32 %v2277, 0.0
    %v2422 = vmax.f32 %v2278, 0.0
    %v2423 = vmax.f32 %v2279, 0.0
    %v2424 = vmax.f32 %v2280, 0.0
    %v2425 = vmax.f32 %v2281, 0.0
    %v2426 = vmax.f32 %v2282, 0.0
    %v2427 = vmax.f32 %v2283, 0.0
    %v2428 = vmax.f32 %v2284, 0.0
    %v2429 = vmax.f32 %v2285, 0.0
    %v2430 = vmax.f32 %v2286, 0.0
    %v2431 = vmax.f32 %v2287, 0.0
    %v2432 = vmax.f32 %v2288, 0.0
    %v2433 = vmax.f32 %v2289, 0.0
    %v2434 = vmax.f32 %v2290, 0.0
    %v2435 = vmax.f32 %v2291, 0.0
    %v2436 = vmax.f32 %v2292, 0.0
    %v2437 = vmax.f32 %v2293, 0.0
    %v2438 = vmax.f32 %v2294, 0.0
    %v2439 = vmax.f32 %v2295, 0.0
    %v2440 = vmax.f32 %v2296, 0.0
    %v2441 = vmax.f32 %v2297, 0.0
    %v2442 = vmax.f32 %v2298, 0.0
    %v2443 = vmax.f32 %v2299, 0.0
    %v2444 = vmax.f32 %v2300, 0.0
    %v2445 = vmax.f32 %v2301, 0.0
    %v2446 = vmax.f32 %v2302, 0.0
    %v2447 = vmax.f32 %v2303, 0.0
    %v2448 = vmax.f32 %v2304, 0.0
    %v2449 = vmax.f32 %v2305, 0.0
    %v2450 = vmax.f32 %v2306, 0.0
    %v2451 = vmax.f32 %v2307, 0.0
    %v2452 = vmax.f32 %v2308, 0.0
    %v2453 = vmax.f32 %v2309, 0.0
    %v2454 = vmax.f32 %v2310, 0.0
    %v2455 = vmax.f32 %v2311, 0.0
    %v2456 = vmax.f32 %v2312, 0.0
    %v2457 = vmax.f32 %v2313, 0.0
    %v2458 = vmax.f32 %v2314, 0.0
    %v2459 = vmax.f32 %v2315, 0.0
    %v2460 = vmax.f32 %v2316, 0.0
    %v2461 = vmax.f32 %v2317, 0.0
    %v2462 = vmax.f32 %v2318, 0.0
    %v2463 = vmax.f32 %v2319, 0.0
    %v2464 = vmax.f32 %v2320, 0.0
    %v2465 = vmax.f32 %v2321, 0.0
    %v2466 = vmax.f32 %v2322, 0.0
    %v2467 = vmax.f32 %v2323, 0.0
    %v2468 = vmax.f32 %v2324, 0.0
    %v2469 = vmax.f32 %v2325, 0.0
    %v2470 = vmax.f32 %v2326, 0.0
    %v2471 = vmax.f32 %v2327, 0.0
    %v2472 = vmax.f32 %v2328, 0.0
    %v2473 = vmax.f32 %v2329, 0.0
    %v2474 = vmax.f32 %v2330, 0.0
    %v2475 = vmax.f32 %v2331, 0.0
    %v2476 = vmax.f32 %v2332, 0.0
    %v2477 = vmax.f32 %v2333, 0.0
    %v2478 = vmax.f32 %v2334, 0.0
    %v2479 = vmax.f32 %v2335, 0.0
    %v2480 = vmax.f32 %v2336, 0.0
    %v2481 = vmax.f32 %v2337, 0.0
    %v2482 = vmax.f32 %v2338, 0.0
    %v2483 = vmax.f32 %v2339, 0.0
    %v2484 = vmax.f32 %v2340, 0.0
    %v2485 = vmax.f32 %v2341, 0.0
    %v2486 = vmax.f32 %v2342, 0.0
    %v2487 = vmax.f32 %v2343, 0.0
    %v2488 = vmax.f32 %v2344, 0.0
    %v2489 = vmax.f32 %v2345, 0.0
    %v2490 = vmax.f32 %v2346, 0.0
    %v2491 = vmax.f32 %v2347, 0.0
    %v2492 = vmax.f32 %v2348, 0.0
    %v2493 = vmax.f32 %v2349, 0.0
    %v2494 = vmax.f32 %v2350, 0.0
    %v2495 = vmax.f32 %v2351, 0.0
    %v2496 = vmax.f32 %v2352, 0.0
    %v2497 = vmax.f32 %v2353, 0.0
    %v2498 = vmax.f32 %v2354, 0.0
    %v2499 = vmax.f32 %v2355, 0.0
    %v2500 = vmax.f32 %v2356, 0.0
    %v2501 = vmax.f32 %v2357, 0.0
    %v2502 = vmax.f32 %v2358, 0.0
    %v2503 = vmax.f32 %v2359, 0.0
    %v2504 = vmax.f32 %v2360, 0.0
    %v2505 = vmax.f32 %v2361, 0.0
    %v2506 = vmax.f32 %v2362, 0.0
    %v2507 = vmax.f32 %v2363, 0.0
    %v2508 = vmax.f32 %v2364, 0.0
    %v2509 = vmax.f32 %v2365, 0.0
    %v2510 = vpack.c.bf16 %v2367, %v2366
    %v2511 = vpack.c.bf16 %v2369, %v2368
    %v2512 = vpack.c.bf16 %v2371, %v2370
    %v2513 = vpack.c.bf16 %v2373, %v2372
    %v2514 = vpack.c.bf16 %v2375, %v2374
    %v2515 = vpack.c.bf16 %v2377, %v2376
    %v2516 = vpack.c.bf16 %v2379, %v2378
    %v2517 = vpack.c.bf16 %v2381, %v2380
    %v2518 = vpack.c.bf16 %v2383, %v2382
    %v2519 = vpack.c.bf16 %v2385, %v2384
    %v2520 = vpack.c.bf16 %v2387, %v2386
    %v2521 = vpack.c.bf16 %v2389, %v2388
    %v2522 = vpack.c.bf16 %v2391, %v2390
    %v2523 = vpack.c.bf16 %v2393, %v2392
    %v2524 = vpack.c.bf16 %v2395, %v2394
    %v2525 = vpack.c.bf16 %v2397, %v2396
    %v2526 = vpack.c.bf16 %v2399, %v2398
    %v2527 = vpack.c.bf16 %v2401, %v2400
    %v2528 = vpack.c.bf16 %v2403, %v2402
    %v2529 = vpack.c.bf16 %v2405, %v2404
    %v2530 = vpack.c.bf16 %v2407, %v2406
    %v2531 = vpack.c.bf16 %v2409, %v2408
    %v2532 = vpack.c.bf16 %v2411, %v2410
    %v2533 = vpack.c.bf16 %v2413, %v2412
    %v2534 = vpack.c.bf16 %v2415, %v2414
    %v2535 = vpack.c.bf16 %v2417, %v2416
    %v2536 = vpack.c.bf16 %v2419, %v2418
    %v2537 = vpack.c.bf16 %v2421, %v2420
    %v2538 = vpack.c.bf16 %v2423, %v2422
    %v2539 = vpack.c.bf16 %v2425, %v2424
    %v2540 = vpack.c.bf16 %v2427, %v2426
    %v2541 = vpack.c.bf16 %v2429, %v2428
    %v2542 = vpack.c.bf16 %v2431, %v2430
    %v2543 = vpack.c.bf16 %v2433, %v2432
    %v2544 = vpack.c.bf16 %v2435, %v2434
    %v2545 = vpack.c.bf16 %v2437, %v2436
    %v2546 = vpack.c.bf16 %v2439, %v2438
    %v2547 = vpack.c.bf16 %v2441, %v2440
    %v2548 = vpack.c.bf16 %v2443, %v2442
    %v2549 = vpack.c.bf16 %v2445, %v2444
    %v2550 = vpack.c.bf16 %v2447, %v2446
    %v2551 = vpack.c.bf16 %v2449, %v2448
    %v2552 = vpack.c.bf16 %v2451, %v2450
    %v2553 = vpack.c.bf16 %v2453, %v2452
    %v2554 = vpack.c.bf16 %v2455, %v2454
    %v2555 = vpack.c.bf16 %v2457, %v2456
    %v2556 = vpack.c.bf16 %v2459, %v2458
    %v2557 = vpack.c.bf16 %v2461, %v2460
    %v2558 = vpack.c.bf16 %v2463, %v2462
    %v2559 = vpack.c.bf16 %v2465, %v2464
    %v2560 = vpack.c.bf16 %v2467, %v2466
    %v2561 = vpack.c.bf16 %v2469, %v2468
    %v2562 = vpack.c.bf16 %v2471, %v2470
    %v2563 = vpack.c.bf16 %v2473, %v2472
    %v2564 = vpack.c.bf16 %v2475, %v2474
    %v2565 = vpack.c.bf16 %v2477, %v2476
    %v2566 = vpack.c.bf16 %v2479, %v2478
    %v2567 = vpack.c.bf16 %v2481, %v2480
    %v2568 = vpack.c.bf16 %v2483, %v2482
    %v2569 = vpack.c.bf16 %v2485, %v2484
    %v2570 = vpack.c.bf16 %v2487, %v2486
    %v2571 = vpack.c.bf16 %v2489, %v2488
    %v2572 = vpack.c.bf16 %v2491, %v2490
    %v2573 = vpack.c.bf16 %v2493, %v2492
    %v2574 = vpack.c.bf16 %v2495, %v2494
    %v2575 = vpack.c.bf16 %v2497, %v2496
    %v2576 = vpack.c.bf16 %v2499, %v2498
    %v2577 = vpack.c.bf16 %v2501, %v2500
    %v2578 = vpack.c.bf16 %v2503, %v2502
    %v2579 = vpack.c.bf16 %v2505, %v2504
    %v2580 = vpack.c.bf16 %v2507, %v2506
    %v2581 = vpack.c.bf16 %v2509, %v2508
    %v2582 = vpack.c.bf16 %v2223, %v2222
    %v2583 = vpack.c.bf16 %v2225, %v2224
    %v2584 = vpack.c.bf16 %v2227, %v2226
    %v2585 = vpack.c.bf16 %v2229, %v2228
    %v2586 = vpack.c.bf16 %v2231, %v2230
    %v2587 = vpack.c.bf16 %v2233, %v2232
    %v2588 = vpack.c.bf16 %v2235, %v2234
    %v2589 = vpack.c.bf16 %v2237, %v2236
    %v2590 = vpack.c.bf16 %v2239, %v2238
    %v2591 = vpack.c.bf16 %v2241, %v2240
    %v2592 = vpack.c.bf16 %v2243, %v2242
    %v2593 = vpack.c.bf16 %v2245, %v2244
    %v2594 = vpack.c.bf16 %v2247, %v2246
    %v2595 = vpack.c.bf16 %v2249, %v2248
    %v2596 = vpack.c.bf16 %v2251, %v2250
    %v2597 = vpack.c.bf16 %v2253, %v2252
    %v2598 = vpack.c.bf16 %v2255, %v2254
    %v2599 = vpack.c.bf16 %v2257, %v2256
    %v2600 = vpack.c.bf16 %v2259, %v2258
    %v2601 = vpack.c.bf16 %v2261, %v2260
    %v2602 = vpack.c.bf16 %v2263, %v2262
    %v2603 = vpack.c.bf16 %v2265, %v2264
    %v2604 = vpack.c.bf16 %v2267, %v2266
    %v2605 = vpack.c.bf16 %v2269, %v2268
    %v2606 = vpack.c.bf16 %v2271, %v2270
    %v2607 = vpack.c.bf16 %v2273, %v2272
    %v2608 = vpack.c.bf16 %v2275, %v2274
    %v2609 = vpack.c.bf16 %v2277, %v2276
    %v2610 = vpack.c.bf16 %v2279, %v2278
    %v2611 = vpack.c.bf16 %v2281, %v2280
    %v2612 = vpack.c.bf16 %v2283, %v2282
    %v2613 = vpack.c.bf16 %v2285, %v2284
    %v2614 = vpack.c.bf16 %v2287, %v2286
    %v2615 = vpack.c.bf16 %v2289, %v2288
    %v2616 = vpack.c.bf16 %v2291, %v2290
    %v2617 = vpack.c.bf16 %v2293, %v2292
    %v2618 = vpack.c.bf16 %v2295, %v2294
    %v2619 = vpack.c.bf16 %v2297, %v2296
    %v2620 = vpack.c.bf16 %v2299, %v2298
    %v2621 = vpack.c.bf16 %v2301, %v2300
    %v2622 = vpack.c.bf16 %v2303, %v2302
    %v2623 = vpack.c.bf16 %v2305, %v2304
    %v2624 = vpack.c.bf16 %v2307, %v2306
    %v2625 = vpack.c.bf16 %v2309, %v2308
    %v2626 = vpack.c.bf16 %v2311, %v2310
    %v2627 = vpack.c.bf16 %v2313, %v2312
    %v2628 = vpack.c.bf16 %v2315, %v2314
    %v2629 = vpack.c.bf16 %v2317, %v2316
    %v2630 = vpack.c.bf16 %v2319, %v2318
    %v2631 = vpack.c.bf16 %v2321, %v2320
    %v2632 = vpack.c.bf16 %v2323, %v2322
    %v2633 = vpack.c.bf16 %v2325, %v2324
    %v2634 = vpack.c.bf16 %v2327, %v2326
    %v2635 = vpack.c.bf16 %v2329, %v2328
    %v2636 = vpack.c.bf16 %v2331, %v2330
    %v2637 = vpack.c.bf16 %v2333, %v2332
    %v2638 = vpack.c.bf16 %v2335, %v2334
    %v2639 = vpack.c.bf16 %v2337, %v2336
    %v2640 = vpack.c.bf16 %v2339, %v2338
    %v2641 = vpack.c.bf16 %v2341, %v2340
    %v2642 = vpack.c.bf16 %v2343, %v2342
    %v2643 = vpack.c.bf16 %v2345, %v2344
    %v2644 = vpack.c.bf16 %v2347, %v2346
    %v2645 = vpack.c.bf16 %v2349, %v2348
    %v2646 = vpack.c.bf16 %v2351, %v2350
    %v2647 = vpack.c.bf16 %v2353, %v2352
    %v2648 = vpack.c.bf16 %v2355, %v2354
    %v2649 = vpack.c.bf16 %v2357, %v2356
    %v2650 = vpack.c.bf16 %v2359, %v2358
    %v2651 = vpack.c.bf16 %v2361, %v2360
    %v2652 = vpack.c.bf16 %v2363, %v2362
    %v2653 = vpack.c.bf16 %v2365, %v2364
    %v2654 = vld [vmem:[%s4] sm:$0xf]
    %v2655 = vld [vmem:[%s4 + $0x4] sm:$0xf]
    %v2656 = vld [vmem:[%s4 + $0x8] sm:$0xf]
    %v2657 = vld [vmem:[%s4 + $0xc] sm:$0xf]
    %v2658 = vld [vmem:[%s4 + $0x10] sm:$0xf]
    %v2659 = vld [vmem:[%s4 + $0x14] sm:$0xf]
    %v2660 = vld [vmem:[%s4 + $0x18] sm:$0xf]
    %v2661 = vld [vmem:[%s4 + $0x1c] sm:$0xf]
    %v2662 = vld [vmem:[%s4 + $0x20] sm:$0x7]
    %v2663 = vld [vmem:[%s5] sm:$0xf]
    %v2664 = vld [vmem:[%s5 + $0x4] sm:$0xf]
    %v2665 = vld [vmem:[%s5 + $0x8] sm:$0xf]
    %v2666 = vld [vmem:[%s5 + $0xc] sm:$0xf]
    %v2667 = vld [vmem:[%s5 + $0x10] sm:$0xf]
    %v2668 = vld [vmem:[%s5 + $0x14] sm:$0xf]
    %v2669 = vld [vmem:[%s5 + $0x18] sm:$0xf]
    %v2670 = vld [vmem:[%s5 + $0x1c] sm:$0xf]
    %v2671 = vld [vmem:[%s5 + $0x20] sm:$0x7]
    %v2681 = vunpack.c.l.b16 %v2663
    %v2682 = vunpack.c.l.b16 %v2664
    %v2683 = vunpack.c.l.b16 %v2665
    %v2684 = vunpack.c.l.b16 %v2666
    %v2685 = vunpack.c.l.b16 %v2667
    %v2686 = vunpack.c.l.b16 %v2668
    %v2687 = vunpack.c.l.b16 %v2669
    %v2688 = vunpack.c.l.b16 %v2670
    %v2689 = vunpack.c.l.b16 %v2671
    %v2690 = vpack.c.b16 %v2682, %v2681
    %v2691 = vpack.c.b16 %v2684, %v2683
    %v2692 = vpack.c.b16 %v2686, %v2685
    %v2693 = vpack.c.b16 %v2688, %v2687
    %v2694 = vpack.c.b16 %v2689, %v2689
    %vm2699 = vcmask 572416
    %v2701 = vsel %vm2699, %v2582, 0
    %v2704 = vsel %vm2699, %v2583, 0
    %v2707 = vsel %vm2699, %v2584, 0
    %v2710 = vsel %vm2699, %v2585, 0
    %v2713 = vsel %vm2699, %v2586, 0
    %v2716 = vsel %vm2699, %v2587, 0
    %v2719 = vsel %vm2699, %v2588, 0
    %v2722 = vsel %vm2699, %v2589, 0
    %v2725 = vsel %vm2699, %v2590, 0
    %v2728 = vsel %vm2699, %v2591, 0
    %v2731 = vsel %vm2699, %v2592, 0
    %v2734 = vsel %vm2699, %v2593, 0
    %v2737 = vsel %vm2699, %v2594, 0
    %v2740 = vsel %vm2699, %v2595, 0
    %v2743 = vsel %vm2699, %v2596, 0
    %v2746 = vsel %vm2699, %v2597, 0
    %v2749 = vsel %vm2699, %v2598, 0
    %v2752 = vsel %vm2699, %v2599, 0
    %v2755 = vsel %vm2699, %v2600, 0
    %v2758 = vsel %vm2699, %v2601, 0
    %v2761 = vsel %vm2699, %v2602, 0
    %v2764 = vsel %vm2699, %v2603, 0
    %v2767 = vsel %vm2699, %v2604, 0
    %v2770 = vsel %vm2699, %v2605, 0
    %v2773 = vsel %vm2699, %v2606, 0
    %v2776 = vsel %vm2699, %v2607, 0
    %v2779 = vsel %vm2699, %v2608, 0
    %v2782 = vsel %vm2699, %v2609, 0
    %v2785 = vsel %vm2699, %v2610, 0
    %v2788 = vsel %vm2699, %v2611, 0
    %v2791 = vsel %vm2699, %v2612, 0
    %v2794 = vsel %vm2699, %v2613, 0
    %v2797 = vsel %vm2699, %v2614, 0
    %v2800 = vsel %vm2699, %v2615, 0
    %v2803 = vsel %vm2699, %v2616, 0
    %v2806 = vsel %vm2699, %v2617, 0
    %v2809 = vsel %vm2699, %v2618, 0
    %v2812 = vsel %vm2699, %v2619, 0
    %v2815 = vsel %vm2699, %v2620, 0
    %v2818 = vsel %vm2699, %v2621, 0
    %v2821 = vsel %vm2699, %v2622, 0
    %v2824 = vsel %vm2699, %v2623, 0
    %v2827 = vsel %vm2699, %v2624, 0
    %v2830 = vsel %vm2699, %v2625, 0
    %v2833 = vsel %vm2699, %v2626, 0
    %v2836 = vsel %vm2699, %v2627, 0
    %v2839 = vsel %vm2699, %v2628, 0
    %v2842 = vsel %vm2699, %v2629, 0
    %v2845 = vsel %vm2699, %v2630, 0
    %v2848 = vsel %vm2699, %v2631, 0
    %v2851 = vsel %vm2699, %v2632, 0
    %v2854 = vsel %vm2699, %v2633, 0
    %v2857 = vsel %vm2699, %v2634, 0
    %v2860 = vsel %vm2699, %v2635, 0
    %v2863 = vsel %vm2699, %v2636, 0
    %v2866 = vsel %vm2699, %v2637, 0
    %v2869 = vsel %vm2699, %v2638, 0
    %v2872 = vsel %vm2699, %v2639, 0
    %v2875 = vsel %vm2699, %v2640, 0
    %v2878 = vsel %vm2699, %v2641, 0
    %v2881 = vsel %vm2699, %v2642, 0
    %v2884 = vsel %vm2699, %v2643, 0
    %v2887 = vsel %vm2699, %v2644, 0
    %v2890 = vsel %vm2699, %v2645, 0
    %v2893 = vsel %vm2699, %v2646, 0
    %v2896 = vsel %vm2699, %v2647, 0
    %v2899 = vsel %vm2699, %v2648, 0
    %v2902 = vsel %vm2699, %v2649, 0
    %v2905 = vsel %vm2699, %v2650, 0
    %v2908 = vsel %vm2699, %v2651, 0
    %v2911 = vsel %vm2699, %v2652, 0
    %v2914 = vsel %vm2699, %v2653, 0
    %vm2916 = vcmask 1042432
    %v2918 = vsel %vm2916, %v2694, 0
    %2920 = vmatprep.subr.bf16.mxu0 0
    %2921 = vmatpush1.bf16.msra.mxu0 %v2690
    %2922 = vmatprep.subr.bf16.mxu0 0
    %2923 = vmatpush1.bf16.msra.mxu0 %v2691
    %2924 = vmatprep.subr.bf16.mxu0 0
    %2925 = vmatpush1.bf16.msra.mxu0 %v2692
    %2926 = vmatprep.subr.bf16.mxu0 0
    %2927 = vmatpush1.bf16.msra.mxu0 %v2693
    %2928 = vmatprep.subr.bf16.mxu0 0
    %2929 = vmatpush1.bf16.msra.mxu0 %v2918
    %2930 = vmatprep.subr.bf16.mxu0 0
    %2931 = vmatpush1.bf16.msra.mxu0 0
    %2932 = vmatprep.subr.bf16.mxu0 0
    %2933 = vmatpush1.bf16.msra.mxu0 0
    %2934 = vmatprep.subr.bf16.mxu0 0
    %2935 = vmatpush1.bf16.msra.mxu0 0
    %2936 = vmatprep.subr.bf16.mxu0 0
    %2937 = vmatpush1.bf16.msra.mxu0 0
    %2938 = vmatprep.subr.bf16.mxu0 0
    %2939 = vmatpush1.bf16.msra.mxu0 0
    %2940 = vmatprep.subr.bf16.mxu0 0
    %2941 = vmatpush1.bf16.msra.mxu0 0
    %2942 = vmatprep.subr.bf16.mxu0 0
    %2943 = vmatpush1.bf16.msra.mxu0 0
    %2944 = vmatprep.subr.bf16.mxu0 0
    %2945 = vmatpush1.bf16.msra.mxu0 0
    %2946 = vmatprep.subr.bf16.mxu0 0
    %2947 = vmatpush1.bf16.msra.mxu0 0
    %2948 = vmatprep.subr.bf16.mxu0 0
    %2949 = vmatpush1.bf16.msra.mxu0 0
    %2950 = vmatprep.subr.bf16.mxu0 0
    %2951 = vmatpush1.bf16.msra.mxu0 0
    %2952 = vmatprep.mubr.bf16.mxu0 0
    %2953 = vmatmul.mubr.bf16.gmra.mrb[0].mxu0 %v2701
    %v2954 = vpop.f32.mrb[0].mxu0
    %v2955 = vadd.f32 0.0, %v2954
    %v2956 = vpop.f32.mrb[0].mxu0
    %v2957 = vpop.f32.mrb[0].mxu0
    %v2958 = vadd.f32 0.0, %v2957
    %v2959 = vpop.f32.mrb[0].mxu0
    %2960 = vmatprep.mubr.bf16.mxu0 0
    %2961 = vmatmul.mubr.bf16.gmra.mrb[0].mxu0 %v2704
    %v2962 = vpop.f32.mrb[0].mxu0
    %v2963 = vadd.f32 0.0, %v2962
    %v2964 = vpop.f32.mrb[0].mxu0
    %v2965 = vpop.f32.mrb[0].mxu0
    %v2966 = vadd.f32 0.0, %v2965
    %v2967 = vpop.f32.mrb[0].mxu0
    %2968 = vmatprep.mubr.bf16.mxu0 0
    %2969 = vmatmul.mubr.bf16.gmra.mrb[0].mxu0 %v2707
    %v2970 = vpop.f32.mrb[0].mxu0
    %v2971 = vadd.f32 0.0, %v2970
    %v2972 = vpop.f32.mrb[0].mxu0
    %v2973 = vpop.f32.mrb[0].mxu0
    %v2974 = vadd.f32 0.0, %v2973
    %v2975 = vpop.f32.mrb[0].mxu0
    %2976 = vmatprep.mubr.bf16.mxu0 0
    %2977 = vmatmul.mubr.bf16.gmra.mrb[0].mxu0 %v2710
    %v2978 = vpop.f32.mrb[0].mxu0
    %v2979 = vadd.f32 0.0, %v2978
    %v2980 = vpop.f32.mrb[0].mxu0
    %v2981 = vpop.f32.mrb[0].mxu0
    %v2982 = vadd.f32 0.0, %v2981
    %v2983 = vpop.f32.mrb[0].mxu0
    %2984 = vmatprep.mubr.bf16.mxu0 0
    %2985 = vmatmul.mubr.bf16.gmra.mrb[0].mxu0 %v2713
    %v2986 = vpop.f32.mrb[0].mxu0
    %v2987 = vadd.f32 0.0, %v2986
    %v2988 = vpop.f32.mrb[0].mxu0
    %v2989 = vpop.f32.mrb[0].mxu0
    %v2990 = vadd.f32 0.0, %v2989
    %v2991 = vpop.f32.mrb[0].mxu0
    %2992 = vmatprep.mubr.bf16.mxu0 0
    %2993 = vmatmul.mubr.bf16.gmra.mrb[0].mxu0 %v2716
    %v2994 = vpop.f32.mrb[0].mxu0
    %v2995 = vadd.f32 0.0, %v2994
    %v2996 = vpop.f32.mrb[0].mxu0
    %v2997 = vpop.f32.mrb[0].mxu0
    %v2998 = vadd.f32 0.0, %v2997
    %v2999 = vpop.f32.mrb[0].mxu0
    %3000 = vmatprep.mubr.bf16.mxu0 0
    %3001 = vmatmul.mubr.bf16.gmra.mrb[0].mxu0 %v2719
    %v3002 = vpop.f32.mrb[0].mxu0
    %v3003 = vadd.f32 0.0, %v3002
    %v3004 = vpop.f32.mrb[0].mxu0
    %v3005 = vpop.f32.mrb[0].mxu0
    %v3006 = vadd.f32 0.0, %v3005
    %v3007 = vpop.f32.mrb[0].mxu0
    %3008 = vmatprep.mubr.bf16.mxu0 0
    %3009 = vmatmul.mubr.bf16.gmra.mrb[0].mxu0 %v2722
    %v3010 = vpop.f32.mrb[0].mxu0
    %v3011 = vadd.f32 0.0, %v3010
    %v3012 = vpop.f32.mrb[0].mxu0
    %v3013 = vpop.f32.mrb[0].mxu0
    %v3014 = vadd.f32 0.0, %v3013
    %v3015 = vpop.f32.mrb[0].mxu0
    %3016 = vmatprep.mubr.bf16.mxu0 0
    %3017 = vmatmul.mubr.bf16.gmra.mrb[0].mxu0 %v2725
    %v3018 = vpop.f32.mrb[0].mxu0
    %v3019 = vadd.f32 0.0, %v3018
    %v3020 = vpop.f32.mrb[0].mxu0
    %v3021 = vpop.f32.mrb[0].mxu0
    %v3022 = vadd.f32 0.0, %v3021
    %v3023 = vpop.f32.mrb[0].mxu0
    %3024 = vmatprep.mubr.bf16.mxu0 0
    %3025 = vmatmul.mubr.bf16.gmra.mrb[0].mxu0 %v2728
    %v3026 = vpop.f32.mrb[0].mxu0
    %v3027 = vadd.f32 0.0, %v3026
    %v3028 = vpop.f32.mrb[0].mxu0
    %v3029 = vpop.f32.mrb[0].mxu0
    %v3030 = vadd.f32 0.0, %v3029
    %v3031 = vpop.f32.mrb[0].mxu0
    %3032 = vmatprep.mubr.bf16.mxu0 0
    %3033 = vmatmul.mubr.bf16.gmra.mrb[0].mxu0 %v2731
    %v3034 = vpop.f32.mrb[0].mxu0
    %v3035 = vadd.f32 0.0, %v3034
    %v3036 = vpop.f32.mrb[0].mxu0
    %v3037 = vpop.f32.mrb[0].mxu0
    %v3038 = vadd.f32 0.0, %v3037
    %v3039 = vpop.f32.mrb[0].mxu0
    %3040 = vmatprep.mubr.bf16.mxu0 0
    %3041 = vmatmul.mubr.bf16.gmra.mrb[0].mxu0 %v2734
    %v3042 = vpop.f32.mrb[0].mxu0
    %v3043 = vadd.f32 0.0, %v3042
    %v3044 = vpop.f32.mrb[0].mxu0
    %v3045 = vpop.f32.mrb[0].mxu0
    %v3046 = vadd.f32 0.0, %v3045
    %v3047 = vpop.f32.mrb[0].mxu0
    %3048 = vmatprep.mubr.bf16.mxu0 0
    %3049 = vmatmul.mubr.bf16.gmra.mrb[0].mxu0 %v2737
    %v3050 = vpop.f32.mrb[0].mxu0
    %v3051 = vadd.f32 0.0, %v3050
    %v3052 = vpop.f32.mrb[0].mxu0
    %v3053 = vpop.f32.mrb[0].mxu0
    %v3054 = vadd.f32 0.0, %v3053
    %v3055 = vpop.f32.mrb[0].mxu0
    %3056 = vmatprep.mubr.bf16.mxu0 0
    %3057 = vmatmul.mubr.bf16.gmra.mrb[0].mxu0 %v2740
    %v3058 = vpop.f32.mrb[0].mxu0
    %v3059 = vadd.f32 0.0, %v3058
    %v3060 = vpop.f32.mrb[0].mxu0
    %v3061 = vpop.f32.mrb[0].mxu0
    %v3062 = vadd.f32 0.0, %v3061
    %v3063 = vpop.f32.mrb[0].mxu0
    %3064 = vmatprep.mubr.bf16.mxu0 0
    %3065 = vmatmul.mubr.bf16.gmra.mrb[0].mxu0 %v2743
    %v3066 = vpop.f32.mrb[0].mxu0
    %v3067 = vadd.f32 0.0, %v3066
    %v3068 = vpop.f32.mrb[0].mxu0
    %v3069 = vpop.f32.mrb[0].mxu0
    %v3070 = vadd.f32 0.0, %v3069
    %v3071 = vpop.f32.mrb[0].mxu0
    %3072 = vmatprep.mubr.bf16.mxu0 0
    %3073 = vmatmul.mubr.bf16.gmra.mrb[0].mxu0 %v2746
    %v3074 = vpop.f32.mrb[0].mxu0
    %v3075 = vadd.f32 0.0, %v3074
    %v3076 = vpop.f32.mrb[0].mxu0
    %v3077 = vpop.f32.mrb[0].mxu0
    %v3078 = vadd.f32 0.0, %v3077
    %v3079 = vpop.f32.mrb[0].mxu0
    %3080 = vmatprep.mubr.bf16.mxu0 0
    %3081 = vmatmul.mubr.bf16.gmra.mrb[0].mxu0 %v2749
    %v3082 = vpop.f32.mrb[0].mxu0
    %v3083 = vadd.f32 0.0, %v3082
    %v3084 = vpop.f32.mrb[0].mxu0
    %v3085 = vpop.f32.mrb[0].mxu0
    %v3086 = vadd.f32 0.0, %v3085
    %v3087 = vpop.f32.mrb[0].mxu0
    %3088 = vmatprep.mubr.bf16.mxu0 0
    %3089 = vmatmul.mubr.bf16.gmra.mrb[0].mxu0 %v2752
    %v3090 = vpop.f32.mrb[0].mxu0
    %v3091 = vadd.f32 0.0, %v3090
    %v3092 = vpop.f32.mrb[0].mxu0
    %v3093 = vpop.f32.mrb[0].mxu0
    %v3094 = vadd.f32 0.0, %v3093
    %v3095 = vpop.f32.mrb[0].mxu0
    %3096 = vmatprep.mubr.bf16.mxu0 0
    %3097 = vmatmul.mubr.bf16.gmra.mrb[0].mxu0 %v2755
    %v3098 = vpop.f32.mrb[0].mxu0
    %v3099 = vadd.f32 0.0, %v3098
    %v3100 = vpop.f32.mrb[0].mxu0
    %v3101 = vpop.f32.mrb[0].mxu0
    %v3102 = vadd.f32 0.0, %v3101
    %v3103 = vpop.f32.mrb[0].mxu0
    %3104 = vmatprep.mubr.bf16.mxu0 0
    %3105 = vmatmul.mubr.bf16.gmra.mrb[0].mxu0 %v2758
    %v3106 = vpop.f32.mrb[0].mxu0
    %v3107 = vadd.f32 0.0, %v3106
    %v3108 = vpop.f32.mrb[0].mxu0
    %v3109 = vpop.f32.mrb[0].mxu0
    %v3110 = vadd.f32 0.0, %v3109
    %v3111 = vpop.f32.mrb[0].mxu0
    %3112 = vmatprep.mubr.bf16.mxu0 0
    %3113 = vmatmul.mubr.bf16.gmra.mrb[0].mxu0 %v2761
    %v3114 = vpop.f32.mrb[0].mxu0
    %v3115 = vadd.f32 0.0, %v3114
    %v3116 = vpop.f32.mrb[0].mxu0
    %v3117 = vpop.f32.mrb[0].mxu0
    %v3118 = vadd.f32 0.0, %v3117
    %v3119 = vpop.f32.mrb[0].mxu0
    %3120 = vmatprep.mubr.bf16.mxu0 0
    %3121 = vmatmul.mubr.bf16.gmra.mrb[0].mxu0 %v2764
    %v3122 = vpop.f32.mrb[0].mxu0
    %v3123 = vadd.f32 0.0, %v3122
    %v3124 = vpop.f32.mrb[0].mxu0
    %v3125 = vpop.f32.mrb[0].mxu0
    %v3126 = vadd.f32 0.0, %v3125
    %v3127 = vpop.f32.mrb[0].mxu0
    %3128 = vmatprep.mubr.bf16.mxu0 0
    %3129 = vmatmul.mubr.bf16.gmra.mrb[0].mxu0 %v2767
    %v3130 = vpop.f32.mrb[0].mxu0
    %v3131 = vadd.f32 0.0, %v3130
    %v3132 = vpop.f32.mrb[0].mxu0
    %v3133 = vpop.f32.mrb[0].mxu0
    %v3134 = vadd.f32 0.0, %v3133
    %v3135 = vpop.f32.mrb[0].mxu0
    %3136 = vmatprep.mubr.bf16.mxu0 0
    %3137 = vmatmul.mubr.bf16.gmra.mrb[0].mxu0 %v2770
    %v3138 = vpop.f32.mrb[0].mxu0
    %v3139 = vadd.f32 0.0, %v3138
    %v3140 = vpop.f32.mrb[0].mxu0
    %v3141 = vpop.f32.mrb[0].mxu0
    %v3142 = vadd.f32 0.0, %v3141
    %v3143 = vpop.f32.mrb[0].mxu0
    %3144 = vmatprep.mubr.bf16.mxu0 0
    %3145 = vmatmul.mubr.bf16.gmra.mrb[0].mxu0 %v2773
    %v3146 = vpop.f32.mrb[0].mxu0
    %v3147 = vadd.f32 0.0, %v3146
    %v3148 = vpop.f32.mrb[0].mxu0
    %v3149 = vpop.f32.mrb[0].mxu0
    %v3150 = vadd.f32 0.0, %v3149
    %v3151 = vpop.f32.mrb[0].mxu0
    %3152 = vmatprep.mubr.bf16.mxu0 0
    %3153 = vmatmul.mubr.bf16.gmra.mrb[0].mxu0 %v2776
    %v3154 = vpop.f32.mrb[0].mxu0
    %v3155 = vadd.f32 0.0, %v3154
    %v3156 = vpop.f32.mrb[0].mxu0
    %v3157 = vpop.f32.mrb[0].mxu0
    %v3158 = vadd.f32 0.0, %v3157
    %v3159 = vpop.f32.mrb[0].mxu0
    %3160 = vmatprep.mubr.bf16.mxu0 0
    %3161 = vmatmul.mubr.bf16.gmra.mrb[0].mxu0 %v2779
    %v3162 = vpop.f32.mrb[0].mxu0
    %v3163 = vadd.f32 0.0, %v3162
    %v3164 = vpop.f32.mrb[0].mxu0
    %v3165 = vpop.f32.mrb[0].mxu0
    %v3166 = vadd.f32 0.0, %v3165
    %v3167 = vpop.f32.mrb[0].mxu0
    %3168 = vmatprep.mubr.bf16.mxu0 0
    %3169 = vmatmul.mubr.bf16.gmra.mrb[0].mxu0 %v2782
    %v3170 = vpop.f32.mrb[0].mxu0
    %v3171 = vadd.f32 0.0, %v3170
    %v3172 = vpop.f32.mrb[0].mxu0
    %v3173 = vpop.f32.mrb[0].mxu0
    %v3174 = vadd.f32 0.0, %v3173
    %v3175 = vpop.f32.mrb[0].mxu0
    %3176 = vmatprep.mubr.bf16.mxu0 0
    %3177 = vmatmul.mubr.bf16.gmra.mrb[0].mxu0 %v2785
    %v3178 = vpop.f32.mrb[0].mxu0
    %v3179 = vadd.f32 0.0, %v3178
    %v3180 = vpop.f32.mrb[0].mxu0
    %v3181 = vpop.f32.mrb[0].mxu0
    %v3182 = vadd.f32 0.0, %v3181
    %v3183 = vpop.f32.mrb[0].mxu0
    %3184 = vmatprep.mubr.bf16.mxu0 0
    %3185 = vmatmul.mubr.bf16.gmra.mrb[0].mxu0 %v2788
    %v3186 = vpop.f32.mrb[0].mxu0
    %v3187 = vadd.f32 0.0, %v3186
    %v3188 = vpop.f32.mrb[0].mxu0
    %v3189 = vpop.f32.mrb[0].mxu0
    %v3190 = vadd.f32 0.0, %v3189
    %v3191 = vpop.f32.mrb[0].mxu0
    %3192 = vmatprep.mubr.bf16.mxu0 0
    %3193 = vmatmul.mubr.bf16.gmra.mrb[0].mxu0 %v2791
    %v3194 = vpop.f32.mrb[0].mxu0
    %v3195 = vadd.f32 0.0, %v3194
    %v3196 = vpop.f32.mrb[0].mxu0
    %v3197 = vpop.f32.mrb[0].mxu0
    %v3198 = vadd.f32 0.0, %v3197
    %v3199 = vpop.f32.mrb[0].mxu0
    %3200 = vmatprep.mubr.bf16.mxu0 0
    %3201 = vmatmul.mubr.bf16.gmra.mrb[0].mxu0 %v2794
    %v3202 = vpop.f32.mrb[0].mxu0
    %v3203 = vadd.f32 0.0, %v3202
    %v3204 = vpop.f32.mrb[0].mxu0
    %v3205 = vpop.f32.mrb[0].mxu0
    %v3206 = vadd.f32 0.0, %v3205
    %v3207 = vpop.f32.mrb[0].mxu0
    %3208 = vmatprep.mubr.bf16.mxu0 0
    %3209 = vmatmul.mubr.bf16.gmra.mrb[0].mxu0 %v2797
    %v3210 = vpop.f32.mrb[0].mxu0
    %v3211 = vadd.f32 0.0, %v3210
    %v3212 = vpop.f32.mrb[0].mxu0
    %v3213 = vpop.f32.mrb[0].mxu0
    %v3214 = vadd.f32 0.0, %v3213
    %v3215 = vpop.f32.mrb[0].mxu0
    %3216 = vmatprep.mubr.bf16.mxu0 0
    %3217 = vmatmul.mubr.bf16.gmra.mrb[0].mxu0 %v2800
    %v3218 = vpop.f32.mrb[0].mxu0
    %v3219 = vadd.f32 0.0, %v3218
    %v3220 = vpop.f32.mrb[0].mxu0
    %v3221 = vpop.f32.mrb[0].mxu0
    %v3222 = vadd.f32 0.0, %v3221
    %v3223 = vpop.f32.mrb[0].mxu0
    %3224 = vmatprep.mubr.bf16.mxu0 0
    %3225 = vmatmul.mubr.bf16.gmra.mrb[0].mxu0 %v2803
    %v3226 = vpop.f32.mrb[0].mxu0
    %v3227 = vadd.f32 0.0, %v3226
    %v3228 = vpop.f32.mrb[0].mxu0
    %v3229 = vpop.f32.mrb[0].mxu0
    %v3230 = vadd.f32 0.0, %v3229
    %v3231 = vpop.f32.mrb[0].mxu0
    %3232 = vmatprep.mubr.bf16.mxu0 0
    %3233 = vmatmul.mubr.bf16.gmra.mrb[0].mxu0 %v2806
    %v3234 = vpop.f32.mrb[0].mxu0
    %v3235 = vadd.f32 0.0, %v3234
    %v3236 = vpop.f32.mrb[0].mxu0
    %v3237 = vpop.f32.mrb[0].mxu0
    %v3238 = vadd.f32 0.0, %v3237
    %v3239 = vpop.f32.mrb[0].mxu0
    %3240 = vmatprep.mubr.bf16.mxu0 0
    %3241 = vmatmul.mubr.bf16.gmra.mrb[0].mxu0 %v2809
    %v3242 = vpop.f32.mrb[0].mxu0
    %v3243 = vadd.f32 0.0, %v3242
    %v3244 = vpop.f32.mrb[0].mxu0
    %v3245 = vpop.f32.mrb[0].mxu0
    %v3246 = vadd.f32 0.0, %v3245
    %v3247 = vpop.f32.mrb[0].mxu0
    %3248 = vmatprep.mubr.bf16.mxu0 0
    %3249 = vmatmul.mubr.bf16.gmra.mrb[0].mxu0 %v2812
    %v3250 = vpop.f32.mrb[0].mxu0
    %v3251 = vadd.f32 0.0, %v3250
    %v3252 = vpop.f32.mrb[0].mxu0
    %v3253 = vpop.f32.mrb[0].mxu0
    %v3254 = vadd.f32 0.0, %v3253
    %v3255 = vpop.f32.mrb[0].mxu0
    %3256 = vmatprep.mubr.bf16.mxu0 0
    %3257 = vmatmul.mubr.bf16.gmra.mrb[0].mxu0 %v2815
    %v3258 = vpop.f32.mrb[0].mxu0
    %v3259 = vadd.f32 0.0, %v3258
    %v3260 = vpop.f32.mrb[0].mxu0
    %v3261 = vpop.f32.mrb[0].mxu0
    %v3262 = vadd.f32 0.0, %v3261
    %v3263 = vpop.f32.mrb[0].mxu0
    %3264 = vmatprep.mubr.bf16.mxu0 0
    %3265 = vmatmul.mubr.bf16.gmra.mrb[0].mxu0 %v2818
    %v3266 = vpop.f32.mrb[0].mxu0
    %v3267 = vadd.f32 0.0, %v3266
    %v3268 = vpop.f32.mrb[0].mxu0
    %v3269 = vpop.f32.mrb[0].mxu0
    %v3270 = vadd.f32 0.0, %v3269
    %v3271 = vpop.f32.mrb[0].mxu0
    %3272 = vmatprep.mubr.bf16.mxu0 0
    %3273 = vmatmul.mubr.bf16.gmra.mrb[0].mxu0 %v2821
    %v3274 = vpop.f32.mrb[0].mxu0
    %v3275 = vadd.f32 0.0, %v3274
    %v3276 = vpop.f32.mrb[0].mxu0
    %v3277 = vpop.f32.mrb[0].mxu0
    %v3278 = vadd.f32 0.0, %v3277
    %v3279 = vpop.f32.mrb[0].mxu0
    %3280 = vmatprep.mubr.bf16.mxu0 0
    %3281 = vmatmul.mubr.bf16.gmra.mrb[0].mxu0 %v2824
    %v3282 = vpop.f32.mrb[0].mxu0
    %v3283 = vadd.f32 0.0, %v3282
    %v3284 = vpop.f32.mrb[0].mxu0
    %v3285 = vpop.f32.mrb[0].mxu0
    %v3286 = vadd.f32 0.0, %v3285
    %v3287 = vpop.f32.mrb[0].mxu0
    %3288 = vmatprep.mubr.bf16.mxu0 0
    %3289 = vmatmul.mubr.bf16.gmra.mrb[0].mxu0 %v2827
    %v3290 = vpop.f32.mrb[0].mxu0
    %v3291 = vadd.f32 0.0, %v3290
    %v3292 = vpop.f32.mrb[0].mxu0
    %v3293 = vpop.f32.mrb[0].mxu0
    %v3294 = vadd.f32 0.0, %v3293
    %v3295 = vpop.f32.mrb[0].mxu0
    %3296 = vmatprep.mubr.bf16.mxu0 0
    %3297 = vmatmul.mubr.bf16.gmra.mrb[0].mxu0 %v2830
    %v3298 = vpop.f32.mrb[0].mxu0
    %v3299 = vadd.f32 0.0, %v3298
    %v3300 = vpop.f32.mrb[0].mxu0
    %v3301 = vpop.f32.mrb[0].mxu0
    %v3302 = vadd.f32 0.0, %v3301
    %v3303 = vpop.f32.mrb[0].mxu0
    %3304 = vmatprep.mubr.bf16.mxu0 0
    %3305 = vmatmul.mubr.bf16.gmra.mrb[0].mxu0 %v2833
    %v3306 = vpop.f32.mrb[0].mxu0
    %v3307 = vadd.f32 0.0, %v3306
    %v3308 = vpop.f32.mrb[0].mxu0
    %v3309 = vpop.f32.mrb[0].mxu0
    %v3310 = vadd.f32 0.0, %v3309
    %v3311 = vpop.f32.mrb[0].mxu0
    %3312 = vmatprep.mubr.bf16.mxu0 0
    %3313 = vmatmul.mubr.bf16.gmra.mrb[0].mxu0 %v2836
    %v3314 = vpop.f32.mrb[0].mxu0
    %v3315 = vadd.f32 0.0, %v3314
    %v3316 = vpop.f32.mrb[0].mxu0
    %v3317 = vpop.f32.mrb[0].mxu0
    %v3318 = vadd.f32 0.0, %v3317
    %v3319 = vpop.f32.mrb[0].mxu0
    %3320 = vmatprep.mubr.bf16.mxu0 0
    %3321 = vmatmul.mubr.bf16.gmra.mrb[0].mxu0 %v2839
    %v3322 = vpop.f32.mrb[0].mxu0
    %v3323 = vadd.f32 0.0, %v3322
    %v3324 = vpop.f32.mrb[0].mxu0
    %v3325 = vpop.f32.mrb[0].mxu0
    %v3326 = vadd.f32 0.0, %v3325
    %v3327 = vpop.f32.mrb[0].mxu0
    %3328 = vmatprep.mubr.bf16.mxu0 0
    %3329 = vmatmul.mubr.bf16.gmra.mrb[0].mxu0 %v2842
    %v3330 = vpop.f32.mrb[0].mxu0
    %v3331 = vadd.f32 0.0, %v3330
    %v3332 = vpop.f32.mrb[0].mxu0
    %v3333 = vpop.f32.mrb[0].mxu0
    %v3334 = vadd.f32 0.0, %v3333
    %v3335 = vpop.f32.mrb[0].mxu0
    %3336 = vmatprep.mubr.bf16.mxu0 0
    %3337 = vmatmul.mubr.bf16.gmra.mrb[0].mxu0 %v2845
    %v3338 = vpop.f32.mrb[0].mxu0
    %v3339 = vadd.f32 0.0, %v3338
    %v3340 = vpop.f32.mrb[0].mxu0
    %v3341 = vpop.f32.mrb[0].mxu0
    %v3342 = vadd.f32 0.0, %v3341
    %v3343 = vpop.f32.mrb[0].mxu0
    %3344 = vmatprep.mubr.bf16.mxu0 0
    %3345 = vmatmul.mubr.bf16.gmra.mrb[0].mxu0 %v2848
    %v3346 = vpop.f32.mrb[0].mxu0
    %v3347 = vadd.f32 0.0, %v3346
    %v3348 = vpop.f32.mrb[0].mxu0
    %v3349 = vpop.f32.mrb[0].mxu0
    %v3350 = vadd.f32 0.0, %v3349
    %v3351 = vpop.f32.mrb[0].mxu0
    %3352 = vmatprep.mubr.bf16.mxu0 0
    %3353 = vmatmul.mubr.bf16.gmra.mrb[0].mxu0 %v2851
    %v3354 = vpop.f32.mrb[0].mxu0
    %v3355 = vadd.f32 0.0, %v3354
    %v3356 = vpop.f32.mrb[0].mxu0
    %v3357 = vpop.f32.mrb[0].mxu0
    %v3358 = vadd.f32 0.0, %v3357
    %v3359 = vpop.f32.mrb[0].mxu0
    %3360 = vmatprep.mubr.bf16.mxu0 0
    %3361 = vmatmul.mubr.bf16.gmra.mrb[0].mxu0 %v2854
    %v3362 = vpop.f32.mrb[0].mxu0
    %v3363 = vadd.f32 0.0, %v3362
    %v3364 = vpop.f32.mrb[0].mxu0
    %v3365 = vpop.f32.mrb[0].mxu0
    %v3366 = vadd.f32 0.0, %v3365
    %v3367 = vpop.f32.mrb[0].mxu0
    %3368 = vmatprep.mubr.bf16.mxu0 0
    %3369 = vmatmul.mubr.bf16.gmra.mrb[0].mxu0 %v2857
    %v3370 = vpop.f32.mrb[0].mxu0
    %v3371 = vadd.f32 0.0, %v3370
    %v3372 = vpop.f32.mrb[0].mxu0
    %v3373 = vpop.f32.mrb[0].mxu0
    %v3374 = vadd.f32 0.0, %v3373
    %v3375 = vpop.f32.mrb[0].mxu0
    %3376 = vmatprep.mubr.bf16.mxu0 0
    %3377 = vmatmul.mubr.bf16.gmra.mrb[0].mxu0 %v2860
    %v3378 = vpop.f32.mrb[0].mxu0
    %v3379 = vadd.f32 0.0, %v3378
    %v3380 = vpop.f32.mrb[0].mxu0
    %v3381 = vpop.f32.mrb[0].mxu0
    %v3382 = vadd.f32 0.0, %v3381
    %v3383 = vpop.f32.mrb[0].mxu0
    %3384 = vmatprep.mubr.bf16.mxu0 0
    %3385 = vmatmul.mubr.bf16.gmra.mrb[0].mxu0 %v2863
    %v3386 = vpop.f32.mrb[0].mxu0
    %v3387 = vadd.f32 0.0, %v3386
    %v3388 = vpop.f32.mrb[0].mxu0
    %v3389 = vpop.f32.mrb[0].mxu0
    %v3390 = vadd.f32 0.0, %v3389
    %v3391 = vpop.f32.mrb[0].mxu0
    %3392 = vmatprep.mubr.bf16.mxu0 0
    %3393 = vmatmul.mubr.bf16.gmra.mrb[0].mxu0 %v2866
    %v3394 = vpop.f32.mrb[0].mxu0
    %v3395 = vadd.f32 0.0, %v3394
    %v3396 = vpop.f32.mrb[0].mxu0
    %v3397 = vpop.f32.mrb[0].mxu0
    %v3398 = vadd.f32 0.0, %v3397
    %v3399 = vpop.f32.mrb[0].mxu0
    %3400 = vmatprep.mubr.bf16.mxu0 0
    %3401 = vmatmul.mubr.bf16.gmra.mrb[0].mxu0 %v2869
    %v3402 = vpop.f32.mrb[0].mxu0
    %v3403 = vadd.f32 0.0, %v3402
    %v3404 = vpop.f32.mrb[0].mxu0
    %v3405 = vpop.f32.mrb[0].mxu0
    %v3406 = vadd.f32 0.0, %v3405
    %v3407 = vpop.f32.mrb[0].mxu0
    %3408 = vmatprep.mubr.bf16.mxu0 0
    %3409 = vmatmul.mubr.bf16.gmra.mrb[0].mxu0 %v2872
    %v3410 = vpop.f32.mrb[0].mxu0
    %v3411 = vadd.f32 0.0, %v3410
    %v3412 = vpop.f32.mrb[0].mxu0
    %v3413 = vpop.f32.mrb[0].mxu0
    %v3414 = vadd.f32 0.0, %v3413
    %v3415 = vpop.f32.mrb[0].mxu0
    %3416 = vmatprep.mubr.bf16.mxu0 0
    %3417 = vmatmul.mubr.bf16.gmra.mrb[0].mxu0 %v2875
    %v3418 = vpop.f32.mrb[0].mxu0
    %v3419 = vadd.f32 0.0, %v3418
    %v3420 = vpop.f32.mrb[0].mxu0
    %v3421 = vpop.f32.mrb[0].mxu0
    %v3422 = vadd.f32 0.0, %v3421
    %v3423 = vpop.f32.mrb[0].mxu0
    %3424 = vmatprep.mubr.bf16.mxu0 0
    %3425 = vmatmul.mubr.bf16.gmra.mrb[0].mxu0 %v2878
    %v3426 = vpop.f32.mrb[0].mxu0
    %v3427 = vadd.f32 0.0, %v3426
    %v3428 = vpop.f32.mrb[0].mxu0
    %v3429 = vpop.f32.mrb[0].mxu0
    %v3430 = vadd.f32 0.0, %v3429
    %v3431 = vpop.f32.mrb[0].mxu0
    %3432 = vmatprep.mubr.bf16.mxu0 0
    %3433 = vmatmul.mubr.bf16.gmra.mrb[0].mxu0 %v2881
    %v3434 = vpop.f32.mrb[0].mxu0
    %v3435 = vadd.f32 0.0, %v3434
    %v3436 = vpop.f32.mrb[0].mxu0
    %v3437 = vpop.f32.mrb[0].mxu0
    %v3438 = vadd.f32 0.0, %v3437
    %v3439 = vpop.f32.mrb[0].mxu0
    %3440 = vmatprep.mubr.bf16.mxu0 0
    %3441 = vmatmul.mubr.bf16.gmra.mrb[0].mxu0 %v2884
    %v3442 = vpop.f32.mrb[0].mxu0
    %v3443 = vadd.f32 0.0, %v3442
    %v3444 = vpop.f32.mrb[0].mxu0
    %v3445 = vpop.f32.mrb[0].mxu0
    %v3446 = vadd.f32 0.0, %v3445
    %v3447 = vpop.f32.mrb[0].mxu0
    %3448 = vmatprep.mubr.bf16.mxu0 0
    %3449 = vmatmul.mubr.bf16.gmra.mrb[0].mxu0 %v2887
    %v3450 = vpop.f32.mrb[0].mxu0
    %v3451 = vadd.f32 0.0, %v3450
    %v3452 = vpop.f32.mrb[0].mxu0
    %v3453 = vpop.f32.mrb[0].mxu0
    %v3454 = vadd.f32 0.0, %v3453
    %v3455 = vpop.f32.mrb[0].mxu0
    %3456 = vmatprep.mubr.bf16.mxu0 0
    %3457 = vmatmul.mubr.bf16.gmra.mrb[0].mxu0 %v2890
    %v3458 = vpop.f32.mrb[0].mxu0
    %v3459 = vadd.f32 0.0, %v3458
    %v3460 = vpop.f32.mrb[0].mxu0
    %v3461 = vpop.f32.mrb[0].mxu0
    %v3462 = vadd.f32 0.0, %v3461
    %v3463 = vpop.f32.mrb[0].mxu0
    %3464 = vmatprep.mubr.bf16.mxu0 0
    %3465 = vmatmul.mubr.bf16.gmra.mrb[0].mxu0 %v2893
    %v3466 = vpop.f32.mrb[0].mxu0
    %v3467 = vadd.f32 0.0, %v3466
    %v3468 = vpop.f32.mrb[0].mxu0
    %v3469 = vpop.f32.mrb[0].mxu0
    %v3470 = vadd.f32 0.0, %v3469
    %v3471 = vpop.f32.mrb[0].mxu0
    %3472 = vmatprep.mubr.bf16.mxu0 0
    %3473 = vmatmul.mubr.bf16.gmra.mrb[0].mxu0 %v2896
    %v3474 = vpop.f32.mrb[0].mxu0
    %v3475 = vadd.f32 0.0, %v3474
    %v3476 = vpop.f32.mrb[0].mxu0
    %v3477 = vpop.f32.mrb[0].mxu0
    %v3478 = vadd.f32 0.0, %v3477
    %v3479 = vpop.f32.mrb[0].mxu0
    %3480 = vmatprep.mubr.bf16.mxu0 0
    %3481 = vmatmul.mubr.bf16.gmra.mrb[0].mxu0 %v2899
    %v3482 = vpop.f32.mrb[0].mxu0
    %v3483 = vadd.f32 0.0, %v3482
    %v3484 = vpop.f32.mrb[0].mxu0
    %v3485 = vpop.f32.mrb[0].mxu0
    %v3486 = vadd.f32 0.0, %v3485
    %v3487 = vpop.f32.mrb[0].mxu0
    %3488 = vmatprep.mubr.bf16.mxu0 0
    %3489 = vmatmul.mubr.bf16.gmra.mrb[0].mxu0 %v2902
    %v3490 = vpop.f32.mrb[0].mxu0
    %v3491 = vadd.f32 0.0, %v3490
    %v3492 = vpop.f32.mrb[0].mxu0
    %v3493 = vpop.f32.mrb[0].mxu0
    %v3494 = vadd.f32 0.0, %v3493
    %v3495 = vpop.f32.mrb[0].mxu0
    %3496 = vmatprep.mubr.bf16.mxu0 0
    %3497 = vmatmul.mubr.bf16.gmra.mrb[0].mxu0 %v2905
    %v3498 = vpop.f32.mrb[0].mxu0
    %v3499 = vadd.f32 0.0, %v3498
    %v3500 = vpop.f32.mrb[0].mxu0
    %v3501 = vpop.f32.mrb[0].mxu0
    %v3502 = vadd.f32 0.0, %v3501
    %v3503 = vpop.f32.mrb[0].mxu0
    %3504 = vmatprep.mubr.bf16.mxu0 0
    %3505 = vmatmul.mubr.bf16.gmra.mrb[0].mxu0 %v2908
    %v3506 = vpop.f32.mrb[0].mxu0
    %v3507 = vadd.f32 0.0, %v3506
    %v3508 = vpop.f32.mrb[0].mxu0
    %v3509 = vpop.f32.mrb[0].mxu0
    %v3510 = vadd.f32 0.0, %v3509
    %v3511 = vpop.f32.mrb[0].mxu0
    %3512 = vmatprep.mubr.bf16.mxu0 0
    %3513 = vmatmul.mubr.bf16.gmra.mrb[0].mxu0 %v2911
    %v3514 = vpop.f32.mrb[0].mxu0
    %v3515 = vadd.f32 0.0, %v3514
    %v3516 = vpop.f32.mrb[0].mxu0
    %v3517 = vpop.f32.mrb[0].mxu0
    %v3518 = vadd.f32 0.0, %v3517
    %v3519 = vpop.f32.mrb[0].mxu0
    %3520 = vmatprep.mubr.bf16.mxu0 0
    %3521 = vmatmul.mubr.bf16.gmra.mrb[0].mxu0 %v2914
    %v3522 = vpop.f32.mrb[0].mxu0
    %v3523 = vadd.f32 0.0, %v3522
    %v3524 = vpop.f32.mrb[0].mxu0
    %v3525 = vpop.f32.mrb[0].mxu0
    %v3526 = vadd.f32 0.0, %v3525
    %v3527 = vpop.f32.mrb[0].mxu0
    %3528 = vdwg.mxu0
    %v3538 = vunpack.c.l.b16 %v2654
    %v3539 = vunpack.c.l.b16 %v2655
    %v3540 = vunpack.c.l.b16 %v2656
    %v3541 = vunpack.c.l.b16 %v2657
    %v3542 = vunpack.c.l.b16 %v2658
    %v3543 = vunpack.c.l.b16 %v2659
    %v3544 = vunpack.c.l.b16 %v2660
    %v3545 = vunpack.c.l.b16 %v2661
    %v3546 = vunpack.c.l.b16 %v2662
    %v3547 = vpack.c.b16 %v3539, %v3538
    %v3548 = vpack.c.b16 %v3541, %v3540
    %v3549 = vpack.c.b16 %v3543, %v3542
    %v3550 = vpack.c.b16 %v3545, %v3544
    %v3551 = vpack.c.b16 %v3546, %v3546
    %v3557 = vsel %vm2699, %v2510, 0
    %v3560 = vsel %vm2699, %v2511, 0
    %v3563 = vsel %vm2699, %v2512, 0
    %v3566 = vsel %vm2699, %v2513, 0
    %v3569 = vsel %vm2699, %v2514, 0
    %v3572 = vsel %vm2699, %v2515, 0
    %v3575 = vsel %vm2699, %v2516, 0
    %v3578 = vsel %vm2699, %v2517, 0
    %v3581 = vsel %vm2699, %v2518, 0
    %v3584 = vsel %vm2699, %v2519, 0
    %v3587 = vsel %vm2699, %v2520, 0
    %v3590 = vsel %vm2699, %v2521, 0
    %v3593 = vsel %vm2699, %v2522, 0
    %v3596 = vsel %vm2699, %v2523, 0
    %v3599 = vsel %vm2699, %v2524, 0
    %v3602 = vsel %vm2699, %v2525, 0
    %v3605 = vsel %vm2699, %v2526, 0
    %v3608 = vsel %vm2699, %v2527, 0
    %v3611 = vsel %vm2699, %v2528, 0
    %v3614 = vsel %vm2699, %v2529, 0
    %v3617 = vsel %vm2699, %v2530, 0
    %v3620 = vsel %vm2699, %v2531, 0
    %v3623 = vsel %vm2699, %v2532, 0
    %v3626 = vsel %vm2699, %v2533, 0
    %v3629 = vsel %vm2699, %v2534, 0
    %v3632 = vsel %vm2699, %v2535, 0
    %v3635 = vsel %vm2699, %v2536, 0
    %v3638 = vsel %vm2699, %v2537, 0
    %v3641 = vsel %vm2699, %v2538, 0
    %v3644 = vsel %vm2699, %v2539, 0
    %v3647 = vsel %vm2699, %v2540, 0
    %v3650 = vsel %vm2699, %v2541, 0
    %v3653 = vsel %vm2699, %v2542, 0
    %v3656 = vsel %vm2699, %v2543, 0
    %v3659 = vsel %vm2699, %v2544, 0
    %v3662 = vsel %vm2699, %v2545, 0
    %v3665 = vsel %vm2699, %v2546, 0
    %v3668 = vsel %vm2699, %v2547, 0
    %v3671 = vsel %vm2699, %v2548, 0
    %v3674 = vsel %vm2699, %v2549, 0
    %v3677 = vsel %vm2699, %v2550, 0
    %v3680 = vsel %vm2699, %v2551, 0
    %v3683 = vsel %vm2699, %v2552, 0
    %v3686 = vsel %vm2699, %v2553, 0
    %v3689 = vsel %vm2699, %v2554, 0
    %v3692 = vsel %vm2699, %v2555, 0
    %v3695 = vsel %vm2699, %v2556, 0
    %v3698 = vsel %vm2699, %v2557, 0
    %v3701 = vsel %vm2699, %v2558, 0
    %v3704 = vsel %vm2699, %v2559, 0
    %v3707 = vsel %vm2699, %v2560, 0
    %v3710 = vsel %vm2699, %v2561, 0
    %v3713 = vsel %vm2699, %v2562, 0
    %v3716 = vsel %vm2699, %v2563, 0
    %v3719 = vsel %vm2699, %v2564, 0
    %v3722 = vsel %vm2699, %v2565, 0
    %v3725 = vsel %vm2699, %v2566, 0
    %v3728 = vsel %vm2699, %v2567, 0
    %v3731 = vsel %vm2699, %v2568, 0
    %v3734 = vsel %vm2699, %v2569, 0
    %v3737 = vsel %vm2699, %v2570, 0
    %v3740 = vsel %vm2699, %v2571, 0
    %v3743 = vsel %vm2699, %v2572, 0
    %v3746 = vsel %vm2699, %v2573, 0
    %v3749 = vsel %vm2699, %v2574, 0
    %v3752 = vsel %vm2699, %v2575, 0
    %v3755 = vsel %vm2699, %v2576, 0
    %v3758 = vsel %vm2699, %v2577, 0
    %v3761 = vsel %vm2699, %v2578, 0
    %v3764 = vsel %vm2699, %v2579, 0
    %v3767 = vsel %vm2699, %v2580, 0
    %v3770 = vsel %vm2699, %v2581, 0
    %v3773 = vsel %vm2916, %v3551, 0
    %3775 = vmatprep.subr.bf16.mxu0 0
    %3776 = vmatpush1.bf16.msra.mxu0 %v3547
    %3777 = vmatprep.subr.bf16.mxu0 0
    %3778 = vmatpush1.bf16.msra.mxu0 %v3548
    %3779 = vmatprep.subr.bf16.mxu0 0
    %3780 = vmatpush1.bf16.msra.mxu0 %v3549
    %3781 = vmatprep.subr.bf16.mxu0 0
    %3782 = vmatpush1.bf16.msra.mxu0 %v3550
    %3783 = vmatprep.subr.bf16.mxu0 0
    %3784 = vmatpush1.bf16.msra.mxu0 %v3773
    %3785 = vmatprep.subr.bf16.mxu0 0
    %3786 = vmatpush1.bf16.msra.mxu0 0
    %3787 = vmatprep.subr.bf16.mxu0 0
    %3788 = vmatpush1.bf16.msra.mxu0 0
    %3789 = vmatprep.subr.bf16.mxu0 0
    %3790 = vmatpush1.bf16.msra.mxu0 0
    %3791 = vmatprep.subr.bf16.mxu0 0
    %3792 = vmatpush1.bf16.msra.mxu0 0
    %3793 = vmatprep.subr.bf16.mxu0 0
    %3794 = vmatpush1.bf16.msra.mxu0 0
    %3795 = vmatprep.subr.bf16.mxu0 0
    %3796 = vmatpush1.bf16.msra.mxu0 0
    %3797 = vmatprep.subr.bf16.mxu0 0
    %3798 = vmatpush1.bf16.msra.mxu0 0
    %3799 = vmatprep.subr.bf16.mxu0 0
    %3800 = vmatpush1.bf16.msra.mxu0 0
    %3801 = vmatprep.subr.bf16.mxu0 0
    %3802 = vmatpush1.bf16.msra.mxu0 0
    %3803 = vmatprep.subr.bf16.mxu0 0
    %3804 = vmatpush1.bf16.msra.mxu0 0
    %3805 = vmatprep.subr.bf16.mxu0 0
    %3806 = vmatpush1.bf16.msra.mxu0 0
    %3807 = vmatprep.mubr.bf16.mxu0 0
    %3808 = vmatmul.mubr.bf16.gmra.mrb[0].mxu0 %v3557
    %v3809 = vpop.f32.mrb[0].mxu0
    %v3810 = vadd.f32 %v2955, %v3809
    %v3811 = vpop.f32.mrb[0].mxu0
    %v3812 = vpop.f32.mrb[0].mxu0
    %v3813 = vadd.f32 %v2958, %v3812
    %v3814 = vpop.f32.mrb[0].mxu0
    %3815 = vmatprep.mubr.bf16.mxu0 0
    %3816 = vmatmul.mubr.bf16.gmra.mrb[0].mxu0 %v3560
    %v3817 = vpop.f32.mrb[0].mxu0
    %v3818 = vadd.f32 %v2963, %v3817
    %v3819 = vpop.f32.mrb[0].mxu0
    %v3820 = vpop.f32.mrb[0].mxu0
    %v3821 = vadd.f32 %v2966, %v3820
    %v3822 = vpop.f32.mrb[0].mxu0
    %3823 = vmatprep.mubr.bf16.mxu0 0
    %3824 = vmatmul.mubr.bf16.gmra.mrb[0].mxu0 %v3563
    %v3825 = vpop.f32.mrb[0].mxu0
    %v3826 = vadd.f32 %v2971, %v3825
    %v3827 = vpop.f32.mrb[0].mxu0
    %v3828 = vpop.f32.mrb[0].mxu0
    %v3829 = vadd.f32 %v2974, %v3828
    %v3830 = vpop.f32.mrb[0].mxu0
    %3831 = vmatprep.mubr.bf16.mxu0 0
    %3832 = vmatmul.mubr.bf16.gmra.mrb[0].mxu0 %v3566
    %v3833 = vpop.f32.mrb[0].mxu0
    %v3834 = vadd.f32 %v2979, %v3833
    %v3835 = vpop.f32.mrb[0].mxu0
    %v3836 = vpop.f32.mrb[0].mxu0
    %v3837 = vadd.f32 %v2982, %v3836
    %v3838 = vpop.f32.mrb[0].mxu0
    %3839 = vmatprep.mubr.bf16.mxu0 0
    %3840 = vmatmul.mubr.bf16.gmra.mrb[0].mxu0 %v3569
    %v3841 = vpop.f32.mrb[0].mxu0
    %v3842 = vadd.f32 %v2987, %v3841
    %v3843 = vpop.f32.mrb[0].mxu0
    %v3844 = vpop.f32.mrb[0].mxu0
    %v3845 = vadd.f32 %v2990, %v3844
    %v3846 = vpop.f32.mrb[0].mxu0
    %3847 = vmatprep.mubr.bf16.mxu0 0
    %3848 = vmatmul.mubr.bf16.gmra.mrb[0].mxu0 %v3572
    %v3849 = vpop.f32.mrb[0].mxu0
    %v3850 = vadd.f32 %v2995, %v3849
    %v3851 = vpop.f32.mrb[0].mxu0
    %v3852 = vpop.f32.mrb[0].mxu0
    %v3853 = vadd.f32 %v2998, %v3852
    %v3854 = vpop.f32.mrb[0].mxu0
    %3855 = vmatprep.mubr.bf16.mxu0 0
    %3856 = vmatmul.mubr.bf16.gmra.mrb[0].mxu0 %v3575
    %v3857 = vpop.f32.mrb[0].mxu0
    %v3858 = vadd.f32 %v3003, %v3857
    %v3859 = vpop.f32.mrb[0].mxu0
    %v3860 = vpop.f32.mrb[0].mxu0
    %v3861 = vadd.f32 %v3006, %v3860
    %v3862 = vpop.f32.mrb[0].mxu0
    %3863 = vmatprep.mubr.bf16.mxu0 0
    %3864 = vmatmul.mubr.bf16.gmra.mrb[0].mxu0 %v3578
    %v3865 = vpop.f32.mrb[0].mxu0
    %v3866 = vadd.f32 %v3011, %v3865
    %v3867 = vpop.f32.mrb[0].mxu0
    %v3868 = vpop.f32.mrb[0].mxu0
    %v3869 = vadd.f32 %v3014, %v3868
    %v3870 = vpop.f32.mrb[0].mxu0
    %3871 = vmatprep.mubr.bf16.mxu0 0
    %3872 = vmatmul.mubr.bf16.gmra.mrb[0].mxu0 %v3581
    %v3873 = vpop.f32.mrb[0].mxu0
    %v3874 = vadd.f32 %v3019, %v3873
    %v3875 = vpop.f32.mrb[0].mxu0
    %v3876 = vpop.f32.mrb[0].mxu0
    %v3877 = vadd.f32 %v3022, %v3876
    %v3878 = vpop.f32.mrb[0].mxu0
    %3879 = vmatprep.mubr.bf16.mxu0 0
    %3880 = vmatmul.mubr.bf16.gmra.mrb[0].mxu0 %v3584
    %v3881 = vpop.f32.mrb[0].mxu0
    %v3882 = vadd.f32 %v3027, %v3881
    %v3883 = vpop.f32.mrb[0].mxu0
    %v3884 = vpop.f32.mrb[0].mxu0
    %v3885 = vadd.f32 %v3030, %v3884
    %v3886 = vpop.f32.mrb[0].mxu0
    %3887 = vmatprep.mubr.bf16.mxu0 0
    %3888 = vmatmul.mubr.bf16.gmra.mrb[0].mxu0 %v3587
    %v3889 = vpop.f32.mrb[0].mxu0
    %v3890 = vadd.f32 %v3035, %v3889
    %v3891 = vpop.f32.mrb[0].mxu0
    %v3892 = vpop.f32.mrb[0].mxu0
    %v3893 = vadd.f32 %v3038, %v3892
    %v3894 = vpop.f32.mrb[0].mxu0
    %3895 = vmatprep.mubr.bf16.mxu0 0
    %3896 = vmatmul.mubr.bf16.gmra.mrb[0].mxu0 %v3590
    %v3897 = vpop.f32.mrb[0].mxu0
    %v3898 = vadd.f32 %v3043, %v3897
    %v3899 = vpop.f32.mrb[0].mxu0
    %v3900 = vpop.f32.mrb[0].mxu0
    %v3901 = vadd.f32 %v3046, %v3900
    %v3902 = vpop.f32.mrb[0].mxu0
    %3903 = vmatprep.mubr.bf16.mxu0 0
    %3904 = vmatmul.mubr.bf16.gmra.mrb[0].mxu0 %v3593
    %v3905 = vpop.f32.mrb[0].mxu0
    %v3906 = vadd.f32 %v3051, %v3905
    %v3907 = vpop.f32.mrb[0].mxu0
    %v3908 = vpop.f32.mrb[0].mxu0
    %v3909 = vadd.f32 %v3054, %v3908
    %v3910 = vpop.f32.mrb[0].mxu0
    %3911 = vmatprep.mubr.bf16.mxu0 0
    %3912 = vmatmul.mubr.bf16.gmra.mrb[0].mxu0 %v3596
    %v3913 = vpop.f32.mrb[0].mxu0
    %v3914 = vadd.f32 %v3059, %v3913
    %v3915 = vpop.f32.mrb[0].mxu0
    %v3916 = vpop.f32.mrb[0].mxu0
    %v3917 = vadd.f32 %v3062, %v3916
    %v3918 = vpop.f32.mrb[0].mxu0
    %3919 = vmatprep.mubr.bf16.mxu0 0
    %3920 = vmatmul.mubr.bf16.gmra.mrb[0].mxu0 %v3599
    %v3921 = vpop.f32.mrb[0].mxu0
    %v3922 = vadd.f32 %v3067, %v3921
    %v3923 = vpop.f32.mrb[0].mxu0
    %v3924 = vpop.f32.mrb[0].mxu0
    %v3925 = vadd.f32 %v3070, %v3924
    %v3926 = vpop.f32.mrb[0].mxu0
    %3927 = vmatprep.mubr.bf16.mxu0 0
    %3928 = vmatmul.mubr.bf16.gmra.mrb[0].mxu0 %v3602
    %v3929 = vpop.f32.mrb[0].mxu0
    %v3930 = vadd.f32 %v3075, %v3929
    %v3931 = vpop.f32.mrb[0].mxu0
    %v3932 = vpop.f32.mrb[0].mxu0
    %v3933 = vadd.f32 %v3078, %v3932
    %v3934 = vpop.f32.mrb[0].mxu0
    %3935 = vmatprep.mubr.bf16.mxu0 0
    %3936 = vmatmul.mubr.bf16.gmra.mrb[0].mxu0 %v3605
    %v3937 = vpop.f32.mrb[0].mxu0
    %v3938 = vadd.f32 %v3083, %v3937
    %v3939 = vpop.f32.mrb[0].mxu0
    %v3940 = vpop.f32.mrb[0].mxu0
    %v3941 = vadd.f32 %v3086, %v3940
    %v3942 = vpop.f32.mrb[0].mxu0
    %3943 = vmatprep.mubr.bf16.mxu0 0
    %3944 = vmatmul.mubr.bf16.gmra.mrb[0].mxu0 %v3608
    %v3945 = vpop.f32.mrb[0].mxu0
    %v3946 = vadd.f32 %v3091, %v3945
    %v3947 = vpop.f32.mrb[0].mxu0
    %v3948 = vpop.f32.mrb[0].mxu0
    %v3949 = vadd.f32 %v3094, %v3948
    %v3950 = vpop.f32.mrb[0].mxu0
    %3951 = vmatprep.mubr.bf16.mxu0 0
    %3952 = vmatmul.mubr.bf16.gmra.mrb[0].mxu0 %v3611
    %v3953 = vpop.f32.mrb[0].mxu0
    %v3954 = vadd.f32 %v3099, %v3953
    %v3955 = vpop.f32.mrb[0].mxu0
    %v3956 = vpop.f32.mrb[0].mxu0
    %v3957 = vadd.f32 %v3102, %v3956
    %v3958 = vpop.f32.mrb[0].mxu0
    %3959 = vmatprep.mubr.bf16.mxu0 0
    %3960 = vmatmul.mubr.bf16.gmra.mrb[0].mxu0 %v3614
    %v3961 = vpop.f32.mrb[0].mxu0
    %v3962 = vadd.f32 %v3107, %v3961
    %v3963 = vpop.f32.mrb[0].mxu0
    %v3964 = vpop.f32.mrb[0].mxu0
    %v3965 = vadd.f32 %v3110, %v3964
    %v3966 = vpop.f32.mrb[0].mxu0
    %3967 = vmatprep.mubr.bf16.mxu0 0
    %3968 = vmatmul.mubr.bf16.gmra.mrb[0].mxu0 %v3617
    %v3969 = vpop.f32.mrb[0].mxu0
    %v3970 = vadd.f32 %v3115, %v3969
    %v3971 = vpop.f32.mrb[0].mxu0
    %v3972 = vpop.f32.mrb[0].mxu0
    %v3973 = vadd.f32 %v3118, %v3972
    %v3974 = vpop.f32.mrb[0].mxu0
    %3975 = vmatprep.mubr.bf16.mxu0 0
    %3976 = vmatmul.mubr.bf16.gmra.mrb[0].mxu0 %v3620
    %v3977 = vpop.f32.mrb[0].mxu0
    %v3978 = vadd.f32 %v3123, %v3977
    %v3979 = vpop.f32.mrb[0].mxu0
    %v3980 = vpop.f32.mrb[0].mxu0
    %v3981 = vadd.f32 %v3126, %v3980
    %v3982 = vpop.f32.mrb[0].mxu0
    %3983 = vmatprep.mubr.bf16.mxu0 0
    %3984 = vmatmul.mubr.bf16.gmra.mrb[0].mxu0 %v3623
    %v3985 = vpop.f32.mrb[0].mxu0
    %v3986 = vadd.f32 %v3131, %v3985
    %v3987 = vpop.f32.mrb[0].mxu0
    %v3988 = vpop.f32.mrb[0].mxu0
    %v3989 = vadd.f32 %v3134, %v3988
    %v3990 = vpop.f32.mrb[0].mxu0
    %3991 = vmatprep.mubr.bf16.mxu0 0
    %3992 = vmatmul.mubr.bf16.gmra.mrb[0].mxu0 %v3626
    %v3993 = vpop.f32.mrb[0].mxu0
    %v3994 = vadd.f32 %v3139, %v3993
    %v3995 = vpop.f32.mrb[0].mxu0
    %v3996 = vpop.f32.mrb[0].mxu0
    %v3997 = vadd.f32 %v3142, %v3996
    %v3998 = vpop.f32.mrb[0].mxu0
    %3999 = vmatprep.mubr.bf16.mxu0 0
    %4000 = vmatmul.mubr.bf16.gmra.mrb[0].mxu0 %v3629
    %v4001 = vpop.f32.mrb[0].mxu0
    %v4002 = vadd.f32 %v3147, %v4001
    %v4003 = vpop.f32.mrb[0].mxu0
    %v4004 = vpop.f32.mrb[0].mxu0
    %v4005 = vadd.f32 %v3150, %v4004
    %v4006 = vpop.f32.mrb[0].mxu0
    %4007 = vmatprep.mubr.bf16.mxu0 0
    %4008 = vmatmul.mubr.bf16.gmra.mrb[0].mxu0 %v3632
    %v4009 = vpop.f32.mrb[0].mxu0
    %v4010 = vadd.f32 %v3155, %v4009
    %v4011 = vpop.f32.mrb[0].mxu0
    %v4012 = vpop.f32.mrb[0].mxu0
    %v4013 = vadd.f32 %v3158, %v4012
    %v4014 = vpop.f32.mrb[0].mxu0
    %4015 = vmatprep.mubr.bf16.mxu0 0
    %4016 = vmatmul.mubr.bf16.gmra.mrb[0].mxu0 %v3635
    %v4017 = vpop.f32.mrb[0].mxu0
    %v4018 = vadd.f32 %v3163, %v4017
    %v4019 = vpop.f32.mrb[0].mxu0
    %v4020 = vpop.f32.mrb[0].mxu0
    %v4021 = vadd.f32 %v3166, %v4020
    %v4022 = vpop.f32.mrb[0].mxu0
    %4023 = vmatprep.mubr.bf16.mxu0 0
    %4024 = vmatmul.mubr.bf16.gmra.mrb[0].mxu0 %v3638
    %v4025 = vpop.f32.mrb[0].mxu0
    %v4026 = vadd.f32 %v3171, %v4025
    %v4027 = vpop.f32.mrb[0].mxu0
    %v4028 = vpop.f32.mrb[0].mxu0
    %v4029 = vadd.f32 %v3174, %v4028
    %v4030 = vpop.f32.mrb[0].mxu0
    %4031 = vmatprep.mubr.bf16.mxu0 0
    %4032 = vmatmul.mubr.bf16.gmra.mrb[0].mxu0 %v3641
    %v4033 = vpop.f32.mrb[0].mxu0
    %v4034 = vadd.f32 %v3179, %v4033
    %v4035 = vpop.f32.mrb[0].mxu0
    %v4036 = vpop.f32.mrb[0].mxu0
    %v4037 = vadd.f32 %v3182, %v4036
    %v4038 = vpop.f32.mrb[0].mxu0
    %4039 = vmatprep.mubr.bf16.mxu0 0
    %4040 = vmatmul.mubr.bf16.gmra.mrb[0].mxu0 %v3644
    %v4041 = vpop.f32.mrb[0].mxu0
    %v4042 = vadd.f32 %v3187, %v4041
    %v4043 = vpop.f32.mrb[0].mxu0
    %v4044 = vpop.f32.mrb[0].mxu0
    %v4045 = vadd.f32 %v3190, %v4044
    %v4046 = vpop.f32.mrb[0].mxu0
    %4047 = vmatprep.mubr.bf16.mxu0 0
    %4048 = vmatmul.mubr.bf16.gmra.mrb[0].mxu0 %v3647
    %v4049 = vpop.f32.mrb[0].mxu0
    %v4050 = vadd.f32 %v3195, %v4049
    %v4051 = vpop.f32.mrb[0].mxu0
    %v4052 = vpop.f32.mrb[0].mxu0
    %v4053 = vadd.f32 %v3198, %v4052
    %v4054 = vpop.f32.mrb[0].mxu0
    %4055 = vmatprep.mubr.bf16.mxu0 0
    %4056 = vmatmul.mubr.bf16.gmra.mrb[0].mxu0 %v3650
    %v4057 = vpop.f32.mrb[0].mxu0
    %v4058 = vadd.f32 %v3203, %v4057
    %v4059 = vpop.f32.mrb[0].mxu0
    %v4060 = vpop.f32.mrb[0].mxu0
    %v4061 = vadd.f32 %v3206, %v4060
    %v4062 = vpop.f32.mrb[0].mxu0
    %4063 = vmatprep.mubr.bf16.mxu0 0
    %4064 = vmatmul.mubr.bf16.gmra.mrb[0].mxu0 %v3653
    %v4065 = vpop.f32.mrb[0].mxu0
    %v4066 = vadd.f32 %v3211, %v4065
    %v4067 = vpop.f32.mrb[0].mxu0
    %v4068 = vpop.f32.mrb[0].mxu0
    %v4069 = vadd.f32 %v3214, %v4068
    %v4070 = vpop.f32.mrb[0].mxu0
    %4071 = vmatprep.mubr.bf16.mxu0 0
    %4072 = vmatmul.mubr.bf16.gmra.mrb[0].mxu0 %v3656
    %v4073 = vpop.f32.mrb[0].mxu0
    %v4074 = vadd.f32 %v3219, %v4073
    %v4075 = vpop.f32.mrb[0].mxu0
    %v4076 = vpop.f32.mrb[0].mxu0
    %v4077 = vadd.f32 %v3222, %v4076
    %v4078 = vpop.f32.mrb[0].mxu0
    %4079 = vmatprep.mubr.bf16.mxu0 0
    %4080 = vmatmul.mubr.bf16.gmra.mrb[0].mxu0 %v3659
    %v4081 = vpop.f32.mrb[0].mxu0
    %v4082 = vadd.f32 %v3227, %v4081
    %v4083 = vpop.f32.mrb[0].mxu0
    %v4084 = vpop.f32.mrb[0].mxu0
    %v4085 = vadd.f32 %v3230, %v4084
    %v4086 = vpop.f32.mrb[0].mxu0
    %4087 = vmatprep.mubr.bf16.mxu0 0
    %4088 = vmatmul.mubr.bf16.gmra.mrb[0].mxu0 %v3662
    %v4089 = vpop.f32.mrb[0].mxu0
    %v4090 = vadd.f32 %v3235, %v4089
    %v4091 = vpop.f32.mrb[0].mxu0
    %v4092 = vpop.f32.mrb[0].mxu0
    %v4093 = vadd.f32 %v3238, %v4092
    %v4094 = vpop.f32.mrb[0].mxu0
    %4095 = vmatprep.mubr.bf16.mxu0 0
    %4096 = vmatmul.mubr.bf16.gmra.mrb[0].mxu0 %v3665
    %v4097 = vpop.f32.mrb[0].mxu0
    %v4098 = vadd.f32 %v3243, %v4097
    %v4099 = vpop.f32.mrb[0].mxu0
    %v4100 = vpop.f32.mrb[0].mxu0
    %v4101 = vadd.f32 %v3246, %v4100
    %v4102 = vpop.f32.mrb[0].mxu0
    %4103 = vmatprep.mubr.bf16.mxu0 0
    %4104 = vmatmul.mubr.bf16.gmra.mrb[0].mxu0 %v3668
    %v4105 = vpop.f32.mrb[0].mxu0
    %v4106 = vadd.f32 %v3251, %v4105
    %v4107 = vpop.f32.mrb[0].mxu0
    %v4108 = vpop.f32.mrb[0].mxu0
    %v4109 = vadd.f32 %v3254, %v4108
    %v4110 = vpop.f32.mrb[0].mxu0
    %4111 = vmatprep.mubr.bf16.mxu0 0
    %4112 = vmatmul.mubr.bf16.gmra.mrb[0].mxu0 %v3671
    %v4113 = vpop.f32.mrb[0].mxu0
    %v4114 = vadd.f32 %v3259, %v4113
    %v4115 = vpop.f32.mrb[0].mxu0
    %v4116 = vpop.f32.mrb[0].mxu0
    %v4117 = vadd.f32 %v3262, %v4116
    %v4118 = vpop.f32.mrb[0].mxu0
    %4119 = vmatprep.mubr.bf16.mxu0 0
    %4120 = vmatmul.mubr.bf16.gmra.mrb[0].mxu0 %v3674
    %v4121 = vpop.f32.mrb[0].mxu0
    %v4122 = vadd.f32 %v3267, %v4121
    %v4123 = vpop.f32.mrb[0].mxu0
    %v4124 = vpop.f32.mrb[0].mxu0
    %v4125 = vadd.f32 %v3270, %v4124
    %v4126 = vpop.f32.mrb[0].mxu0
    %4127 = vmatprep.mubr.bf16.mxu0 0
    %4128 = vmatmul.mubr.bf16.gmra.mrb[0].mxu0 %v3677
    %v4129 = vpop.f32.mrb[0].mxu0
    %v4130 = vadd.f32 %v3275, %v4129
    %v4131 = vpop.f32.mrb[0].mxu0
    %v4132 = vpop.f32.mrb[0].mxu0
    %v4133 = vadd.f32 %v3278, %v4132
    %v4134 = vpop.f32.mrb[0].mxu0
    %4135 = vmatprep.mubr.bf16.mxu0 0
    %4136 = vmatmul.mubr.bf16.gmra.mrb[0].mxu0 %v3680
    %v4137 = vpop.f32.mrb[0].mxu0
    %v4138 = vadd.f32 %v3283, %v4137
    %v4139 = vpop.f32.mrb[0].mxu0
    %v4140 = vpop.f32.mrb[0].mxu0
    %v4141 = vadd.f32 %v3286, %v4140
    %v4142 = vpop.f32.mrb[0].mxu0
    %4143 = vmatprep.mubr.bf16.mxu0 0
    %4144 = vmatmul.mubr.bf16.gmra.mrb[0].mxu0 %v3683
    %v4145 = vpop.f32.mrb[0].mxu0
    %v4146 = vadd.f32 %v3291, %v4145
    %v4147 = vpop.f32.mrb[0].mxu0
    %v4148 = vpop.f32.mrb[0].mxu0
    %v4149 = vadd.f32 %v3294, %v4148
    %v4150 = vpop.f32.mrb[0].mxu0
    %4151 = vmatprep.mubr.bf16.mxu0 0
    %4152 = vmatmul.mubr.bf16.gmra.mrb[0].mxu0 %v3686
    %v4153 = vpop.f32.mrb[0].mxu0
    %v4154 = vadd.f32 %v3299, %v4153
    %v4155 = vpop.f32.mrb[0].mxu0
    %v4156 = vpop.f32.mrb[0].mxu0
    %v4157 = vadd.f32 %v3302, %v4156
    %v4158 = vpop.f32.mrb[0].mxu0
    %4159 = vmatprep.mubr.bf16.mxu0 0
    %4160 = vmatmul.mubr.bf16.gmra.mrb[0].mxu0 %v3689
    %v4161 = vpop.f32.mrb[0].mxu0
    %v4162 = vadd.f32 %v3307, %v4161
    %v4163 = vpop.f32.mrb[0].mxu0
    %v4164 = vpop.f32.mrb[0].mxu0
    %v4165 = vadd.f32 %v3310, %v4164
    %v4166 = vpop.f32.mrb[0].mxu0
    %4167 = vmatprep.mubr.bf16.mxu0 0
    %4168 = vmatmul.mubr.bf16.gmra.mrb[0].mxu0 %v3692
    %v4169 = vpop.f32.mrb[0].mxu0
    %v4170 = vadd.f32 %v3315, %v4169
    %v4171 = vpop.f32.mrb[0].mxu0
    %v4172 = vpop.f32.mrb[0].mxu0
    %v4173 = vadd.f32 %v3318, %v4172
    %v4174 = vpop.f32.mrb[0].mxu0
    %4175 = vmatprep.mubr.bf16.mxu0 0
    %4176 = vmatmul.mubr.bf16.gmra.mrb[0].mxu0 %v3695
    %v4177 = vpop.f32.mrb[0].mxu0
    %v4178 = vadd.f32 %v3323, %v4177
    %v4179 = vpop.f32.mrb[0].mxu0
    %v4180 = vpop.f32.mrb[0].mxu0
    %v4181 = vadd.f32 %v3326, %v4180
    %v4182 = vpop.f32.mrb[0].mxu0
    %4183 = vmatprep.mubr.bf16.mxu0 0
    %4184 = vmatmul.mubr.bf16.gmra.mrb[0].mxu0 %v3698
    %v4185 = vpop.f32.mrb[0].mxu0
    %v4186 = vadd.f32 %v3331, %v4185
    %v4187 = vpop.f32.mrb[0].mxu0
    %v4188 = vpop.f32.mrb[0].mxu0
    %v4189 = vadd.f32 %v3334, %v4188
    %v4190 = vpop.f32.mrb[0].mxu0
    %4191 = vmatprep.mubr.bf16.mxu0 0
    %4192 = vmatmul.mubr.bf16.gmra.mrb[0].mxu0 %v3701
    %v4193 = vpop.f32.mrb[0].mxu0
    %v4194 = vadd.f32 %v3339, %v4193
    %v4195 = vpop.f32.mrb[0].mxu0
    %v4196 = vpop.f32.mrb[0].mxu0
    %v4197 = vadd.f32 %v3342, %v4196
    %v4198 = vpop.f32.mrb[0].mxu0
    %4199 = vmatprep.mubr.bf16.mxu0 0
    %4200 = vmatmul.mubr.bf16.gmra.mrb[0].mxu0 %v3704
    %v4201 = vpop.f32.mrb[0].mxu0
    %v4202 = vadd.f32 %v3347, %v4201
    %v4203 = vpop.f32.mrb[0].mxu0
    %v4204 = vpop.f32.mrb[0].mxu0
    %v4205 = vadd.f32 %v3350, %v4204
    %v4206 = vpop.f32.mrb[0].mxu0
    %4207 = vmatprep.mubr.bf16.mxu0 0
    %4208 = vmatmul.mubr.bf16.gmra.mrb[0].mxu0 %v3707
    %v4209 = vpop.f32.mrb[0].mxu0
    %v4210 = vadd.f32 %v3355, %v4209
    %v4211 = vpop.f32.mrb[0].mxu0
    %v4212 = vpop.f32.mrb[0].mxu0
    %v4213 = vadd.f32 %v3358, %v4212
    %v4214 = vpop.f32.mrb[0].mxu0
    %4215 = vmatprep.mubr.bf16.mxu0 0
    %4216 = vmatmul.mubr.bf16.gmra.mrb[0].mxu0 %v3710
    %v4217 = vpop.f32.mrb[0].mxu0
    %v4218 = vadd.f32 %v3363, %v4217
    %v4219 = vpop.f32.mrb[0].mxu0
    %v4220 = vpop.f32.mrb[0].mxu0
    %v4221 = vadd.f32 %v3366, %v4220
    %v4222 = vpop.f32.mrb[0].mxu0
    %4223 = vmatprep.mubr.bf16.mxu0 0
    %4224 = vmatmul.mubr.bf16.gmra.mrb[0].mxu0 %v3713
    %v4225 = vpop.f32.mrb[0].mxu0
    %v4226 = vadd.f32 %v3371, %v4225
    %v4227 = vpop.f32.mrb[0].mxu0
    %v4228 = vpop.f32.mrb[0].mxu0
    %v4229 = vadd.f32 %v3374, %v4228
    %v4230 = vpop.f32.mrb[0].mxu0
    %4231 = vmatprep.mubr.bf16.mxu0 0
    %4232 = vmatmul.mubr.bf16.gmra.mrb[0].mxu0 %v3716
    %v4233 = vpop.f32.mrb[0].mxu0
    %v4234 = vadd.f32 %v3379, %v4233
    %v4235 = vpop.f32.mrb[0].mxu0
    %v4236 = vpop.f32.mrb[0].mxu0
    %v4237 = vadd.f32 %v3382, %v4236
    %v4238 = vpop.f32.mrb[0].mxu0
    %4239 = vmatprep.mubr.bf16.mxu0 0
    %4240 = vmatmul.mubr.bf16.gmra.mrb[0].mxu0 %v3719
    %v4241 = vpop.f32.mrb[0].mxu0
    %v4242 = vadd.f32 %v3387, %v4241
    %v4243 = vpop.f32.mrb[0].mxu0
    %v4244 = vpop.f32.mrb[0].mxu0
    %v4245 = vadd.f32 %v3390, %v4244
    %v4246 = vpop.f32.mrb[0].mxu0
    %4247 = vmatprep.mubr.bf16.mxu0 0
    %4248 = vmatmul.mubr.bf16.gmra.mrb[0].mxu0 %v3722
    %v4249 = vpop.f32.mrb[0].mxu0
    %v4250 = vadd.f32 %v3395, %v4249
    %v4251 = vpop.f32.mrb[0].mxu0
    %v4252 = vpop.f32.mrb[0].mxu0
    %v4253 = vadd.f32 %v3398, %v4252
    %v4254 = vpop.f32.mrb[0].mxu0
    %4255 = vmatprep.mubr.bf16.mxu0 0
    %4256 = vmatmul.mubr.bf16.gmra.mrb[0].mxu0 %v3725
    %v4257 = vpop.f32.mrb[0].mxu0
    %v4258 = vadd.f32 %v3403, %v4257
    %v4259 = vpop.f32.mrb[0].mxu0
    %v4260 = vpop.f32.mrb[0].mxu0
    %v4261 = vadd.f32 %v3406, %v4260
    %v4262 = vpop.f32.mrb[0].mxu0
    %4263 = vmatprep.mubr.bf16.mxu0 0
    %4264 = vmatmul.mubr.bf16.gmra.mrb[0].mxu0 %v3728
    %v4265 = vpop.f32.mrb[0].mxu0
    %v4266 = vadd.f32 %v3411, %v4265
    %v4267 = vpop.f32.mrb[0].mxu0
    %v4268 = vpop.f32.mrb[0].mxu0
    %v4269 = vadd.f32 %v3414, %v4268
    %v4270 = vpop.f32.mrb[0].mxu0
    %4271 = vmatprep.mubr.bf16.mxu0 0
    %4272 = vmatmul.mubr.bf16.gmra.mrb[0].mxu0 %v3731
    %v4273 = vpop.f32.mrb[0].mxu0
    %v4274 = vadd.f32 %v3419, %v4273
    %v4275 = vpop.f32.mrb[0].mxu0
    %v4276 = vpop.f32.mrb[0].mxu0
    %v4277 = vadd.f32 %v3422, %v4276
    %v4278 = vpop.f32.mrb[0].mxu0
    %4279 = vmatprep.mubr.bf16.mxu0 0
    %4280 = vmatmul.mubr.bf16.gmra.mrb[0].mxu0 %v3734
    %v4281 = vpop.f32.mrb[0].mxu0
    %v4282 = vadd.f32 %v3427, %v4281
    %v4283 = vpop.f32.mrb[0].mxu0
    %v4284 = vpop.f32.mrb[0].mxu0
    %v4285 = vadd.f32 %v3430, %v4284
    %v4286 = vpop.f32.mrb[0].mxu0
    %4287 = vmatprep.mubr.bf16.mxu0 0
    %4288 = vmatmul.mubr.bf16.gmra.mrb[0].mxu0 %v3737
    %v4289 = vpop.f32.mrb[0].mxu0
    %v4290 = vadd.f32 %v3435, %v4289
    %v4291 = vpop.f32.mrb[0].mxu0
    %v4292 = vpop.f32.mrb[0].mxu0
    %v4293 = vadd.f32 %v3438, %v4292
    %v4294 = vpop.f32.mrb[0].mxu0
    %4295 = vmatprep.mubr.bf16.mxu0 0
    %4296 = vmatmul.mubr.bf16.gmra.mrb[0].mxu0 %v3740
    %v4297 = vpop.f32.mrb[0].mxu0
    %v4298 = vadd.f32 %v3443, %v4297
    %v4299 = vpop.f32.mrb[0].mxu0
    %v4300 = vpop.f32.mrb[0].mxu0
    %v4301 = vadd.f32 %v3446, %v4300
    %v4302 = vpop.f32.mrb[0].mxu0
    %4303 = vmatprep.mubr.bf16.mxu0 0
    %4304 = vmatmul.mubr.bf16.gmra.mrb[0].mxu0 %v3743
    %v4305 = vpop.f32.mrb[0].mxu0
    %v4306 = vadd.f32 %v3451, %v4305
    %v4307 = vpop.f32.mrb[0].mxu0
    %v4308 = vpop.f32.mrb[0].mxu0
    %v4309 = vadd.f32 %v3454, %v4308
    %v4310 = vpop.f32.mrb[0].mxu0
    %4311 = vmatprep.mubr.bf16.mxu0 0
    %4312 = vmatmul.mubr.bf16.gmra.mrb[0].mxu0 %v3746
    %v4313 = vpop.f32.mrb[0].mxu0
    %v4314 = vadd.f32 %v3459, %v4313
    %v4315 = vpop.f32.mrb[0].mxu0
    %v4316 = vpop.f32.mrb[0].mxu0
    %v4317 = vadd.f32 %v3462, %v4316
    %v4318 = vpop.f32.mrb[0].mxu0
    %4319 = vmatprep.mubr.bf16.mxu0 0
    %4320 = vmatmul.mubr.bf16.gmra.mrb[0].mxu0 %v3749
    %v4321 = vpop.f32.mrb[0].mxu0
    %v4322 = vadd.f32 %v3467, %v4321
    %v4323 = vpop.f32.mrb[0].mxu0
    %v4324 = vpop.f32.mrb[0].mxu0
    %v4325 = vadd.f32 %v3470, %v4324
    %v4326 = vpop.f32.mrb[0].mxu0
    %4327 = vmatprep.mubr.bf16.mxu0 0
    %4328 = vmatmul.mubr.bf16.gmra.mrb[0].mxu0 %v3752
    %v4329 = vpop.f32.mrb[0].mxu0
    %v4330 = vadd.f32 %v3475, %v4329
    %v4331 = vpop.f32.mrb[0].mxu0
    %v4332 = vpop.f32.mrb[0].mxu0
    %v4333 = vadd.f32 %v3478, %v4332
    %v4334 = vpop.f32.mrb[0].mxu0
    %4335 = vmatprep.mubr.bf16.mxu0 0
    %4336 = vmatmul.mubr.bf16.gmra.mrb[0].mxu0 %v3755
    %v4337 = vpop.f32.mrb[0].mxu0
    %v4338 = vadd.f32 %v3483, %v4337
    %v4339 = vpop.f32.mrb[0].mxu0
    %v4340 = vpop.f32.mrb[0].mxu0
    %v4341 = vadd.f32 %v3486, %v4340
    %v4342 = vpop.f32.mrb[0].mxu0
    %4343 = vmatprep.mubr.bf16.mxu0 0
    %4344 = vmatmul.mubr.bf16.gmra.mrb[0].mxu0 %v3758
    %v4345 = vpop.f32.mrb[0].mxu0
    %v4346 = vadd.f32 %v3491, %v4345
    %v4347 = vpop.f32.mrb[0].mxu0
    %v4348 = vpop.f32.mrb[0].mxu0
    %v4349 = vadd.f32 %v3494, %v4348
    %v4350 = vpop.f32.mrb[0].mxu0
    %4351 = vmatprep.mubr.bf16.mxu0 0
    %4352 = vmatmul.mubr.bf16.gmra.mrb[0].mxu0 %v3761
    %v4353 = vpop.f32.mrb[0].mxu0
    %v4354 = vadd.f32 %v3499, %v4353
    %v4355 = vpop.f32.mrb[0].mxu0
    %v4356 = vpop.f32.mrb[0].mxu0
    %v4357 = vadd.f32 %v3502, %v4356
    %v4358 = vpop.f32.mrb[0].mxu0
    %4359 = vmatprep.mubr.bf16.mxu0 0
    %4360 = vmatmul.mubr.bf16.gmra.mrb[0].mxu0 %v3764
    %v4361 = vpop.f32.mrb[0].mxu0
    %v4362 = vadd.f32 %v3507, %v4361
    %v4363 = vpop.f32.mrb[0].mxu0
    %v4364 = vpop.f32.mrb[0].mxu0
    %v4365 = vadd.f32 %v3510, %v4364
    %v4366 = vpop.f32.mrb[0].mxu0
    %4367 = vmatprep.mubr.bf16.mxu0 0
    %4368 = vmatmul.mubr.bf16.gmra.mrb[0].mxu0 %v3767
    %v4369 = vpop.f32.mrb[0].mxu0
    %v4370 = vadd.f32 %v3515, %v4369
    %v4371 = vpop.f32.mrb[0].mxu0
    %v4372 = vpop.f32.mrb[0].mxu0
    %v4373 = vadd.f32 %v3518, %v4372
    %v4374 = vpop.f32.mrb[0].mxu0
    %4375 = vmatprep.mubr.bf16.mxu0 0
    %4376 = vmatmul.mubr.bf16.gmra.mrb[0].mxu0 %v3770
    %v4377 = vpop.f32.mrb[0].mxu0
    %v4378 = vadd.f32 %v3523, %v4377
    %v4379 = vpop.f32.mrb[0].mxu0
    %v4380 = vpop.f32.mrb[0].mxu0
    %v4381 = vadd.f32 %v3526, %v4380
    %v4382 = vpop.f32.mrb[0].mxu0
    %4383 = vdwg.mxu0
    %v4384 = vld [vmem:[%s6] sm:$0x1]
    %v4386 = vlaneseq
    %v4387 = vshrl.u32 %v4386, 7
    %v4388 = vsub.s32 0, %v4387
    %v4389 = vrot.slane %v4384, %v4388
    %v4391 = vadd.f32 %v3810, %v4389
    %v4392 = vadd.f32 %v3813, %v4389
    %v4393 = vadd.f32 %v3818, %v4389
    %v4394 = vadd.f32 %v3821, %v4389
    %v4395 = vadd.f32 %v3826, %v4389
    %v4396 = vadd.f32 %v3829, %v4389
    %v4397 = vadd.f32 %v3834, %v4389
    %v4398 = vadd.f32 %v3837, %v4389
    %v4399 = vadd.f32 %v3842, %v4389
    %v4400 = vadd.f32 %v3845, %v4389
    %v4401 = vadd.f32 %v3850, %v4389
    %v4402 = vadd.f32 %v3853, %v4389
    %v4403 = vadd.f32 %v3858, %v4389
    %v4404 = vadd.f32 %v3861, %v4389
    %v4405 = vadd.f32 %v3866, %v4389
    %v4406 = vadd.f32 %v3869, %v4389
    %v4407 = vadd.f32 %v3874, %v4389
    %v4408 = vadd.f32 %v3877, %v4389
    %v4409 = vadd.f32 %v3882, %v4389
    %v4410 = vadd.f32 %v3885, %v4389
    %v4411 = vadd.f32 %v3890, %v4389
    %v4412 = vadd.f32 %v3893, %v4389
    %v4413 = vadd.f32 %v3898, %v4389
    %v4414 = vadd.f32 %v3901, %v4389
    %v4415 = vadd.f32 %v3906, %v4389
    %v4416 = vadd.f32 %v3909, %v4389
    %v4417 = vadd.f32 %v3914, %v4389
    %v4418 = vadd.f32 %v3917, %v4389
    %v4419 = vadd.f32 %v3922, %v4389
    %v4420 = vadd.f32 %v3925, %v4389
    %v4421 = vadd.f32 %v3930, %v4389
    %v4422 = vadd.f32 %v3933, %v4389
    %v4423 = vadd.f32 %v3938, %v4389
    %v4424 = vadd.f32 %v3941, %v4389
    %v4425 = vadd.f32 %v3946, %v4389
    %v4426 = vadd.f32 %v3949, %v4389
    %v4427 = vadd.f32 %v3954, %v4389
    %v4428 = vadd.f32 %v3957, %v4389
    %v4429 = vadd.f32 %v3962, %v4389
    %v4430 = vadd.f32 %v3965, %v4389
    %v4431 = vadd.f32 %v3970, %v4389
    %v4432 = vadd.f32 %v3973, %v4389
    %v4433 = vadd.f32 %v3978, %v4389
    %v4434 = vadd.f32 %v3981, %v4389
    %v4435 = vadd.f32 %v3986, %v4389
    %v4436 = vadd.f32 %v3989, %v4389
    %v4437 = vadd.f32 %v3994, %v4389
    %v4438 = vadd.f32 %v3997, %v4389
    %v4439 = vadd.f32 %v4002, %v4389
    %v4440 = vadd.f32 %v4005, %v4389
    %v4441 = vadd.f32 %v4010, %v4389
    %v4442 = vadd.f32 %v4013, %v4389
    %v4443 = vadd.f32 %v4018, %v4389
    %v4444 = vadd.f32 %v4021, %v4389
    %v4445 = vadd.f32 %v4026, %v4389
    %v4446 = vadd.f32 %v4029, %v4389
    %v4447 = vadd.f32 %v4034, %v4389
    %v4448 = vadd.f32 %v4037, %v4389
    %v4449 = vadd.f32 %v4042, %v4389
    %v4450 = vadd.f32 %v4045, %v4389
    %v4451 = vadd.f32 %v4050, %v4389
    %v4452 = vadd.f32 %v4053, %v4389
    %v4453 = vadd.f32 %v4058, %v4389
    %v4454 = vadd.f32 %v4061, %v4389
    %v4455 = vadd.f32 %v4066, %v4389
    %v4456 = vadd.f32 %v4069, %v4389
    %v4457 = vadd.f32 %v4074, %v4389
    %v4458 = vadd.f32 %v4077, %v4389
    %v4459 = vadd.f32 %v4082, %v4389
    %v4460 = vadd.f32 %v4085, %v4389
    %v4461 = vadd.f32 %v4090, %v4389
    %v4462 = vadd.f32 %v4093, %v4389
    %v4463 = vadd.f32 %v4098, %v4389
    %v4464 = vadd.f32 %v4101, %v4389
    %v4465 = vadd.f32 %v4106, %v4389
    %v4466 = vadd.f32 %v4109, %v4389
    %v4467 = vadd.f32 %v4114, %v4389
    %v4468 = vadd.f32 %v4117, %v4389
    %v4469 = vadd.f32 %v4122, %v4389
    %v4470 = vadd.f32 %v4125, %v4389
    %v4471 = vadd.f32 %v4130, %v4389
    %v4472 = vadd.f32 %v4133, %v4389
    %v4473 = vadd.f32 %v4138, %v4389
    %v4474 = vadd.f32 %v4141, %v4389
    %v4475 = vadd.f32 %v4146, %v4389
    %v4476 = vadd.f32 %v4149, %v4389
    %v4477 = vadd.f32 %v4154, %v4389
    %v4478 = vadd.f32 %v4157, %v4389
    %v4479 = vadd.f32 %v4162, %v4389
    %v4480 = vadd.f32 %v4165, %v4389
    %v4481 = vadd.f32 %v4170, %v4389
    %v4482 = vadd.f32 %v4173, %v4389
    %v4483 = vadd.f32 %v4178, %v4389
    %v4484 = vadd.f32 %v4181, %v4389
    %v4485 = vadd.f32 %v4186, %v4389
    %v4486 = vadd.f32 %v4189, %v4389
    %v4487 = vadd.f32 %v4194, %v4389
    %v4488 = vadd.f32 %v4197, %v4389
    %v4489 = vadd.f32 %v4202, %v4389
    %v4490 = vadd.f32 %v4205, %v4389
    %v4491 = vadd.f32 %v4210, %v4389
    %v4492 = vadd.f32 %v4213, %v4389
    %v4493 = vadd.f32 %v4218, %v4389
    %v4494 = vadd.f32 %v4221, %v4389
    %v4495 = vadd.f32 %v4226, %v4389
    %v4496 = vadd.f32 %v4229, %v4389
    %v4497 = vadd.f32 %v4234, %v4389
    %v4498 = vadd.f32 %v4237, %v4389
    %v4499 = vadd.f32 %v4242, %v4389
    %v4500 = vadd.f32 %v4245, %v4389
    %v4501 = vadd.f32 %v4250, %v4389
    %v4502 = vadd.f32 %v4253, %v4389
    %v4503 = vadd.f32 %v4258, %v4389
    %v4504 = vadd.f32 %v4261, %v4389
    %v4505 = vadd.f32 %v4266, %v4389
    %v4506 = vadd.f32 %v4269, %v4389
    %v4507 = vadd.f32 %v4274, %v4389
    %v4508 = vadd.f32 %v4277, %v4389
    %v4509 = vadd.f32 %v4282, %v4389
    %v4510 = vadd.f32 %v4285, %v4389
    %v4511 = vadd.f32 %v4290, %v4389
    %v4512 = vadd.f32 %v4293, %v4389
    %v4513 = vadd.f32 %v4298, %v4389
    %v4514 = vadd.f32 %v4301, %v4389
    %v4515 = vadd.f32 %v4306, %v4389
    %v4516 = vadd.f32 %v4309, %v4389
    %v4517 = vadd.f32 %v4314, %v4389
    %v4518 = vadd.f32 %v4317, %v4389
    %v4519 = vadd.f32 %v4322, %v4389
    %v4520 = vadd.f32 %v4325, %v4389
    %v4521 = vadd.f32 %v4330, %v4389
    %v4522 = vadd.f32 %v4333, %v4389
    %v4523 = vadd.f32 %v4338, %v4389
    %v4524 = vadd.f32 %v4341, %v4389
    %v4525 = vadd.f32 %v4346, %v4389
    %v4526 = vadd.f32 %v4349, %v4389
    %v4527 = vadd.f32 %v4354, %v4389
    %v4528 = vadd.f32 %v4357, %v4389
    %v4529 = vadd.f32 %v4362, %v4389
    %v4530 = vadd.f32 %v4365, %v4389
    %v4531 = vadd.f32 %v4370, %v4389
    %v4532 = vadd.f32 %v4373, %v4389
    %v4533 = vadd.f32 %v4378, %v4389
    %v4534 = vadd.f32 %v4381, %v4389
    %4535 = vadd.xlane.f32.xlu0 %v4391
    %v4536 = vpop.xlane.xlu0 %4535
    %4537 = vadd.xlane.f32.xlu0 %v4392
    %v4538 = vpop.xlane.xlu0 %4537
    %4539 = vadd.xlane.f32.xlu0 %v4393
    %v4540 = vpop.xlane.xlu0 %4539
    %4541 = vadd.xlane.f32.xlu0 %v4394
    %v4542 = vpop.xlane.xlu0 %4541
    %4543 = vadd.xlane.f32.xlu0 %v4395
    %v4544 = vpop.xlane.xlu0 %4543
    %4545 = vadd.xlane.f32.xlu0 %v4396
    %v4546 = vpop.xlane.xlu0 %4545
    %4547 = vadd.xlane.f32.xlu0 %v4397
    %v4548 = vpop.xlane.xlu0 %4547
    %4549 = vadd.xlane.f32.xlu0 %v4398
    %v4550 = vpop.xlane.xlu0 %4549
    %4551 = vadd.xlane.f32.xlu0 %v4399
    %v4552 = vpop.xlane.xlu0 %4551
    %4553 = vadd.xlane.f32.xlu0 %v4400
    %v4554 = vpop.xlane.xlu0 %4553
    %4555 = vadd.xlane.f32.xlu0 %v4401
    %v4556 = vpop.xlane.xlu0 %4555
    %4557 = vadd.xlane.f32.xlu0 %v4402
    %v4558 = vpop.xlane.xlu0 %4557
    %4559 = vadd.xlane.f32.xlu0 %v4403
    %v4560 = vpop.xlane.xlu0 %4559
    %4561 = vadd.xlane.f32.xlu0 %v4404
    %v4562 = vpop.xlane.xlu0 %4561
    %4563 = vadd.xlane.f32.xlu0 %v4405
    %v4564 = vpop.xlane.xlu0 %4563
    %4565 = vadd.xlane.f32.xlu0 %v4406
    %v4566 = vpop.xlane.xlu0 %4565
    %4567 = vadd.xlane.f32.xlu0 %v4407
    %v4568 = vpop.xlane.xlu0 %4567
    %4569 = vadd.xlane.f32.xlu0 %v4408
    %v4570 = vpop.xlane.xlu0 %4569
    %4571 = vadd.xlane.f32.xlu0 %v4409
    %v4572 = vpop.xlane.xlu0 %4571
    %4573 = vadd.xlane.f32.xlu0 %v4410
    %v4574 = vpop.xlane.xlu0 %4573
    %4575 = vadd.xlane.f32.xlu0 %v4411
    %v4576 = vpop.xlane.xlu0 %4575
    %4577 = vadd.xlane.f32.xlu0 %v4412
    %v4578 = vpop.xlane.xlu0 %4577
    %4579 = vadd.xlane.f32.xlu0 %v4413
    %v4580 = vpop.xlane.xlu0 %4579
    %4581 = vadd.xlane.f32.xlu0 %v4414
    %v4582 = vpop.xlane.xlu0 %4581
    %4583 = vadd.xlane.f32.xlu0 %v4415
    %v4584 = vpop.xlane.xlu0 %4583
    %4585 = vadd.xlane.f32.xlu0 %v4416
    %v4586 = vpop.xlane.xlu0 %4585
    %4587 = vadd.xlane.f32.xlu0 %v4417
    %v4588 = vpop.xlane.xlu0 %4587
    %4589 = vadd.xlane.f32.xlu0 %v4418
    %v4590 = vpop.xlane.xlu0 %4589
    %4591 = vadd.xlane.f32.xlu0 %v4419
    %v4592 = vpop.xlane.xlu0 %4591
    %4593 = vadd.xlane.f32.xlu0 %v4420
    %v4594 = vpop.xlane.xlu0 %4593
    %4595 = vadd.xlane.f32.xlu0 %v4421
    %v4596 = vpop.xlane.xlu0 %4595
    %4597 = vadd.xlane.f32.xlu0 %v4422
    %v4598 = vpop.xlane.xlu0 %4597
    %4599 = vadd.xlane.f32.xlu0 %v4423
    %v4600 = vpop.xlane.xlu0 %4599
    %4601 = vadd.xlane.f32.xlu0 %v4424
    %v4602 = vpop.xlane.xlu0 %4601
    %4603 = vadd.xlane.f32.xlu0 %v4425
    %v4604 = vpop.xlane.xlu0 %4603
    %4605 = vadd.xlane.f32.xlu0 %v4426
    %v4606 = vpop.xlane.xlu0 %4605
    %4607 = vadd.xlane.f32.xlu0 %v4427
    %v4608 = vpop.xlane.xlu0 %4607
    %4609 = vadd.xlane.f32.xlu0 %v4428
    %v4610 = vpop.xlane.xlu0 %4609
    %4611 = vadd.xlane.f32.xlu0 %v4429
    %v4612 = vpop.xlane.xlu0 %4611
    %4613 = vadd.xlane.f32.xlu0 %v4430
    %v4614 = vpop.xlane.xlu0 %4613
    %4615 = vadd.xlane.f32.xlu0 %v4431
    %v4616 = vpop.xlane.xlu0 %4615
    %4617 = vadd.xlane.f32.xlu0 %v4432
    %v4618 = vpop.xlane.xlu0 %4617
    %4619 = vadd.xlane.f32.xlu0 %v4433
    %v4620 = vpop.xlane.xlu0 %4619
    %4621 = vadd.xlane.f32.xlu0 %v4434
    %v4622 = vpop.xlane.xlu0 %4621
    %4623 = vadd.xlane.f32.xlu0 %v4435
    %v4624 = vpop.xlane.xlu0 %4623
    %4625 = vadd.xlane.f32.xlu0 %v4436
    %v4626 = vpop.xlane.xlu0 %4625
    %4627 = vadd.xlane.f32.xlu0 %v4437
    %v4628 = vpop.xlane.xlu0 %4627
    %4629 = vadd.xlane.f32.xlu0 %v4438
    %v4630 = vpop.xlane.xlu0 %4629
    %4631 = vadd.xlane.f32.xlu0 %v4439
    %v4632 = vpop.xlane.xlu0 %4631
    %4633 = vadd.xlane.f32.xlu0 %v4440
    %v4634 = vpop.xlane.xlu0 %4633
    %4635 = vadd.xlane.f32.xlu0 %v4441
    %v4636 = vpop.xlane.xlu0 %4635
    %4637 = vadd.xlane.f32.xlu0 %v4442
    %v4638 = vpop.xlane.xlu0 %4637
    %4639 = vadd.xlane.f32.xlu0 %v4443
    %v4640 = vpop.xlane.xlu0 %4639
    %4641 = vadd.xlane.f32.xlu0 %v4444
    %v4642 = vpop.xlane.xlu0 %4641
    %4643 = vadd.xlane.f32.xlu0 %v4445
    %v4644 = vpop.xlane.xlu0 %4643
    %4645 = vadd.xlane.f32.xlu0 %v4446
    %v4646 = vpop.xlane.xlu0 %4645
    %4647 = vadd.xlane.f32.xlu0 %v4447
    %v4648 = vpop.xlane.xlu0 %4647
    %4649 = vadd.xlane.f32.xlu0 %v4448
    %v4650 = vpop.xlane.xlu0 %4649
    %4651 = vadd.xlane.f32.xlu0 %v4449
    %v4652 = vpop.xlane.xlu0 %4651
    %4653 = vadd.xlane.f32.xlu0 %v4450
    %v4654 = vpop.xlane.xlu0 %4653
    %4655 = vadd.xlane.f32.xlu0 %v4451
    %v4656 = vpop.xlane.xlu0 %4655
    %4657 = vadd.xlane.f32.xlu0 %v4452
    %v4658 = vpop.xlane.xlu0 %4657
    %4659 = vadd.xlane.f32.xlu0 %v4453
    %v4660 = vpop.xlane.xlu0 %4659
    %4661 = vadd.xlane.f32.xlu0 %v4454
    %v4662 = vpop.xlane.xlu0 %4661
    %4663 = vadd.xlane.f32.xlu0 %v4455
    %v4664 = vpop.xlane.xlu0 %4663
    %4665 = vadd.xlane.f32.xlu0 %v4456
    %v4666 = vpop.xlane.xlu0 %4665
    %4667 = vadd.xlane.f32.xlu0 %v4457
    %v4668 = vpop.xlane.xlu0 %4667
    %4669 = vadd.xlane.f32.xlu0 %v4458
    %v4670 = vpop.xlane.xlu0 %4669
    %4671 = vadd.xlane.f32.xlu0 %v4459
    %v4672 = vpop.xlane.xlu0 %4671
    %4673 = vadd.xlane.f32.xlu0 %v4460
    %v4674 = vpop.xlane.xlu0 %4673
    %4675 = vadd.xlane.f32.xlu0 %v4461
    %v4676 = vpop.xlane.xlu0 %4675
    %4677 = vadd.xlane.f32.xlu0 %v4462
    %v4678 = vpop.xlane.xlu0 %4677
    %4679 = vadd.xlane.f32.xlu0 %v4463
    %v4680 = vpop.xlane.xlu0 %4679
    %4681 = vadd.xlane.f32.xlu0 %v4464
    %v4682 = vpop.xlane.xlu0 %4681
    %4683 = vadd.xlane.f32.xlu0 %v4465
    %v4684 = vpop.xlane.xlu0 %4683
    %4685 = vadd.xlane.f32.xlu0 %v4466
    %v4686 = vpop.xlane.xlu0 %4685
    %4687 = vadd.xlane.f32.xlu0 %v4467
    %v4688 = vpop.xlane.xlu0 %4687
    %4689 = vadd.xlane.f32.xlu0 %v4468
    %v4690 = vpop.xlane.xlu0 %4689
    %4691 = vadd.xlane.f32.xlu0 %v4469
    %v4692 = vpop.xlane.xlu0 %4691
    %4693 = vadd.xlane.f32.xlu0 %v4470
    %v4694 = vpop.xlane.xlu0 %4693
    %4695 = vadd.xlane.f32.xlu0 %v4471
    %v4696 = vpop.xlane.xlu0 %4695
    %4697 = vadd.xlane.f32.xlu0 %v4472
    %v4698 = vpop.xlane.xlu0 %4697
    %4699 = vadd.xlane.f32.xlu0 %v4473
    %v4700 = vpop.xlane.xlu0 %4699
    %4701 = vadd.xlane.f32.xlu0 %v4474
    %v4702 = vpop.xlane.xlu0 %4701
    %4703 = vadd.xlane.f32.xlu0 %v4475
    %v4704 = vpop.xlane.xlu0 %4703
    %4705 = vadd.xlane.f32.xlu0 %v4476
    %v4706 = vpop.xlane.xlu0 %4705
    %4707 = vadd.xlane.f32.xlu0 %v4477
    %v4708 = vpop.xlane.xlu0 %4707
    %4709 = vadd.xlane.f32.xlu0 %v4478
    %v4710 = vpop.xlane.xlu0 %4709
    %4711 = vadd.xlane.f32.xlu0 %v4479
    %v4712 = vpop.xlane.xlu0 %4711
    %4713 = vadd.xlane.f32.xlu0 %v4480
    %v4714 = vpop.xlane.xlu0 %4713
    %4715 = vadd.xlane.f32.xlu0 %v4481
    %v4716 = vpop.xlane.xlu0 %4715
    %4717 = vadd.xlane.f32.xlu0 %v4482
    %v4718 = vpop.xlane.xlu0 %4717
    %4719 = vadd.xlane.f32.xlu0 %v4483
    %v4720 = vpop.xlane.xlu0 %4719
    %4721 = vadd.xlane.f32.xlu0 %v4484
    %v4722 = vpop.xlane.xlu0 %4721
    %4723 = vadd.xlane.f32.xlu0 %v4485
    %v4724 = vpop.xlane.xlu0 %4723
    %4725 = vadd.xlane.f32.xlu0 %v4486
    %v4726 = vpop.xlane.xlu0 %4725
    %4727 = vadd.xlane.f32.xlu0 %v4487
    %v4728 = vpop.xlane.xlu0 %4727
    %4729 = vadd.xlane.f32.xlu0 %v4488
    %v4730 = vpop.xlane.xlu0 %4729
    %4731 = vadd.xlane.f32.xlu0 %v4489
    %v4732 = vpop.xlane.xlu0 %4731
    %4733 = vadd.xlane.f32.xlu0 %v4490
    %v4734 = vpop.xlane.xlu0 %4733
    %4735 = vadd.xlane.f32.xlu0 %v4491
    %v4736 = vpop.xlane.xlu0 %4735
    %4737 = vadd.xlane.f32.xlu0 %v4492
    %v4738 = vpop.xlane.xlu0 %4737
    %4739 = vadd.xlane.f32.xlu0 %v4493
    %v4740 = vpop.xlane.xlu0 %4739
    %4741 = vadd.xlane.f32.xlu0 %v4494
    %v4742 = vpop.xlane.xlu0 %4741
    %4743 = vadd.xlane.f32.xlu0 %v4495
    %v4744 = vpop.xlane.xlu0 %4743
    %4745 = vadd.xlane.f32.xlu0 %v4496
    %v4746 = vpop.xlane.xlu0 %4745
    %4747 = vadd.xlane.f32.xlu0 %v4497
    %v4748 = vpop.xlane.xlu0 %4747
    %4749 = vadd.xlane.f32.xlu0 %v4498
    %v4750 = vpop.xlane.xlu0 %4749
    %4751 = vadd.xlane.f32.xlu0 %v4499
    %v4752 = vpop.xlane.xlu0 %4751
    %4753 = vadd.xlane.f32.xlu0 %v4500
    %v4754 = vpop.xlane.xlu0 %4753
    %4755 = vadd.xlane.f32.xlu0 %v4501
    %v4756 = vpop.xlane.xlu0 %4755
    %4757 = vadd.xlane.f32.xlu0 %v4502
    %v4758 = vpop.xlane.xlu0 %4757
    %4759 = vadd.xlane.f32.xlu0 %v4503
    %v4760 = vpop.xlane.xlu0 %4759
    %4761 = vadd.xlane.f32.xlu0 %v4504
    %v4762 = vpop.xlane.xlu0 %4761
    %4763 = vadd.xlane.f32.xlu0 %v4505
    %v4764 = vpop.xlane.xlu0 %4763
    %4765 = vadd.xlane.f32.xlu0 %v4506
    %v4766 = vpop.xlane.xlu0 %4765
    %4767 = vadd.xlane.f32.xlu0 %v4507
    %v4768 = vpop.xlane.xlu0 %4767
    %4769 = vadd.xlane.f32.xlu0 %v4508
    %v4770 = vpop.xlane.xlu0 %4769
    %4771 = vadd.xlane.f32.xlu0 %v4509
    %v4772 = vpop.xlane.xlu0 %4771
    %4773 = vadd.xlane.f32.xlu0 %v4510
    %v4774 = vpop.xlane.xlu0 %4773
    %4775 = vadd.xlane.f32.xlu0 %v4511
    %v4776 = vpop.xlane.xlu0 %4775
    %4777 = vadd.xlane.f32.xlu0 %v4512
    %v4778 = vpop.xlane.xlu0 %4777
    %4779 = vadd.xlane.f32.xlu0 %v4513
    %v4780 = vpop.xlane.xlu0 %4779
    %4781 = vadd.xlane.f32.xlu0 %v4514
    %v4782 = vpop.xlane.xlu0 %4781
    %4783 = vadd.xlane.f32.xlu0 %v4515
    %v4784 = vpop.xlane.xlu0 %4783
    %4785 = vadd.xlane.f32.xlu0 %v4516
    %v4786 = vpop.xlane.xlu0 %4785
    %4787 = vadd.xlane.f32.xlu0 %v4517
    %v4788 = vpop.xlane.xlu0 %4787
    %4789 = vadd.xlane.f32.xlu0 %v4518
    %v4790 = vpop.xlane.xlu0 %4789
    %4791 = vadd.xlane.f32.xlu0 %v4519
    %v4792 = vpop.xlane.xlu0 %4791
    %4793 = vadd.xlane.f32.xlu0 %v4520
    %v4794 = vpop.xlane.xlu0 %4793
    %4795 = vadd.xlane.f32.xlu0 %v4521
    %v4796 = vpop.xlane.xlu0 %4795
    %4797 = vadd.xlane.f32.xlu0 %v4522
    %v4798 = vpop.xlane.xlu0 %4797
    %4799 = vadd.xlane.f32.xlu0 %v4523
    %v4800 = vpop.xlane.xlu0 %4799
    %4801 = vadd.xlane.f32.xlu0 %v4524
    %v4802 = vpop.xlane.xlu0 %4801
    %4803 = vadd.xlane.f32.xlu0 %v4525
    %v4804 = vpop.xlane.xlu0 %4803
    %4805 = vadd.xlane.f32.xlu0 %v4526
    %v4806 = vpop.xlane.xlu0 %4805
    %4807 = vadd.xlane.f32.xlu0 %v4527
    %v4808 = vpop.xlane.xlu0 %4807
    %4809 = vadd.xlane.f32.xlu0 %v4528
    %v4810 = vpop.xlane.xlu0 %4809
    %4811 = vadd.xlane.f32.xlu0 %v4529
    %v4812 = vpop.xlane.xlu0 %4811
    %4813 = vadd.xlane.f32.xlu0 %v4530
    %v4814 = vpop.xlane.xlu0 %4813
    %4815 = vadd.xlane.f32.xlu0 %v4531
    %v4816 = vpop.xlane.xlu0 %4815
    %4817 = vadd.xlane.f32.xlu0 %v4532
    %v4818 = vpop.xlane.xlu0 %4817
    %4819 = vadd.xlane.f32.xlu0 %v4533
    %v4820 = vpop.xlane.xlu0 %4819
    %4821 = vadd.xlane.f32.xlu0 %v4534
    %v4822 = vpop.xlane.xlu0 %4821
    %v4823 = vmul.f32 %v4536, 0.014285714
    %v4824 = vmul.f32 %v4538, 0.014285714
    %v4825 = vmul.f32 %v4540, 0.014285714
    %v4826 = vmul.f32 %v4542, 0.014285714
    %v4827 = vmul.f32 %v4544, 0.014285714
    %v4828 = vmul.f32 %v4546, 0.014285714
    %v4829 = vmul.f32 %v4548, 0.014285714
    %v4830 = vmul.f32 %v4550, 0.014285714
    %v4831 = vmul.f32 %v4552, 0.014285714
    %v4832 = vmul.f32 %v4554, 0.014285714
    %v4833 = vmul.f32 %v4556, 0.014285714
    %v4834 = vmul.f32 %v4558, 0.014285714
    %v4835 = vmul.f32 %v4560, 0.014285714
    %v4836 = vmul.f32 %v4562, 0.014285714
    %v4837 = vmul.f32 %v4564, 0.014285714
    %v4838 = vmul.f32 %v4566, 0.014285714
    %v4839 = vmul.f32 %v4568, 0.014285714
    %v4840 = vmul.f32 %v4570, 0.014285714
    %v4841 = vmul.f32 %v4572, 0.014285714
    %v4842 = vmul.f32 %v4574, 0.014285714
    %v4843 = vmul.f32 %v4576, 0.014285714
    %v4844 = vmul.f32 %v4578, 0.014285714
    %v4845 = vmul.f32 %v4580, 0.014285714
    %v4846 = vmul.f32 %v4582, 0.014285714
    %v4847 = vmul.f32 %v4584, 0.014285714
    %v4848 = vmul.f32 %v4586, 0.014285714
    %v4849 = vmul.f32 %v4588, 0.014285714
    %v4850 = vmul.f32 %v4590, 0.014285714
    %v4851 = vmul.f32 %v4592, 0.014285714
    %v4852 = vmul.f32 %v4594, 0.014285714
    %v4853 = vmul.f32 %v4596, 0.014285714
    %v4854 = vmul.f32 %v4598, 0.014285714
    %v4855 = vmul.f32 %v4600, 0.014285714
    %v4856 = vmul.f32 %v4602, 0.014285714
    %v4857 = vmul.f32 %v4604, 0.014285714
    %v4858 = vmul.f32 %v4606, 0.014285714
    %v4859 = vmul.f32 %v4608, 0.014285714
    %v4860 = vmul.f32 %v4610, 0.014285714
    %v4861 = vmul.f32 %v4612, 0.014285714
    %v4862 = vmul.f32 %v4614, 0.014285714
    %v4863 = vmul.f32 %v4616, 0.014285714
    %v4864 = vmul.f32 %v4618, 0.014285714
    %v4865 = vmul.f32 %v4620, 0.014285714
    %v4866 = vmul.f32 %v4622, 0.014285714
    %v4867 = vmul.f32 %v4624, 0.014285714
    %v4868 = vmul.f32 %v4626, 0.014285714
    %v4869 = vmul.f32 %v4628, 0.014285714
    %v4870 = vmul.f32 %v4630, 0.014285714
    %v4871 = vmul.f32 %v4632, 0.014285714
    %v4872 = vmul.f32 %v4634, 0.014285714
    %v4873 = vmul.f32 %v4636, 0.014285714
    %v4874 = vmul.f32 %v4638, 0.014285714
    %v4875 = vmul.f32 %v4640, 0.014285714
    %v4876 = vmul.f32 %v4642, 0.014285714
    %v4877 = vmul.f32 %v4644, 0.014285714
    %v4878 = vmul.f32 %v4646, 0.014285714
    %v4879 = vmul.f32 %v4648, 0.014285714
    %v4880 = vmul.f32 %v4650, 0.014285714
    %v4881 = vmul.f32 %v4652, 0.014285714
    %v4882 = vmul.f32 %v4654, 0.014285714
    %v4883 = vmul.f32 %v4656, 0.014285714
    %v4884 = vmul.f32 %v4658, 0.014285714
    %v4885 = vmul.f32 %v4660, 0.014285714
    %v4886 = vmul.f32 %v4662, 0.014285714
    %v4887 = vmul.f32 %v4664, 0.014285714
    %v4888 = vmul.f32 %v4666, 0.014285714
    %v4889 = vmul.f32 %v4668, 0.014285714
    %v4890 = vmul.f32 %v4670, 0.014285714
    %v4891 = vmul.f32 %v4672, 0.014285714
    %v4892 = vmul.f32 %v4674, 0.014285714
    %v4893 = vmul.f32 %v4676, 0.014285714
    %v4894 = vmul.f32 %v4678, 0.014285714
    %v4895 = vmul.f32 %v4680, 0.014285714
    %v4896 = vmul.f32 %v4682, 0.014285714
    %v4897 = vmul.f32 %v4684, 0.014285714
    %v4898 = vmul.f32 %v4686, 0.014285714
    %v4899 = vmul.f32 %v4688, 0.014285714
    %v4900 = vmul.f32 %v4690, 0.014285714
    %v4901 = vmul.f32 %v4692, 0.014285714
    %v4902 = vmul.f32 %v4694, 0.014285714
    %v4903 = vmul.f32 %v4696, 0.014285714
    %v4904 = vmul.f32 %v4698, 0.014285714
    %v4905 = vmul.f32 %v4700, 0.014285714
    %v4906 = vmul.f32 %v4702, 0.014285714
    %v4907 = vmul.f32 %v4704, 0.014285714
    %v4908 = vmul.f32 %v4706, 0.014285714
    %v4909 = vmul.f32 %v4708, 0.014285714
    %v4910 = vmul.f32 %v4710, 0.014285714
    %v4911 = vmul.f32 %v4712, 0.014285714
    %v4912 = vmul.f32 %v4714, 0.014285714
    %v4913 = vmul.f32 %v4716, 0.014285714
    %v4914 = vmul.f32 %v4718, 0.014285714
    %v4915 = vmul.f32 %v4720, 0.014285714
    %v4916 = vmul.f32 %v4722, 0.014285714
    %v4917 = vmul.f32 %v4724, 0.014285714
    %v4918 = vmul.f32 %v4726, 0.014285714
    %v4919 = vmul.f32 %v4728, 0.014285714
    %v4920 = vmul.f32 %v4730, 0.014285714
    %v4921 = vmul.f32 %v4732, 0.014285714
    %v4922 = vmul.f32 %v4734, 0.014285714
    %v4923 = vmul.f32 %v4736, 0.014285714
    %v4924 = vmul.f32 %v4738, 0.014285714
    %v4925 = vmul.f32 %v4740, 0.014285714
    %v4926 = vmul.f32 %v4742, 0.014285714
    %v4927 = vmul.f32 %v4744, 0.014285714
    %v4928 = vmul.f32 %v4746, 0.014285714
    %v4929 = vmul.f32 %v4748, 0.014285714
    %v4930 = vmul.f32 %v4750, 0.014285714
    %v4931 = vmul.f32 %v4752, 0.014285714
    %v4932 = vmul.f32 %v4754, 0.014285714
    %v4933 = vmul.f32 %v4756, 0.014285714
    %v4934 = vmul.f32 %v4758, 0.014285714
    %v4935 = vmul.f32 %v4760, 0.014285714
    %v4936 = vmul.f32 %v4762, 0.014285714
    %v4937 = vmul.f32 %v4764, 0.014285714
    %v4938 = vmul.f32 %v4766, 0.014285714
    %v4939 = vmul.f32 %v4768, 0.014285714
    %v4940 = vmul.f32 %v4770, 0.014285714
    %v4941 = vmul.f32 %v4772, 0.014285714
    %v4942 = vmul.f32 %v4774, 0.014285714
    %v4943 = vmul.f32 %v4776, 0.014285714
    %v4944 = vmul.f32 %v4778, 0.014285714
    %v4945 = vmul.f32 %v4780, 0.014285714
    %v4946 = vmul.f32 %v4782, 0.014285714
    %v4947 = vmul.f32 %v4784, 0.014285714
    %v4948 = vmul.f32 %v4786, 0.014285714
    %v4949 = vmul.f32 %v4788, 0.014285714
    %v4950 = vmul.f32 %v4790, 0.014285714
    %v4951 = vmul.f32 %v4792, 0.014285714
    %v4952 = vmul.f32 %v4794, 0.014285714
    %v4953 = vmul.f32 %v4796, 0.014285714
    %v4954 = vmul.f32 %v4798, 0.014285714
    %v4955 = vmul.f32 %v4800, 0.014285714
    %v4956 = vmul.f32 %v4802, 0.014285714
    %v4957 = vmul.f32 %v4804, 0.014285714
    %v4958 = vmul.f32 %v4806, 0.014285714
    %v4959 = vmul.f32 %v4808, 0.014285714
    %v4960 = vmul.f32 %v4810, 0.014285714
    %v4961 = vmul.f32 %v4812, 0.014285714
    %v4962 = vmul.f32 %v4814, 0.014285714
    %v4963 = vmul.f32 %v4816, 0.014285714
    %v4964 = vmul.f32 %v4818, 0.014285714
    %v4965 = vmul.f32 %v4820, 0.014285714
    %v4966 = vmul.f32 %v4822, 0.014285714
    %v4967 = vmul.f32 %v4391, %v4391
    %v4968 = vmul.f32 %v4392, %v4392
    %v4969 = vmul.f32 %v4393, %v4393
    %v4970 = vmul.f32 %v4394, %v4394
    %v4971 = vmul.f32 %v4395, %v4395
    %v4972 = vmul.f32 %v4396, %v4396
    %v4973 = vmul.f32 %v4397, %v4397
    %v4974 = vmul.f32 %v4398, %v4398
    %v4975 = vmul.f32 %v4399, %v4399
    %v4976 = vmul.f32 %v4400, %v4400
    %v4977 = vmul.f32 %v4401, %v4401
    %v4978 = vmul.f32 %v4402, %v4402
    %v4979 = vmul.f32 %v4403, %v4403
    %v4980 = vmul.f32 %v4404, %v4404
    %v4981 = vmul.f32 %v4405, %v4405
    %v4982 = vmul.f32 %v4406, %v4406
    %v4983 = vmul.f32 %v4407, %v4407
    %v4984 = vmul.f32 %v4408, %v4408
    %v4985 = vmul.f32 %v4409, %v4409
    %v4986 = vmul.f32 %v4410, %v4410
    %v4987 = vmul.f32 %v4411, %v4411
    %v4988 = vmul.f32 %v4412, %v4412
    %v4989 = vmul.f32 %v4413, %v4413
    %v4990 = vmul.f32 %v4414, %v4414
    %v4991 = vmul.f32 %v4415, %v4415
    %v4992 = vmul.f32 %v4416, %v4416
    %v4993 = vmul.f32 %v4417, %v4417
    %v4994 = vmul.f32 %v4418, %v4418
    %v4995 = vmul.f32 %v4419, %v4419
    %v4996 = vmul.f32 %v4420, %v4420
    %v4997 = vmul.f32 %v4421, %v4421
    %v4998 = vmul.f32 %v4422, %v4422
    %v4999 = vmul.f32 %v4423, %v4423
    %v5000 = vmul.f32 %v4424, %v4424
    %v5001 = vmul.f32 %v4425, %v4425
    %v5002 = vmul.f32 %v4426, %v4426
    %v5003 = vmul.f32 %v4427, %v4427
    %v5004 = vmul.f32 %v4428, %v4428
    %v5005 = vmul.f32 %v4429, %v4429
    %v5006 = vmul.f32 %v4430, %v4430
    %v5007 = vmul.f32 %v4431, %v4431
    %v5008 = vmul.f32 %v4432, %v4432
    %v5009 = vmul.f32 %v4433, %v4433
    %v5010 = vmul.f32 %v4434, %v4434
    %v5011 = vmul.f32 %v4435, %v4435
    %v5012 = vmul.f32 %v4436, %v4436
    %v5013 = vmul.f32 %v4437, %v4437
    %v5014 = vmul.f32 %v4438, %v4438
    %v5015 = vmul.f32 %v4439, %v4439
    %v5016 = vmul.f32 %v4440, %v4440
    %v5017 = vmul.f32 %v4441, %v4441
    %v5018 = vmul.f32 %v4442, %v4442
    %v5019 = vmul.f32 %v4443, %v4443
    %v5020 = vmul.f32 %v4444, %v4444
    %v5021 = vmul.f32 %v4445, %v4445
    %v5022 = vmul.f32 %v4446, %v4446
    %v5023 = vmul.f32 %v4447, %v4447
    %v5024 = vmul.f32 %v4448, %v4448
    %v5025 = vmul.f32 %v4449, %v4449
    %v5026 = vmul.f32 %v4450, %v4450
    %v5027 = vmul.f32 %v4451, %v4451
    %v5028 = vmul.f32 %v4452, %v4452
    %v5029 = vmul.f32 %v4453, %v4453
    %v5030 = vmul.f32 %v4454, %v4454
    %v5031 = vmul.f32 %v4455, %v4455
    %v5032 = vmul.f32 %v4456, %v4456
    %v5033 = vmul.f32 %v4457, %v4457
    %v5034 = vmul.f32 %v4458, %v4458
    %v5035 = vmul.f32 %v4459, %v4459
    %v5036 = vmul.f32 %v4460, %v4460
    %v5037 = vmul.f32 %v4461, %v4461
    %v5038 = vmul.f32 %v4462, %v4462
    %v5039 = vmul.f32 %v4463, %v4463
    %v5040 = vmul.f32 %v4464, %v4464
    %v5041 = vmul.f32 %v4465, %v4465
    %v5042 = vmul.f32 %v4466, %v4466
    %v5043 = vmul.f32 %v4467, %v4467
    %v5044 = vmul.f32 %v4468, %v4468
    %v5045 = vmul.f32 %v4469, %v4469
    %v5046 = vmul.f32 %v4470, %v4470
    %v5047 = vmul.f32 %v4471, %v4471
    %v5048 = vmul.f32 %v4472, %v4472
    %v5049 = vmul.f32 %v4473, %v4473
    %v5050 = vmul.f32 %v4474, %v4474
    %v5051 = vmul.f32 %v4475, %v4475
    %v5052 = vmul.f32 %v4476, %v4476
    %v5053 = vmul.f32 %v4477, %v4477
    %v5054 = vmul.f32 %v4478, %v4478
    %v5055 = vmul.f32 %v4479, %v4479
    %v5056 = vmul.f32 %v4480, %v4480
    %v5057 = vmul.f32 %v4481, %v4481
    %v5058 = vmul.f32 %v4482, %v4482
    %v5059 = vmul.f32 %v4483, %v4483
    %v5060 = vmul.f32 %v4484, %v4484
    %v5061 = vmul.f32 %v4485, %v4485
    %v5062 = vmul.f32 %v4486, %v4486
    %v5063 = vmul.f32 %v4487, %v4487
    %v5064 = vmul.f32 %v4488, %v4488
    %v5065 = vmul.f32 %v4489, %v4489
    %v5066 = vmul.f32 %v4490, %v4490
    %v5067 = vmul.f32 %v4491, %v4491
    %v5068 = vmul.f32 %v4492, %v4492
    %v5069 = vmul.f32 %v4493, %v4493
    %v5070 = vmul.f32 %v4494, %v4494
    %v5071 = vmul.f32 %v4495, %v4495
    %v5072 = vmul.f32 %v4496, %v4496
    %v5073 = vmul.f32 %v4497, %v4497
    %v5074 = vmul.f32 %v4498, %v4498
    %v5075 = vmul.f32 %v4499, %v4499
    %v5076 = vmul.f32 %v4500, %v4500
    %v5077 = vmul.f32 %v4501, %v4501
    %v5078 = vmul.f32 %v4502, %v4502
    %v5079 = vmul.f32 %v4503, %v4503
    %v5080 = vmul.f32 %v4504, %v4504
    %v5081 = vmul.f32 %v4505, %v4505
    %v5082 = vmul.f32 %v4506, %v4506
    %v5083 = vmul.f32 %v4507, %v4507
    %v5084 = vmul.f32 %v4508, %v4508
    %v5085 = vmul.f32 %v4509, %v4509
    %v5086 = vmul.f32 %v4510, %v4510
    %v5087 = vmul.f32 %v4511, %v4511
    %v5088 = vmul.f32 %v4512, %v4512
    %v5089 = vmul.f32 %v4513, %v4513
    %v5090 = vmul.f32 %v4514, %v4514
    %v5091 = vmul.f32 %v4515, %v4515
    %v5092 = vmul.f32 %v4516, %v4516
    %v5093 = vmul.f32 %v4517, %v4517
    %v5094 = vmul.f32 %v4518, %v4518
    %v5095 = vmul.f32 %v4519, %v4519
    %v5096 = vmul.f32 %v4520, %v4520
    %v5097 = vmul.f32 %v4521, %v4521
    %v5098 = vmul.f32 %v4522, %v4522
    %v5099 = vmul.f32 %v4523, %v4523
    %v5100 = vmul.f32 %v4524, %v4524
    %v5101 = vmul.f32 %v4525, %v4525
    %v5102 = vmul.f32 %v4526, %v4526
    %v5103 = vmul.f32 %v4527, %v4527
    %v5104 = vmul.f32 %v4528, %v4528
    %v5105 = vmul.f32 %v4529, %v4529
    %v5106 = vmul.f32 %v4530, %v4530
    %v5107 = vmul.f32 %v4531, %v4531
    %v5108 = vmul.f32 %v4532, %v4532
    %v5109 = vmul.f32 %v4533, %v4533
    %v5110 = vmul.f32 %v4534, %v4534
    %5111 = vadd.xlane.f32.xlu0 %v4967
    %v5112 = vpop.xlane.xlu0 %5111
    %5113 = vadd.xlane.f32.xlu0 %v4968
    %v5114 = vpop.xlane.xlu0 %5113
    %5115 = vadd.xlane.f32.xlu0 %v4969
    %v5116 = vpop.xlane.xlu0 %5115
    %5117 = vadd.xlane.f32.xlu0 %v4970
    %v5118 = vpop.xlane.xlu0 %5117
    %5119 = vadd.xlane.f32.xlu0 %v4971
    %v5120 = vpop.xlane.xlu0 %5119
    %5121 = vadd.xlane.f32.xlu0 %v4972
    %v5122 = vpop.xlane.xlu0 %5121
    %5123 = vadd.xlane.f32.xlu0 %v4973
    %v5124 = vpop.xlane.xlu0 %5123
    %5125 = vadd.xlane.f32.xlu0 %v4974
    %v5126 = vpop.xlane.xlu0 %5125
    %5127 = vadd.xlane.f32.xlu0 %v4975
    %v5128 = vpop.xlane.xlu0 %5127
    %5129 = vadd.xlane.f32.xlu0 %v4976
    %v5130 = vpop.xlane.xlu0 %5129
    %5131 = vadd.xlane.f32.xlu0 %v4977
    %v5132 = vpop.xlane.xlu0 %5131
    %5133 = vadd.xlane.f32.xlu0 %v4978
    %v5134 = vpop.xlane.xlu0 %5133
    %5135 = vadd.xlane.f32.xlu0 %v4979
    %v5136 = vpop.xlane.xlu0 %5135
    %5137 = vadd.xlane.f32.xlu0 %v4980
    %v5138 = vpop.xlane.xlu0 %5137
    %5139 = vadd.xlane.f32.xlu0 %v4981
    %v5140 = vpop.xlane.xlu0 %5139
    %5141 = vadd.xlane.f32.xlu0 %v4982
    %v5142 = vpop.xlane.xlu0 %5141
    %5143 = vadd.xlane.f32.xlu0 %v4983
    %v5144 = vpop.xlane.xlu0 %5143
    %5145 = vadd.xlane.f32.xlu0 %v4984
    %v5146 = vpop.xlane.xlu0 %5145
    %5147 = vadd.xlane.f32.xlu0 %v4985
    %v5148 = vpop.xlane.xlu0 %5147
    %5149 = vadd.xlane.f32.xlu0 %v4986
    %v5150 = vpop.xlane.xlu0 %5149
    %5151 = vadd.xlane.f32.xlu0 %v4987
    %v5152 = vpop.xlane.xlu0 %5151
    %5153 = vadd.xlane.f32.xlu0 %v4988
    %v5154 = vpop.xlane.xlu0 %5153
    %5155 = vadd.xlane.f32.xlu0 %v4989
    %v5156 = vpop.xlane.xlu0 %5155
    %5157 = vadd.xlane.f32.xlu0 %v4990
    %v5158 = vpop.xlane.xlu0 %5157
    %5159 = vadd.xlane.f32.xlu0 %v4991
    %v5160 = vpop.xlane.xlu0 %5159
    %5161 = vadd.xlane.f32.xlu0 %v4992
    %v5162 = vpop.xlane.xlu0 %5161
    %5163 = vadd.xlane.f32.xlu0 %v4993
    %v5164 = vpop.xlane.xlu0 %5163
    %5165 = vadd.xlane.f32.xlu0 %v4994
    %v5166 = vpop.xlane.xlu0 %5165
    %5167 = vadd.xlane.f32.xlu0 %v4995
    %v5168 = vpop.xlane.xlu0 %5167
    %5169 = vadd.xlane.f32.xlu0 %v4996
    %v5170 = vpop.xlane.xlu0 %5169
    %5171 = vadd.xlane.f32.xlu0 %v4997
    %v5172 = vpop.xlane.xlu0 %5171
    %5173 = vadd.xlane.f32.xlu0 %v4998
    %v5174 = vpop.xlane.xlu0 %5173
    %5175 = vadd.xlane.f32.xlu0 %v4999
    %v5176 = vpop.xlane.xlu0 %5175
    %5177 = vadd.xlane.f32.xlu0 %v5000
    %v5178 = vpop.xlane.xlu0 %5177
    %5179 = vadd.xlane.f32.xlu0 %v5001
    %v5180 = vpop.xlane.xlu0 %5179
    %5181 = vadd.xlane.f32.xlu0 %v5002
    %v5182 = vpop.xlane.xlu0 %5181
    %5183 = vadd.xlane.f32.xlu0 %v5003
    %v5184 = vpop.xlane.xlu0 %5183
    %5185 = vadd.xlane.f32.xlu0 %v5004
    %v5186 = vpop.xlane.xlu0 %5185
    %5187 = vadd.xlane.f32.xlu0 %v5005
    %v5188 = vpop.xlane.xlu0 %5187
    %5189 = vadd.xlane.f32.xlu0 %v5006
    %v5190 = vpop.xlane.xlu0 %5189
    %5191 = vadd.xlane.f32.xlu0 %v5007
    %v5192 = vpop.xlane.xlu0 %5191
    %5193 = vadd.xlane.f32.xlu0 %v5008
    %v5194 = vpop.xlane.xlu0 %5193
    %5195 = vadd.xlane.f32.xlu0 %v5009
    %v5196 = vpop.xlane.xlu0 %5195
    %5197 = vadd.xlane.f32.xlu0 %v5010
    %v5198 = vpop.xlane.xlu0 %5197
    %5199 = vadd.xlane.f32.xlu0 %v5011
    %v5200 = vpop.xlane.xlu0 %5199
    %5201 = vadd.xlane.f32.xlu0 %v5012
    %v5202 = vpop.xlane.xlu0 %5201
    %5203 = vadd.xlane.f32.xlu0 %v5013
    %v5204 = vpop.xlane.xlu0 %5203
    %5205 = vadd.xlane.f32.xlu0 %v5014
    %v5206 = vpop.xlane.xlu0 %5205
    %5207 = vadd.xlane.f32.xlu0 %v5015
    %v5208 = vpop.xlane.xlu0 %5207
    %5209 = vadd.xlane.f32.xlu0 %v5016
    %v5210 = vpop.xlane.xlu0 %5209
    %5211 = vadd.xlane.f32.xlu0 %v5017
    %v5212 = vpop.xlane.xlu0 %5211
    %5213 = vadd.xlane.f32.xlu0 %v5018
    %v5214 = vpop.xlane.xlu0 %5213
    %5215 = vadd.xlane.f32.xlu0 %v5019
    %v5216 = vpop.xlane.xlu0 %5215
    %5217 = vadd.xlane.f32.xlu0 %v5020
    %v5218 = vpop.xlane.xlu0 %5217
    %5219 = vadd.xlane.f32.xlu0 %v5021
    %v5220 = vpop.xlane.xlu0 %5219
    %5221 = vadd.xlane.f32.xlu0 %v5022
    %v5222 = vpop.xlane.xlu0 %5221
    %5223 = vadd.xlane.f32.xlu0 %v5023
    %v5224 = vpop.xlane.xlu0 %5223
    %5225 = vadd.xlane.f32.xlu0 %v5024
    %v5226 = vpop.xlane.xlu0 %5225
    %5227 = vadd.xlane.f32.xlu0 %v5025
    %v5228 = vpop.xlane.xlu0 %5227
    %5229 = vadd.xlane.f32.xlu0 %v5026
    %v5230 = vpop.xlane.xlu0 %5229
    %5231 = vadd.xlane.f32.xlu0 %v5027
    %v5232 = vpop.xlane.xlu0 %5231
    %5233 = vadd.xlane.f32.xlu0 %v5028
    %v5234 = vpop.xlane.xlu0 %5233
    %5235 = vadd.xlane.f32.xlu0 %v5029
    %v5236 = vpop.xlane.xlu0 %5235
    %5237 = vadd.xlane.f32.xlu0 %v5030
    %v5238 = vpop.xlane.xlu0 %5237
    %5239 = vadd.xlane.f32.xlu0 %v5031
    %v5240 = vpop.xlane.xlu0 %5239
    %5241 = vadd.xlane.f32.xlu0 %v5032
    %v5242 = vpop.xlane.xlu0 %5241
    %5243 = vadd.xlane.f32.xlu0 %v5033
    %v5244 = vpop.xlane.xlu0 %5243
    %5245 = vadd.xlane.f32.xlu0 %v5034
    %v5246 = vpop.xlane.xlu0 %5245
    %5247 = vadd.xlane.f32.xlu0 %v5035
    %v5248 = vpop.xlane.xlu0 %5247
    %5249 = vadd.xlane.f32.xlu0 %v5036
    %v5250 = vpop.xlane.xlu0 %5249
    %5251 = vadd.xlane.f32.xlu0 %v5037
    %v5252 = vpop.xlane.xlu0 %5251
    %5253 = vadd.xlane.f32.xlu0 %v5038
    %v5254 = vpop.xlane.xlu0 %5253
    %5255 = vadd.xlane.f32.xlu0 %v5039
    %v5256 = vpop.xlane.xlu0 %5255
    %5257 = vadd.xlane.f32.xlu0 %v5040
    %v5258 = vpop.xlane.xlu0 %5257
    %5259 = vadd.xlane.f32.xlu0 %v5041
    %v5260 = vpop.xlane.xlu0 %5259
    %5261 = vadd.xlane.f32.xlu0 %v5042
    %v5262 = vpop.xlane.xlu0 %5261
    %5263 = vadd.xlane.f32.xlu0 %v5043
    %v5264 = vpop.xlane.xlu0 %5263
    %5265 = vadd.xlane.f32.xlu0 %v5044
    %v5266 = vpop.xlane.xlu0 %5265
    %5267 = vadd.xlane.f32.xlu0 %v5045
    %v5268 = vpop.xlane.xlu0 %5267
    %5269 = vadd.xlane.f32.xlu0 %v5046
    %v5270 = vpop.xlane.xlu0 %5269
    %5271 = vadd.xlane.f32.xlu0 %v5047
    %v5272 = vpop.xlane.xlu0 %5271
    %5273 = vadd.xlane.f32.xlu0 %v5048
    %v5274 = vpop.xlane.xlu0 %5273
    %5275 = vadd.xlane.f32.xlu0 %v5049
    %v5276 = vpop.xlane.xlu0 %5275
    %5277 = vadd.xlane.f32.xlu0 %v5050
    %v5278 = vpop.xlane.xlu0 %5277
    %5279 = vadd.xlane.f32.xlu0 %v5051
    %v5280 = vpop.xlane.xlu0 %5279
    %5281 = vadd.xlane.f32.xlu0 %v5052
    %v5282 = vpop.xlane.xlu0 %5281
    %5283 = vadd.xlane.f32.xlu0 %v5053
    %v5284 = vpop.xlane.xlu0 %5283
    %5285 = vadd.xlane.f32.xlu0 %v5054
    %v5286 = vpop.xlane.xlu0 %5285
    %5287 = vadd.xlane.f32.xlu0 %v5055
    %v5288 = vpop.xlane.xlu0 %5287
    %5289 = vadd.xlane.f32.xlu0 %v5056
    %v5290 = vpop.xlane.xlu0 %5289
    %5291 = vadd.xlane.f32.xlu0 %v5057
    %v5292 = vpop.xlane.xlu0 %5291
    %5293 = vadd.xlane.f32.xlu0 %v5058
    %v5294 = vpop.xlane.xlu0 %5293
    %5295 = vadd.xlane.f32.xlu0 %v5059
    %v5296 = vpop.xlane.xlu0 %5295
    %5297 = vadd.xlane.f32.xlu0 %v5060
    %v5298 = vpop.xlane.xlu0 %5297
    %5299 = vadd.xlane.f32.xlu0 %v5061
    %v5300 = vpop.xlane.xlu0 %5299
    %5301 = vadd.xlane.f32.xlu0 %v5062
    %v5302 = vpop.xlane.xlu0 %5301
    %5303 = vadd.xlane.f32.xlu0 %v5063
    %v5304 = vpop.xlane.xlu0 %5303
    %5305 = vadd.xlane.f32.xlu0 %v5064
    %v5306 = vpop.xlane.xlu0 %5305
    %5307 = vadd.xlane.f32.xlu0 %v5065
    %v5308 = vpop.xlane.xlu0 %5307
    %5309 = vadd.xlane.f32.xlu0 %v5066
    %v5310 = vpop.xlane.xlu0 %5309
    %5311 = vadd.xlane.f32.xlu0 %v5067
    %v5312 = vpop.xlane.xlu0 %5311
    %5313 = vadd.xlane.f32.xlu0 %v5068
    %v5314 = vpop.xlane.xlu0 %5313
    %5315 = vadd.xlane.f32.xlu0 %v5069
    %v5316 = vpop.xlane.xlu0 %5315
    %5317 = vadd.xlane.f32.xlu0 %v5070
    %v5318 = vpop.xlane.xlu0 %5317
    %5319 = vadd.xlane.f32.xlu0 %v5071
    %v5320 = vpop.xlane.xlu0 %5319
    %5321 = vadd.xlane.f32.xlu0 %v5072
    %v5322 = vpop.xlane.xlu0 %5321
    %5323 = vadd.xlane.f32.xlu0 %v5073
    %v5324 = vpop.xlane.xlu0 %5323
    %5325 = vadd.xlane.f32.xlu0 %v5074
    %v5326 = vpop.xlane.xlu0 %5325
    %5327 = vadd.xlane.f32.xlu0 %v5075
    %v5328 = vpop.xlane.xlu0 %5327
    %5329 = vadd.xlane.f32.xlu0 %v5076
    %v5330 = vpop.xlane.xlu0 %5329
    %5331 = vadd.xlane.f32.xlu0 %v5077
    %v5332 = vpop.xlane.xlu0 %5331
    %5333 = vadd.xlane.f32.xlu0 %v5078
    %v5334 = vpop.xlane.xlu0 %5333
    %5335 = vadd.xlane.f32.xlu0 %v5079
    %v5336 = vpop.xlane.xlu0 %5335
    %5337 = vadd.xlane.f32.xlu0 %v5080
    %v5338 = vpop.xlane.xlu0 %5337
    %5339 = vadd.xlane.f32.xlu0 %v5081
    %v5340 = vpop.xlane.xlu0 %5339
    %5341 = vadd.xlane.f32.xlu0 %v5082
    %v5342 = vpop.xlane.xlu0 %5341
    %5343 = vadd.xlane.f32.xlu0 %v5083
    %v5344 = vpop.xlane.xlu0 %5343
    %5345 = vadd.xlane.f32.xlu0 %v5084
    %v5346 = vpop.xlane.xlu0 %5345
    %5347 = vadd.xlane.f32.xlu0 %v5085
    %v5348 = vpop.xlane.xlu0 %5347
    %5349 = vadd.xlane.f32.xlu0 %v5086
    %v5350 = vpop.xlane.xlu0 %5349
    %5351 = vadd.xlane.f32.xlu0 %v5087
    %v5352 = vpop.xlane.xlu0 %5351
    %5353 = vadd.xlane.f32.xlu0 %v5088
    %v5354 = vpop.xlane.xlu0 %5353
    %5355 = vadd.xlane.f32.xlu0 %v5089
    %v5356 = vpop.xlane.xlu0 %5355
    %5357 = vadd.xlane.f32.xlu0 %v5090
    %v5358 = vpop.xlane.xlu0 %5357
    %5359 = vadd.xlane.f32.xlu0 %v5091
    %v5360 = vpop.xlane.xlu0 %5359
    %5361 = vadd.xlane.f32.xlu0 %v5092
    %v5362 = vpop.xlane.xlu0 %5361
    %5363 = vadd.xlane.f32.xlu0 %v5093
    %v5364 = vpop.xlane.xlu0 %5363
    %5365 = vadd.xlane.f32.xlu0 %v5094
    %v5366 = vpop.xlane.xlu0 %5365
    %5367 = vadd.xlane.f32.xlu0 %v5095
    %v5368 = vpop.xlane.xlu0 %5367
    %5369 = vadd.xlane.f32.xlu0 %v5096
    %v5370 = vpop.xlane.xlu0 %5369
    %5371 = vadd.xlane.f32.xlu0 %v5097
    %v5372 = vpop.xlane.xlu0 %5371
    %5373 = vadd.xlane.f32.xlu0 %v5098
    %v5374 = vpop.xlane.xlu0 %5373
    %5375 = vadd.xlane.f32.xlu0 %v5099
    %v5376 = vpop.xlane.xlu0 %5375
    %5377 = vadd.xlane.f32.xlu0 %v5100
    %v5378 = vpop.xlane.xlu0 %5377
    %5379 = vadd.xlane.f32.xlu0 %v5101
    %v5380 = vpop.xlane.xlu0 %5379
    %5381 = vadd.xlane.f32.xlu0 %v5102
    %v5382 = vpop.xlane.xlu0 %5381
    %5383 = vadd.xlane.f32.xlu0 %v5103
    %v5384 = vpop.xlane.xlu0 %5383
    %5385 = vadd.xlane.f32.xlu0 %v5104
    %v5386 = vpop.xlane.xlu0 %5385
    %5387 = vadd.xlane.f32.xlu0 %v5105
    %v5388 = vpop.xlane.xlu0 %5387
    %5389 = vadd.xlane.f32.xlu0 %v5106
    %v5390 = vpop.xlane.xlu0 %5389
    %5391 = vadd.xlane.f32.xlu0 %v5107
    %v5392 = vpop.xlane.xlu0 %5391
    %5393 = vadd.xlane.f32.xlu0 %v5108
    %v5394 = vpop.xlane.xlu0 %5393
    %5395 = vadd.xlane.f32.xlu0 %v5109
    %v5396 = vpop.xlane.xlu0 %5395
    %5397 = vadd.xlane.f32.xlu0 %v5110
    %v5398 = vpop.xlane.xlu0 %5397
    %v5399 = vmul.f32 %v5112, 0.014285714
    %v5400 = vmul.f32 %v5114, 0.014285714
    %v5401 = vmul.f32 %v5116, 0.014285714
    %v5402 = vmul.f32 %v5118, 0.014285714
    %v5403 = vmul.f32 %v5120, 0.014285714
    %v5404 = vmul.f32 %v5122, 0.014285714
    %v5405 = vmul.f32 %v5124, 0.014285714
    %v5406 = vmul.f32 %v5126, 0.014285714
    %v5407 = vmul.f32 %v5128, 0.014285714
    %v5408 = vmul.f32 %v5130, 0.014285714
    %v5409 = vmul.f32 %v5132, 0.014285714
    %v5410 = vmul.f32 %v5134, 0.014285714
    %v5411 = vmul.f32 %v5136, 0.014285714
    %v5412 = vmul.f32 %v5138, 0.014285714
    %v5413 = vmul.f32 %v5140, 0.014285714
    %v5414 = vmul.f32 %v5142, 0.014285714
    %v5415 = vmul.f32 %v5144, 0.014285714
    %v5416 = vmul.f32 %v5146, 0.014285714
    %v5417 = vmul.f32 %v5148, 0.014285714
    %v5418 = vmul.f32 %v5150, 0.014285714
    %v5419 = vmul.f32 %v5152, 0.014285714
    %v5420 = vmul.f32 %v5154, 0.014285714
    %v5421 = vmul.f32 %v5156, 0.014285714
    %v5422 = vmul.f32 %v5158, 0.014285714
    %v5423 = vmul.f32 %v5160, 0.014285714
    %v5424 = vmul.f32 %v5162, 0.014285714
    %v5425 = vmul.f32 %v5164, 0.014285714
    %v5426 = vmul.f32 %v5166, 0.014285714
    %v5427 = vmul.f32 %v5168, 0.014285714
    %v5428 = vmul.f32 %v5170, 0.014285714
    %v5429 = vmul.f32 %v5172, 0.014285714
    %v5430 = vmul.f32 %v5174, 0.014285714
    %v5431 = vmul.f32 %v5176, 0.014285714
    %v5432 = vmul.f32 %v5178, 0.014285714
    %v5433 = vmul.f32 %v5180, 0.014285714
    %v5434 = vmul.f32 %v5182, 0.014285714
    %v5435 = vmul.f32 %v5184, 0.014285714
    %v5436 = vmul.f32 %v5186, 0.014285714
    %v5437 = vmul.f32 %v5188, 0.014285714
    %v5438 = vmul.f32 %v5190, 0.014285714
    %v5439 = vmul.f32 %v5192, 0.014285714
    %v5440 = vmul.f32 %v5194, 0.014285714
    %v5441 = vmul.f32 %v5196, 0.014285714
    %v5442 = vmul.f32 %v5198, 0.014285714
    %v5443 = vmul.f32 %v5200, 0.014285714
    %v5444 = vmul.f32 %v5202, 0.014285714
    %v5445 = vmul.f32 %v5204, 0.014285714
    %v5446 = vmul.f32 %v5206, 0.014285714
    %v5447 = vmul.f32 %v5208, 0.014285714
    %v5448 = vmul.f32 %v5210, 0.014285714
    %v5449 = vmul.f32 %v5212, 0.014285714
    %v5450 = vmul.f32 %v5214, 0.014285714
    %v5451 = vmul.f32 %v5216, 0.014285714
    %v5452 = vmul.f32 %v5218, 0.014285714
    %v5453 = vmul.f32 %v5220, 0.014285714
    %v5454 = vmul.f32 %v5222, 0.014285714
    %v5455 = vmul.f32 %v5224, 0.014285714
    %v5456 = vmul.f32 %v5226, 0.014285714
    %v5457 = vmul.f32 %v5228, 0.014285714
    %v5458 = vmul.f32 %v5230, 0.014285714
    %v5459 = vmul.f32 %v5232, 0.014285714
    %v5460 = vmul.f32 %v5234, 0.014285714
    %v5461 = vmul.f32 %v5236, 0.014285714
    %v5462 = vmul.f32 %v5238, 0.014285714
    %v5463 = vmul.f32 %v5240, 0.014285714
    %v5464 = vmul.f32 %v5242, 0.014285714
    %v5465 = vmul.f32 %v5244, 0.014285714
    %v5466 = vmul.f32 %v5246, 0.014285714
    %v5467 = vmul.f32 %v5248, 0.014285714
    %v5468 = vmul.f32 %v5250, 0.014285714
    %v5469 = vmul.f32 %v5252, 0.014285714
    %v5470 = vmul.f32 %v5254, 0.014285714
    %v5471 = vmul.f32 %v5256, 0.014285714
    %v5472 = vmul.f32 %v5258, 0.014285714
    %v5473 = vmul.f32 %v5260, 0.014285714
    %v5474 = vmul.f32 %v5262, 0.014285714
    %v5475 = vmul.f32 %v5264, 0.014285714
    %v5476 = vmul.f32 %v5266, 0.014285714
    %v5477 = vmul.f32 %v5268, 0.014285714
    %v5478 = vmul.f32 %v5270, 0.014285714
    %v5479 = vmul.f32 %v5272, 0.014285714
    %v5480 = vmul.f32 %v5274, 0.014285714
    %v5481 = vmul.f32 %v5276, 0.014285714
    %v5482 = vmul.f32 %v5278, 0.014285714
    %v5483 = vmul.f32 %v5280, 0.014285714
    %v5484 = vmul.f32 %v5282, 0.014285714
    %v5485 = vmul.f32 %v5284, 0.014285714
    %v5486 = vmul.f32 %v5286, 0.014285714
    %v5487 = vmul.f32 %v5288, 0.014285714
    %v5488 = vmul.f32 %v5290, 0.014285714
    %v5489 = vmul.f32 %v5292, 0.014285714
    %v5490 = vmul.f32 %v5294, 0.014285714
    %v5491 = vmul.f32 %v5296, 0.014285714
    %v5492 = vmul.f32 %v5298, 0.014285714
    %v5493 = vmul.f32 %v5300, 0.014285714
    %v5494 = vmul.f32 %v5302, 0.014285714
    %v5495 = vmul.f32 %v5304, 0.014285714
    %v5496 = vmul.f32 %v5306, 0.014285714
    %v5497 = vmul.f32 %v5308, 0.014285714
    %v5498 = vmul.f32 %v5310, 0.014285714
    %v5499 = vmul.f32 %v5312, 0.014285714
    %v5500 = vmul.f32 %v5314, 0.014285714
    %v5501 = vmul.f32 %v5316, 0.014285714
    %v5502 = vmul.f32 %v5318, 0.014285714
    %v5503 = vmul.f32 %v5320, 0.014285714
    %v5504 = vmul.f32 %v5322, 0.014285714
    %v5505 = vmul.f32 %v5324, 0.014285714
    %v5506 = vmul.f32 %v5326, 0.014285714
    %v5507 = vmul.f32 %v5328, 0.014285714
    %v5508 = vmul.f32 %v5330, 0.014285714
    %v5509 = vmul.f32 %v5332, 0.014285714
    %v5510 = vmul.f32 %v5334, 0.014285714
    %v5511 = vmul.f32 %v5336, 0.014285714
    %v5512 = vmul.f32 %v5338, 0.014285714
    %v5513 = vmul.f32 %v5340, 0.014285714
    %v5514 = vmul.f32 %v5342, 0.014285714
    %v5515 = vmul.f32 %v5344, 0.014285714
    %v5516 = vmul.f32 %v5346, 0.014285714
    %v5517 = vmul.f32 %v5348, 0.014285714
    %v5518 = vmul.f32 %v5350, 0.014285714
    %v5519 = vmul.f32 %v5352, 0.014285714
    %v5520 = vmul.f32 %v5354, 0.014285714
    %v5521 = vmul.f32 %v5356, 0.014285714
    %v5522 = vmul.f32 %v5358, 0.014285714
    %v5523 = vmul.f32 %v5360, 0.014285714
    %v5524 = vmul.f32 %v5362, 0.014285714
    %v5525 = vmul.f32 %v5364, 0.014285714
    %v5526 = vmul.f32 %v5366, 0.014285714
    %v5527 = vmul.f32 %v5368, 0.014285714
    %v5528 = vmul.f32 %v5370, 0.014285714
    %v5529 = vmul.f32 %v5372, 0.014285714
    %v5530 = vmul.f32 %v5374, 0.014285714
    %v5531 = vmul.f32 %v5376, 0.014285714
    %v5532 = vmul.f32 %v5378, 0.014285714
    %v5533 = vmul.f32 %v5380, 0.014285714
    %v5534 = vmul.f32 %v5382, 0.014285714
    %v5535 = vmul.f32 %v5384, 0.014285714
    %v5536 = vmul.f32 %v5386, 0.014285714
    %v5537 = vmul.f32 %v5388, 0.014285714
    %v5538 = vmul.f32 %v5390, 0.014285714
    %v5539 = vmul.f32 %v5392, 0.014285714
    %v5540 = vmul.f32 %v5394, 0.014285714
    %v5541 = vmul.f32 %v5396, 0.014285714
    %v5542 = vmul.f32 %v5398, 0.014285714
    %v5543 = vmul.f32 %v4823, %v4823
    %v5544 = vmul.f32 %v4824, %v4824
    %v5545 = vmul.f32 %v4825, %v4825
    %v5546 = vmul.f32 %v4826, %v4826
    %v5547 = vmul.f32 %v4827, %v4827
    %v5548 = vmul.f32 %v4828, %v4828
    %v5549 = vmul.f32 %v4829, %v4829
    %v5550 = vmul.f32 %v4830, %v4830
    %v5551 = vmul.f32 %v4831, %v4831
    %v5552 = vmul.f32 %v4832, %v4832
    %v5553 = vmul.f32 %v4833, %v4833
    %v5554 = vmul.f32 %v4834, %v4834
    %v5555 = vmul.f32 %v4835, %v4835
    %v5556 = vmul.f32 %v4836, %v4836
    %v5557 = vmul.f32 %v4837, %v4837
    %v5558 = vmul.f32 %v4838, %v4838
    %v5559 = vmul.f32 %v4839, %v4839
    %v5560 = vmul.f32 %v4840, %v4840
    %v5561 = vmul.f32 %v4841, %v4841
    %v5562 = vmul.f32 %v4842, %v4842
    %v5563 = vmul.f32 %v4843, %v4843
    %v5564 = vmul.f32 %v4844, %v4844
    %v5565 = vmul.f32 %v4845, %v4845
    %v5566 = vmul.f32 %v4846, %v4846
    %v5567 = vmul.f32 %v4847, %v4847
    %v5568 = vmul.f32 %v4848, %v4848
    %v5569 = vmul.f32 %v4849, %v4849
    %v5570 = vmul.f32 %v4850, %v4850
    %v5571 = vmul.f32 %v4851, %v4851
    %v5572 = vmul.f32 %v4852, %v4852
    %v5573 = vmul.f32 %v4853, %v4853
    %v5574 = vmul.f32 %v4854, %v4854
    %v5575 = vmul.f32 %v4855, %v4855
    %v5576 = vmul.f32 %v4856, %v4856
    %v5577 = vmul.f32 %v4857, %v4857
    %v5578 = vmul.f32 %v4858, %v4858
    %v5579 = vmul.f32 %v4859, %v4859
    %v5580 = vmul.f32 %v4860, %v4860
    %v5581 = vmul.f32 %v4861, %v4861
    %v5582 = vmul.f32 %v4862, %v4862
    %v5583 = vmul.f32 %v4863, %v4863
    %v5584 = vmul.f32 %v4864, %v4864
    %v5585 = vmul.f32 %v4865, %v4865
    %v5586 = vmul.f32 %v4866, %v4866
    %v5587 = vmul.f32 %v4867, %v4867
    %v5588 = vmul.f32 %v4868, %v4868
    %v5589 = vmul.f32 %v4869, %v4869
    %v5590 = vmul.f32 %v4870, %v4870
    %v5591 = vmul.f32 %v4871, %v4871
    %v5592 = vmul.f32 %v4872, %v4872
    %v5593 = vmul.f32 %v4873, %v4873
    %v5594 = vmul.f32 %v4874, %v4874
    %v5595 = vmul.f32 %v4875, %v4875
    %v5596 = vmul.f32 %v4876, %v4876
    %v5597 = vmul.f32 %v4877, %v4877
    %v5598 = vmul.f32 %v4878, %v4878
    %v5599 = vmul.f32 %v4879, %v4879
    %v5600 = vmul.f32 %v4880, %v4880
    %v5601 = vmul.f32 %v4881, %v4881
    %v5602 = vmul.f32 %v4882, %v4882
    %v5603 = vmul.f32 %v4883, %v4883
    %v5604 = vmul.f32 %v4884, %v4884
    %v5605 = vmul.f32 %v4885, %v4885
    %v5606 = vmul.f32 %v4886, %v4886
    %v5607 = vmul.f32 %v4887, %v4887
    %v5608 = vmul.f32 %v4888, %v4888
    %v5609 = vmul.f32 %v4889, %v4889
    %v5610 = vmul.f32 %v4890, %v4890
    %v5611 = vmul.f32 %v4891, %v4891
    %v5612 = vmul.f32 %v4892, %v4892
    %v5613 = vmul.f32 %v4893, %v4893
    %v5614 = vmul.f32 %v4894, %v4894
    %v5615 = vmul.f32 %v4895, %v4895
    %v5616 = vmul.f32 %v4896, %v4896
    %v5617 = vmul.f32 %v4897, %v4897
    %v5618 = vmul.f32 %v4898, %v4898
    %v5619 = vmul.f32 %v4899, %v4899
    %v5620 = vmul.f32 %v4900, %v4900
    %v5621 = vmul.f32 %v4901, %v4901
    %v5622 = vmul.f32 %v4902, %v4902
    %v5623 = vmul.f32 %v4903, %v4903
    %v5624 = vmul.f32 %v4904, %v4904
    %v5625 = vmul.f32 %v4905, %v4905
    %v5626 = vmul.f32 %v4906, %v4906
    %v5627 = vmul.f32 %v4907, %v4907
    %v5628 = vmul.f32 %v4908, %v4908
    %v5629 = vmul.f32 %v4909, %v4909
    %v5630 = vmul.f32 %v4910, %v4910
    %v5631 = vmul.f32 %v4911, %v4911
    %v5632 = vmul.f32 %v4912, %v4912
    %v5633 = vmul.f32 %v4913, %v4913
    %v5634 = vmul.f32 %v4914, %v4914
    %v5635 = vmul.f32 %v4915, %v4915
    %v5636 = vmul.f32 %v4916, %v4916
    %v5637 = vmul.f32 %v4917, %v4917
    %v5638 = vmul.f32 %v4918, %v4918
    %v5639 = vmul.f32 %v4919, %v4919
    %v5640 = vmul.f32 %v4920, %v4920
    %v5641 = vmul.f32 %v4921, %v4921
    %v5642 = vmul.f32 %v4922, %v4922
    %v5643 = vmul.f32 %v4923, %v4923
    %v5644 = vmul.f32 %v4924, %v4924
    %v5645 = vmul.f32 %v4925, %v4925
    %v5646 = vmul.f32 %v4926, %v4926
    %v5647 = vmul.f32 %v4927, %v4927
    %v5648 = vmul.f32 %v4928, %v4928
    %v5649 = vmul.f32 %v4929, %v4929
    %v5650 = vmul.f32 %v4930, %v4930
    %v5651 = vmul.f32 %v4931, %v4931
    %v5652 = vmul.f32 %v4932, %v4932
    %v5653 = vmul.f32 %v4933, %v4933
    %v5654 = vmul.f32 %v4934, %v4934
    %v5655 = vmul.f32 %v4935, %v4935
    %v5656 = vmul.f32 %v4936, %v4936
    %v5657 = vmul.f32 %v4937, %v4937
    %v5658 = vmul.f32 %v4938, %v4938
    %v5659 = vmul.f32 %v4939, %v4939
    %v5660 = vmul.f32 %v4940, %v4940
    %v5661 = vmul.f32 %v4941, %v4941
    %v5662 = vmul.f32 %v4942, %v4942
    %v5663 = vmul.f32 %v4943, %v4943
    %v5664 = vmul.f32 %v4944, %v4944
    %v5665 = vmul.f32 %v4945, %v4945
    %v5666 = vmul.f32 %v4946, %v4946
    %v5667 = vmul.f32 %v4947, %v4947
    %v5668 = vmul.f32 %v4948, %v4948
    %v5669 = vmul.f32 %v4949, %v4949
    %v5670 = vmul.f32 %v4950, %v4950
    %v5671 = vmul.f32 %v4951, %v4951
    %v5672 = vmul.f32 %v4952, %v4952
    %v5673 = vmul.f32 %v4953, %v4953
    %v5674 = vmul.f32 %v4954, %v4954
    %v5675 = vmul.f32 %v4955, %v4955
    %v5676 = vmul.f32 %v4956, %v4956
    %v5677 = vmul.f32 %v4957, %v4957
    %v5678 = vmul.f32 %v4958, %v4958
    %v5679 = vmul.f32 %v4959, %v4959
    %v5680 = vmul.f32 %v4960, %v4960
    %v5681 = vmul.f32 %v4961, %v4961
    %v5682 = vmul.f32 %v4962, %v4962
    %v5683 = vmul.f32 %v4963, %v4963
    %v5684 = vmul.f32 %v4964, %v4964
    %v5685 = vmul.f32 %v4965, %v4965
    %v5686 = vmul.f32 %v4966, %v4966
    %v5687 = vsub.f32 %v5399, %v5543
    %v5688 = vsub.f32 %v5400, %v5544
    %v5689 = vsub.f32 %v5401, %v5545
    %v5690 = vsub.f32 %v5402, %v5546
    %v5691 = vsub.f32 %v5403, %v5547
    %v5692 = vsub.f32 %v5404, %v5548
    %v5693 = vsub.f32 %v5405, %v5549
    %v5694 = vsub.f32 %v5406, %v5550
    %v5695 = vsub.f32 %v5407, %v5551
    %v5696 = vsub.f32 %v5408, %v5552
    %v5697 = vsub.f32 %v5409, %v5553
    %v5698 = vsub.f32 %v5410, %v5554
    %v5699 = vsub.f32 %v5411, %v5555
    %v5700 = vsub.f32 %v5412, %v5556
    %v5701 = vsub.f32 %v5413, %v5557
    %v5702 = vsub.f32 %v5414, %v5558
    %v5703 = vsub.f32 %v5415, %v5559
    %v5704 = vsub.f32 %v5416, %v5560
    %v5705 = vsub.f32 %v5417, %v5561
    %v5706 = vsub.f32 %v5418, %v5562
    %v5707 = vsub.f32 %v5419, %v5563
    %v5708 = vsub.f32 %v5420, %v5564
    %v5709 = vsub.f32 %v5421, %v5565
    %v5710 = vsub.f32 %v5422, %v5566
    %v5711 = vsub.f32 %v5423, %v5567
    %v5712 = vsub.f32 %v5424, %v5568
    %v5713 = vsub.f32 %v5425, %v5569
    %v5714 = vsub.f32 %v5426, %v5570
    %v5715 = vsub.f32 %v5427, %v5571
    %v5716 = vsub.f32 %v5428, %v5572
    %v5717 = vsub.f32 %v5429, %v5573
    %v5718 = vsub.f32 %v5430, %v5574
    %v5719 = vsub.f32 %v5431, %v5575
    %v5720 = vsub.f32 %v5432, %v5576
    %v5721 = vsub.f32 %v5433, %v5577
    %v5722 = vsub.f32 %v5434, %v5578
    %v5723 = vsub.f32 %v5435, %v5579
    %v5724 = vsub.f32 %v5436, %v5580
    %v5725 = vsub.f32 %v5437, %v5581
    %v5726 = vsub.f32 %v5438, %v5582
    %v5727 = vsub.f32 %v5439, %v5583
    %v5728 = vsub.f32 %v5440, %v5584
    %v5729 = vsub.f32 %v5441, %v5585
    %v5730 = vsub.f32 %v5442, %v5586
    %v5731 = vsub.f32 %v5443, %v5587
    %v5732 = vsub.f32 %v5444, %v5588
    %v5733 = vsub.f32 %v5445, %v5589
    %v5734 = vsub.f32 %v5446, %v5590
    %v5735 = vsub.f32 %v5447, %v5591
    %v5736 = vsub.f32 %v5448, %v5592
    %v5737 = vsub.f32 %v5449, %v5593
    %v5738 = vsub.f32 %v5450, %v5594
    %v5739 = vsub.f32 %v5451, %v5595
    %v5740 = vsub.f32 %v5452, %v5596
    %v5741 = vsub.f32 %v5453, %v5597
    %v5742 = vsub.f32 %v5454, %v5598
    %v5743 = vsub.f32 %v5455, %v5599
    %v5744 = vsub.f32 %v5456, %v5600
    %v5745 = vsub.f32 %v5457, %v5601
    %v5746 = vsub.f32 %v5458, %v5602
    %v5747 = vsub.f32 %v5459, %v5603
    %v5748 = vsub.f32 %v5460, %v5604
    %v5749 = vsub.f32 %v5461, %v5605
    %v5750 = vsub.f32 %v5462, %v5606
    %v5751 = vsub.f32 %v5463, %v5607
    %v5752 = vsub.f32 %v5464, %v5608
    %v5753 = vsub.f32 %v5465, %v5609
    %v5754 = vsub.f32 %v5466, %v5610
    %v5755 = vsub.f32 %v5467, %v5611
    %v5756 = vsub.f32 %v5468, %v5612
    %v5757 = vsub.f32 %v5469, %v5613
    %v5758 = vsub.f32 %v5470, %v5614
    %v5759 = vsub.f32 %v5471, %v5615
    %v5760 = vsub.f32 %v5472, %v5616
    %v5761 = vsub.f32 %v5473, %v5617
    %v5762 = vsub.f32 %v5474, %v5618
    %v5763 = vsub.f32 %v5475, %v5619
    %v5764 = vsub.f32 %v5476, %v5620
    %v5765 = vsub.f32 %v5477, %v5621
    %v5766 = vsub.f32 %v5478, %v5622
    %v5767 = vsub.f32 %v5479, %v5623
    %v5768 = vsub.f32 %v5480, %v5624
    %v5769 = vsub.f32 %v5481, %v5625
    %v5770 = vsub.f32 %v5482, %v5626
    %v5771 = vsub.f32 %v5483, %v5627
    %v5772 = vsub.f32 %v5484, %v5628
    %v5773 = vsub.f32 %v5485, %v5629
    %v5774 = vsub.f32 %v5486, %v5630
    %v5775 = vsub.f32 %v5487, %v5631
    %v5776 = vsub.f32 %v5488, %v5632
    %v5777 = vsub.f32 %v5489, %v5633
    %v5778 = vsub.f32 %v5490, %v5634
    %v5779 = vsub.f32 %v5491, %v5635
    %v5780 = vsub.f32 %v5492, %v5636
    %v5781 = vsub.f32 %v5493, %v5637
    %v5782 = vsub.f32 %v5494, %v5638
    %v5783 = vsub.f32 %v5495, %v5639
    %v5784 = vsub.f32 %v5496, %v5640
    %v5785 = vsub.f32 %v5497, %v5641
    %v5786 = vsub.f32 %v5498, %v5642
    %v5787 = vsub.f32 %v5499, %v5643
    %v5788 = vsub.f32 %v5500, %v5644
    %v5789 = vsub.f32 %v5501, %v5645
    %v5790 = vsub.f32 %v5502, %v5646
    %v5791 = vsub.f32 %v5503, %v5647
    %v5792 = vsub.f32 %v5504, %v5648
    %v5793 = vsub.f32 %v5505, %v5649
    %v5794 = vsub.f32 %v5506, %v5650
    %v5795 = vsub.f32 %v5507, %v5651
    %v5796 = vsub.f32 %v5508, %v5652
    %v5797 = vsub.f32 %v5509, %v5653
    %v5798 = vsub.f32 %v5510, %v5654
    %v5799 = vsub.f32 %v5511, %v5655
    %v5800 = vsub.f32 %v5512, %v5656
    %v5801 = vsub.f32 %v5513, %v5657
    %v5802 = vsub.f32 %v5514, %v5658
    %v5803 = vsub.f32 %v5515, %v5659
    %v5804 = vsub.f32 %v5516, %v5660
    %v5805 = vsub.f32 %v5517, %v5661
    %v5806 = vsub.f32 %v5518, %v5662
    %v5807 = vsub.f32 %v5519, %v5663
    %v5808 = vsub.f32 %v5520, %v5664
    %v5809 = vsub.f32 %v5521, %v5665
    %v5810 = vsub.f32 %v5522, %v5666
    %v5811 = vsub.f32 %v5523, %v5667
    %v5812 = vsub.f32 %v5524, %v5668
    %v5813 = vsub.f32 %v5525, %v5669
    %v5814 = vsub.f32 %v5526, %v5670
    %v5815 = vsub.f32 %v5527, %v5671
    %v5816 = vsub.f32 %v5528, %v5672
    %v5817 = vsub.f32 %v5529, %v5673
    %v5818 = vsub.f32 %v5530, %v5674
    %v5819 = vsub.f32 %v5531, %v5675
    %v5820 = vsub.f32 %v5532, %v5676
    %v5821 = vsub.f32 %v5533, %v5677
    %v5822 = vsub.f32 %v5534, %v5678
    %v5823 = vsub.f32 %v5535, %v5679
    %v5824 = vsub.f32 %v5536, %v5680
    %v5825 = vsub.f32 %v5537, %v5681
    %v5826 = vsub.f32 %v5538, %v5682
    %v5827 = vsub.f32 %v5539, %v5683
    %v5828 = vsub.f32 %v5540, %v5684
    %v5829 = vsub.f32 %v5541, %v5685
    %v5830 = vsub.f32 %v5542, %v5686
    %v5831 = vsub.f32 %v4391, %v4823
    %v5832 = vsub.f32 %v4392, %v4824
    %v5833 = vsub.f32 %v4393, %v4825
    %v5834 = vsub.f32 %v4394, %v4826
    %v5835 = vsub.f32 %v4395, %v4827
    %v5836 = vsub.f32 %v4396, %v4828
    %v5837 = vsub.f32 %v4397, %v4829
    %v5838 = vsub.f32 %v4398, %v4830
    %v5839 = vsub.f32 %v4399, %v4831
    %v5840 = vsub.f32 %v4400, %v4832
    %v5841 = vsub.f32 %v4401, %v4833
    %v5842 = vsub.f32 %v4402, %v4834
    %v5843 = vsub.f32 %v4403, %v4835
    %v5844 = vsub.f32 %v4404, %v4836
    %v5845 = vsub.f32 %v4405, %v4837
    %v5846 = vsub.f32 %v4406, %v4838
    %v5847 = vsub.f32 %v4407, %v4839
    %v5848 = vsub.f32 %v4408, %v4840
    %v5849 = vsub.f32 %v4409, %v4841
    %v5850 = vsub.f32 %v4410, %v4842
    %v5851 = vsub.f32 %v4411, %v4843
    %v5852 = vsub.f32 %v4412, %v4844
    %v5853 = vsub.f32 %v4413, %v4845
    %v5854 = vsub.f32 %v4414, %v4846
    %v5855 = vsub.f32 %v4415, %v4847
    %v5856 = vsub.f32 %v4416, %v4848
    %v5857 = vsub.f32 %v4417, %v4849
    %v5858 = vsub.f32 %v4418, %v4850
    %v5859 = vsub.f32 %v4419, %v4851
    %v5860 = vsub.f32 %v4420, %v4852
    %v5861 = vsub.f32 %v4421, %v4853
    %v5862 = vsub.f32 %v4422, %v4854
    %v5863 = vsub.f32 %v4423, %v4855
    %v5864 = vsub.f32 %v4424, %v4856
    %v5865 = vsub.f32 %v4425, %v4857
    %v5866 = vsub.f32 %v4426, %v4858
    %v5867 = vsub.f32 %v4427, %v4859
    %v5868 = vsub.f32 %v4428, %v4860
    %v5869 = vsub.f32 %v4429, %v4861
    %v5870 = vsub.f32 %v4430, %v4862
    %v5871 = vsub.f32 %v4431, %v4863
    %v5872 = vsub.f32 %v4432, %v4864
    %v5873 = vsub.f32 %v4433, %v4865
    %v5874 = vsub.f32 %v4434, %v4866
    %v5875 = vsub.f32 %v4435, %v4867
    %v5876 = vsub.f32 %v4436, %v4868
    %v5877 = vsub.f32 %v4437, %v4869
    %v5878 = vsub.f32 %v4438, %v4870
    %v5879 = vsub.f32 %v4439, %v4871
    %v5880 = vsub.f32 %v4440, %v4872
    %v5881 = vsub.f32 %v4441, %v4873
    %v5882 = vsub.f32 %v4442, %v4874
    %v5883 = vsub.f32 %v4443, %v4875
    %v5884 = vsub.f32 %v4444, %v4876
    %v5885 = vsub.f32 %v4445, %v4877
    %v5886 = vsub.f32 %v4446, %v4878
    %v5887 = vsub.f32 %v4447, %v4879
    %v5888 = vsub.f32 %v4448, %v4880
    %v5889 = vsub.f32 %v4449, %v4881
    %v5890 = vsub.f32 %v4450, %v4882
    %v5891 = vsub.f32 %v4451, %v4883
    %v5892 = vsub.f32 %v4452, %v4884
    %v5893 = vsub.f32 %v4453, %v4885
    %v5894 = vsub.f32 %v4454, %v4886
    %v5895 = vsub.f32 %v4455, %v4887
    %v5896 = vsub.f32 %v4456, %v4888
    %v5897 = vsub.f32 %v4457, %v4889
    %v5898 = vsub.f32 %v4458, %v4890
    %v5899 = vsub.f32 %v4459, %v4891
    %v5900 = vsub.f32 %v4460, %v4892
    %v5901 = vsub.f32 %v4461, %v4893
    %v5902 = vsub.f32 %v4462, %v4894
    %v5903 = vsub.f32 %v4463, %v4895
    %v5904 = vsub.f32 %v4464, %v4896
    %v5905 = vsub.f32 %v4465, %v4897
    %v5906 = vsub.f32 %v4466, %v4898
    %v5907 = vsub.f32 %v4467, %v4899
    %v5908 = vsub.f32 %v4468, %v4900
    %v5909 = vsub.f32 %v4469, %v4901
    %v5910 = vsub.f32 %v4470, %v4902
    %v5911 = vsub.f32 %v4471, %v4903
    %v5912 = vsub.f32 %v4472, %v4904
    %v5913 = vsub.f32 %v4473, %v4905
    %v5914 = vsub.f32 %v4474, %v4906
    %v5915 = vsub.f32 %v4475, %v4907
    %v5916 = vsub.f32 %v4476, %v4908
    %v5917 = vsub.f32 %v4477, %v4909
    %v5918 = vsub.f32 %v4478, %v4910
    %v5919 = vsub.f32 %v4479, %v4911
    %v5920 = vsub.f32 %v4480, %v4912
    %v5921 = vsub.f32 %v4481, %v4913
    %v5922 = vsub.f32 %v4482, %v4914
    %v5923 = vsub.f32 %v4483, %v4915
    %v5924 = vsub.f32 %v4484, %v4916
    %v5925 = vsub.f32 %v4485, %v4917
    %v5926 = vsub.f32 %v4486, %v4918
    %v5927 = vsub.f32 %v4487, %v4919
    %v5928 = vsub.f32 %v4488, %v4920
    %v5929 = vsub.f32 %v4489, %v4921
    %v5930 = vsub.f32 %v4490, %v4922
    %v5931 = vsub.f32 %v4491, %v4923
    %v5932 = vsub.f32 %v4492, %v4924
    %v5933 = vsub.f32 %v4493, %v4925
    %v5934 = vsub.f32 %v4494, %v4926
    %v5935 = vsub.f32 %v4495, %v4927
    %v5936 = vsub.f32 %v4496, %v4928
    %v5937 = vsub.f32 %v4497, %v4929
    %v5938 = vsub.f32 %v4498, %v4930
    %v5939 = vsub.f32 %v4499, %v4931
    %v5940 = vsub.f32 %v4500, %v4932
    %v5941 = vsub.f32 %v4501, %v4933
    %v5942 = vsub.f32 %v4502, %v4934
    %v5943 = vsub.f32 %v4503, %v4935
    %v5944 = vsub.f32 %v4504, %v4936
    %v5945 = vsub.f32 %v4505, %v4937
    %v5946 = vsub.f32 %v4506, %v4938
    %v5947 = vsub.f32 %v4507, %v4939
    %v5948 = vsub.f32 %v4508, %v4940
    %v5949 = vsub.f32 %v4509, %v4941
    %v5950 = vsub.f32 %v4510, %v4942
    %v5951 = vsub.f32 %v4511, %v4943
    %v5952 = vsub.f32 %v4512, %v4944
    %v5953 = vsub.f32 %v4513, %v4945
    %v5954 = vsub.f32 %v4514, %v4946
    %v5955 = vsub.f32 %v4515, %v4947
    %v5956 = vsub.f32 %v4516, %v4948
    %v5957 = vsub.f32 %v4517, %v4949
    %v5958 = vsub.f32 %v4518, %v4950
    %v5959 = vsub.f32 %v4519, %v4951
    %v5960 = vsub.f32 %v4520, %v4952
    %v5961 = vsub.f32 %v4521, %v4953
    %v5962 = vsub.f32 %v4522, %v4954
    %v5963 = vsub.f32 %v4523, %v4955
    %v5964 = vsub.f32 %v4524, %v4956
    %v5965 = vsub.f32 %v4525, %v4957
    %v5966 = vsub.f32 %v4526, %v4958
    %v5967 = vsub.f32 %v4527, %v4959
    %v5968 = vsub.f32 %v4528, %v4960
    %v5969 = vsub.f32 %v4529, %v4961
    %v5970 = vsub.f32 %v4530, %v4962
    %v5971 = vsub.f32 %v4531, %v4963
    %v5972 = vsub.f32 %v4532, %v4964
    %v5973 = vsub.f32 %v4533, %v4965
    %v5974 = vsub.f32 %v4534, %v4966
    %v5975 = vadd.f32 %v5687, 1e-05
    %v5976 = vadd.f32 %v5688, 1e-05
    %v5977 = vadd.f32 %v5689, 1e-05
    %v5978 = vadd.f32 %v5690, 1e-05
    %v5979 = vadd.f32 %v5691, 1e-05
    %v5980 = vadd.f32 %v5692, 1e-05
    %v5981 = vadd.f32 %v5693, 1e-05
    %v5982 = vadd.f32 %v5694, 1e-05
    %v5983 = vadd.f32 %v5695, 1e-05
    %v5984 = vadd.f32 %v5696, 1e-05
    %v5985 = vadd.f32 %v5697, 1e-05
    %v5986 = vadd.f32 %v5698, 1e-05
    %v5987 = vadd.f32 %v5699, 1e-05
    %v5988 = vadd.f32 %v5700, 1e-05
    %v5989 = vadd.f32 %v5701, 1e-05
    %v5990 = vadd.f32 %v5702, 1e-05
    %v5991 = vadd.f32 %v5703, 1e-05
    %v5992 = vadd.f32 %v5704, 1e-05
    %v5993 = vadd.f32 %v5705, 1e-05
    %v5994 = vadd.f32 %v5706, 1e-05
    %v5995 = vadd.f32 %v5707, 1e-05
    %v5996 = vadd.f32 %v5708, 1e-05
    %v5997 = vadd.f32 %v5709, 1e-05
    %v5998 = vadd.f32 %v5710, 1e-05
    %v5999 = vadd.f32 %v5711, 1e-05
    %v6000 = vadd.f32 %v5712, 1e-05
    %v6001 = vadd.f32 %v5713, 1e-05
    %v6002 = vadd.f32 %v5714, 1e-05
    %v6003 = vadd.f32 %v5715, 1e-05
    %v6004 = vadd.f32 %v5716, 1e-05
    %v6005 = vadd.f32 %v5717, 1e-05
    %v6006 = vadd.f32 %v5718, 1e-05
    %v6007 = vadd.f32 %v5719, 1e-05
    %v6008 = vadd.f32 %v5720, 1e-05
    %v6009 = vadd.f32 %v5721, 1e-05
    %v6010 = vadd.f32 %v5722, 1e-05
    %v6011 = vadd.f32 %v5723, 1e-05
    %v6012 = vadd.f32 %v5724, 1e-05
    %v6013 = vadd.f32 %v5725, 1e-05
    %v6014 = vadd.f32 %v5726, 1e-05
    %v6015 = vadd.f32 %v5727, 1e-05
    %v6016 = vadd.f32 %v5728, 1e-05
    %v6017 = vadd.f32 %v5729, 1e-05
    %v6018 = vadd.f32 %v5730, 1e-05
    %v6019 = vadd.f32 %v5731, 1e-05
    %v6020 = vadd.f32 %v5732, 1e-05
    %v6021 = vadd.f32 %v5733, 1e-05
    %v6022 = vadd.f32 %v5734, 1e-05
    %v6023 = vadd.f32 %v5735, 1e-05
    %v6024 = vadd.f32 %v5736, 1e-05
    %v6025 = vadd.f32 %v5737, 1e-05
    %v6026 = vadd.f32 %v5738, 1e-05
    %v6027 = vadd.f32 %v5739, 1e-05
    %v6028 = vadd.f32 %v5740, 1e-05
    %v6029 = vadd.f32 %v5741, 1e-05
    %v6030 = vadd.f32 %v5742, 1e-05
    %v6031 = vadd.f32 %v5743, 1e-05
    %v6032 = vadd.f32 %v5744, 1e-05
    %v6033 = vadd.f32 %v5745, 1e-05
    %v6034 = vadd.f32 %v5746, 1e-05
    %v6035 = vadd.f32 %v5747, 1e-05
    %v6036 = vadd.f32 %v5748, 1e-05
    %v6037 = vadd.f32 %v5749, 1e-05
    %v6038 = vadd.f32 %v5750, 1e-05
    %v6039 = vadd.f32 %v5751, 1e-05
    %v6040 = vadd.f32 %v5752, 1e-05
    %v6041 = vadd.f32 %v5753, 1e-05
    %v6042 = vadd.f32 %v5754, 1e-05
    %v6043 = vadd.f32 %v5755, 1e-05
    %v6044 = vadd.f32 %v5756, 1e-05
    %v6045 = vadd.f32 %v5757, 1e-05
    %v6046 = vadd.f32 %v5758, 1e-05
    %v6047 = vadd.f32 %v5759, 1e-05
    %v6048 = vadd.f32 %v5760, 1e-05
    %v6049 = vadd.f32 %v5761, 1e-05
    %v6050 = vadd.f32 %v5762, 1e-05
    %v6051 = vadd.f32 %v5763, 1e-05
    %v6052 = vadd.f32 %v5764, 1e-05
    %v6053 = vadd.f32 %v5765, 1e-05
    %v6054 = vadd.f32 %v5766, 1e-05
    %v6055 = vadd.f32 %v5767, 1e-05
    %v6056 = vadd.f32 %v5768, 1e-05
    %v6057 = vadd.f32 %v5769, 1e-05
    %v6058 = vadd.f32 %v5770, 1e-05
    %v6059 = vadd.f32 %v5771, 1e-05
    %v6060 = vadd.f32 %v5772, 1e-05
    %v6061 = vadd.f32 %v5773, 1e-05
    %v6062 = vadd.f32 %v5774, 1e-05
    %v6063 = vadd.f32 %v5775, 1e-05
    %v6064 = vadd.f32 %v5776, 1e-05
    %v6065 = vadd.f32 %v5777, 1e-05
    %v6066 = vadd.f32 %v5778, 1e-05
    %v6067 = vadd.f32 %v5779, 1e-05
    %v6068 = vadd.f32 %v5780, 1e-05
    %v6069 = vadd.f32 %v5781, 1e-05
    %v6070 = vadd.f32 %v5782, 1e-05
    %v6071 = vadd.f32 %v5783, 1e-05
    %v6072 = vadd.f32 %v5784, 1e-05
    %v6073 = vadd.f32 %v5785, 1e-05
    %v6074 = vadd.f32 %v5786, 1e-05
    %v6075 = vadd.f32 %v5787, 1e-05
    %v6076 = vadd.f32 %v5788, 1e-05
    %v6077 = vadd.f32 %v5789, 1e-05
    %v6078 = vadd.f32 %v5790, 1e-05
    %v6079 = vadd.f32 %v5791, 1e-05
    %v6080 = vadd.f32 %v5792, 1e-05
    %v6081 = vadd.f32 %v5793, 1e-05
    %v6082 = vadd.f32 %v5794, 1e-05
    %v6083 = vadd.f32 %v5795, 1e-05
    %v6084 = vadd.f32 %v5796, 1e-05
    %v6085 = vadd.f32 %v5797, 1e-05
    %v6086 = vadd.f32 %v5798, 1e-05
    %v6087 = vadd.f32 %v5799, 1e-05
    %v6088 = vadd.f32 %v5800, 1e-05
    %v6089 = vadd.f32 %v5801, 1e-05
    %v6090 = vadd.f32 %v5802, 1e-05
    %v6091 = vadd.f32 %v5803, 1e-05
    %v6092 = vadd.f32 %v5804, 1e-05
    %v6093 = vadd.f32 %v5805, 1e-05
    %v6094 = vadd.f32 %v5806, 1e-05
    %v6095 = vadd.f32 %v5807, 1e-05
    %v6096 = vadd.f32 %v5808, 1e-05
    %v6097 = vadd.f32 %v5809, 1e-05
    %v6098 = vadd.f32 %v5810, 1e-05
    %v6099 = vadd.f32 %v5811, 1e-05
    %v6100 = vadd.f32 %v5812, 1e-05
    %v6101 = vadd.f32 %v5813, 1e-05
    %v6102 = vadd.f32 %v5814, 1e-05
    %v6103 = vadd.f32 %v5815, 1e-05
    %v6104 = vadd.f32 %v5816, 1e-05
    %v6105 = vadd.f32 %v5817, 1e-05
    %v6106 = vadd.f32 %v5818, 1e-05
    %v6107 = vadd.f32 %v5819, 1e-05
    %v6108 = vadd.f32 %v5820, 1e-05
    %v6109 = vadd.f32 %v5821, 1e-05
    %v6110 = vadd.f32 %v5822, 1e-05
    %v6111 = vadd.f32 %v5823, 1e-05
    %v6112 = vadd.f32 %v5824, 1e-05
    %v6113 = vadd.f32 %v5825, 1e-05
    %v6114 = vadd.f32 %v5826, 1e-05
    %v6115 = vadd.f32 %v5827, 1e-05
    %v6116 = vadd.f32 %v5828, 1e-05
    %v6117 = vadd.f32 %v5829, 1e-05
    %v6118 = vadd.f32 %v5830, 1e-05
    %v6119 = vrsqrt.pop %v5975
    %v6120 = vrsqrt.pop %v5976
    %v6121 = vrsqrt.pop %v5977
    %v6122 = vrsqrt.pop %v5978
    %v6123 = vrsqrt.pop %v5979
    %v6124 = vrsqrt.pop %v5980
    %v6125 = vrsqrt.pop %v5981
    %v6126 = vrsqrt.pop %v5982
    %v6127 = vrsqrt.pop %v5983
    %v6128 = vrsqrt.pop %v5984
    %v6129 = vrsqrt.pop %v5985
    %v6130 = vrsqrt.pop %v5986
    %v6131 = vrsqrt.pop %v5987
    %v6132 = vrsqrt.pop %v5988
    %v6133 = vrsqrt.pop %v5989
    %v6134 = vrsqrt.pop %v5990
    %v6135 = vrsqrt.pop %v5991
    %v6136 = vrsqrt.pop %v5992
    %v6137 = vrsqrt.pop %v5993
    %v6138 = vrsqrt.pop %v5994
    %v6139 = vrsqrt.pop %v5995
    %v6140 = vrsqrt.pop %v5996
    %v6141 = vrsqrt.pop %v5997
    %v6142 = vrsqrt.pop %v5998
    %v6143 = vrsqrt.pop %v5999
    %v6144 = vrsqrt.pop %v6000
    %v6145 = vrsqrt.pop %v6001
    %v6146 = vrsqrt.pop %v6002
    %v6147 = vrsqrt.pop %v6003
    %v6148 = vrsqrt.pop %v6004
    %v6149 = vrsqrt.pop %v6005
    %v6150 = vrsqrt.pop %v6006
    %v6151 = vrsqrt.pop %v6007
    %v6152 = vrsqrt.pop %v6008
    %v6153 = vrsqrt.pop %v6009
    %v6154 = vrsqrt.pop %v6010
    %v6155 = vrsqrt.pop %v6011
    %v6156 = vrsqrt.pop %v6012
    %v6157 = vrsqrt.pop %v6013
    %v6158 = vrsqrt.pop %v6014
    %v6159 = vrsqrt.pop %v6015
    %v6160 = vrsqrt.pop %v6016
    %v6161 = vrsqrt.pop %v6017
    %v6162 = vrsqrt.pop %v6018
    %v6163 = vrsqrt.pop %v6019
    %v6164 = vrsqrt.pop %v6020
    %v6165 = vrsqrt.pop %v6021
    %v6166 = vrsqrt.pop %v6022
    %v6167 = vrsqrt.pop %v6023
    %v6168 = vrsqrt.pop %v6024
    %v6169 = vrsqrt.pop %v6025
    %v6170 = vrsqrt.pop %v6026
    %v6171 = vrsqrt.pop %v6027
    %v6172 = vrsqrt.pop %v6028
    %v6173 = vrsqrt.pop %v6029
    %v6174 = vrsqrt.pop %v6030
    %v6175 = vrsqrt.pop %v6031
    %v6176 = vrsqrt.pop %v6032
    %v6177 = vrsqrt.pop %v6033
    %v6178 = vrsqrt.pop %v6034
    %v6179 = vrsqrt.pop %v6035
    %v6180 = vrsqrt.pop %v6036
    %v6181 = vrsqrt.pop %v6037
    %v6182 = vrsqrt.pop %v6038
    %v6183 = vrsqrt.pop %v6039
    %v6184 = vrsqrt.pop %v6040
    %v6185 = vrsqrt.pop %v6041
    %v6186 = vrsqrt.pop %v6042
    %v6187 = vrsqrt.pop %v6043
    %v6188 = vrsqrt.pop %v6044
    %v6189 = vrsqrt.pop %v6045
    %v6190 = vrsqrt.pop %v6046
    %v6191 = vrsqrt.pop %v6047
    %v6192 = vrsqrt.pop %v6048
    %v6193 = vrsqrt.pop %v6049
    %v6194 = vrsqrt.pop %v6050
    %v6195 = vrsqrt.pop %v6051
    %v6196 = vrsqrt.pop %v6052
    %v6197 = vrsqrt.pop %v6053
    %v6198 = vrsqrt.pop %v6054
    %v6199 = vrsqrt.pop %v6055
    %v6200 = vrsqrt.pop %v6056
    %v6201 = vrsqrt.pop %v6057
    %v6202 = vrsqrt.pop %v6058
    %v6203 = vrsqrt.pop %v6059
    %v6204 = vrsqrt.pop %v6060
    %v6205 = vrsqrt.pop %v6061
    %v6206 = vrsqrt.pop %v6062
    %v6207 = vrsqrt.pop %v6063
    %v6208 = vrsqrt.pop %v6064
    %v6209 = vrsqrt.pop %v6065
    %v6210 = vrsqrt.pop %v6066
    %v6211 = vrsqrt.pop %v6067
    %v6212 = vrsqrt.pop %v6068
    %v6213 = vrsqrt.pop %v6069
    %v6214 = vrsqrt.pop %v6070
    %v6215 = vrsqrt.pop %v6071
    %v6216 = vrsqrt.pop %v6072
    %v6217 = vrsqrt.pop %v6073
    %v6218 = vrsqrt.pop %v6074
    %v6219 = vrsqrt.pop %v6075
    %v6220 = vrsqrt.pop %v6076
    %v6221 = vrsqrt.pop %v6077
    %v6222 = vrsqrt.pop %v6078
    %v6223 = vrsqrt.pop %v6079
    %v6224 = vrsqrt.pop %v6080
    %v6225 = vrsqrt.pop %v6081
    %v6226 = vrsqrt.pop %v6082
    %v6227 = vrsqrt.pop %v6083
    %v6228 = vrsqrt.pop %v6084
    %v6229 = vrsqrt.pop %v6085
    %v6230 = vrsqrt.pop %v6086
    %v6231 = vrsqrt.pop %v6087
    %v6232 = vrsqrt.pop %v6088
    %v6233 = vrsqrt.pop %v6089
    %v6234 = vrsqrt.pop %v6090
    %v6235 = vrsqrt.pop %v6091
    %v6236 = vrsqrt.pop %v6092
    %v6237 = vrsqrt.pop %v6093
    %v6238 = vrsqrt.pop %v6094
    %v6239 = vrsqrt.pop %v6095
    %v6240 = vrsqrt.pop %v6096
    %v6241 = vrsqrt.pop %v6097
    %v6242 = vrsqrt.pop %v6098
    %v6243 = vrsqrt.pop %v6099
    %v6244 = vrsqrt.pop %v6100
    %v6245 = vrsqrt.pop %v6101
    %v6246 = vrsqrt.pop %v6102
    %v6247 = vrsqrt.pop %v6103
    %v6248 = vrsqrt.pop %v6104
    %v6249 = vrsqrt.pop %v6105
    %v6250 = vrsqrt.pop %v6106
    %v6251 = vrsqrt.pop %v6107
    %v6252 = vrsqrt.pop %v6108
    %v6253 = vrsqrt.pop %v6109
    %v6254 = vrsqrt.pop %v6110
    %v6255 = vrsqrt.pop %v6111
    %v6256 = vrsqrt.pop %v6112
    %v6257 = vrsqrt.pop %v6113
    %v6258 = vrsqrt.pop %v6114
    %v6259 = vrsqrt.pop %v6115
    %v6260 = vrsqrt.pop %v6116
    %v6261 = vrsqrt.pop %v6117
    %v6262 = vrsqrt.pop %v6118
    %v6263 = vmul.f32 %v5831, %v6119
    %v6264 = vmul.f32 %v5832, %v6120
    %v6265 = vmul.f32 %v5833, %v6121
    %v6266 = vmul.f32 %v5834, %v6122
    %v6267 = vmul.f32 %v5835, %v6123
    %v6268 = vmul.f32 %v5836, %v6124
    %v6269 = vmul.f32 %v5837, %v6125
    %v6270 = vmul.f32 %v5838, %v6126
    %v6271 = vmul.f32 %v5839, %v6127
    %v6272 = vmul.f32 %v5840, %v6128
    %v6273 = vmul.f32 %v5841, %v6129
    %v6274 = vmul.f32 %v5842, %v6130
    %v6275 = vmul.f32 %v5843, %v6131
    %v6276 = vmul.f32 %v5844, %v6132
    %v6277 = vmul.f32 %v5845, %v6133
    %v6278 = vmul.f32 %v5846, %v6134
    %v6279 = vmul.f32 %v5847, %v6135
    %v6280 = vmul.f32 %v5848, %v6136
    %v6281 = vmul.f32 %v5849, %v6137
    %v6282 = vmul.f32 %v5850, %v6138
    %v6283 = vmul.f32 %v5851, %v6139
    %v6284 = vmul.f32 %v5852, %v6140
    %v6285 = vmul.f32 %v5853, %v6141
    %v6286 = vmul.f32 %v5854, %v6142
    %v6287 = vmul.f32 %v5855, %v6143
    %v6288 = vmul.f32 %v5856, %v6144
    %v6289 = vmul.f32 %v5857, %v6145
    %v6290 = vmul.f32 %v5858, %v6146
    %v6291 = vmul.f32 %v5859, %v6147
    %v6292 = vmul.f32 %v5860, %v6148
    %v6293 = vmul.f32 %v5861, %v6149
    %v6294 = vmul.f32 %v5862, %v6150
    %v6295 = vmul.f32 %v5863, %v6151
    %v6296 = vmul.f32 %v5864, %v6152
    %v6297 = vmul.f32 %v5865, %v6153
    %v6298 = vmul.f32 %v5866, %v6154
    %v6299 = vmul.f32 %v5867, %v6155
    %v6300 = vmul.f32 %v5868, %v6156
    %v6301 = vmul.f32 %v5869, %v6157
    %v6302 = vmul.f32 %v5870, %v6158
    %v6303 = vmul.f32 %v5871, %v6159
    %v6304 = vmul.f32 %v5872, %v6160
    %v6305 = vmul.f32 %v5873, %v6161
    %v6306 = vmul.f32 %v5874, %v6162
    %v6307 = vmul.f32 %v5875, %v6163
    %v6308 = vmul.f32 %v5876, %v6164
    %v6309 = vmul.f32 %v5877, %v6165
    %v6310 = vmul.f32 %v5878, %v6166
    %v6311 = vmul.f32 %v5879, %v6167
    %v6312 = vmul.f32 %v5880, %v6168
    %v6313 = vmul.f32 %v5881, %v6169
    %v6314 = vmul.f32 %v5882, %v6170
    %v6315 = vmul.f32 %v5883, %v6171
    %v6316 = vmul.f32 %v5884, %v6172
    %v6317 = vmul.f32 %v5885, %v6173
    %v6318 = vmul.f32 %v5886, %v6174
    %v6319 = vmul.f32 %v5887, %v6175
    %v6320 = vmul.f32 %v5888, %v6176
    %v6321 = vmul.f32 %v5889, %v6177
    %v6322 = vmul.f32 %v5890, %v6178
    %v6323 = vmul.f32 %v5891, %v6179
    %v6324 = vmul.f32 %v5892, %v6180
    %v6325 = vmul.f32 %v5893, %v6181
    %v6326 = vmul.f32 %v5894, %v6182
    %v6327 = vmul.f32 %v5895, %v6183
    %v6328 = vmul.f32 %v5896, %v6184
    %v6329 = vmul.f32 %v5897, %v6185
    %v6330 = vmul.f32 %v5898, %v6186
    %v6331 = vmul.f32 %v5899, %v6187
    %v6332 = vmul.f32 %v5900, %v6188
    %v6333 = vmul.f32 %v5901, %v6189
    %v6334 = vmul.f32 %v5902, %v6190
    %v6335 = vmul.f32 %v5903, %v6191
    %v6336 = vmul.f32 %v5904, %v6192
    %v6337 = vmul.f32 %v5905, %v6193
    %v6338 = vmul.f32 %v5906, %v6194
    %v6339 = vmul.f32 %v5907, %v6195
    %v6340 = vmul.f32 %v5908, %v6196
    %v6341 = vmul.f32 %v5909, %v6197
    %v6342 = vmul.f32 %v5910, %v6198
    %v6343 = vmul.f32 %v5911, %v6199
    %v6344 = vmul.f32 %v5912, %v6200
    %v6345 = vmul.f32 %v5913, %v6201
    %v6346 = vmul.f32 %v5914, %v6202
    %v6347 = vmul.f32 %v5915, %v6203
    %v6348 = vmul.f32 %v5916, %v6204
    %v6349 = vmul.f32 %v5917, %v6205
    %v6350 = vmul.f32 %v5918, %v6206
    %v6351 = vmul.f32 %v5919, %v6207
    %v6352 = vmul.f32 %v5920, %v6208
    %v6353 = vmul.f32 %v5921, %v6209
    %v6354 = vmul.f32 %v5922, %v6210
    %v6355 = vmul.f32 %v5923, %v6211
    %v6356 = vmul.f32 %v5924, %v6212
    %v6357 = vmul.f32 %v5925, %v6213
    %v6358 = vmul.f32 %v5926, %v6214
    %v6359 = vmul.f32 %v5927, %v6215
    %v6360 = vmul.f32 %v5928, %v6216
    %v6361 = vmul.f32 %v5929, %v6217
    %v6362 = vmul.f32 %v5930, %v6218
    %v6363 = vmul.f32 %v5931, %v6219
    %v6364 = vmul.f32 %v5932, %v6220
    %v6365 = vmul.f32 %v5933, %v6221
    %v6366 = vmul.f32 %v5934, %v6222
    %v6367 = vmul.f32 %v5935, %v6223
    %v6368 = vmul.f32 %v5936, %v6224
    %v6369 = vmul.f32 %v5937, %v6225
    %v6370 = vmul.f32 %v5938, %v6226
    %v6371 = vmul.f32 %v5939, %v6227
    %v6372 = vmul.f32 %v5940, %v6228
    %v6373 = vmul.f32 %v5941, %v6229
    %v6374 = vmul.f32 %v5942, %v6230
    %v6375 = vmul.f32 %v5943, %v6231
    %v6376 = vmul.f32 %v5944, %v6232
    %v6377 = vmul.f32 %v5945, %v6233
    %v6378 = vmul.f32 %v5946, %v6234
    %v6379 = vmul.f32 %v5947, %v6235
    %v6380 = vmul.f32 %v5948, %v6236
    %v6381 = vmul.f32 %v5949, %v6237
    %v6382 = vmul.f32 %v5950, %v6238
    %v6383 = vmul.f32 %v5951, %v6239
    %v6384 = vmul.f32 %v5952, %v6240
    %v6385 = vmul.f32 %v5953, %v6241
    %v6386 = vmul.f32 %v5954, %v6242
    %v6387 = vmul.f32 %v5955, %v6243
    %v6388 = vmul.f32 %v5956, %v6244
    %v6389 = vmul.f32 %v5957, %v6245
    %v6390 = vmul.f32 %v5958, %v6246
    %v6391 = vmul.f32 %v5959, %v6247
    %v6392 = vmul.f32 %v5960, %v6248
    %v6393 = vmul.f32 %v5961, %v6249
    %v6394 = vmul.f32 %v5962, %v6250
    %v6395 = vmul.f32 %v5963, %v6251
    %v6396 = vmul.f32 %v5964, %v6252
    %v6397 = vmul.f32 %v5965, %v6253
    %v6398 = vmul.f32 %v5966, %v6254
    %v6399 = vmul.f32 %v5967, %v6255
    %v6400 = vmul.f32 %v5968, %v6256
    %v6401 = vmul.f32 %v5969, %v6257
    %v6402 = vmul.f32 %v5970, %v6258
    %v6403 = vmul.f32 %v5971, %v6259
    %v6404 = vmul.f32 %v5972, %v6260
    %v6405 = vmul.f32 %v5973, %v6261
    %v6406 = vmul.f32 %v5974, %v6262
    %v6407 = vld [vmem:[%s7] sm:$0x1]
    %v6409 = vlaneseq
    %v6410 = vshrl.u32 %v6409, 7
    %v6411 = vsub.s32 0, %v6410
    %v6412 = vrot.slane %v6407, %v6411
    %v6414 = vmul.f32 %v6263, %v6412
    %v6415 = vmul.f32 %v6264, %v6412
    %v6416 = vmul.f32 %v6265, %v6412
    %v6417 = vmul.f32 %v6266, %v6412
    %v6418 = vmul.f32 %v6267, %v6412
    %v6419 = vmul.f32 %v6268, %v6412
    %v6420 = vmul.f32 %v6269, %v6412
    %v6421 = vmul.f32 %v6270, %v6412
    %v6422 = vmul.f32 %v6271, %v6412
    %v6423 = vmul.f32 %v6272, %v6412
    %v6424 = vmul.f32 %v6273, %v6412
    %v6425 = vmul.f32 %v6274, %v6412
    %v6426 = vmul.f32 %v6275, %v6412
    %v6427 = vmul.f32 %v6276, %v6412
    %v6428 = vmul.f32 %v6277, %v6412
    %v6429 = vmul.f32 %v6278, %v6412
    %v6430 = vmul.f32 %v6279, %v6412
    %v6431 = vmul.f32 %v6280, %v6412
    %v6432 = vmul.f32 %v6281, %v6412
    %v6433 = vmul.f32 %v6282, %v6412
    %v6434 = vmul.f32 %v6283, %v6412
    %v6435 = vmul.f32 %v6284, %v6412
    %v6436 = vmul.f32 %v6285, %v6412
    %v6437 = vmul.f32 %v6286, %v6412
    %v6438 = vmul.f32 %v6287, %v6412
    %v6439 = vmul.f32 %v6288, %v6412
    %v6440 = vmul.f32 %v6289, %v6412
    %v6441 = vmul.f32 %v6290, %v6412
    %v6442 = vmul.f32 %v6291, %v6412
    %v6443 = vmul.f32 %v6292, %v6412
    %v6444 = vmul.f32 %v6293, %v6412
    %v6445 = vmul.f32 %v6294, %v6412
    %v6446 = vmul.f32 %v6295, %v6412
    %v6447 = vmul.f32 %v6296, %v6412
    %v6448 = vmul.f32 %v6297, %v6412
    %v6449 = vmul.f32 %v6298, %v6412
    %v6450 = vmul.f32 %v6299, %v6412
    %v6451 = vmul.f32 %v6300, %v6412
    %v6452 = vmul.f32 %v6301, %v6412
    %v6453 = vmul.f32 %v6302, %v6412
    %v6454 = vmul.f32 %v6303, %v6412
    %v6455 = vmul.f32 %v6304, %v6412
    %v6456 = vmul.f32 %v6305, %v6412
    %v6457 = vmul.f32 %v6306, %v6412
    %v6458 = vmul.f32 %v6307, %v6412
    %v6459 = vmul.f32 %v6308, %v6412
    %v6460 = vmul.f32 %v6309, %v6412
    %v6461 = vmul.f32 %v6310, %v6412
    %v6462 = vmul.f32 %v6311, %v6412
    %v6463 = vmul.f32 %v6312, %v6412
    %v6464 = vmul.f32 %v6313, %v6412
    %v6465 = vmul.f32 %v6314, %v6412
    %v6466 = vmul.f32 %v6315, %v6412
    %v6467 = vmul.f32 %v6316, %v6412
    %v6468 = vmul.f32 %v6317, %v6412
    %v6469 = vmul.f32 %v6318, %v6412
    %v6470 = vmul.f32 %v6319, %v6412
    %v6471 = vmul.f32 %v6320, %v6412
    %v6472 = vmul.f32 %v6321, %v6412
    %v6473 = vmul.f32 %v6322, %v6412
    %v6474 = vmul.f32 %v6323, %v6412
    %v6475 = vmul.f32 %v6324, %v6412
    %v6476 = vmul.f32 %v6325, %v6412
    %v6477 = vmul.f32 %v6326, %v6412
    %v6478 = vmul.f32 %v6327, %v6412
    %v6479 = vmul.f32 %v6328, %v6412
    %v6480 = vmul.f32 %v6329, %v6412
    %v6481 = vmul.f32 %v6330, %v6412
    %v6482 = vmul.f32 %v6331, %v6412
    %v6483 = vmul.f32 %v6332, %v6412
    %v6484 = vmul.f32 %v6333, %v6412
    %v6485 = vmul.f32 %v6334, %v6412
    %v6486 = vmul.f32 %v6335, %v6412
    %v6487 = vmul.f32 %v6336, %v6412
    %v6488 = vmul.f32 %v6337, %v6412
    %v6489 = vmul.f32 %v6338, %v6412
    %v6490 = vmul.f32 %v6339, %v6412
    %v6491 = vmul.f32 %v6340, %v6412
    %v6492 = vmul.f32 %v6341, %v6412
    %v6493 = vmul.f32 %v6342, %v6412
    %v6494 = vmul.f32 %v6343, %v6412
    %v6495 = vmul.f32 %v6344, %v6412
    %v6496 = vmul.f32 %v6345, %v6412
    %v6497 = vmul.f32 %v6346, %v6412
    %v6498 = vmul.f32 %v6347, %v6412
    %v6499 = vmul.f32 %v6348, %v6412
    %v6500 = vmul.f32 %v6349, %v6412
    %v6501 = vmul.f32 %v6350, %v6412
    %v6502 = vmul.f32 %v6351, %v6412
    %v6503 = vmul.f32 %v6352, %v6412
    %v6504 = vmul.f32 %v6353, %v6412
    %v6505 = vmul.f32 %v6354, %v6412
    %v6506 = vmul.f32 %v6355, %v6412
    %v6507 = vmul.f32 %v6356, %v6412
    %v6508 = vmul.f32 %v6357, %v6412
    %v6509 = vmul.f32 %v6358, %v6412
    %v6510 = vmul.f32 %v6359, %v6412
    %v6511 = vmul.f32 %v6360, %v6412
    %v6512 = vmul.f32 %v6361, %v6412
    %v6513 = vmul.f32 %v6362, %v6412
    %v6514 = vmul.f32 %v6363, %v6412
    %v6515 = vmul.f32 %v6364, %v6412
    %v6516 = vmul.f32 %v6365, %v6412
    %v6517 = vmul.f32 %v6366, %v6412
    %v6518 = vmul.f32 %v6367, %v6412
    %v6519 = vmul.f32 %v6368, %v6412
    %v6520 = vmul.f32 %v6369, %v6412
    %v6521 = vmul.f32 %v6370, %v6412
    %v6522 = vmul.f32 %v6371, %v6412
    %v6523 = vmul.f32 %v6372, %v6412
    %v6524 = vmul.f32 %v6373, %v6412
    %v6525 = vmul.f32 %v6374, %v6412
    %v6526 = vmul.f32 %v6375, %v6412
    %v6527 = vmul.f32 %v6376, %v6412
    %v6528 = vmul.f32 %v6377, %v6412
    %v6529 = vmul.f32 %v6378, %v6412
    %v6530 = vmul.f32 %v6379, %v6412
    %v6531 = vmul.f32 %v6380, %v6412
    %v6532 = vmul.f32 %v6381, %v6412
    %v6533 = vmul.f32 %v6382, %v6412
    %v6534 = vmul.f32 %v6383, %v6412
    %v6535 = vmul.f32 %v6384, %v6412
    %v6536 = vmul.f32 %v6385, %v6412
    %v6537 = vmul.f32 %v6386, %v6412
    %v6538 = vmul.f32 %v6387, %v6412
    %v6539 = vmul.f32 %v6388, %v6412
    %v6540 = vmul.f32 %v6389, %v6412
    %v6541 = vmul.f32 %v6390, %v6412
    %v6542 = vmul.f32 %v6391, %v6412
    %v6543 = vmul.f32 %v6392, %v6412
    %v6544 = vmul.f32 %v6393, %v6412
    %v6545 = vmul.f32 %v6394, %v6412
    %v6546 = vmul.f32 %v6395, %v6412
    %v6547 = vmul.f32 %v6396, %v6412
    %v6548 = vmul.f32 %v6397, %v6412
    %v6549 = vmul.f32 %v6398, %v6412
    %v6550 = vmul.f32 %v6399, %v6412
    %v6551 = vmul.f32 %v6400, %v6412
    %v6552 = vmul.f32 %v6401, %v6412
    %v6553 = vmul.f32 %v6402, %v6412
    %v6554 = vmul.f32 %v6403, %v6412
    %v6555 = vmul.f32 %v6404, %v6412
    %v6556 = vmul.f32 %v6405, %v6412
    %v6557 = vmul.f32 %v6406, %v6412
    %v6558 = vld [vmem:[%s8] sm:$0x1]
    %v6560 = vlaneseq
    %v6561 = vshrl.u32 %v6560, 7
    %v6562 = vsub.s32 0, %v6561
    %v6563 = vrot.slane %v6558, %v6562
    %v6565 = vadd.f32 %v6414, %v6563
    %v6566 = vadd.f32 %v6415, %v6563
    %v6567 = vadd.f32 %v6416, %v6563
    %v6568 = vadd.f32 %v6417, %v6563
    %v6569 = vadd.f32 %v6418, %v6563
    %v6570 = vadd.f32 %v6419, %v6563
    %v6571 = vadd.f32 %v6420, %v6563
    %v6572 = vadd.f32 %v6421, %v6563
    %v6573 = vadd.f32 %v6422, %v6563
    %v6574 = vadd.f32 %v6423, %v6563
    %v6575 = vadd.f32 %v6424, %v6563
    %v6576 = vadd.f32 %v6425, %v6563
    %v6577 = vadd.f32 %v6426, %v6563
    %v6578 = vadd.f32 %v6427, %v6563
    %v6579 = vadd.f32 %v6428, %v6563
    %v6580 = vadd.f32 %v6429, %v6563
    %v6581 = vadd.f32 %v6430, %v6563
    %v6582 = vadd.f32 %v6431, %v6563
    %v6583 = vadd.f32 %v6432, %v6563
    %v6584 = vadd.f32 %v6433, %v6563
    %v6585 = vadd.f32 %v6434, %v6563
    %v6586 = vadd.f32 %v6435, %v6563
    %v6587 = vadd.f32 %v6436, %v6563
    %v6588 = vadd.f32 %v6437, %v6563
    %v6589 = vadd.f32 %v6438, %v6563
    %v6590 = vadd.f32 %v6439, %v6563
    %v6591 = vadd.f32 %v6440, %v6563
    %v6592 = vadd.f32 %v6441, %v6563
    %v6593 = vadd.f32 %v6442, %v6563
    %v6594 = vadd.f32 %v6443, %v6563
    %v6595 = vadd.f32 %v6444, %v6563
    %v6596 = vadd.f32 %v6445, %v6563
    %v6597 = vadd.f32 %v6446, %v6563
    %v6598 = vadd.f32 %v6447, %v6563
    %v6599 = vadd.f32 %v6448, %v6563
    %v6600 = vadd.f32 %v6449, %v6563
    %v6601 = vadd.f32 %v6450, %v6563
    %v6602 = vadd.f32 %v6451, %v6563
    %v6603 = vadd.f32 %v6452, %v6563
    %v6604 = vadd.f32 %v6453, %v6563
    %v6605 = vadd.f32 %v6454, %v6563
    %v6606 = vadd.f32 %v6455, %v6563
    %v6607 = vadd.f32 %v6456, %v6563
    %v6608 = vadd.f32 %v6457, %v6563
    %v6609 = vadd.f32 %v6458, %v6563
    %v6610 = vadd.f32 %v6459, %v6563
    %v6611 = vadd.f32 %v6460, %v6563
    %v6612 = vadd.f32 %v6461, %v6563
    %v6613 = vadd.f32 %v6462, %v6563
    %v6614 = vadd.f32 %v6463, %v6563
    %v6615 = vadd.f32 %v6464, %v6563
    %v6616 = vadd.f32 %v6465, %v6563
    %v6617 = vadd.f32 %v6466, %v6563
    %v6618 = vadd.f32 %v6467, %v6563
    %v6619 = vadd.f32 %v6468, %v6563
    %v6620 = vadd.f32 %v6469, %v6563
    %v6621 = vadd.f32 %v6470, %v6563
    %v6622 = vadd.f32 %v6471, %v6563
    %v6623 = vadd.f32 %v6472, %v6563
    %v6624 = vadd.f32 %v6473, %v6563
    %v6625 = vadd.f32 %v6474, %v6563
    %v6626 = vadd.f32 %v6475, %v6563
    %v6627 = vadd.f32 %v6476, %v6563
    %v6628 = vadd.f32 %v6477, %v6563
    %v6629 = vadd.f32 %v6478, %v6563
    %v6630 = vadd.f32 %v6479, %v6563
    %v6631 = vadd.f32 %v6480, %v6563
    %v6632 = vadd.f32 %v6481, %v6563
    %v6633 = vadd.f32 %v6482, %v6563
    %v6634 = vadd.f32 %v6483, %v6563
    %v6635 = vadd.f32 %v6484, %v6563
    %v6636 = vadd.f32 %v6485, %v6563
    %v6637 = vadd.f32 %v6486, %v6563
    %v6638 = vadd.f32 %v6487, %v6563
    %v6639 = vadd.f32 %v6488, %v6563
    %v6640 = vadd.f32 %v6489, %v6563
    %v6641 = vadd.f32 %v6490, %v6563
    %v6642 = vadd.f32 %v6491, %v6563
    %v6643 = vadd.f32 %v6492, %v6563
    %v6644 = vadd.f32 %v6493, %v6563
    %v6645 = vadd.f32 %v6494, %v6563
    %v6646 = vadd.f32 %v6495, %v6563
    %v6647 = vadd.f32 %v6496, %v6563
    %v6648 = vadd.f32 %v6497, %v6563
    %v6649 = vadd.f32 %v6498, %v6563
    %v6650 = vadd.f32 %v6499, %v6563
    %v6651 = vadd.f32 %v6500, %v6563
    %v6652 = vadd.f32 %v6501, %v6563
    %v6653 = vadd.f32 %v6502, %v6563
    %v6654 = vadd.f32 %v6503, %v6563
    %v6655 = vadd.f32 %v6504, %v6563
    %v6656 = vadd.f32 %v6505, %v6563
    %v6657 = vadd.f32 %v6506, %v6563
    %v6658 = vadd.f32 %v6507, %v6563
    %v6659 = vadd.f32 %v6508, %v6563
    %v6660 = vadd.f32 %v6509, %v6563
    %v6661 = vadd.f32 %v6510, %v6563
    %v6662 = vadd.f32 %v6511, %v6563
    %v6663 = vadd.f32 %v6512, %v6563
    %v6664 = vadd.f32 %v6513, %v6563
    %v6665 = vadd.f32 %v6514, %v6563
    %v6666 = vadd.f32 %v6515, %v6563
    %v6667 = vadd.f32 %v6516, %v6563
    %v6668 = vadd.f32 %v6517, %v6563
    %v6669 = vadd.f32 %v6518, %v6563
    %v6670 = vadd.f32 %v6519, %v6563
    %v6671 = vadd.f32 %v6520, %v6563
    %v6672 = vadd.f32 %v6521, %v6563
    %v6673 = vadd.f32 %v6522, %v6563
    %v6674 = vadd.f32 %v6523, %v6563
    %v6675 = vadd.f32 %v6524, %v6563
    %v6676 = vadd.f32 %v6525, %v6563
    %v6677 = vadd.f32 %v6526, %v6563
    %v6678 = vadd.f32 %v6527, %v6563
    %v6679 = vadd.f32 %v6528, %v6563
    %v6680 = vadd.f32 %v6529, %v6563
    %v6681 = vadd.f32 %v6530, %v6563
    %v6682 = vadd.f32 %v6531, %v6563
    %v6683 = vadd.f32 %v6532, %v6563
    %v6684 = vadd.f32 %v6533, %v6563
    %v6685 = vadd.f32 %v6534, %v6563
    %v6686 = vadd.f32 %v6535, %v6563
    %v6687 = vadd.f32 %v6536, %v6563
    %v6688 = vadd.f32 %v6537, %v6563
    %v6689 = vadd.f32 %v6538, %v6563
    %v6690 = vadd.f32 %v6539, %v6563
    %v6691 = vadd.f32 %v6540, %v6563
    %v6692 = vadd.f32 %v6541, %v6563
    %v6693 = vadd.f32 %v6542, %v6563
    %v6694 = vadd.f32 %v6543, %v6563
    %v6695 = vadd.f32 %v6544, %v6563
    %v6696 = vadd.f32 %v6545, %v6563
    %v6697 = vadd.f32 %v6546, %v6563
    %v6698 = vadd.f32 %v6547, %v6563
    %v6699 = vadd.f32 %v6548, %v6563
    %v6700 = vadd.f32 %v6549, %v6563
    %v6701 = vadd.f32 %v6550, %v6563
    %v6702 = vadd.f32 %v6551, %v6563
    %v6703 = vadd.f32 %v6552, %v6563
    %v6704 = vadd.f32 %v6553, %v6563
    %v6705 = vadd.f32 %v6554, %v6563
    %v6706 = vadd.f32 %v6555, %v6563
    %v6707 = vadd.f32 %v6556, %v6563
    %v6708 = vadd.f32 %v6557, %v6563
    %v6709 = vpack.c.bf16 %v6566, %v6565
    %v6710 = vpack.c.bf16 %v6568, %v6567
    %v6711 = vpack.c.bf16 %v6570, %v6569
    %v6712 = vpack.c.bf16 %v6572, %v6571
    %v6713 = vpack.c.bf16 %v6574, %v6573
    %v6714 = vpack.c.bf16 %v6576, %v6575
    %v6715 = vpack.c.bf16 %v6578, %v6577
    %v6716 = vpack.c.bf16 %v6580, %v6579
    %v6717 = vpack.c.bf16 %v6582, %v6581
    %v6718 = vpack.c.bf16 %v6584, %v6583
    %v6719 = vpack.c.bf16 %v6586, %v6585
    %v6720 = vpack.c.bf16 %v6588, %v6587
    %v6721 = vpack.c.bf16 %v6590, %v6589
    %v6722 = vpack.c.bf16 %v6592, %v6591
    %v6723 = vpack.c.bf16 %v6594, %v6593
    %v6724 = vpack.c.bf16 %v6596, %v6595
    %v6725 = vpack.c.bf16 %v6598, %v6597
    %v6726 = vpack.c.bf16 %v6600, %v6599
    %v6727 = vpack.c.bf16 %v6602, %v6601
    %v6728 = vpack.c.bf16 %v6604, %v6603
    %v6729 = vpack.c.bf16 %v6606, %v6605
    %v6730 = vpack.c.bf16 %v6608, %v6607
    %v6731 = vpack.c.bf16 %v6610, %v6609
    %v6732 = vpack.c.bf16 %v6612, %v6611
    %v6733 = vpack.c.bf16 %v6614, %v6613
    %v6734 = vpack.c.bf16 %v6616, %v6615
    %v6735 = vpack.c.bf16 %v6618, %v6617
    %v6736 = vpack.c.bf16 %v6620, %v6619
    %v6737 = vpack.c.bf16 %v6622, %v6621
    %v6738 = vpack.c.bf16 %v6624, %v6623
    %v6739 = vpack.c.bf16 %v6626, %v6625
    %v6740 = vpack.c.bf16 %v6628, %v6627
    %v6741 = vpack.c.bf16 %v6630, %v6629
    %v6742 = vpack.c.bf16 %v6632, %v6631
    %v6743 = vpack.c.bf16 %v6634, %v6633
    %v6744 = vpack.c.bf16 %v6636, %v6635
    %v6745 = vpack.c.bf16 %v6638, %v6637
    %v6746 = vpack.c.bf16 %v6640, %v6639
    %v6747 = vpack.c.bf16 %v6642, %v6641
    %v6748 = vpack.c.bf16 %v6644, %v6643
    %v6749 = vpack.c.bf16 %v6646, %v6645
    %v6750 = vpack.c.bf16 %v6648, %v6647
    %v6751 = vpack.c.bf16 %v6650, %v6649
    %v6752 = vpack.c.bf16 %v6652, %v6651
    %v6753 = vpack.c.bf16 %v6654, %v6653
    %v6754 = vpack.c.bf16 %v6656, %v6655
    %v6755 = vpack.c.bf16 %v6658, %v6657
    %v6756 = vpack.c.bf16 %v6660, %v6659
    %v6757 = vpack.c.bf16 %v6662, %v6661
    %v6758 = vpack.c.bf16 %v6664, %v6663
    %v6759 = vpack.c.bf16 %v6666, %v6665
    %v6760 = vpack.c.bf16 %v6668, %v6667
    %v6761 = vpack.c.bf16 %v6670, %v6669
    %v6762 = vpack.c.bf16 %v6672, %v6671
    %v6763 = vpack.c.bf16 %v6674, %v6673
    %v6764 = vpack.c.bf16 %v6676, %v6675
    %v6765 = vpack.c.bf16 %v6678, %v6677
    %v6766 = vpack.c.bf16 %v6680, %v6679
    %v6767 = vpack.c.bf16 %v6682, %v6681
    %v6768 = vpack.c.bf16 %v6684, %v6683
    %v6769 = vpack.c.bf16 %v6686, %v6685
    %v6770 = vpack.c.bf16 %v6688, %v6687
    %v6771 = vpack.c.bf16 %v6690, %v6689
    %v6772 = vpack.c.bf16 %v6692, %v6691
    %v6773 = vpack.c.bf16 %v6694, %v6693
    %v6774 = vpack.c.bf16 %v6696, %v6695
    %v6775 = vpack.c.bf16 %v6698, %v6697
    %v6776 = vpack.c.bf16 %v6700, %v6699
    %v6777 = vpack.c.bf16 %v6702, %v6701
    %v6778 = vpack.c.bf16 %v6704, %v6703
    %v6779 = vpack.c.bf16 %v6706, %v6705
    %v6780 = vpack.c.bf16 %v6708, %v6707
    %v6781 = vld [vmem:[%s9] sm:$0xf]
    %v6782 = vld [vmem:[%s9 + $0x4] sm:$0xf]
    %v6783 = vld [vmem:[%s9 + $0x8] sm:$0xf]
    %v6784 = vld [vmem:[%s9 + $0xc] sm:$0xf]
    %v6785 = vld [vmem:[%s9 + $0x10] sm:$0xf]
    %v6786 = vld [vmem:[%s9 + $0x14] sm:$0xf]
    %v6787 = vld [vmem:[%s9 + $0x18] sm:$0xf]
    %v6788 = vld [vmem:[%s9 + $0x1c] sm:$0xf]
    %v6789 = vld [vmem:[%s9 + $0x20] sm:$0xf]
    %v6790 = vld [vmem:[%s9 + $0x24] sm:$0xf]
    %v6791 = vld [vmem:[%s9 + $0x28] sm:$0xf]
    %v6792 = vld [vmem:[%s9 + $0x2c] sm:$0xf]
    %v6793 = vld [vmem:[%s9 + $0x30] sm:$0xf]
    %v6794 = vld [vmem:[%s9 + $0x34] sm:$0xf]
    %v6795 = vld [vmem:[%s9 + $0x38] sm:$0xf]
    %v6796 = vld [vmem:[%s9 + $0x3c] sm:$0xf]
    %v6797 = vld [vmem:[%s9 + $0x40] sm:$0xf]
    %v6798 = vld [vmem:[%s9 + $0x44] sm:$0xf]
    %v6799 = vld [vmem:[%s9 + $0x48] sm:$0xf]
    %v6800 = vld [vmem:[%s9 + $0x4c] sm:$0xf]
    %v6801 = vld [vmem:[%s9 + $0x50] sm:$0xf]
    %v6802 = vld [vmem:[%s9 + $0x54] sm:$0xf]
    %v6803 = vld [vmem:[%s9 + $0x58] sm:$0xf]
    %v6804 = vld [vmem:[%s9 + $0x5c] sm:$0xf]
    %v6805 = vld [vmem:[%s9 + $0x60] sm:$0xf]
    %v6806 = vld [vmem:[%s9 + $0x64] sm:$0xf]
    %v6807 = vld [vmem:[%s9 + $0x68] sm:$0xf]
    %v6808 = vld [vmem:[%s9 + $0x6c] sm:$0xf]
    %v6809 = vld [vmem:[%s9 + $0x70] sm:$0xf]
    %v6810 = vld [vmem:[%s9 + $0x74] sm:$0xf]
    %v6811 = vld [vmem:[%s9 + $0x78] sm:$0xf]
    %v6812 = vld [vmem:[%s9 + $0x7c] sm:$0xf]
    %v6813 = vld [vmem:[%s9 + $0x80] sm:$0xf]
    %v6814 = vld [vmem:[%s9 + $0x84] sm:$0xf]
    %v6815 = vld [vmem:[%s9 + $0x88] sm:$0xf]
    %v6816 = vld [vmem:[%s9 + $0x8c] sm:$0xf]
    %v6817 = vld [vmem:[%s9 + $0x90] sm:$0xf]
    %v6818 = vld [vmem:[%s9 + $0x94] sm:$0xf]
    %v6819 = vld [vmem:[%s9 + $0x98] sm:$0xf]
    %v6820 = vld [vmem:[%s9 + $0x9c] sm:$0xf]
    %v6821 = vld [vmem:[%s9 + $0xa0] sm:$0xf]
    %v6822 = vld [vmem:[%s9 + $0xa4] sm:$0xf]
    %v6823 = vld [vmem:[%s9 + $0xa8] sm:$0xf]
    %v6824 = vld [vmem:[%s9 + $0xac] sm:$0xf]
    %v6825 = vld [vmem:[%s9 + $0xb0] sm:$0xf]
    %v6826 = vld [vmem:[%s9 + $0xb4] sm:$0xf]
    %v6827 = vld [vmem:[%s9 + $0xb8] sm:$0xf]
    %v6828 = vld [vmem:[%s9 + $0xbc] sm:$0xf]
    %v6829 = vld [vmem:[%s9 + $0xc0] sm:$0xf]
    %v6830 = vld [vmem:[%s9 + $0xc4] sm:$0xf]
    %v6831 = vld [vmem:[%s9 + $0xc8] sm:$0xf]
    %v6832 = vld [vmem:[%s9 + $0xcc] sm:$0xf]
    %v6833 = vld [vmem:[%s9 + $0xd0] sm:$0xf]
    %v6834 = vld [vmem:[%s9 + $0xd4] sm:$0xf]
    %v6835 = vld [vmem:[%s9 + $0xd8] sm:$0xf]
    %v6836 = vld [vmem:[%s9 + $0xdc] sm:$0xf]
    %v6837 = vld [vmem:[%s9 + $0xe0] sm:$0xf]
    %v6838 = vld [vmem:[%s9 + $0xe4] sm:$0xf]
    %v6839 = vld [vmem:[%s9 + $0xe8] sm:$0xf]
    %v6840 = vld [vmem:[%s9 + $0xec] sm:$0xf]
    %v6841 = vld [vmem:[%s9 + $0xf0] sm:$0xf]
    %v6842 = vld [vmem:[%s9 + $0xf4] sm:$0xf]
    %v6843 = vld [vmem:[%s9 + $0xf8] sm:$0xf]
    %v6844 = vld [vmem:[%s9 + $0xfc] sm:$0xf]
    %v6845 = vld [vmem:[%s9 + $0x100] sm:$0xf]
    %v6846 = vld [vmem:[%s9 + $0x104] sm:$0xf]
    %v6847 = vld [vmem:[%s9 + $0x108] sm:$0xf]
    %v6848 = vld [vmem:[%s9 + $0x10c] sm:$0xf]
    %v6849 = vld [vmem:[%s9 + $0x110] sm:$0xf]
    %v6850 = vld [vmem:[%s9 + $0x114] sm:$0xf]
    %v6851 = vld [vmem:[%s9 + $0x118] sm:$0xf]
    %v6852 = vld [vmem:[%s9 + $0x11c] sm:$0xf]
    %v6853 = vld [vmem:[%s9 + $0x120] sm:$0xf]
    %v6854 = vld [vmem:[%s9 + $0x124] sm:$0xf]
    %v6855 = vld [vmem:[%s9 + $0x128] sm:$0xf]
    %v6856 = vld [vmem:[%s9 + $0x12c] sm:$0xf]
    %v6857 = vld [vmem:[%s9 + $0x130] sm:$0xf]
    %v6858 = vld [vmem:[%s9 + $0x134] sm:$0xf]
    %v6859 = vld [vmem:[%s9 + $0x138] sm:$0xf]
    %v6860 = vld [vmem:[%s9 + $0x13c] sm:$0xf]
    %v6861 = vld [vmem:[%s9 + $0x140] sm:$0xf]
    %v6862 = vld [vmem:[%s9 + $0x144] sm:$0xf]
    %v6863 = vld [vmem:[%s9 + $0x148] sm:$0xf]
    %v6864 = vld [vmem:[%s9 + $0x14c] sm:$0xf]
    %v6865 = vld [vmem:[%s9 + $0x150] sm:$0xf]
    %v6866 = vld [vmem:[%s9 + $0x154] sm:$0xf]
    %v6867 = vld [vmem:[%s9 + $0x158] sm:$0xf]
    %v6868 = vld [vmem:[%s9 + $0x15c] sm:$0xf]
    %v6869 = vld [vmem:[%s9 + $0x160] sm:$0xf]
    %v6870 = vld [vmem:[%s9 + $0x164] sm:$0xf]
    %v6871 = vld [vmem:[%s9 + $0x168] sm:$0xf]
    %v6872 = vld [vmem:[%s9 + $0x16c] sm:$0xf]
    %v6873 = vld [vmem:[%s9 + $0x170] sm:$0xf]
    %v6874 = vld [vmem:[%s9 + $0x174] sm:$0xf]
    %v6875 = vld [vmem:[%s9 + $0x178] sm:$0xf]
    %v6876 = vld [vmem:[%s9 + $0x17c] sm:$0xf]
    %v6877 = vld [vmem:[%s9 + $0x180] sm:$0xf]
    %v6878 = vld [vmem:[%s9 + $0x184] sm:$0xf]
    %v6879 = vld [vmem:[%s9 + $0x188] sm:$0xf]
    %v6880 = vld [vmem:[%s9 + $0x18c] sm:$0xf]
    %v6881 = vld [vmem:[%s9 + $0x190] sm:$0xf]
    %v6882 = vld [vmem:[%s9 + $0x194] sm:$0xf]
    %v6883 = vld [vmem:[%s9 + $0x198] sm:$0xf]
    %v6884 = vld [vmem:[%s9 + $0x19c] sm:$0xf]
    %v6885 = vld [vmem:[%s9 + $0x1a0] sm:$0xf]
    %v6886 = vld [vmem:[%s9 + $0x1a4] sm:$0xf]
    %v6887 = vld [vmem:[%s9 + $0x1a8] sm:$0xf]
    %v6888 = vld [vmem:[%s9 + $0x1ac] sm:$0xf]
    %v6889 = vld [vmem:[%s9 + $0x1b0] sm:$0xf]
    %v6890 = vld [vmem:[%s9 + $0x1b4] sm:$0xf]
    %v6891 = vld [vmem:[%s9 + $0x1b8] sm:$0xf]
    %v6892 = vld [vmem:[%s9 + $0x1bc] sm:$0xf]
    %v6893 = vld [vmem:[%s9 + $0x1c0] sm:$0xf]
    %v6894 = vld [vmem:[%s9 + $0x1c4] sm:$0xf]
    %v6895 = vld [vmem:[%s9 + $0x1c8] sm:$0xf]
    %v6896 = vld [vmem:[%s9 + $0x1cc] sm:$0xf]
    %v6897 = vld [vmem:[%s9 + $0x1d0] sm:$0xf]
    %v6898 = vld [vmem:[%s9 + $0x1d4] sm:$0xf]
    %v6899 = vld [vmem:[%s9 + $0x1d8] sm:$0xf]
    %v6900 = vld [vmem:[%s9 + $0x1dc] sm:$0xf]
    %v6901 = vld [vmem:[%s9 + $0x1e0] sm:$0xf]
    %v6902 = vld [vmem:[%s9 + $0x1e4] sm:$0xf]
    %v6903 = vld [vmem:[%s9 + $0x1e8] sm:$0xf]
    %v6904 = vld [vmem:[%s9 + $0x1ec] sm:$0xf]
    %v6905 = vld [vmem:[%s9 + $0x1f0] sm:$0xf]
    %v6906 = vld [vmem:[%s9 + $0x1f4] sm:$0xf]
    %v6907 = vld [vmem:[%s9 + $0x1f8] sm:$0xf]
    %v6908 = vld [vmem:[%s9 + $0x1fc] sm:$0xf]
    %v6909 = vld [vmem:[%s9 + $0x200] sm:$0xf]
    %v6910 = vld [vmem:[%s9 + $0x204] sm:$0xf]
    %v6911 = vld [vmem:[%s9 + $0x208] sm:$0xf]
    %v6912 = vld [vmem:[%s9 + $0x20c] sm:$0xf]
    %v6913 = vld [vmem:[%s9 + $0x210] sm:$0xf]
    %v6914 = vld [vmem:[%s9 + $0x214] sm:$0xf]
    %v6915 = vld [vmem:[%s9 + $0x218] sm:$0xf]
    %v6916 = vld [vmem:[%s9 + $0x21c] sm:$0xf]
    %v6917 = vld [vmem:[%s9 + $0x220] sm:$0xf]
    %v6918 = vld [vmem:[%s9 + $0x224] sm:$0xf]
    %v6919 = vld [vmem:[%s9 + $0x228] sm:$0xf]
    %v6920 = vld [vmem:[%s9 + $0x22c] sm:$0xf]
    %v6921 = vld [vmem:[%s9 + $0x230] sm:$0xf]
    %v6922 = vld [vmem:[%s9 + $0x234] sm:$0xf]
    %v6923 = vld [vmem:[%s9 + $0x238] sm:$0xf]
    %v6924 = vld [vmem:[%s9 + $0x23c] sm:$0xf]
    %v6925 = vld [vmem:[%s9 + $0x240] sm:$0xf]
    %v6926 = vld [vmem:[%s9 + $0x244] sm:$0xf]
    %v6927 = vld [vmem:[%s9 + $0x248] sm:$0xf]
    %v6928 = vld [vmem:[%s9 + $0x24c] sm:$0xf]
    %v6929 = vld [vmem:[%s9 + $0x250] sm:$0xf]
    %v6930 = vld [vmem:[%s9 + $0x254] sm:$0xf]
    %v6931 = vld [vmem:[%s9 + $0x258] sm:$0xf]
    %v6932 = vld [vmem:[%s9 + $0x25c] sm:$0xf]
    %v6933 = vld [vmem:[%s9 + $0x260] sm:$0xf]
    %v6934 = vld [vmem:[%s9 + $0x264] sm:$0xf]
    %v6935 = vld [vmem:[%s9 + $0x268] sm:$0xf]
    %v6936 = vld [vmem:[%s9 + $0x26c] sm:$0xf]
    %v6937 = vld [vmem:[%s9 + $0x270] sm:$0xf]
    %v6938 = vld [vmem:[%s9 + $0x274] sm:$0xf]
    %v6939 = vld [vmem:[%s9 + $0x278] sm:$0xf]
    %v6940 = vld [vmem:[%s9 + $0x27c] sm:$0xf]
    %v6941 = vld [vmem:[%s9 + $0x280] sm:$0xf]
    %v6942 = vld [vmem:[%s9 + $0x284] sm:$0xf]
    %v6943 = vld [vmem:[%s9 + $0x288] sm:$0xf]
    %v6944 = vld [vmem:[%s9 + $0x28c] sm:$0xf]
    %v6945 = vld [vmem:[%s9 + $0x290] sm:$0xf]
    %v6946 = vld [vmem:[%s9 + $0x294] sm:$0xf]
    %v6947 = vld [vmem:[%s9 + $0x298] sm:$0xf]
    %v6948 = vld [vmem:[%s9 + $0x29c] sm:$0xf]
    %v6949 = vld [vmem:[%s9 + $0x2a0] sm:$0xf]
    %v6950 = vld [vmem:[%s9 + $0x2a4] sm:$0xf]
    %v6951 = vld [vmem:[%s9 + $0x2a8] sm:$0xf]
    %v6952 = vld [vmem:[%s9 + $0x2ac] sm:$0xf]
    %v6953 = vld [vmem:[%s9 + $0x2b0] sm:$0xf]
    %v6954 = vld [vmem:[%s9 + $0x2b4] sm:$0xf]
    %v6955 = vld [vmem:[%s9 + $0x2b8] sm:$0xf]
    %v6956 = vld [vmem:[%s9 + $0x2bc] sm:$0xf]
    %v6957 = vld [vmem:[%s9 + $0x2c0] sm:$0xf]
    %v6958 = vld [vmem:[%s9 + $0x2c4] sm:$0xf]
    %v6959 = vld [vmem:[%s9 + $0x2c8] sm:$0xf]
    %v6960 = vld [vmem:[%s9 + $0x2cc] sm:$0xf]
    %v6961 = vld [vmem:[%s9 + $0x2d0] sm:$0xf]
    %v6962 = vld [vmem:[%s9 + $0x2d4] sm:$0xf]
    %v6963 = vld [vmem:[%s9 + $0x2d8] sm:$0xf]
    %v6964 = vld [vmem:[%s9 + $0x2dc] sm:$0xf]
    %v6965 = vld [vmem:[%s9 + $0x2e0] sm:$0xf]
    %v6966 = vld [vmem:[%s9 + $0x2e4] sm:$0xf]
    %v6967 = vld [vmem:[%s9 + $0x2e8] sm:$0xf]
    %v6968 = vld [vmem:[%s9 + $0x2ec] sm:$0xf]
    %v6969 = vld [vmem:[%s9 + $0x2f0] sm:$0xf]
    %v6970 = vld [vmem:[%s9 + $0x2f4] sm:$0xf]
    %v6971 = vld [vmem:[%s9 + $0x2f8] sm:$0xf]
    %v6972 = vld [vmem:[%s9 + $0x2fc] sm:$0xf]
    %v6989 = vunpack.c.l.b16 %v6781
    %v6990 = vunpack.c.l.b16 %v6782
    %v6991 = vunpack.c.l.b16 %v6783
    %v6992 = vunpack.c.l.b16 %v6784
    %v6993 = vunpack.c.l.b16 %v6785
    %v6994 = vunpack.c.l.b16 %v6786
    %v6995 = vunpack.c.l.b16 %v6787
    %v6996 = vunpack.c.l.b16 %v6788
    %v6997 = vunpack.c.l.b16 %v6789
    %v6998 = vunpack.c.l.b16 %v6790
    %v6999 = vunpack.c.l.b16 %v6791
    %v7000 = vunpack.c.l.b16 %v6792
    %v7001 = vunpack.c.l.b16 %v6793
    %v7002 = vunpack.c.l.b16 %v6794
    %v7003 = vunpack.c.l.b16 %v6795
    %v7004 = vunpack.c.l.b16 %v6796
    %v7005 = vpack.c.b16 %v6990, %v6989
    %v7006 = vpack.c.b16 %v6992, %v6991
    %v7007 = vpack.c.b16 %v6994, %v6993
    %v7008 = vpack.c.b16 %v6996, %v6995
    %v7009 = vpack.c.b16 %v6998, %v6997
    %v7010 = vpack.c.b16 %v7000, %v6999
    %v7011 = vpack.c.b16 %v7002, %v7001
    %v7012 = vpack.c.b16 %v7004, %v7003
    %7021 = vmatprep.subr.bf16.mxu0 0
    %7022 = vmatpush1.bf16.msra.mxu0 %v7005
    %7023 = vmatprep.subr.bf16.mxu0 0
    %7024 = vmatpush1.bf16.msra.mxu0 %v7006
    %7025 = vmatprep.subr.bf16.mxu0 0
    %7026 = vmatpush1.bf16.msra.mxu0 %v7007
    %7027 = vmatprep.subr.bf16.mxu0 0
    %7028 = vmatpush1.bf16.msra.mxu0 %v7008
    %7029 = vmatprep.subr.bf16.mxu0 0
    %7030 = vmatpush1.bf16.msra.mxu0 %v7009
    %7031 = vmatprep.subr.bf16.mxu0 0
    %7032 = vmatpush1.bf16.msra.mxu0 %v7010
    %7033 = vmatprep.subr.bf16.mxu0 0
    %7034 = vmatpush1.bf16.msra.mxu0 %v7011
    %7035 = vmatprep.subr.bf16.mxu0 0
    %7036 = vmatpush1.bf16.msra.mxu0 %v7012
    %7037 = vmatprep.subr.bf16.mxu0 0
    %7038 = vmatpush1.bf16.msra.mxu0 0
    %7039 = vmatprep.subr.bf16.mxu0 0
    %7040 = vmatpush1.bf16.msra.mxu0 0
    %7041 = vmatprep.subr.bf16.mxu0 0
    %7042 = vmatpush1.bf16.msra.mxu0 0
    %7043 = vmatprep.subr.bf16.mxu0 0
    %7044 = vmatpush1.bf16.msra.mxu0 0
    %7045 = vmatprep.subr.bf16.mxu0 0
    %7046 = vmatpush1.bf16.msra.mxu0 0
    %7047 = vmatprep.subr.bf16.mxu0 0
    %7048 = vmatpush1.bf16.msra.mxu0 0
    %7049 = vmatprep.subr.bf16.mxu0 0
    %7050 = vmatpush1.bf16.msra.mxu0 0
    %7051 = vmatprep.subr.bf16.mxu0 0
    %7052 = vmatpush1.bf16.msra.mxu0 0
    %7053 = vmatprep.mubr.bf16.mxu0 0
    %7054 = vmatmul.mubr.bf16.gmra.mrb[0].mxu0 %v6709
    %v7055 = vpop.f32.mrb[0].mxu0
    %v7056 = vadd.f32 0.0, %v7055
    %v7057 = vpop.f32.mrb[0].mxu0
    %v7058 = vpop.f32.mrb[0].mxu0
    %v7059 = vadd.f32 0.0, %v7058
    %v7060 = vpop.f32.mrb[0].mxu0
    %7061 = vmatprep.mubr.bf16.mxu0 0
    %7062 = vmatmul.mubr.bf16.gmra.mrb[0].mxu0 %v6710
    %v7063 = vpop.f32.mrb[0].mxu0
    %v7064 = vadd.f32 0.0, %v7063
    %v7065 = vpop.f32.mrb[0].mxu0
    %v7066 = vpop.f32.mrb[0].mxu0
    %v7067 = vadd.f32 0.0, %v7066
    %v7068 = vpop.f32.mrb[0].mxu0
    %7069 = vmatprep.mubr.bf16.mxu0 0
    %7070 = vmatmul.mubr.bf16.gmra.mrb[0].mxu0 %v6711
    %v7071 = vpop.f32.mrb[0].mxu0
    %v7072 = vadd.f32 0.0, %v7071
    %v7073 = vpop.f32.mrb[0].mxu0
    %v7074 = vpop.f32.mrb[0].mxu0
    %v7075 = vadd.f32 0.0, %v7074
    %v7076 = vpop.f32.mrb[0].mxu0
    %7077 = vmatprep.mubr.bf16.mxu0 0
    %7078 = vmatmul.mubr.bf16.gmra.mrb[0].mxu0 %v6712
    %v7079 = vpop.f32.mrb[0].mxu0
    %v7080 = vadd.f32 0.0, %v7079
    %v7081 = vpop.f32.mrb[0].mxu0
    %v7082 = vpop.f32.mrb[0].mxu0
    %v7083 = vadd.f32 0.0, %v7082
    %v7084 = vpop.f32.mrb[0].mxu0
    %7085 = vmatprep.mubr.bf16.mxu0 0
    %7086 = vmatmul.mubr.bf16.gmra.mrb[0].mxu0 %v6713
    %v7087 = vpop.f32.mrb[0].mxu0
    %v7088 = vadd.f32 0.0, %v7087
    %v7089 = vpop.f32.mrb[0].mxu0
    %v7090 = vpop.f32.mrb[0].mxu0
    %v7091 = vadd.f32 0.0, %v7090
    %v7092 = vpop.f32.mrb[0].mxu0
    %7093 = vmatprep.mubr.bf16.mxu0 0
    %7094 = vmatmul.mubr.bf16.gmra.mrb[0].mxu0 %v6714
    %v7095 = vpop.f32.mrb[0].mxu0
    %v7096 = vadd.f32 0.0, %v7095
    %v7097 = vpop.f32.mrb[0].mxu0
    %v7098 = vpop.f32.mrb[0].mxu0
    %v7099 = vadd.f32 0.0, %v7098
    %v7100 = vpop.f32.mrb[0].mxu0
    %7101 = vdwg.mxu0
    %v7118 = vunpack.c.l.b16 %v6797
    %v7119 = vunpack.c.l.b16 %v6798
    %v7120 = vunpack.c.l.b16 %v6799
    %v7121 = vunpack.c.l.b16 %v6800
    %v7122 = vunpack.c.l.b16 %v6801
    %v7123 = vunpack.c.l.b16 %v6802
    %v7124 = vunpack.c.l.b16 %v6803
    %v7125 = vunpack.c.l.b16 %v6804
    %v7126 = vunpack.c.l.b16 %v6805
    %v7127 = vunpack.c.l.b16 %v6806
    %v7128 = vunpack.c.l.b16 %v6807
    %v7129 = vunpack.c.l.b16 %v6808
    %v7130 = vunpack.c.l.b16 %v6809
    %v7131 = vunpack.c.l.b16 %v6810
    %v7132 = vunpack.c.l.b16 %v6811
    %v7133 = vunpack.c.l.b16 %v6812
    %v7134 = vpack.c.b16 %v7119, %v7118
    %v7135 = vpack.c.b16 %v7121, %v7120
    %v7136 = vpack.c.b16 %v7123, %v7122
    %v7137 = vpack.c.b16 %v7125, %v7124
    %v7138 = vpack.c.b16 %v7127, %v7126
    %v7139 = vpack.c.b16 %v7129, %v7128
    %v7140 = vpack.c.b16 %v7131, %v7130
    %v7141 = vpack.c.b16 %v7133, %v7132
    %7150 = vmatprep.subr.bf16.mxu0 0
    %7151 = vmatpush1.bf16.msra.mxu0 %v7134
    %7152 = vmatprep.subr.bf16.mxu0 0
    %7153 = vmatpush1.bf16.msra.mxu0 %v7135
    %7154 = vmatprep.subr.bf16.mxu0 0
    %7155 = vmatpush1.bf16.msra.mxu0 %v7136
    %7156 = vmatprep.subr.bf16.mxu0 0
    %7157 = vmatpush1.bf16.msra.mxu0 %v7137
    %7158 = vmatprep.subr.bf16.mxu0 0
    %7159 = vmatpush1.bf16.msra.mxu0 %v7138
    %7160 = vmatprep.subr.bf16.mxu0 0
    %7161 = vmatpush1.bf16.msra.mxu0 %v7139
    %7162 = vmatprep.subr.bf16.mxu0 0
    %7163 = vmatpush1.bf16.msra.mxu0 %v7140
    %7164 = vmatprep.subr.bf16.mxu0 0
    %7165 = vmatpush1.bf16.msra.mxu0 %v7141
    %7166 = vmatprep.subr.bf16.mxu0 0
    %7167 = vmatpush1.bf16.msra.mxu0 0
    %7168 = vmatprep.subr.bf16.mxu0 0
    %7169 = vmatpush1.bf16.msra.mxu0 0
    %7170 = vmatprep.subr.bf16.mxu0 0
    %7171 = vmatpush1.bf16.msra.mxu0 0
    %7172 = vmatprep.subr.bf16.mxu0 0
    %7173 = vmatpush1.bf16.msra.mxu0 0
    %7174 = vmatprep.subr.bf16.mxu0 0
    %7175 = vmatpush1.bf16.msra.mxu0 0
    %7176 = vmatprep.subr.bf16.mxu0 0
    %7177 = vmatpush1.bf16.msra.mxu0 0
    %7178 = vmatprep.subr.bf16.mxu0 0
    %7179 = vmatpush1.bf16.msra.mxu0 0
    %7180 = vmatprep.subr.bf16.mxu0 0
    %7181 = vmatpush1.bf16.msra.mxu0 0
    %7182 = vmatprep.mubr.bf16.mxu0 0
    %7183 = vmatmul.mubr.bf16.gmra.mrb[0].mxu0 %v6715
    %v7184 = vpop.f32.mrb[0].mxu0
    %v7185 = vadd.f32 0.0, %v7184
    %v7186 = vpop.f32.mrb[0].mxu0
    %v7187 = vpop.f32.mrb[0].mxu0
    %v7188 = vadd.f32 0.0, %v7187
    %v7189 = vpop.f32.mrb[0].mxu0
    %7190 = vmatprep.mubr.bf16.mxu0 0
    %7191 = vmatmul.mubr.bf16.gmra.mrb[0].mxu0 %v6716
    %v7192 = vpop.f32.mrb[0].mxu0
    %v7193 = vadd.f32 0.0, %v7192
    %v7194 = vpop.f32.mrb[0].mxu0
    %v7195 = vpop.f32.mrb[0].mxu0
    %v7196 = vadd.f32 0.0, %v7195
    %v7197 = vpop.f32.mrb[0].mxu0
    %7198 = vmatprep.mubr.bf16.mxu0 0
    %7199 = vmatmul.mubr.bf16.gmra.mrb[0].mxu0 %v6717
    %v7200 = vpop.f32.mrb[0].mxu0
    %v7201 = vadd.f32 0.0, %v7200
    %v7202 = vpop.f32.mrb[0].mxu0
    %v7203 = vpop.f32.mrb[0].mxu0
    %v7204 = vadd.f32 0.0, %v7203
    %v7205 = vpop.f32.mrb[0].mxu0
    %7206 = vmatprep.mubr.bf16.mxu0 0
    %7207 = vmatmul.mubr.bf16.gmra.mrb[0].mxu0 %v6718
    %v7208 = vpop.f32.mrb[0].mxu0
    %v7209 = vadd.f32 0.0, %v7208
    %v7210 = vpop.f32.mrb[0].mxu0
    %v7211 = vpop.f32.mrb[0].mxu0
    %v7212 = vadd.f32 0.0, %v7211
    %v7213 = vpop.f32.mrb[0].mxu0
    %7214 = vmatprep.mubr.bf16.mxu0 0
    %7215 = vmatmul.mubr.bf16.gmra.mrb[0].mxu0 %v6719
    %v7216 = vpop.f32.mrb[0].mxu0
    %v7217 = vadd.f32 0.0, %v7216
    %v7218 = vpop.f32.mrb[0].mxu0
    %v7219 = vpop.f32.mrb[0].mxu0
    %v7220 = vadd.f32 0.0, %v7219
    %v7221 = vpop.f32.mrb[0].mxu0
    %7222 = vmatprep.mubr.bf16.mxu0 0
    %7223 = vmatmul.mubr.bf16.gmra.mrb[0].mxu0 %v6720
    %v7224 = vpop.f32.mrb[0].mxu0
    %v7225 = vadd.f32 0.0, %v7224
    %v7226 = vpop.f32.mrb[0].mxu0
    %v7227 = vpop.f32.mrb[0].mxu0
    %v7228 = vadd.f32 0.0, %v7227
    %v7229 = vpop.f32.mrb[0].mxu0
    %7230 = vdwg.mxu0
    %v7247 = vunpack.c.l.b16 %v6813
    %v7248 = vunpack.c.l.b16 %v6814
    %v7249 = vunpack.c.l.b16 %v6815
    %v7250 = vunpack.c.l.b16 %v6816
    %v7251 = vunpack.c.l.b16 %v6817
    %v7252 = vunpack.c.l.b16 %v6818
    %v7253 = vunpack.c.l.b16 %v6819
    %v7254 = vunpack.c.l.b16 %v6820
    %v7255 = vunpack.c.l.b16 %v6821
    %v7256 = vunpack.c.l.b16 %v6822
    %v7257 = vunpack.c.l.b16 %v6823
    %v7258 = vunpack.c.l.b16 %v6824
    %v7259 = vunpack.c.l.b16 %v6825
    %v7260 = vunpack.c.l.b16 %v6826
    %v7261 = vunpack.c.l.b16 %v6827
    %v7262 = vunpack.c.l.b16 %v6828
    %v7263 = vpack.c.b16 %v7248, %v7247
    %v7264 = vpack.c.b16 %v7250, %v7249
    %v7265 = vpack.c.b16 %v7252, %v7251
    %v7266 = vpack.c.b16 %v7254, %v7253
    %v7267 = vpack.c.b16 %v7256, %v7255
    %v7268 = vpack.c.b16 %v7258, %v7257
    %v7269 = vpack.c.b16 %v7260, %v7259
    %v7270 = vpack.c.b16 %v7262, %v7261
    %7279 = vmatprep.subr.bf16.mxu0 0
    %7280 = vmatpush1.bf16.msra.mxu0 %v7263
    %7281 = vmatprep.subr.bf16.mxu0 0
    %7282 = vmatpush1.bf16.msra.mxu0 %v7264
    %7283 = vmatprep.subr.bf16.mxu0 0
    %7284 = vmatpush1.bf16.msra.mxu0 %v7265
    %7285 = vmatprep.subr.bf16.mxu0 0
    %7286 = vmatpush1.bf16.msra.mxu0 %v7266
    %7287 = vmatprep.subr.bf16.mxu0 0
    %7288 = vmatpush1.bf16.msra.mxu0 %v7267
    %7289 = vmatprep.subr.bf16.mxu0 0
    %7290 = vmatpush1.bf16.msra.mxu0 %v7268
    %7291 = vmatprep.subr.bf16.mxu0 0
    %7292 = vmatpush1.bf16.msra.mxu0 %v7269
    %7293 = vmatprep.subr.bf16.mxu0 0
    %7294 = vmatpush1.bf16.msra.mxu0 %v7270
    %7295 = vmatprep.subr.bf16.mxu0 0
    %7296 = vmatpush1.bf16.msra.mxu0 0
    %7297 = vmatprep.subr.bf16.mxu0 0
    %7298 = vmatpush1.bf16.msra.mxu0 0
    %7299 = vmatprep.subr.bf16.mxu0 0
    %7300 = vmatpush1.bf16.msra.mxu0 0
    %7301 = vmatprep.subr.bf16.mxu0 0
    %7302 = vmatpush1.bf16.msra.mxu0 0
    %7303 = vmatprep.subr.bf16.mxu0 0
    %7304 = vmatpush1.bf16.msra.mxu0 0
    %7305 = vmatprep.subr.bf16.mxu0 0
    %7306 = vmatpush1.bf16.msra.mxu0 0
    %7307 = vmatprep.subr.bf16.mxu0 0
    %7308 = vmatpush1.bf16.msra.mxu0 0
    %7309 = vmatprep.subr.bf16.mxu0 0
    %7310 = vmatpush1.bf16.msra.mxu0 0
    %7311 = vmatprep.mubr.bf16.mxu0 0
    %7312 = vmatmul.mubr.bf16.gmra.mrb[0].mxu0 %v6721
    %v7313 = vpop.f32.mrb[0].mxu0
    %v7314 = vadd.f32 0.0, %v7313
    %v7315 = vpop.f32.mrb[0].mxu0
    %v7316 = vpop.f32.mrb[0].mxu0
    %v7317 = vadd.f32 0.0, %v7316
    %v7318 = vpop.f32.mrb[0].mxu0
    %7319 = vmatprep.mubr.bf16.mxu0 0
    %7320 = vmatmul.mubr.bf16.gmra.mrb[0].mxu0 %v6722
    %v7321 = vpop.f32.mrb[0].mxu0
    %v7322 = vadd.f32 0.0, %v7321
    %v7323 = vpop.f32.mrb[0].mxu0
    %v7324 = vpop.f32.mrb[0].mxu0
    %v7325 = vadd.f32 0.0, %v7324
    %v7326 = vpop.f32.mrb[0].mxu0
    %7327 = vmatprep.mubr.bf16.mxu0 0
    %7328 = vmatmul.mubr.bf16.gmra.mrb[0].mxu0 %v6723
    %v7329 = vpop.f32.mrb[0].mxu0
    %v7330 = vadd.f32 0.0, %v7329
    %v7331 = vpop.f32.mrb[0].mxu0
    %v7332 = vpop.f32.mrb[0].mxu0
    %v7333 = vadd.f32 0.0, %v7332
    %v7334 = vpop.f32.mrb[0].mxu0
    %7335 = vmatprep.mubr.bf16.mxu0 0
    %7336 = vmatmul.mubr.bf16.gmra.mrb[0].mxu0 %v6724
    %v7337 = vpop.f32.mrb[0].mxu0
    %v7338 = vadd.f32 0.0, %v7337
    %v7339 = vpop.f32.mrb[0].mxu0
    %v7340 = vpop.f32.mrb[0].mxu0
    %v7341 = vadd.f32 0.0, %v7340
    %v7342 = vpop.f32.mrb[0].mxu0
    %7343 = vmatprep.mubr.bf16.mxu0 0
    %7344 = vmatmul.mubr.bf16.gmra.mrb[0].mxu0 %v6725
    %v7345 = vpop.f32.mrb[0].mxu0
    %v7346 = vadd.f32 0.0, %v7345
    %v7347 = vpop.f32.mrb[0].mxu0
    %v7348 = vpop.f32.mrb[0].mxu0
    %v7349 = vadd.f32 0.0, %v7348
    %v7350 = vpop.f32.mrb[0].mxu0
    %7351 = vmatprep.mubr.bf16.mxu0 0
    %7352 = vmatmul.mubr.bf16.gmra.mrb[0].mxu0 %v6726
    %v7353 = vpop.f32.mrb[0].mxu0
    %v7354 = vadd.f32 0.0, %v7353
    %v7355 = vpop.f32.mrb[0].mxu0
    %v7356 = vpop.f32.mrb[0].mxu0
    %v7357 = vadd.f32 0.0, %v7356
    %v7358 = vpop.f32.mrb[0].mxu0
    %7359 = vdwg.mxu0
    %v7376 = vunpack.c.l.b16 %v6829
    %v7377 = vunpack.c.l.b16 %v6830
    %v7378 = vunpack.c.l.b16 %v6831
    %v7379 = vunpack.c.l.b16 %v6832
    %v7380 = vunpack.c.l.b16 %v6833
    %v7381 = vunpack.c.l.b16 %v6834
    %v7382 = vunpack.c.l.b16 %v6835
    %v7383 = vunpack.c.l.b16 %v6836
    %v7384 = vunpack.c.l.b16 %v6837
    %v7385 = vunpack.c.l.b16 %v6838
    %v7386 = vunpack.c.l.b16 %v6839
    %v7387 = vunpack.c.l.b16 %v6840
    %v7388 = vunpack.c.l.b16 %v6841
    %v7389 = vunpack.c.l.b16 %v6842
    %v7390 = vunpack.c.l.b16 %v6843
    %v7391 = vunpack.c.l.b16 %v6844
    %v7392 = vpack.c.b16 %v7377, %v7376
    %v7393 = vpack.c.b16 %v7379, %v7378
    %v7394 = vpack.c.b16 %v7381, %v7380
    %v7395 = vpack.c.b16 %v7383, %v7382
    %v7396 = vpack.c.b16 %v7385, %v7384
    %v7397 = vpack.c.b16 %v7387, %v7386
    %v7398 = vpack.c.b16 %v7389, %v7388
    %v7399 = vpack.c.b16 %v7391, %v7390
    %7408 = vmatprep.subr.bf16.mxu0 0
    %7409 = vmatpush1.bf16.msra.mxu0 %v7392
    %7410 = vmatprep.subr.bf16.mxu0 0
    %7411 = vmatpush1.bf16.msra.mxu0 %v7393
    %7412 = vmatprep.subr.bf16.mxu0 0
    %7413 = vmatpush1.bf16.msra.mxu0 %v7394
    %7414 = vmatprep.subr.bf16.mxu0 0
    %7415 = vmatpush1.bf16.msra.mxu0 %v7395
    %7416 = vmatprep.subr.bf16.mxu0 0
    %7417 = vmatpush1.bf16.msra.mxu0 %v7396
    %7418 = vmatprep.subr.bf16.mxu0 0
    %7419 = vmatpush1.bf16.msra.mxu0 %v7397
    %7420 = vmatprep.subr.bf16.mxu0 0
    %7421 = vmatpush1.bf16.msra.mxu0 %v7398
    %7422 = vmatprep.subr.bf16.mxu0 0
    %7423 = vmatpush1.bf16.msra.mxu0 %v7399
    %7424 = vmatprep.subr.bf16.mxu0 0
    %7425 = vmatpush1.bf16.msra.mxu0 0
    %7426 = vmatprep.subr.bf16.mxu0 0
    %7427 = vmatpush1.bf16.msra.mxu0 0
    %7428 = vmatprep.subr.bf16.mxu0 0
    %7429 = vmatpush1.bf16.msra.mxu0 0
    %7430 = vmatprep.subr.bf16.mxu0 0
    %7431 = vmatpush1.bf16.msra.mxu0 0
    %7432 = vmatprep.subr.bf16.mxu0 0
    %7433 = vmatpush1.bf16.msra.mxu0 0
    %7434 = vmatprep.subr.bf16.mxu0 0
    %7435 = vmatpush1.bf16.msra.mxu0 0
    %7436 = vmatprep.subr.bf16.mxu0 0
    %7437 = vmatpush1.bf16.msra.mxu0 0
    %7438 = vmatprep.subr.bf16.mxu0 0
    %7439 = vmatpush1.bf16.msra.mxu0 0
    %7440 = vmatprep.mubr.bf16.mxu0 0
    %7441 = vmatmul.mubr.bf16.gmra.mrb[0].mxu0 %v6727
    %v7442 = vpop.f32.mrb[0].mxu0
    %v7443 = vadd.f32 0.0, %v7442
    %v7444 = vpop.f32.mrb[0].mxu0
    %v7445 = vpop.f32.mrb[0].mxu0
    %v7446 = vadd.f32 0.0, %v7445
    %v7447 = vpop.f32.mrb[0].mxu0
    %7448 = vmatprep.mubr.bf16.mxu0 0
    %7449 = vmatmul.mubr.bf16.gmra.mrb[0].mxu0 %v6728
    %v7450 = vpop.f32.mrb[0].mxu0
    %v7451 = vadd.f32 0.0, %v7450
    %v7452 = vpop.f32.mrb[0].mxu0
    %v7453 = vpop.f32.mrb[0].mxu0
    %v7454 = vadd.f32 0.0, %v7453
    %v7455 = vpop.f32.mrb[0].mxu0
    %7456 = vmatprep.mubr.bf16.mxu0 0
    %7457 = vmatmul.mubr.bf16.gmra.mrb[0].mxu0 %v6729
    %v7458 = vpop.f32.mrb[0].mxu0
    %v7459 = vadd.f32 0.0, %v7458
    %v7460 = vpop.f32.mrb[0].mxu0
    %v7461 = vpop.f32.mrb[0].mxu0
    %v7462 = vadd.f32 0.0, %v7461
    %v7463 = vpop.f32.mrb[0].mxu0
    %7464 = vmatprep.mubr.bf16.mxu0 0
    %7465 = vmatmul.mubr.bf16.gmra.mrb[0].mxu0 %v6730
    %v7466 = vpop.f32.mrb[0].mxu0
    %v7467 = vadd.f32 0.0, %v7466
    %v7468 = vpop.f32.mrb[0].mxu0
    %v7469 = vpop.f32.mrb[0].mxu0
    %v7470 = vadd.f32 0.0, %v7469
    %v7471 = vpop.f32.mrb[0].mxu0
    %7472 = vmatprep.mubr.bf16.mxu0 0
    %7473 = vmatmul.mubr.bf16.gmra.mrb[0].mxu0 %v6731
    %v7474 = vpop.f32.mrb[0].mxu0
    %v7475 = vadd.f32 0.0, %v7474
    %v7476 = vpop.f32.mrb[0].mxu0
    %v7477 = vpop.f32.mrb[0].mxu0
    %v7478 = vadd.f32 0.0, %v7477
    %v7479 = vpop.f32.mrb[0].mxu0
    %7480 = vmatprep.mubr.bf16.mxu0 0
    %7481 = vmatmul.mubr.bf16.gmra.mrb[0].mxu0 %v6732
    %v7482 = vpop.f32.mrb[0].mxu0
    %v7483 = vadd.f32 0.0, %v7482
    %v7484 = vpop.f32.mrb[0].mxu0
    %v7485 = vpop.f32.mrb[0].mxu0
    %v7486 = vadd.f32 0.0, %v7485
    %v7487 = vpop.f32.mrb[0].mxu0
    %7488 = vdwg.mxu0
    %v7505 = vunpack.c.l.b16 %v6845
    %v7506 = vunpack.c.l.b16 %v6846
    %v7507 = vunpack.c.l.b16 %v6847
    %v7508 = vunpack.c.l.b16 %v6848
    %v7509 = vunpack.c.l.b16 %v6849
    %v7510 = vunpack.c.l.b16 %v6850
    %v7511 = vunpack.c.l.b16 %v6851
    %v7512 = vunpack.c.l.b16 %v6852
    %v7513 = vunpack.c.l.b16 %v6853
    %v7514 = vunpack.c.l.b16 %v6854
    %v7515 = vunpack.c.l.b16 %v6855
    %v7516 = vunpack.c.l.b16 %v6856
    %v7517 = vunpack.c.l.b16 %v6857
    %v7518 = vunpack.c.l.b16 %v6858
    %v7519 = vunpack.c.l.b16 %v6859
    %v7520 = vunpack.c.l.b16 %v6860
    %v7521 = vpack.c.b16 %v7506, %v7505
    %v7522 = vpack.c.b16 %v7508, %v7507
    %v7523 = vpack.c.b16 %v7510, %v7509
    %v7524 = vpack.c.b16 %v7512, %v7511
    %v7525 = vpack.c.b16 %v7514, %v7513
    %v7526 = vpack.c.b16 %v7516, %v7515
    %v7527 = vpack.c.b16 %v7518, %v7517
    %v7528 = vpack.c.b16 %v7520, %v7519
    %7537 = vmatprep.subr.bf16.mxu0 0
    %7538 = vmatpush1.bf16.msra.mxu0 %v7521
    %7539 = vmatprep.subr.bf16.mxu0 0
    %7540 = vmatpush1.bf16.msra.mxu0 %v7522
    %7541 = vmatprep.subr.bf16.mxu0 0
    %7542 = vmatpush1.bf16.msra.mxu0 %v7523
    %7543 = vmatprep.subr.bf16.mxu0 0
    %7544 = vmatpush1.bf16.msra.mxu0 %v7524
    %7545 = vmatprep.subr.bf16.mxu0 0
    %7546 = vmatpush1.bf16.msra.mxu0 %v7525
    %7547 = vmatprep.subr.bf16.mxu0 0
    %7548 = vmatpush1.bf16.msra.mxu0 %v7526
    %7549 = vmatprep.subr.bf16.mxu0 0
    %7550 = vmatpush1.bf16.msra.mxu0 %v7527
    %7551 = vmatprep.subr.bf16.mxu0 0
    %7552 = vmatpush1.bf16.msra.mxu0 %v7528
    %7553 = vmatprep.subr.bf16.mxu0 0
    %7554 = vmatpush1.bf16.msra.mxu0 0
    %7555 = vmatprep.subr.bf16.mxu0 0
    %7556 = vmatpush1.bf16.msra.mxu0 0
    %7557 = vmatprep.subr.bf16.mxu0 0
    %7558 = vmatpush1.bf16.msra.mxu0 0
    %7559 = vmatprep.subr.bf16.mxu0 0
    %7560 = vmatpush1.bf16.msra.mxu0 0
    %7561 = vmatprep.subr.bf16.mxu0 0
    %7562 = vmatpush1.bf16.msra.mxu0 0
    %7563 = vmatprep.subr.bf16.mxu0 0
    %7564 = vmatpush1.bf16.msra.mxu0 0
    %7565 = vmatprep.subr.bf16.mxu0 0
    %7566 = vmatpush1.bf16.msra.mxu0 0
    %7567 = vmatprep.subr.bf16.mxu0 0
    %7568 = vmatpush1.bf16.msra.mxu0 0
    %7569 = vmatprep.mubr.bf16.mxu0 0
    %7570 = vmatmul.mubr.bf16.gmra.mrb[0].mxu0 %v6733
    %v7571 = vpop.f32.mrb[0].mxu0
    %v7572 = vadd.f32 0.0, %v7571
    %v7573 = vpop.f32.mrb[0].mxu0
    %v7574 = vpop.f32.mrb[0].mxu0
    %v7575 = vadd.f32 0.0, %v7574
    %v7576 = vpop.f32.mrb[0].mxu0
    %7577 = vmatprep.mubr.bf16.mxu0 0
    %7578 = vmatmul.mubr.bf16.gmra.mrb[0].mxu0 %v6734
    %v7579 = vpop.f32.mrb[0].mxu0
    %v7580 = vadd.f32 0.0, %v7579
    %v7581 = vpop.f32.mrb[0].mxu0
    %v7582 = vpop.f32.mrb[0].mxu0
    %v7583 = vadd.f32 0.0, %v7582
    %v7584 = vpop.f32.mrb[0].mxu0
    %7585 = vmatprep.mubr.bf16.mxu0 0
    %7586 = vmatmul.mubr.bf16.gmra.mrb[0].mxu0 %v6735
    %v7587 = vpop.f32.mrb[0].mxu0
    %v7588 = vadd.f32 0.0, %v7587
    %v7589 = vpop.f32.mrb[0].mxu0
    %v7590 = vpop.f32.mrb[0].mxu0
    %v7591 = vadd.f32 0.0, %v7590
    %v7592 = vpop.f32.mrb[0].mxu0
    %7593 = vmatprep.mubr.bf16.mxu0 0
    %7594 = vmatmul.mubr.bf16.gmra.mrb[0].mxu0 %v6736
    %v7595 = vpop.f32.mrb[0].mxu0
    %v7596 = vadd.f32 0.0, %v7595
    %v7597 = vpop.f32.mrb[0].mxu0
    %v7598 = vpop.f32.mrb[0].mxu0
    %v7599 = vadd.f32 0.0, %v7598
    %v7600 = vpop.f32.mrb[0].mxu0
    %7601 = vmatprep.mubr.bf16.mxu0 0
    %7602 = vmatmul.mubr.bf16.gmra.mrb[0].mxu0 %v6737
    %v7603 = vpop.f32.mrb[0].mxu0
    %v7604 = vadd.f32 0.0, %v7603
    %v7605 = vpop.f32.mrb[0].mxu0
    %v7606 = vpop.f32.mrb[0].mxu0
    %v7607 = vadd.f32 0.0, %v7606
    %v7608 = vpop.f32.mrb[0].mxu0
    %7609 = vmatprep.mubr.bf16.mxu0 0
    %7610 = vmatmul.mubr.bf16.gmra.mrb[0].mxu0 %v6738
    %v7611 = vpop.f32.mrb[0].mxu0
    %v7612 = vadd.f32 0.0, %v7611
    %v7613 = vpop.f32.mrb[0].mxu0
    %v7614 = vpop.f32.mrb[0].mxu0
    %v7615 = vadd.f32 0.0, %v7614
    %v7616 = vpop.f32.mrb[0].mxu0
    %7617 = vdwg.mxu0
    %v7634 = vunpack.c.l.b16 %v6861
    %v7635 = vunpack.c.l.b16 %v6862
    %v7636 = vunpack.c.l.b16 %v6863
    %v7637 = vunpack.c.l.b16 %v6864
    %v7638 = vunpack.c.l.b16 %v6865
    %v7639 = vunpack.c.l.b16 %v6866
    %v7640 = vunpack.c.l.b16 %v6867
    %v7641 = vunpack.c.l.b16 %v6868
    %v7642 = vunpack.c.l.b16 %v6869
    %v7643 = vunpack.c.l.b16 %v6870
    %v7644 = vunpack.c.l.b16 %v6871
    %v7645 = vunpack.c.l.b16 %v6872
    %v7646 = vunpack.c.l.b16 %v6873
    %v7647 = vunpack.c.l.b16 %v6874
    %v7648 = vunpack.c.l.b16 %v6875
    %v7649 = vunpack.c.l.b16 %v6876
    %v7650 = vpack.c.b16 %v7635, %v7634
    %v7651 = vpack.c.b16 %v7637, %v7636
    %v7652 = vpack.c.b16 %v7639, %v7638
    %v7653 = vpack.c.b16 %v7641, %v7640
    %v7654 = vpack.c.b16 %v7643, %v7642
    %v7655 = vpack.c.b16 %v7645, %v7644
    %v7656 = vpack.c.b16 %v7647, %v7646
    %v7657 = vpack.c.b16 %v7649, %v7648
    %7666 = vmatprep.subr.bf16.mxu0 0
    %7667 = vmatpush1.bf16.msra.mxu0 %v7650
    %7668 = vmatprep.subr.bf16.mxu0 0
    %7669 = vmatpush1.bf16.msra.mxu0 %v7651
    %7670 = vmatprep.subr.bf16.mxu0 0
    %7671 = vmatpush1.bf16.msra.mxu0 %v7652
    %7672 = vmatprep.subr.bf16.mxu0 0
    %7673 = vmatpush1.bf16.msra.mxu0 %v7653
    %7674 = vmatprep.subr.bf16.mxu0 0
    %7675 = vmatpush1.bf16.msra.mxu0 %v7654
    %7676 = vmatprep.subr.bf16.mxu0 0
    %7677 = vmatpush1.bf16.msra.mxu0 %v7655
    %7678 = vmatprep.subr.bf16.mxu0 0
    %7679 = vmatpush1.bf16.msra.mxu0 %v7656
    %7680 = vmatprep.subr.bf16.mxu0 0
    %7681 = vmatpush1.bf16.msra.mxu0 %v7657
    %7682 = vmatprep.subr.bf16.mxu0 0
    %7683 = vmatpush1.bf16.msra.mxu0 0
    %7684 = vmatprep.subr.bf16.mxu0 0
    %7685 = vmatpush1.bf16.msra.mxu0 0
    %7686 = vmatprep.subr.bf16.mxu0 0
    %7687 = vmatpush1.bf16.msra.mxu0 0
    %7688 = vmatprep.subr.bf16.mxu0 0
    %7689 = vmatpush1.bf16.msra.mxu0 0
    %7690 = vmatprep.subr.bf16.mxu0 0
    %7691 = vmatpush1.bf16.msra.mxu0 0
    %7692 = vmatprep.subr.bf16.mxu0 0
    %7693 = vmatpush1.bf16.msra.mxu0 0
    %7694 = vmatprep.subr.bf16.mxu0 0
    %7695 = vmatpush1.bf16.msra.mxu0 0
    %7696 = vmatprep.subr.bf16.mxu0 0
    %7697 = vmatpush1.bf16.msra.mxu0 0
    %7698 = vmatprep.mubr.bf16.mxu0 0
    %7699 = vmatmul.mubr.bf16.gmra.mrb[0].mxu0 %v6739
    %v7700 = vpop.f32.mrb[0].mxu0
    %v7701 = vadd.f32 0.0, %v7700
    %v7702 = vpop.f32.mrb[0].mxu0
    %v7703 = vpop.f32.mrb[0].mxu0
    %v7704 = vadd.f32 0.0, %v7703
    %v7705 = vpop.f32.mrb[0].mxu0
    %7706 = vmatprep.mubr.bf16.mxu0 0
    %7707 = vmatmul.mubr.bf16.gmra.mrb[0].mxu0 %v6740
    %v7708 = vpop.f32.mrb[0].mxu0
    %v7709 = vadd.f32 0.0, %v7708
    %v7710 = vpop.f32.mrb[0].mxu0
    %v7711 = vpop.f32.mrb[0].mxu0
    %v7712 = vadd.f32 0.0, %v7711
    %v7713 = vpop.f32.mrb[0].mxu0
    %7714 = vmatprep.mubr.bf16.mxu0 0
    %7715 = vmatmul.mubr.bf16.gmra.mrb[0].mxu0 %v6741
    %v7716 = vpop.f32.mrb[0].mxu0
    %v7717 = vadd.f32 0.0, %v7716
    %v7718 = vpop.f32.mrb[0].mxu0
    %v7719 = vpop.f32.mrb[0].mxu0
    %v7720 = vadd.f32 0.0, %v7719
    %v7721 = vpop.f32.mrb[0].mxu0
    %7722 = vmatprep.mubr.bf16.mxu0 0
    %7723 = vmatmul.mubr.bf16.gmra.mrb[0].mxu0 %v6742
    %v7724 = vpop.f32.mrb[0].mxu0
    %v7725 = vadd.f32 0.0, %v7724
    %v7726 = vpop.f32.mrb[0].mxu0
    %v7727 = vpop.f32.mrb[0].mxu0
    %v7728 = vadd.f32 0.0, %v7727
    %v7729 = vpop.f32.mrb[0].mxu0
    %7730 = vmatprep.mubr.bf16.mxu0 0
    %7731 = vmatmul.mubr.bf16.gmra.mrb[0].mxu0 %v6743
    %v7732 = vpop.f32.mrb[0].mxu0
    %v7733 = vadd.f32 0.0, %v7732
    %v7734 = vpop.f32.mrb[0].mxu0
    %v7735 = vpop.f32.mrb[0].mxu0
    %v7736 = vadd.f32 0.0, %v7735
    %v7737 = vpop.f32.mrb[0].mxu0
    %7738 = vmatprep.mubr.bf16.mxu0 0
    %7739 = vmatmul.mubr.bf16.gmra.mrb[0].mxu0 %v6744
    %v7740 = vpop.f32.mrb[0].mxu0
    %v7741 = vadd.f32 0.0, %v7740
    %v7742 = vpop.f32.mrb[0].mxu0
    %v7743 = vpop.f32.mrb[0].mxu0
    %v7744 = vadd.f32 0.0, %v7743
    %v7745 = vpop.f32.mrb[0].mxu0
    %7746 = vdwg.mxu0
    %v7763 = vunpack.c.l.b16 %v6877
    %v7764 = vunpack.c.l.b16 %v6878
    %v7765 = vunpack.c.l.b16 %v6879
    %v7766 = vunpack.c.l.b16 %v6880
    %v7767 = vunpack.c.l.b16 %v6881
    %v7768 = vunpack.c.l.b16 %v6882
    %v7769 = vunpack.c.l.b16 %v6883
    %v7770 = vunpack.c.l.b16 %v6884
    %v7771 = vunpack.c.l.b16 %v6885
    %v7772 = vunpack.c.l.b16 %v6886
    %v7773 = vunpack.c.l.b16 %v6887
    %v7774 = vunpack.c.l.b16 %v6888
    %v7775 = vunpack.c.l.b16 %v6889
    %v7776 = vunpack.c.l.b16 %v6890
    %v7777 = vunpack.c.l.b16 %v6891
    %v7778 = vunpack.c.l.b16 %v6892
    %v7779 = vpack.c.b16 %v7764, %v7763
    %v7780 = vpack.c.b16 %v7766, %v7765
    %v7781 = vpack.c.b16 %v7768, %v7767
    %v7782 = vpack.c.b16 %v7770, %v7769
    %v7783 = vpack.c.b16 %v7772, %v7771
    %v7784 = vpack.c.b16 %v7774, %v7773
    %v7785 = vpack.c.b16 %v7776, %v7775
    %v7786 = vpack.c.b16 %v7778, %v7777
    %7795 = vmatprep.subr.bf16.mxu0 0
    %7796 = vmatpush1.bf16.msra.mxu0 %v7779
    %7797 = vmatprep.subr.bf16.mxu0 0
    %7798 = vmatpush1.bf16.msra.mxu0 %v7780
    %7799 = vmatprep.subr.bf16.mxu0 0
    %7800 = vmatpush1.bf16.msra.mxu0 %v7781
    %7801 = vmatprep.subr.bf16.mxu0 0
    %7802 = vmatpush1.bf16.msra.mxu0 %v7782
    %7803 = vmatprep.subr.bf16.mxu0 0
    %7804 = vmatpush1.bf16.msra.mxu0 %v7783
    %7805 = vmatprep.subr.bf16.mxu0 0
    %7806 = vmatpush1.bf16.msra.mxu0 %v7784
    %7807 = vmatprep.subr.bf16.mxu0 0
    %7808 = vmatpush1.bf16.msra.mxu0 %v7785
    %7809 = vmatprep.subr.bf16.mxu0 0
    %7810 = vmatpush1.bf16.msra.mxu0 %v7786
    %7811 = vmatprep.subr.bf16.mxu0 0
    %7812 = vmatpush1.bf16.msra.mxu0 0
    %7813 = vmatprep.subr.bf16.mxu0 0
    %7814 = vmatpush1.bf16.msra.mxu0 0
    %7815 = vmatprep.subr.bf16.mxu0 0
    %7816 = vmatpush1.bf16.msra.mxu0 0
    %7817 = vmatprep.subr.bf16.mxu0 0
    %7818 = vmatpush1.bf16.msra.mxu0 0
    %7819 = vmatprep.subr.bf16.mxu0 0
    %7820 = vmatpush1.bf16.msra.mxu0 0
    %7821 = vmatprep.subr.bf16.mxu0 0
    %7822 = vmatpush1.bf16.msra.mxu0 0
    %7823 = vmatprep.subr.bf16.mxu0 0
    %7824 = vmatpush1.bf16.msra.mxu0 0
    %7825 = vmatprep.subr.bf16.mxu0 0
    %7826 = vmatpush1.bf16.msra.mxu0 0
    %7827 = vmatprep.mubr.bf16.mxu0 0
    %7828 = vmatmul.mubr.bf16.gmra.mrb[0].mxu0 %v6745
    %v7829 = vpop.f32.mrb[0].mxu0
    %v7830 = vadd.f32 0.0, %v7829
    %v7831 = vpop.f32.mrb[0].mxu0
    %v7832 = vpop.f32.mrb[0].mxu0
    %v7833 = vadd.f32 0.0, %v7832
    %v7834 = vpop.f32.mrb[0].mxu0
    %7835 = vmatprep.mubr.bf16.mxu0 0
    %7836 = vmatmul.mubr.bf16.gmra.mrb[0].mxu0 %v6746
    %v7837 = vpop.f32.mrb[0].mxu0
    %v7838 = vadd.f32 0.0, %v7837
    %v7839 = vpop.f32.mrb[0].mxu0
    %v7840 = vpop.f32.mrb[0].mxu0
    %v7841 = vadd.f32 0.0, %v7840
    %v7842 = vpop.f32.mrb[0].mxu0
    %7843 = vmatprep.mubr.bf16.mxu0 0
    %7844 = vmatmul.mubr.bf16.gmra.mrb[0].mxu0 %v6747
    %v7845 = vpop.f32.mrb[0].mxu0
    %v7846 = vadd.f32 0.0, %v7845
    %v7847 = vpop.f32.mrb[0].mxu0
    %v7848 = vpop.f32.mrb[0].mxu0
    %v7849 = vadd.f32 0.0, %v7848
    %v7850 = vpop.f32.mrb[0].mxu0
    %7851 = vmatprep.mubr.bf16.mxu0 0
    %7852 = vmatmul.mubr.bf16.gmra.mrb[0].mxu0 %v6748
    %v7853 = vpop.f32.mrb[0].mxu0
    %v7854 = vadd.f32 0.0, %v7853
    %v7855 = vpop.f32.mrb[0].mxu0
    %v7856 = vpop.f32.mrb[0].mxu0
    %v7857 = vadd.f32 0.0, %v7856
    %v7858 = vpop.f32.mrb[0].mxu0
    %7859 = vmatprep.mubr.bf16.mxu0 0
    %7860 = vmatmul.mubr.bf16.gmra.mrb[0].mxu0 %v6749
    %v7861 = vpop.f32.mrb[0].mxu0
    %v7862 = vadd.f32 0.0, %v7861
    %v7863 = vpop.f32.mrb[0].mxu0
    %v7864 = vpop.f32.mrb[0].mxu0
    %v7865 = vadd.f32 0.0, %v7864
    %v7866 = vpop.f32.mrb[0].mxu0
    %7867 = vmatprep.mubr.bf16.mxu0 0
    %7868 = vmatmul.mubr.bf16.gmra.mrb[0].mxu0 %v6750
    %v7869 = vpop.f32.mrb[0].mxu0
    %v7870 = vadd.f32 0.0, %v7869
    %v7871 = vpop.f32.mrb[0].mxu0
    %v7872 = vpop.f32.mrb[0].mxu0
    %v7873 = vadd.f32 0.0, %v7872
    %v7874 = vpop.f32.mrb[0].mxu0
    %7875 = vdwg.mxu0
    %v7892 = vunpack.c.l.b16 %v6893
    %v7893 = vunpack.c.l.b16 %v6894
    %v7894 = vunpack.c.l.b16 %v6895
    %v7895 = vunpack.c.l.b16 %v6896
    %v7896 = vunpack.c.l.b16 %v6897
    %v7897 = vunpack.c.l.b16 %v6898
    %v7898 = vunpack.c.l.b16 %v6899
    %v7899 = vunpack.c.l.b16 %v6900
    %v7900 = vunpack.c.l.b16 %v6901
    %v7901 = vunpack.c.l.b16 %v6902
    %v7902 = vunpack.c.l.b16 %v6903
    %v7903 = vunpack.c.l.b16 %v6904
    %v7904 = vunpack.c.l.b16 %v6905
    %v7905 = vunpack.c.l.b16 %v6906
    %v7906 = vunpack.c.l.b16 %v6907
    %v7907 = vunpack.c.l.b16 %v6908
    %v7908 = vpack.c.b16 %v7893, %v7892
    %v7909 = vpack.c.b16 %v7895, %v7894
    %v7910 = vpack.c.b16 %v7897, %v7896
    %v7911 = vpack.c.b16 %v7899, %v7898
    %v7912 = vpack.c.b16 %v7901, %v7900
    %v7913 = vpack.c.b16 %v7903, %v7902
    %v7914 = vpack.c.b16 %v7905, %v7904
    %v7915 = vpack.c.b16 %v7907, %v7906
    %7924 = vmatprep.subr.bf16.mxu0 0
    %7925 = vmatpush1.bf16.msra.mxu0 %v7908
    %7926 = vmatprep.subr.bf16.mxu0 0
    %7927 = vmatpush1.bf16.msra.mxu0 %v7909
    %7928 = vmatprep.subr.bf16.mxu0 0
    %7929 = vmatpush1.bf16.msra.mxu0 %v7910
    %7930 = vmatprep.subr.bf16.mxu0 0
    %7931 = vmatpush1.bf16.msra.mxu0 %v7911
    %7932 = vmatprep.subr.bf16.mxu0 0
    %7933 = vmatpush1.bf16.msra.mxu0 %v7912
    %7934 = vmatprep.subr.bf16.mxu0 0
    %7935 = vmatpush1.bf16.msra.mxu0 %v7913
    %7936 = vmatprep.subr.bf16.mxu0 0
    %7937 = vmatpush1.bf16.msra.mxu0 %v7914
    %7938 = vmatprep.subr.bf16.mxu0 0
    %7939 = vmatpush1.bf16.msra.mxu0 %v7915
    %7940 = vmatprep.subr.bf16.mxu0 0
    %7941 = vmatpush1.bf16.msra.mxu0 0
    %7942 = vmatprep.subr.bf16.mxu0 0
    %7943 = vmatpush1.bf16.msra.mxu0 0
    %7944 = vmatprep.subr.bf16.mxu0 0
    %7945 = vmatpush1.bf16.msra.mxu0 0
    %7946 = vmatprep.subr.bf16.mxu0 0
    %7947 = vmatpush1.bf16.msra.mxu0 0
    %7948 = vmatprep.subr.bf16.mxu0 0
    %7949 = vmatpush1.bf16.msra.mxu0 0
    %7950 = vmatprep.subr.bf16.mxu0 0
    %7951 = vmatpush1.bf16.msra.mxu0 0
    %7952 = vmatprep.subr.bf16.mxu0 0
    %7953 = vmatpush1.bf16.msra.mxu0 0
    %7954 = vmatprep.subr.bf16.mxu0 0
    %7955 = vmatpush1.bf16.msra.mxu0 0
    %7956 = vmatprep.mubr.bf16.mxu0 0
    %7957 = vmatmul.mubr.bf16.gmra.mrb[0].mxu0 %v6751
    %v7958 = vpop.f32.mrb[0].mxu0
    %v7959 = vadd.f32 0.0, %v7958
    %v7960 = vpop.f32.mrb[0].mxu0
    %v7961 = vpop.f32.mrb[0].mxu0
    %v7962 = vadd.f32 0.0, %v7961
    %v7963 = vpop.f32.mrb[0].mxu0
    %7964 = vmatprep.mubr.bf16.mxu0 0
    %7965 = vmatmul.mubr.bf16.gmra.mrb[0].mxu0 %v6752
    %v7966 = vpop.f32.mrb[0].mxu0
    %v7967 = vadd.f32 0.0, %v7966
    %v7968 = vpop.f32.mrb[0].mxu0
    %v7969 = vpop.f32.mrb[0].mxu0
    %v7970 = vadd.f32 0.0, %v7969
    %v7971 = vpop.f32.mrb[0].mxu0
    %7972 = vmatprep.mubr.bf16.mxu0 0
    %7973 = vmatmul.mubr.bf16.gmra.mrb[0].mxu0 %v6753
    %v7974 = vpop.f32.mrb[0].mxu0
    %v7975 = vadd.f32 0.0, %v7974
    %v7976 = vpop.f32.mrb[0].mxu0
    %v7977 = vpop.f32.mrb[0].mxu0
    %v7978 = vadd.f32 0.0, %v7977
    %v7979 = vpop.f32.mrb[0].mxu0
    %7980 = vmatprep.mubr.bf16.mxu0 0
    %7981 = vmatmul.mubr.bf16.gmra.mrb[0].mxu0 %v6754
    %v7982 = vpop.f32.mrb[0].mxu0
    %v7983 = vadd.f32 0.0, %v7982
    %v7984 = vpop.f32.mrb[0].mxu0
    %v7985 = vpop.f32.mrb[0].mxu0
    %v7986 = vadd.f32 0.0, %v7985
    %v7987 = vpop.f32.mrb[0].mxu0
    %7988 = vmatprep.mubr.bf16.mxu0 0
    %7989 = vmatmul.mubr.bf16.gmra.mrb[0].mxu0 %v6755
    %v7990 = vpop.f32.mrb[0].mxu0
    %v7991 = vadd.f32 0.0, %v7990
    %v7992 = vpop.f32.mrb[0].mxu0
    %v7993 = vpop.f32.mrb[0].mxu0
    %v7994 = vadd.f32 0.0, %v7993
    %v7995 = vpop.f32.mrb[0].mxu0
    %7996 = vmatprep.mubr.bf16.mxu0 0
    %7997 = vmatmul.mubr.bf16.gmra.mrb[0].mxu0 %v6756
    %v7998 = vpop.f32.mrb[0].mxu0
    %v7999 = vadd.f32 0.0, %v7998
    %v8000 = vpop.f32.mrb[0].mxu0
    %v8001 = vpop.f32.mrb[0].mxu0
    %v8002 = vadd.f32 0.0, %v8001
    %v8003 = vpop.f32.mrb[0].mxu0
    %8004 = vdwg.mxu0
    %v8021 = vunpack.c.l.b16 %v6909
    %v8022 = vunpack.c.l.b16 %v6910
    %v8023 = vunpack.c.l.b16 %v6911
    %v8024 = vunpack.c.l.b16 %v6912
    %v8025 = vunpack.c.l.b16 %v6913
    %v8026 = vunpack.c.l.b16 %v6914
    %v8027 = vunpack.c.l.b16 %v6915
    %v8028 = vunpack.c.l.b16 %v6916
    %v8029 = vunpack.c.l.b16 %v6917
    %v8030 = vunpack.c.l.b16 %v6918
    %v8031 = vunpack.c.l.b16 %v6919
    %v8032 = vunpack.c.l.b16 %v6920
    %v8033 = vunpack.c.l.b16 %v6921
    %v8034 = vunpack.c.l.b16 %v6922
    %v8035 = vunpack.c.l.b16 %v6923
    %v8036 = vunpack.c.l.b16 %v6924
    %v8037 = vpack.c.b16 %v8022, %v8021
    %v8038 = vpack.c.b16 %v8024, %v8023
    %v8039 = vpack.c.b16 %v8026, %v8025
    %v8040 = vpack.c.b16 %v8028, %v8027
    %v8041 = vpack.c.b16 %v8030, %v8029
    %v8042 = vpack.c.b16 %v8032, %v8031
    %v8043 = vpack.c.b16 %v8034, %v8033
    %v8044 = vpack.c.b16 %v8036, %v8035
    %8053 = vmatprep.subr.bf16.mxu0 0
    %8054 = vmatpush1.bf16.msra.mxu0 %v8037
    %8055 = vmatprep.subr.bf16.mxu0 0
    %8056 = vmatpush1.bf16.msra.mxu0 %v8038
    %8057 = vmatprep.subr.bf16.mxu0 0
    %8058 = vmatpush1.bf16.msra.mxu0 %v8039
    %8059 = vmatprep.subr.bf16.mxu0 0
    %8060 = vmatpush1.bf16.msra.mxu0 %v8040
    %8061 = vmatprep.subr.bf16.mxu0 0
    %8062 = vmatpush1.bf16.msra.mxu0 %v8041
    %8063 = vmatprep.subr.bf16.mxu0 0
    %8064 = vmatpush1.bf16.msra.mxu0 %v8042
    %8065 = vmatprep.subr.bf16.mxu0 0
    %8066 = vmatpush1.bf16.msra.mxu0 %v8043
    %8067 = vmatprep.subr.bf16.mxu0 0
    %8068 = vmatpush1.bf16.msra.mxu0 %v8044
    %8069 = vmatprep.subr.bf16.mxu0 0
    %8070 = vmatpush1.bf16.msra.mxu0 0
    %8071 = vmatprep.subr.bf16.mxu0 0
    %8072 = vmatpush1.bf16.msra.mxu0 0
    %8073 = vmatprep.subr.bf16.mxu0 0
    %8074 = vmatpush1.bf16.msra.mxu0 0
    %8075 = vmatprep.subr.bf16.mxu0 0
    %8076 = vmatpush1.bf16.msra.mxu0 0
    %8077 = vmatprep.subr.bf16.mxu0 0
    %8078 = vmatpush1.bf16.msra.mxu0 0
    %8079 = vmatprep.subr.bf16.mxu0 0
    %8080 = vmatpush1.bf16.msra.mxu0 0
    %8081 = vmatprep.subr.bf16.mxu0 0
    %8082 = vmatpush1.bf16.msra.mxu0 0
    %8083 = vmatprep.subr.bf16.mxu0 0
    %8084 = vmatpush1.bf16.msra.mxu0 0
    %8085 = vmatprep.mubr.bf16.mxu0 0
    %8086 = vmatmul.mubr.bf16.gmra.mrb[0].mxu0 %v6757
    %v8087 = vpop.f32.mrb[0].mxu0
    %v8088 = vadd.f32 0.0, %v8087
    %v8089 = vpop.f32.mrb[0].mxu0
    %v8090 = vpop.f32.mrb[0].mxu0
    %v8091 = vadd.f32 0.0, %v8090
    %v8092 = vpop.f32.mrb[0].mxu0
    %8093 = vmatprep.mubr.bf16.mxu0 0
    %8094 = vmatmul.mubr.bf16.gmra.mrb[0].mxu0 %v6758
    %v8095 = vpop.f32.mrb[0].mxu0
    %v8096 = vadd.f32 0.0, %v8095
    %v8097 = vpop.f32.mrb[0].mxu0
    %v8098 = vpop.f32.mrb[0].mxu0
    %v8099 = vadd.f32 0.0, %v8098
    %v8100 = vpop.f32.mrb[0].mxu0
    %8101 = vmatprep.mubr.bf16.mxu0 0
    %8102 = vmatmul.mubr.bf16.gmra.mrb[0].mxu0 %v6759
    %v8103 = vpop.f32.mrb[0].mxu0
    %v8104 = vadd.f32 0.0, %v8103
    %v8105 = vpop.f32.mrb[0].mxu0
    %v8106 = vpop.f32.mrb[0].mxu0
    %v8107 = vadd.f32 0.0, %v8106
    %v8108 = vpop.f32.mrb[0].mxu0
    %8109 = vmatprep.mubr.bf16.mxu0 0
    %8110 = vmatmul.mubr.bf16.gmra.mrb[0].mxu0 %v6760
    %v8111 = vpop.f32.mrb[0].mxu0
    %v8112 = vadd.f32 0.0, %v8111
    %v8113 = vpop.f32.mrb[0].mxu0
    %v8114 = vpop.f32.mrb[0].mxu0
    %v8115 = vadd.f32 0.0, %v8114
    %v8116 = vpop.f32.mrb[0].mxu0
    %8117 = vmatprep.mubr.bf16.mxu0 0
    %8118 = vmatmul.mubr.bf16.gmra.mrb[0].mxu0 %v6761
    %v8119 = vpop.f32.mrb[0].mxu0
    %v8120 = vadd.f32 0.0, %v8119
    %v8121 = vpop.f32.mrb[0].mxu0
    %v8122 = vpop.f32.mrb[0].mxu0
    %v8123 = vadd.f32 0.0, %v8122
    %v8124 = vpop.f32.mrb[0].mxu0
    %8125 = vmatprep.mubr.bf16.mxu0 0
    %8126 = vmatmul.mubr.bf16.gmra.mrb[0].mxu0 %v6762
    %v8127 = vpop.f32.mrb[0].mxu0
    %v8128 = vadd.f32 0.0, %v8127
    %v8129 = vpop.f32.mrb[0].mxu0
    %v8130 = vpop.f32.mrb[0].mxu0
    %v8131 = vadd.f32 0.0, %v8130
    %v8132 = vpop.f32.mrb[0].mxu0
    %8133 = vdwg.mxu0
    %v8150 = vunpack.c.l.b16 %v6925
    %v8151 = vunpack.c.l.b16 %v6926
    %v8152 = vunpack.c.l.b16 %v6927
    %v8153 = vunpack.c.l.b16 %v6928
    %v8154 = vunpack.c.l.b16 %v6929
    %v8155 = vunpack.c.l.b16 %v6930
    %v8156 = vunpack.c.l.b16 %v6931
    %v8157 = vunpack.c.l.b16 %v6932
    %v8158 = vunpack.c.l.b16 %v6933
    %v8159 = vunpack.c.l.b16 %v6934
    %v8160 = vunpack.c.l.b16 %v6935
    %v8161 = vunpack.c.l.b16 %v6936
    %v8162 = vunpack.c.l.b16 %v6937
    %v8163 = vunpack.c.l.b16 %v6938
    %v8164 = vunpack.c.l.b16 %v6939
    %v8165 = vunpack.c.l.b16 %v6940
    %v8166 = vpack.c.b16 %v8151, %v8150
    %v8167 = vpack.c.b16 %v8153, %v8152
    %v8168 = vpack.c.b16 %v8155, %v8154
    %v8169 = vpack.c.b16 %v8157, %v8156
    %v8170 = vpack.c.b16 %v8159, %v8158
    %v8171 = vpack.c.b16 %v8161, %v8160
    %v8172 = vpack.c.b16 %v8163, %v8162
    %v8173 = vpack.c.b16 %v8165, %v8164
    %8182 = vmatprep.subr.bf16.mxu0 0
    %8183 = vmatpush1.bf16.msra.mxu0 %v8166
    %8184 = vmatprep.subr.bf16.mxu0 0
    %8185 = vmatpush1.bf16.msra.mxu0 %v8167
    %8186 = vmatprep.subr.bf16.mxu0 0
    %8187 = vmatpush1.bf16.msra.mxu0 %v8168
    %8188 = vmatprep.subr.bf16.mxu0 0
    %8189 = vmatpush1.bf16.msra.mxu0 %v8169
    %8190 = vmatprep.subr.bf16.mxu0 0
    %8191 = vmatpush1.bf16.msra.mxu0 %v8170
    %8192 = vmatprep.subr.bf16.mxu0 0
    %8193 = vmatpush1.bf16.msra.mxu0 %v8171
    %8194 = vmatprep.subr.bf16.mxu0 0
    %8195 = vmatpush1.bf16.msra.mxu0 %v8172
    %8196 = vmatprep.subr.bf16.mxu0 0
    %8197 = vmatpush1.bf16.msra.mxu0 %v8173
    %8198 = vmatprep.subr.bf16.mxu0 0
    %8199 = vmatpush1.bf16.msra.mxu0 0
    %8200 = vmatprep.subr.bf16.mxu0 0
    %8201 = vmatpush1.bf16.msra.mxu0 0
    %8202 = vmatprep.subr.bf16.mxu0 0
    %8203 = vmatpush1.bf16.msra.mxu0 0
    %8204 = vmatprep.subr.bf16.mxu0 0
    %8205 = vmatpush1.bf16.msra.mxu0 0
    %8206 = vmatprep.subr.bf16.mxu0 0
    %8207 = vmatpush1.bf16.msra.mxu0 0
    %8208 = vmatprep.subr.bf16.mxu0 0
    %8209 = vmatpush1.bf16.msra.mxu0 0
    %8210 = vmatprep.subr.bf16.mxu0 0
    %8211 = vmatpush1.bf16.msra.mxu0 0
    %8212 = vmatprep.subr.bf16.mxu0 0
    %8213 = vmatpush1.bf16.msra.mxu0 0
    %8214 = vmatprep.mubr.bf16.mxu0 0
    %8215 = vmatmul.mubr.bf16.gmra.mrb[0].mxu0 %v6763
    %v8216 = vpop.f32.mrb[0].mxu0
    %v8217 = vadd.f32 0.0, %v8216
    %v8218 = vpop.f32.mrb[0].mxu0
    %v8219 = vpop.f32.mrb[0].mxu0
    %v8220 = vadd.f32 0.0, %v8219
    %v8221 = vpop.f32.mrb[0].mxu0
    %8222 = vmatprep.mubr.bf16.mxu0 0
    %8223 = vmatmul.mubr.bf16.gmra.mrb[0].mxu0 %v6764
    %v8224 = vpop.f32.mrb[0].mxu0
    %v8225 = vadd.f32 0.0, %v8224
    %v8226 = vpop.f32.mrb[0].mxu0
    %v8227 = vpop.f32.mrb[0].mxu0
    %v8228 = vadd.f32 0.0, %v8227
    %v8229 = vpop.f32.mrb[0].mxu0
    %8230 = vmatprep.mubr.bf16.mxu0 0
    %8231 = vmatmul.mubr.bf16.gmra.mrb[0].mxu0 %v6765
    %v8232 = vpop.f32.mrb[0].mxu0
    %v8233 = vadd.f32 0.0, %v8232
    %v8234 = vpop.f32.mrb[0].mxu0
    %v8235 = vpop.f32.mrb[0].mxu0
    %v8236 = vadd.f32 0.0, %v8235
    %v8237 = vpop.f32.mrb[0].mxu0
    %8238 = vmatprep.mubr.bf16.mxu0 0
    %8239 = vmatmul.mubr.bf16.gmra.mrb[0].mxu0 %v6766
    %v8240 = vpop.f32.mrb[0].mxu0
    %v8241 = vadd.f32 0.0, %v8240
    %v8242 = vpop.f32.mrb[0].mxu0
    %v8243 = vpop.f32.mrb[0].mxu0
    %v8244 = vadd.f32 0.0, %v8243
    %v8245 = vpop.f32.mrb[0].mxu0
    %8246 = vmatprep.mubr.bf16.mxu0 0
    %8247 = vmatmul.mubr.bf16.gmra.mrb[0].mxu0 %v6767
    %v8248 = vpop.f32.mrb[0].mxu0
    %v8249 = vadd.f32 0.0, %v8248
    %v8250 = vpop.f32.mrb[0].mxu0
    %v8251 = vpop.f32.mrb[0].mxu0
    %v8252 = vadd.f32 0.0, %v8251
    %v8253 = vpop.f32.mrb[0].mxu0
    %8254 = vmatprep.mubr.bf16.mxu0 0
    %8255 = vmatmul.mubr.bf16.gmra.mrb[0].mxu0 %v6768
    %v8256 = vpop.f32.mrb[0].mxu0
    %v8257 = vadd.f32 0.0, %v8256
    %v8258 = vpop.f32.mrb[0].mxu0
    %v8259 = vpop.f32.mrb[0].mxu0
    %v8260 = vadd.f32 0.0, %v8259
    %v8261 = vpop.f32.mrb[0].mxu0
    %8262 = vdwg.mxu0
    %v8279 = vunpack.c.l.b16 %v6941
    %v8280 = vunpack.c.l.b16 %v6942
    %v8281 = vunpack.c.l.b16 %v6943
    %v8282 = vunpack.c.l.b16 %v6944
    %v8283 = vunpack.c.l.b16 %v6945
    %v8284 = vunpack.c.l.b16 %v6946
    %v8285 = vunpack.c.l.b16 %v6947
    %v8286 = vunpack.c.l.b16 %v6948
    %v8287 = vunpack.c.l.b16 %v6949
    %v8288 = vunpack.c.l.b16 %v6950
    %v8289 = vunpack.c.l.b16 %v6951
    %v8290 = vunpack.c.l.b16 %v6952
    %v8291 = vunpack.c.l.b16 %v6953
    %v8292 = vunpack.c.l.b16 %v6954
    %v8293 = vunpack.c.l.b16 %v6955
    %v8294 = vunpack.c.l.b16 %v6956
    %v8295 = vpack.c.b16 %v8280, %v8279
    %v8296 = vpack.c.b16 %v8282, %v8281
    %v8297 = vpack.c.b16 %v8284, %v8283
    %v8298 = vpack.c.b16 %v8286, %v8285
    %v8299 = vpack.c.b16 %v8288, %v8287
    %v8300 = vpack.c.b16 %v8290, %v8289
    %v8301 = vpack.c.b16 %v8292, %v8291
    %v8302 = vpack.c.b16 %v8294, %v8293
    %8311 = vmatprep.subr.bf16.mxu0 0
    %8312 = vmatpush1.bf16.msra.mxu0 %v8295
    %8313 = vmatprep.subr.bf16.mxu0 0
    %8314 = vmatpush1.bf16.msra.mxu0 %v8296
    %8315 = vmatprep.subr.bf16.mxu0 0
    %8316 = vmatpush1.bf16.msra.mxu0 %v8297
    %8317 = vmatprep.subr.bf16.mxu0 0
    %8318 = vmatpush1.bf16.msra.mxu0 %v8298
    %8319 = vmatprep.subr.bf16.mxu0 0
    %8320 = vmatpush1.bf16.msra.mxu0 %v8299
    %8321 = vmatprep.subr.bf16.mxu0 0
    %8322 = vmatpush1.bf16.msra.mxu0 %v8300
    %8323 = vmatprep.subr.bf16.mxu0 0
    %8324 = vmatpush1.bf16.msra.mxu0 %v8301
    %8325 = vmatprep.subr.bf16.mxu0 0
    %8326 = vmatpush1.bf16.msra.mxu0 %v8302
    %8327 = vmatprep.subr.bf16.mxu0 0
    %8328 = vmatpush1.bf16.msra.mxu0 0
    %8329 = vmatprep.subr.bf16.mxu0 0
    %8330 = vmatpush1.bf16.msra.mxu0 0
    %8331 = vmatprep.subr.bf16.mxu0 0
    %8332 = vmatpush1.bf16.msra.mxu0 0
    %8333 = vmatprep.subr.bf16.mxu0 0
    %8334 = vmatpush1.bf16.msra.mxu0 0
    %8335 = vmatprep.subr.bf16.mxu0 0
    %8336 = vmatpush1.bf16.msra.mxu0 0
    %8337 = vmatprep.subr.bf16.mxu0 0
    %8338 = vmatpush1.bf16.msra.mxu0 0
    %8339 = vmatprep.subr.bf16.mxu0 0
    %8340 = vmatpush1.bf16.msra.mxu0 0
    %8341 = vmatprep.subr.bf16.mxu0 0
    %8342 = vmatpush1.bf16.msra.mxu0 0
    %8343 = vmatprep.mubr.bf16.mxu0 0
    %8344 = vmatmul.mubr.bf16.gmra.mrb[0].mxu0 %v6769
    %v8345 = vpop.f32.mrb[0].mxu0
    %v8346 = vadd.f32 0.0, %v8345
    %v8347 = vpop.f32.mrb[0].mxu0
    %v8348 = vpop.f32.mrb[0].mxu0
    %v8349 = vadd.f32 0.0, %v8348
    %v8350 = vpop.f32.mrb[0].mxu0
    %8351 = vmatprep.mubr.bf16.mxu0 0
    %8352 = vmatmul.mubr.bf16.gmra.mrb[0].mxu0 %v6770
    %v8353 = vpop.f32.mrb[0].mxu0
    %v8354 = vadd.f32 0.0, %v8353
    %v8355 = vpop.f32.mrb[0].mxu0
    %v8356 = vpop.f32.mrb[0].mxu0
    %v8357 = vadd.f32 0.0, %v8356
    %v8358 = vpop.f32.mrb[0].mxu0
    %8359 = vmatprep.mubr.bf16.mxu0 0
    %8360 = vmatmul.mubr.bf16.gmra.mrb[0].mxu0 %v6771
    %v8361 = vpop.f32.mrb[0].mxu0
    %v8362 = vadd.f32 0.0, %v8361
    %v8363 = vpop.f32.mrb[0].mxu0
    %v8364 = vpop.f32.mrb[0].mxu0
    %v8365 = vadd.f32 0.0, %v8364
    %v8366 = vpop.f32.mrb[0].mxu0
    %8367 = vmatprep.mubr.bf16.mxu0 0
    %8368 = vmatmul.mubr.bf16.gmra.mrb[0].mxu0 %v6772
    %v8369 = vpop.f32.mrb[0].mxu0
    %v8370 = vadd.f32 0.0, %v8369
    %v8371 = vpop.f32.mrb[0].mxu0
    %v8372 = vpop.f32.mrb[0].mxu0
    %v8373 = vadd.f32 0.0, %v8372
    %v8374 = vpop.f32.mrb[0].mxu0
    %8375 = vmatprep.mubr.bf16.mxu0 0
    %8376 = vmatmul.mubr.bf16.gmra.mrb[0].mxu0 %v6773
    %v8377 = vpop.f32.mrb[0].mxu0
    %v8378 = vadd.f32 0.0, %v8377
    %v8379 = vpop.f32.mrb[0].mxu0
    %v8380 = vpop.f32.mrb[0].mxu0
    %v8381 = vadd.f32 0.0, %v8380
    %v8382 = vpop.f32.mrb[0].mxu0
    %8383 = vmatprep.mubr.bf16.mxu0 0
    %8384 = vmatmul.mubr.bf16.gmra.mrb[0].mxu0 %v6774
    %v8385 = vpop.f32.mrb[0].mxu0
    %v8386 = vadd.f32 0.0, %v8385
    %v8387 = vpop.f32.mrb[0].mxu0
    %v8388 = vpop.f32.mrb[0].mxu0
    %v8389 = vadd.f32 0.0, %v8388
    %v8390 = vpop.f32.mrb[0].mxu0
    %8391 = vdwg.mxu0
    %v8408 = vunpack.c.l.b16 %v6957
    %v8409 = vunpack.c.l.b16 %v6958
    %v8410 = vunpack.c.l.b16 %v6959
    %v8411 = vunpack.c.l.b16 %v6960
    %v8412 = vunpack.c.l.b16 %v6961
    %v8413 = vunpack.c.l.b16 %v6962
    %v8414 = vunpack.c.l.b16 %v6963
    %v8415 = vunpack.c.l.b16 %v6964
    %v8416 = vunpack.c.l.b16 %v6965
    %v8417 = vunpack.c.l.b16 %v6966
    %v8418 = vunpack.c.l.b16 %v6967
    %v8419 = vunpack.c.l.b16 %v6968
    %v8420 = vunpack.c.l.b16 %v6969
    %v8421 = vunpack.c.l.b16 %v6970
    %v8422 = vunpack.c.l.b16 %v6971
    %v8423 = vunpack.c.l.b16 %v6972
    %v8424 = vpack.c.b16 %v8409, %v8408
    %v8425 = vpack.c.b16 %v8411, %v8410
    %v8426 = vpack.c.b16 %v8413, %v8412
    %v8427 = vpack.c.b16 %v8415, %v8414
    %v8428 = vpack.c.b16 %v8417, %v8416
    %v8429 = vpack.c.b16 %v8419, %v8418
    %v8430 = vpack.c.b16 %v8421, %v8420
    %v8431 = vpack.c.b16 %v8423, %v8422
    %8440 = vmatprep.subr.bf16.mxu0 0
    %8441 = vmatpush1.bf16.msra.mxu0 %v8424
    %8442 = vmatprep.subr.bf16.mxu0 0
    %8443 = vmatpush1.bf16.msra.mxu0 %v8425
    %8444 = vmatprep.subr.bf16.mxu0 0
    %8445 = vmatpush1.bf16.msra.mxu0 %v8426
    %8446 = vmatprep.subr.bf16.mxu0 0
    %8447 = vmatpush1.bf16.msra.mxu0 %v8427
    %8448 = vmatprep.subr.bf16.mxu0 0
    %8449 = vmatpush1.bf16.msra.mxu0 %v8428
    %8450 = vmatprep.subr.bf16.mxu0 0
    %8451 = vmatpush1.bf16.msra.mxu0 %v8429
    %8452 = vmatprep.subr.bf16.mxu0 0
    %8453 = vmatpush1.bf16.msra.mxu0 %v8430
    %8454 = vmatprep.subr.bf16.mxu0 0
    %8455 = vmatpush1.bf16.msra.mxu0 %v8431
    %8456 = vmatprep.subr.bf16.mxu0 0
    %8457 = vmatpush1.bf16.msra.mxu0 0
    %8458 = vmatprep.subr.bf16.mxu0 0
    %8459 = vmatpush1.bf16.msra.mxu0 0
    %8460 = vmatprep.subr.bf16.mxu0 0
    %8461 = vmatpush1.bf16.msra.mxu0 0
    %8462 = vmatprep.subr.bf16.mxu0 0
    %8463 = vmatpush1.bf16.msra.mxu0 0
    %8464 = vmatprep.subr.bf16.mxu0 0
    %8465 = vmatpush1.bf16.msra.mxu0 0
    %8466 = vmatprep.subr.bf16.mxu0 0
    %8467 = vmatpush1.bf16.msra.mxu0 0
    %8468 = vmatprep.subr.bf16.mxu0 0
    %8469 = vmatpush1.bf16.msra.mxu0 0
    %8470 = vmatprep.subr.bf16.mxu0 0
    %8471 = vmatpush1.bf16.msra.mxu0 0
    %8472 = vmatprep.mubr.bf16.mxu0 0
    %8473 = vmatmul.mubr.bf16.gmra.mrb[0].mxu0 %v6775
    %v8474 = vpop.f32.mrb[0].mxu0
    %v8475 = vadd.f32 0.0, %v8474
    %v8476 = vpop.f32.mrb[0].mxu0
    %v8477 = vpop.f32.mrb[0].mxu0
    %v8478 = vadd.f32 0.0, %v8477
    %v8479 = vpop.f32.mrb[0].mxu0
    %8480 = vmatprep.mubr.bf16.mxu0 0
    %8481 = vmatmul.mubr.bf16.gmra.mrb[0].mxu0 %v6776
    %v8482 = vpop.f32.mrb[0].mxu0
    %v8483 = vadd.f32 0.0, %v8482
    %v8484 = vpop.f32.mrb[0].mxu0
    %v8485 = vpop.f32.mrb[0].mxu0
    %v8486 = vadd.f32 0.0, %v8485
    %v8487 = vpop.f32.mrb[0].mxu0
    %8488 = vmatprep.mubr.bf16.mxu0 0
    %8489 = vmatmul.mubr.bf16.gmra.mrb[0].mxu0 %v6777
    %v8490 = vpop.f32.mrb[0].mxu0
    %v8491 = vadd.f32 0.0, %v8490
    %v8492 = vpop.f32.mrb[0].mxu0
    %v8493 = vpop.f32.mrb[0].mxu0
    %v8494 = vadd.f32 0.0, %v8493
    %v8495 = vpop.f32.mrb[0].mxu0
    %8496 = vmatprep.mubr.bf16.mxu0 0
    %8497 = vmatmul.mubr.bf16.gmra.mrb[0].mxu0 %v6778
    %v8498 = vpop.f32.mrb[0].mxu0
    %v8499 = vadd.f32 0.0, %v8498
    %v8500 = vpop.f32.mrb[0].mxu0
    %v8501 = vpop.f32.mrb[0].mxu0
    %v8502 = vadd.f32 0.0, %v8501
    %v8503 = vpop.f32.mrb[0].mxu0
    %8504 = vmatprep.mubr.bf16.mxu0 0
    %8505 = vmatmul.mubr.bf16.gmra.mrb[0].mxu0 %v6779
    %v8506 = vpop.f32.mrb[0].mxu0
    %v8507 = vadd.f32 0.0, %v8506
    %v8508 = vpop.f32.mrb[0].mxu0
    %v8509 = vpop.f32.mrb[0].mxu0
    %v8510 = vadd.f32 0.0, %v8509
    %v8511 = vpop.f32.mrb[0].mxu0
    %8512 = vmatprep.mubr.bf16.mxu0 0
    %8513 = vmatmul.mubr.bf16.gmra.mrb[0].mxu0 %v6780
    %v8514 = vpop.f32.mrb[0].mxu0
    %v8515 = vadd.f32 0.0, %v8514
    %v8516 = vpop.f32.mrb[0].mxu0
    %v8517 = vpop.f32.mrb[0].mxu0
    %v8518 = vadd.f32 0.0, %v8517
    %v8519 = vpop.f32.mrb[0].mxu0
    %8520 = vdwg.mxu0
    %vm8521 = vcmask 23552
    %v8522 = vsel %vm8521, %v7056, 0.0
    %v8523 = vsel %vm8521, %v7185, 0.0
    %v8524 = vadd.f32 %v8522, %v8523
    %v8525 = vsel %vm8521, %v7314, 0.0
    %v8526 = vadd.f32 %v8524, %v8525
    %v8527 = vsel %vm8521, %v7443, 0.0
    %v8528 = vadd.f32 %v8526, %v8527
    %v8529 = vsel %vm8521, %v7572, 0.0
    %v8530 = vadd.f32 %v8528, %v8529
    %v8531 = vsel %vm8521, %v7701, 0.0
    %v8532 = vadd.f32 %v8530, %v8531
    %v8533 = vsel %vm8521, %v7830, 0.0
    %v8534 = vadd.f32 %v8532, %v8533
    %v8535 = vsel %vm8521, %v7959, 0.0
    %v8536 = vadd.f32 %v8534, %v8535
    %v8537 = vsel %vm8521, %v8088, 0.0
    %v8538 = vadd.f32 %v8536, %v8537
    %v8539 = vsel %vm8521, %v8217, 0.0
    %v8540 = vadd.f32 %v8538, %v8539
    %v8541 = vsel %vm8521, %v8346, 0.0
    %v8542 = vadd.f32 %v8540, %v8541
    %v8543 = vsel %vm8521, %v8475, 0.0
    %v8544 = vadd.f32 %v8542, %v8543
    %v8545 = vsel %vm8521, %v7059, 0.0
    %v8546 = vsel %vm8521, %v7188, 0.0
    %v8547 = vadd.f32 %v8545, %v8546
    %v8548 = vsel %vm8521, %v7317, 0.0
    %v8549 = vadd.f32 %v8547, %v8548
    %v8550 = vsel %vm8521, %v7446, 0.0
    %v8551 = vadd.f32 %v8549, %v8550
    %v8552 = vsel %vm8521, %v7575, 0.0
    %v8553 = vadd.f32 %v8551, %v8552
    %v8554 = vsel %vm8521, %v7704, 0.0
    %v8555 = vadd.f32 %v8553, %v8554
    %v8556 = vsel %vm8521, %v7833, 0.0
    %v8557 = vadd.f32 %v8555, %v8556
    %v8558 = vsel %vm8521, %v7962, 0.0
    %v8559 = vadd.f32 %v8557, %v8558
    %v8560 = vsel %vm8521, %v8091, 0.0
    %v8561 = vadd.f32 %v8559, %v8560
    %v8562 = vsel %vm8521, %v8220, 0.0
    %v8563 = vadd.f32 %v8561, %v8562
    %v8564 = vsel %vm8521, %v8349, 0.0
    %v8565 = vadd.f32 %v8563, %v8564
    %v8566 = vsel %vm8521, %v8478, 0.0
    %v8567 = vadd.f32 %v8565, %v8566
    %v8568 = vsel %vm8521, %v7064, 0.0
    %v8569 = vsel %vm8521, %v7193, 0.0
    %v8570 = vadd.f32 %v8568, %v8569
    %v8571 = vsel %vm8521, %v7322, 0.0
    %v8572 = vadd.f32 %v8570, %v8571
    %v8573 = vsel %vm8521, %v7451, 0.0
    %v8574 = vadd.f32 %v8572, %v8573
    %v8575 = vsel %vm8521, %v7580, 0.0
    %v8576 = vadd.f32 %v8574, %v8575
    %v8577 = vsel %vm8521, %v7709, 0.0
    %v8578 = vadd.f32 %v8576, %v8577
    %v8579 = vsel %vm8521, %v7838, 0.0
    %v8580 = vadd.f32 %v8578, %v8579
    %v8581 = vsel %vm8521, %v7967, 0.0
    %v8582 = vadd.f32 %v8580, %v8581
    %v8583 = vsel %vm8521, %v8096, 0.0
    %v8584 = vadd.f32 %v8582, %v8583
    %v8585 = vsel %vm8521, %v8225, 0.0
    %v8586 = vadd.f32 %v8584, %v8585
    %v8587 = vsel %vm8521, %v8354, 0.0
    %v8588 = vadd.f32 %v8586, %v8587
    %v8589 = vsel %vm8521, %v8483, 0.0
    %v8590 = vadd.f32 %v8588, %v8589
    %v8591 = vsel %vm8521, %v7067, 0.0
    %v8592 = vsel %vm8521, %v7196, 0.0
    %v8593 = vadd.f32 %v8591, %v8592
    %v8594 = vsel %vm8521, %v7325, 0.0
    %v8595 = vadd.f32 %v8593, %v8594
    %v8596 = vsel %vm8521, %v7454, 0.0
    %v8597 = vadd.f32 %v8595, %v8596
    %v8598 = vsel %vm8521, %v7583, 0.0
    %v8599 = vadd.f32 %v8597, %v8598
    %v8600 = vsel %vm8521, %v7712, 0.0
    %v8601 = vadd.f32 %v8599, %v8600
    %v8602 = vsel %vm8521, %v7841, 0.0
    %v8603 = vadd.f32 %v8601, %v8602
    %v8604 = vsel %vm8521, %v7970, 0.0
    %v8605 = vadd.f32 %v8603, %v8604
    %v8606 = vsel %vm8521, %v8099, 0.0
    %v8607 = vadd.f32 %v8605, %v8606
    %v8608 = vsel %vm8521, %v8228, 0.0
    %v8609 = vadd.f32 %v8607, %v8608
    %v8610 = vsel %vm8521, %v8357, 0.0
    %v8611 = vadd.f32 %v8609, %v8610
    %v8612 = vsel %vm8521, %v8486, 0.0
    %v8613 = vadd.f32 %v8611, %v8612
    %v8614 = vsel %vm8521, %v7072, 0.0
    %v8615 = vsel %vm8521, %v7201, 0.0
    %v8616 = vadd.f32 %v8614, %v8615
    %v8617 = vsel %vm8521, %v7330, 0.0
    %v8618 = vadd.f32 %v8616, %v8617
    %v8619 = vsel %vm8521, %v7459, 0.0
    %v8620 = vadd.f32 %v8618, %v8619
    %v8621 = vsel %vm8521, %v7588, 0.0
    %v8622 = vadd.f32 %v8620, %v8621
    %v8623 = vsel %vm8521, %v7717, 0.0
    %v8624 = vadd.f32 %v8622, %v8623
    %v8625 = vsel %vm8521, %v7846, 0.0
    %v8626 = vadd.f32 %v8624, %v8625
    %v8627 = vsel %vm8521, %v7975, 0.0
    %v8628 = vadd.f32 %v8626, %v8627
    %v8629 = vsel %vm8521, %v8104, 0.0
    %v8630 = vadd.f32 %v8628, %v8629
    %v8631 = vsel %vm8521, %v8233, 0.0
    %v8632 = vadd.f32 %v8630, %v8631
    %v8633 = vsel %vm8521, %v8362, 0.0
    %v8634 = vadd.f32 %v8632, %v8633
    %v8635 = vsel %vm8521, %v8491, 0.0
    %v8636 = vadd.f32 %v8634, %v8635
    %v8637 = vsel %vm8521, %v7075, 0.0
    %v8638 = vsel %vm8521, %v7204, 0.0
    %v8639 = vadd.f32 %v8637, %v8638
    %v8640 = vsel %vm8521, %v7333, 0.0
    %v8641 = vadd.f32 %v8639, %v8640
    %v8642 = vsel %vm8521, %v7462, 0.0
    %v8643 = vadd.f32 %v8641, %v8642
    %v8644 = vsel %vm8521, %v7591, 0.0
    %v8645 = vadd.f32 %v8643, %v8644
    %v8646 = vsel %vm8521, %v7720, 0.0
    %v8647 = vadd.f32 %v8645, %v8646
    %v8648 = vsel %vm8521, %v7849, 0.0
    %v8649 = vadd.f32 %v8647, %v8648
    %v8650 = vsel %vm8521, %v7978, 0.0
    %v8651 = vadd.f32 %v8649, %v8650
    %v8652 = vsel %vm8521, %v8107, 0.0
    %v8653 = vadd.f32 %v8651, %v8652
    %v8654 = vsel %vm8521, %v8236, 0.0
    %v8655 = vadd.f32 %v8653, %v8654
    %v8656 = vsel %vm8521, %v8365, 0.0
    %v8657 = vadd.f32 %v8655, %v8656
    %v8658 = vsel %vm8521, %v8494, 0.0
    %v8659 = vadd.f32 %v8657, %v8658
    %v8660 = vsel %vm8521, %v7080, 0.0
    %v8661 = vsel %vm8521, %v7209, 0.0
    %v8662 = vadd.f32 %v8660, %v8661
    %v8663 = vsel %vm8521, %v7338, 0.0
    %v8664 = vadd.f32 %v8662, %v8663
    %v8665 = vsel %vm8521, %v7467, 0.0
    %v8666 = vadd.f32 %v8664, %v8665
    %v8667 = vsel %vm8521, %v7596, 0.0
    %v8668 = vadd.f32 %v8666, %v8667
    %v8669 = vsel %vm8521, %v7725, 0.0
    %v8670 = vadd.f32 %v8668, %v8669
    %v8671 = vsel %vm8521, %v7854, 0.0
    %v8672 = vadd.f32 %v8670, %v8671
    %v8673 = vsel %vm8521, %v7983, 0.0
    %v8674 = vadd.f32 %v8672, %v8673
    %v8675 = vsel %vm8521, %v8112, 0.0
    %v8676 = vadd.f32 %v8674, %v8675
    %v8677 = vsel %vm8521, %v8241, 0.0
    %v8678 = vadd.f32 %v8676, %v8677
    %v8679 = vsel %vm8521, %v8370, 0.0
    %v8680 = vadd.f32 %v8678, %v8679
    %v8681 = vsel %vm8521, %v8499, 0.0
    %v8682 = vadd.f32 %v8680, %v8681
    %v8683 = vsel %vm8521, %v7083, 0.0
    %v8684 = vsel %vm8521, %v7212, 0.0
    %v8685 = vadd.f32 %v8683, %v8684
    %v8686 = vsel %vm8521, %v7341, 0.0
    %v8687 = vadd.f32 %v8685, %v8686
    %v8688 = vsel %vm8521, %v7470, 0.0
    %v8689 = vadd.f32 %v8687, %v8688
    %v8690 = vsel %vm8521, %v7599, 0.0
    %v8691 = vadd.f32 %v8689, %v8690
    %v8692 = vsel %vm8521, %v7728, 0.0
    %v8693 = vadd.f32 %v8691, %v8692
    %v8694 = vsel %vm8521, %v7857, 0.0
    %v8695 = vadd.f32 %v8693, %v8694
    %v8696 = vsel %vm8521, %v7986, 0.0
    %v8697 = vadd.f32 %v8695, %v8696
    %v8698 = vsel %vm8521, %v8115, 0.0
    %v8699 = vadd.f32 %v8697, %v8698
    %v8700 = vsel %vm8521, %v8244, 0.0
    %v8701 = vadd.f32 %v8699, %v8700
    %v8702 = vsel %vm8521, %v8373, 0.0
    %v8703 = vadd.f32 %v8701, %v8702
    %v8704 = vsel %vm8521, %v8502, 0.0
    %v8705 = vadd.f32 %v8703, %v8704
    %v8706 = vsel %vm8521, %v7088, 0.0
    %v8707 = vsel %vm8521, %v7217, 0.0
    %v8708 = vadd.f32 %v8706, %v8707
    %v8709 = vsel %vm8521, %v7346, 0.0
    %v8710 = vadd.f32 %v8708, %v8709
    %v8711 = vsel %vm8521, %v7475, 0.0
    %v8712 = vadd.f32 %v8710, %v8711
    %v8713 = vsel %vm8521, %v7604, 0.0
    %v8714 = vadd.f32 %v8712, %v8713
    %v8715 = vsel %vm8521, %v7733, 0.0
    %v8716 = vadd.f32 %v8714, %v8715
    %v8717 = vsel %vm8521, %v7862, 0.0
    %v8718 = vadd.f32 %v8716, %v8717
    %v8719 = vsel %vm8521, %v7991, 0.0
    %v8720 = vadd.f32 %v8718, %v8719
    %v8721 = vsel %vm8521, %v8120, 0.0
    %v8722 = vadd.f32 %v8720, %v8721
    %v8723 = vsel %vm8521, %v8249, 0.0
    %v8724 = vadd.f32 %v8722, %v8723
    %v8725 = vsel %vm8521, %v8378, 0.0
    %v8726 = vadd.f32 %v8724, %v8725
    %v8727 = vsel %vm8521, %v8507, 0.0
    %v8728 = vadd.f32 %v8726, %v8727
    %v8729 = vsel %vm8521, %v7091, 0.0
    %v8730 = vsel %vm8521, %v7220, 0.0
    %v8731 = vadd.f32 %v8729, %v8730
    %v8732 = vsel %vm8521, %v7349, 0.0
    %v8733 = vadd.f32 %v8731, %v8732
    %v8734 = vsel %vm8521, %v7478, 0.0
    %v8735 = vadd.f32 %v8733, %v8734
    %v8736 = vsel %vm8521, %v7607, 0.0
    %v8737 = vadd.f32 %v8735, %v8736
    %v8738 = vsel %vm8521, %v7736, 0.0
    %v8739 = vadd.f32 %v8737, %v8738
    %v8740 = vsel %vm8521, %v7865, 0.0
    %v8741 = vadd.f32 %v8739, %v8740
    %v8742 = vsel %vm8521, %v7994, 0.0
    %v8743 = vadd.f32 %v8741, %v8742
    %v8744 = vsel %vm8521, %v8123, 0.0
    %v8745 = vadd.f32 %v8743, %v8744
    %v8746 = vsel %vm8521, %v8252, 0.0
    %v8747 = vadd.f32 %v8745, %v8746
    %v8748 = vsel %vm8521, %v8381, 0.0
    %v8749 = vadd.f32 %v8747, %v8748
    %v8750 = vsel %vm8521, %v8510, 0.0
    %v8751 = vadd.f32 %v8749, %v8750
    %v8752 = vsel %vm8521, %v7096, 0.0
    %v8753 = vsel %vm8521, %v7225, 0.0
    %v8754 = vadd.f32 %v8752, %v8753
    %v8755 = vsel %vm8521, %v7354, 0.0
    %v8756 = vadd.f32 %v8754, %v8755
    %v8757 = vsel %vm8521, %v7483, 0.0
    %v8758 = vadd.f32 %v8756, %v8757
    %v8759 = vsel %vm8521, %v7612, 0.0
    %v8760 = vadd.f32 %v8758, %v8759
    %v8761 = vsel %vm8521, %v7741, 0.0
    %v8762 = vadd.f32 %v8760, %v8761
    %v8763 = vsel %vm8521, %v7870, 0.0
    %v8764 = vadd.f32 %v8762, %v8763
    %v8765 = vsel %vm8521, %v7999, 0.0
    %v8766 = vadd.f32 %v8764, %v8765
    %v8767 = vsel %vm8521, %v8128, 0.0
    %v8768 = vadd.f32 %v8766, %v8767
    %v8769 = vsel %vm8521, %v8257, 0.0
    %v8770 = vadd.f32 %v8768, %v8769
    %v8771 = vsel %vm8521, %v8386, 0.0
    %v8772 = vadd.f32 %v8770, %v8771
    %v8773 = vsel %vm8521, %v8515, 0.0
    %v8774 = vadd.f32 %v8772, %v8773
    %v8775 = vsel %vm8521, %v7099, 0.0
    %v8776 = vsel %vm8521, %v7228, 0.0
    %v8777 = vadd.f32 %v8775, %v8776
    %v8778 = vsel %vm8521, %v7357, 0.0
    %v8779 = vadd.f32 %v8777, %v8778
    %v8780 = vsel %vm8521, %v7486, 0.0
    %v8781 = vadd.f32 %v8779, %v8780
    %v8782 = vsel %vm8521, %v7615, 0.0
    %v8783 = vadd.f32 %v8781, %v8782
    %v8784 = vsel %vm8521, %v7744, 0.0
    %v8785 = vadd.f32 %v8783, %v8784
    %v8786 = vsel %vm8521, %v7873, 0.0
    %v8787 = vadd.f32 %v8785, %v8786
    %v8788 = vsel %vm8521, %v8002, 0.0
    %v8789 = vadd.f32 %v8787, %v8788
    %v8790 = vsel %vm8521, %v8131, 0.0
    %v8791 = vadd.f32 %v8789, %v8790
    %v8792 = vsel %vm8521, %v8260, 0.0
    %v8793 = vadd.f32 %v8791, %v8792
    %v8794 = vsel %vm8521, %v8389, 0.0
    %v8795 = vadd.f32 %v8793, %v8794
    %v8796 = vsel %vm8521, %v8518, 0.0
    %v8797 = vadd.f32 %v8795, %v8796
    %v8798 = vld [vmem:[%s10] sm:$0x1]
    %v8800 = vlaneseq
    %v8801 = vshrl.u32 %v8800, 7
    %v8802 = vsub.s32 0, %v8801
    %v8803 = vrot.slane %v8798, %v8802
    %v8805 = vadd.f32 %v8544, %v8803
    %v8806 = vadd.f32 %v8567, %v8803
    %v8807 = vadd.f32 %v8590, %v8803
    %v8808 = vadd.f32 %v8613, %v8803
    %v8809 = vadd.f32 %v8636, %v8803
    %v8810 = vadd.f32 %v8659, %v8803
    %v8811 = vadd.f32 %v8682, %v8803
    %v8812 = vadd.f32 %v8705, %v8803
    %v8813 = vadd.f32 %v8728, %v8803
    %v8814 = vadd.f32 %v8751, %v8803
    %v8815 = vadd.f32 %v8774, %v8803
    %v8816 = vadd.f32 %v8797, %v8803
    %s8817 = sld [smem:[#allocation2]]
    %v8818 = vstv %s8817
    %v8819 = vmul.f32 %v8818, %v8805
    %v8820 = vmul.f32 %v8818, %v8806
    %v8821 = vmul.f32 %v8818, %v8807
    %v8822 = vmul.f32 %v8818, %v8808
    %s8823 = sld [smem:[#allocation2 + $0x1]]
    %v8824 = vstv %s8823
    %v8825 = vmul.f32 %v8824, %v8809
    %v8826 = vmul.f32 %v8824, %v8810
    %v8827 = vmul.f32 %v8824, %v8811
    %v8828 = vmul.f32 %v8824, %v8812
    %v8829 = vadd.f32 %v8819, %v8825
    %v8830 = vadd.f32 %v8820, %v8826
    %v8831 = vadd.f32 %v8821, %v8827
    %v8832 = vadd.f32 %v8822, %v8828
    %s8833 = sld [smem:[#allocation2 + $0x2]]
    %v8834 = vstv %s8833
    %v8835 = vmul.f32 %v8834, %v8813
    %v8836 = vmul.f32 %v8834, %v8814
    %v8837 = vmul.f32 %v8834, %v8815
    %v8838 = vmul.f32 %v8834, %v8816
    %v8839 = vadd.f32 %v8829, %v8835
    %v8840 = vadd.f32 %v8830, %v8836
    %v8841 = vadd.f32 %v8831, %v8837
    %v8842 = vadd.f32 %v8832, %v8838
    %s8843 = sld [smem:[#allocation2 + $0x80]]
    %v8844 = vstv %s8843
    %v8845 = vmul.f32 %v8844, %v8805
    %v8846 = vmul.f32 %v8844, %v8806
    %v8847 = vmul.f32 %v8844, %v8807
    %v8848 = vmul.f32 %v8844, %v8808
    %s8849 = sld [smem:[#allocation2 + $0x81]]
    %v8850 = vstv %s8849
    %v8851 = vmul.f32 %v8850, %v8809
    %v8852 = vmul.f32 %v8850, %v8810
    %v8853 = vmul.f32 %v8850, %v8811
    %v8854 = vmul.f32 %v8850, %v8812
    %v8855 = vadd.f32 %v8845, %v8851
    %v8856 = vadd.f32 %v8846, %v8852
    %v8857 = vadd.f32 %v8847, %v8853
    %v8858 = vadd.f32 %v8848, %v8854
    %s8859 = sld [smem:[#allocation2 + $0x82]]
    %v8860 = vstv %s8859
    %v8861 = vmul.f32 %v8860, %v8813
    %v8862 = vmul.f32 %v8860, %v8814
    %v8863 = vmul.f32 %v8860, %v8815
    %v8864 = vmul.f32 %v8860, %v8816
    %v8865 = vadd.f32 %v8855, %v8861
    %v8866 = vadd.f32 %v8856, %v8862
    %v8867 = vadd.f32 %v8857, %v8863
    %v8868 = vadd.f32 %v8858, %v8864
    %v8869 = vxor.u32 %v8839, 2147483648
    %v8870 = vxor.u32 %v8840, 2147483648
    %v8871 = vxor.u32 %v8841, 2147483648
    %v8872 = vxor.u32 %v8842, 2147483648
    %v8873 = vmul.f32 %v8869, 1.442695
    %v8874 = vpow.pop %v8873
    %v8875 = vmul.f32 %v8870, 1.442695
    %v8876 = vpow.pop %v8875
    %v8877 = vmul.f32 %v8871, 1.442695
    %v8878 = vpow.pop %v8877
    %v8879 = vmul.f32 %v8872, 1.442695
    %v8880 = vpow.pop %v8879
    %v8881 = vadd.f32 %v8874, 1.0
    %v8882 = vadd.f32 %v8876, 1.0
    %v8883 = vadd.f32 %v8878, 1.0
    %v8884 = vadd.f32 %v8880, 1.0
    %v8885 = vrcp.pop %v8881
    %v8886 = vmul.f32 1.0, %v8885
    %v8887 = vrcp.pop %v8882
    %v8888 = vmul.f32 1.0, %v8887
    %v8889 = vrcp.pop %v8883
    %v8890 = vmul.f32 1.0, %v8889
    %v8891 = vrcp.pop %v8884
    %v8892 = vmul.f32 1.0, %v8891
    %v8893 = vrcp.pop %v8886
    %v8894 = vrcp.pop %v8888
    %v8895 = vrcp.pop %v8890
    %v8896 = vrcp.pop %v8892
    %8901 = vrot.lane.b32.xlu0 %v8893, 2
    %v8902 = vpop.permute.xlu0 %8901
    %8903 = vrot.lane.b32.xlu0 %v8894, 2
    %v8904 = vpop.permute.xlu0 %8903
    %8905 = vrot.lane.b32.xlu0 %v8895, 2
    %v8906 = vpop.permute.xlu0 %8905
    %8907 = vrot.lane.b32.xlu0 %v8896, 2
    %v8908 = vpop.permute.xlu0 %8907
    %v8913 = vmul.f32 %v8865, %v8902
    %v8914 = vmul.f32 %v8866, %v8904
    %v8915 = vmul.f32 %v8867, %v8906
    %v8916 = vmul.f32 %v8868, %v8908
    %v8917 = vxor.u32 %v8913, 2147483648
    %v8918 = vxor.u32 %v8914, 2147483648
    %v8919 = vxor.u32 %v8915, 2147483648
    %v8920 = vxor.u32 %v8916, 2147483648
    %v8921 = vmul.f32 %v8917, 1.442695
    %v8922 = vpow.pop %v8921
    %v8923 = vmul.f32 %v8918, 1.442695
    %v8924 = vpow.pop %v8923
    %v8925 = vmul.f32 %v8919, 1.442695
    %v8926 = vpow.pop %v8925
    %v8927 = vmul.f32 %v8920, 1.442695
    %v8928 = vpow.pop %v8927
    %v8929 = vadd.f32 %v8922, 1.0
    %v8930 = vadd.f32 %v8924, 1.0
    %v8931 = vadd.f32 %v8926, 1.0
    %v8932 = vadd.f32 %v8928, 1.0
    %v8933 = vrcp.pop %v8929
    %v8934 = vmul.f32 1.0, %v8933
    %v8935 = vrcp.pop %v8930
    %v8936 = vmul.f32 1.0, %v8935
    %v8937 = vrcp.pop %v8931
    %v8938 = vmul.f32 1.0, %v8937
    %v8939 = vrcp.pop %v8932
    %v8940 = vmul.f32 1.0, %v8939
    %8941 = vrot.lane.b32.xlu0 %v8893, 1
    %v8942 = vpop.permute.xlu0 %8941
    %8943 = vrot.lane.b32.xlu0 %v8894, 1
    %v8944 = vpop.permute.xlu0 %8943
    %8945 = vrot.lane.b32.xlu0 %v8895, 1
    %v8946 = vpop.permute.xlu0 %8945
    %8947 = vrot.lane.b32.xlu0 %v8896, 1
    %v8948 = vpop.permute.xlu0 %8947
    %v8953 = vmul.f32 %v8865, %v8942
    %v8954 = vmul.f32 %v8866, %v8944
    %v8955 = vmul.f32 %v8867, %v8946
    %v8956 = vmul.f32 %v8868, %v8948
    %v8957 = vxor.u32 %v8953, 2147483648
    %v8958 = vxor.u32 %v8954, 2147483648
    %v8959 = vxor.u32 %v8955, 2147483648
    %v8960 = vxor.u32 %v8956, 2147483648
    %v8961 = vmul.f32 %v8957, 1.442695
    %v8962 = vpow.pop %v8961
    %v8963 = vmul.f32 %v8958, 1.442695
    %v8964 = vpow.pop %v8963
    %v8965 = vmul.f32 %v8959, 1.442695
    %v8966 = vpow.pop %v8965
    %v8967 = vmul.f32 %v8960, 1.442695
    %v8968 = vpow.pop %v8967
    %v8969 = vadd.f32 %v8962, 1.0
    %v8970 = vadd.f32 %v8964, 1.0
    %v8971 = vadd.f32 %v8966, 1.0
    %v8972 = vadd.f32 %v8968, 1.0
    %v8973 = vrcp.pop %v8969
    %v8974 = vmul.f32 1.0, %v8973
    %v8975 = vrcp.pop %v8970
    %v8976 = vmul.f32 1.0, %v8975
    %v8977 = vrcp.pop %v8971
    %v8978 = vmul.f32 1.0, %v8977
    %v8979 = vrcp.pop %v8972
    %v8980 = vmul.f32 1.0, %v8979
    %8985 = vrot.lane.b32.xlu0 %v8974, 127
    %v8986 = vpop.permute.xlu0 %8985
    %8987 = vrot.lane.b32.xlu0 %v8976, 127
    %v8988 = vpop.permute.xlu0 %8987
    %8989 = vrot.lane.b32.xlu0 %v8978, 127
    %v8990 = vpop.permute.xlu0 %8989
    %8991 = vrot.lane.b32.xlu0 %v8980, 127
    %v8992 = vpop.permute.xlu0 %8991
    %9001 = vrot.lane.b32.xlu0 %v8934, 127
    %v9002 = vpop.permute.xlu0 %9001
    %9003 = vrot.lane.b32.xlu0 %v8936, 127
    %v9004 = vpop.permute.xlu0 %9003
    %9005 = vrot.lane.b32.xlu0 %v8938, 127
    %v9006 = vpop.permute.xlu0 %9005
    %9007 = vrot.lane.b32.xlu0 %v8940, 127
    %v9008 = vpop.permute.xlu0 %9007
    %9017 = vrot.lane.b32.xlu0 %v8886, 2
    %v9018 = vpop.permute.xlu0 %9017
    %9019 = vrot.lane.b32.xlu0 %v8888, 2
    %v9020 = vpop.permute.xlu0 %9019
    %9021 = vrot.lane.b32.xlu0 %v8890, 2
    %v9022 = vpop.permute.xlu0 %9021
    %9023 = vrot.lane.b32.xlu0 %v8892, 2
    %v9024 = vpop.permute.xlu0 %9023
    %vm9029 = vcmask 7168
    %v9030 = vsel %vm9029, %v8986, %v9002
    %v9031 = vsel %vm9029, %v8988, %v9004
    %v9032 = vsel %vm9029, %v8990, %v9006
    %v9033 = vsel %vm9029, %v8992, %v9008
    %vm9034 = vcmask 15360
    %v9035 = vsel %vm9034, %v9030, %v9018
    %v9036 = vsel %vm9034, %v9031, %v9020
    %v9037 = vsel %vm9034, %v9032, %v9022
    %v9038 = vsel %vm9034, %v9033, %v9024
    %9039 = vst.msk [vmem:[%s12] sm:$0xff] %vm8521, %v9035
    %9040 = vst.msk [vmem:[%s12 + $0x8] sm:$0xff] %vm8521, %v9036
    %9041 = vst.msk [vmem:[%s12 + $0x10] sm:$0xff] %vm8521, %v9037
    %9042 = vst.msk [vmem:[%s12 + $0x18] sm:$0xff] %vm8521, %v9038
    // Predicated region
    $region54: #{splite_forward.1} parent=1 // pred_check
      _
    $region55: #{splite_forward.1} parent=1 // pred_check_branch
      %9044 = sbr.rel (0) target = $region57
    $region56: #{splite_forward.1} parent=1 // pred_region
      _
    $region57: #{splite_forward.1} parent=1 // pred_fallthru
      _
    // Predicated region
    $region58: #{splite_forward.1} parent=1 // pred_check
      _
    $region59: #{splite_forward.1} parent=1 // pred_check_branch
      %9046 = sbr.rel (0) target = $region61
    $region60: #{splite_forward.1} parent=1 // pred_region
      _
    $region61: #{splite_forward.1} parent=1 // pred_fallthru
      _
    %9047 = vsyncpa [#allocation3], 1

</llo_original>
